<compile_context>
chip_gen: v7x
topology: tpu7x:2x2x1
jax: 0.10.0
libtpu: 0.0.40
codegen_flags: <defaults>
</compile_context>

<pallas_src>
import functools

import jax
import jax.numpy as jnp
from jax.experimental import pallas as pl
from jax.experimental.pallas import tpu as pltpu

# Keep f32 matmul precision identical between the in-kernel dots and the JAX reference.
jax.config.update("jax_default_matmul_precision", "float32")


def _question_embedding_kernel(*refs, T, B, H, num_layers):
    qsts_ref = refs[0]                       # SMEM (B, T) int32 token ids
    len_ref = refs[1]                        # SMEM (B,)   int32 valid lengths
    table_ref = refs[2]                      # VMEM (V, 1, D) f32 embedding table
    w_refs = refs[3:3 + 3 * num_layers]      # per layer: w_ih (in,4H), w_hh (H,4H), bias (1,4H)
    out_ref = refs[3 + 3 * num_layers]       # VMEM (B, H)
    x_ref, g_ref, hall_ref, h_ref, c_ref = refs[4 + 3 * num_layers:]

    # ---- embedding lookup: x[t*B + b, :] = table[qsts[b, t]] ------------------
    for t in range(T):
        for b in range(B):
            idx = qsts_ref[b, t]
            r = t * B + b
            x_ref[r:r + 1, :] = table_ref[idx]

    out_ref[...] = jnp.zeros_like(out_ref)

    # ---- stacked LSTM ----------------------------------------------------------
    for layer in range(num_layers):
        w_ih_ref = w_refs[3 * layer + 0]
        w_hh_ref = w_refs[3 * layer + 1]
        bias_ref = w_refs[3 * layer + 2]
        last_layer = layer == num_layers - 1

        # Input projections for ALL timesteps in one lane-dense MXU matmul.
        inp = x_ref[...] if layer == 0 else hall_ref[...]
        g_ref[...] = (
            jnp.dot(inp, w_ih_ref[...], preferred_element_type=jnp.float32)
            + bias_ref[...]
        )

        h_ref[...] = jnp.zeros_like(h_ref)
        c_ref[...] = jnp.zeros_like(c_ref)

        # Sequential recurrence (statically unrolled); only h @ W_hh stays inside.
        for t in range(T):
            gates = g_ref[t * B:(t + 1) * B, :] + jnp.dot(
                h_ref[...], w_hh_ref[...], preferred_element_type=jnp.float32
            )
            i_g = jax.nn.sigmoid(gates[:, 0 * H:1 * H])
            f_g = jax.nn.sigmoid(gates[:, 1 * H:2 * H])
            g_g = jnp.tanh(gates[:, 2 * H:3 * H])
            o_g = jax.nn.sigmoid(gates[:, 3 * H:4 * H])
            c_new = f_g * c_ref[...] + i_g * g_g
            h_new = o_g * jnp.tanh(c_new)
            c_ref[...] = c_new
            h_ref[...] = h_new

            if not last_layer:
                # Feed the next layer.
                hall_ref[t * B:(t + 1) * B, :] = h_new
            else:
                # pack_padded_sequence + gather(out, len-1): the b-th output is the
                # last layer's hidden state at its last valid timestep.
                for b in range(B):
                    @pl.when(t + 1 == len_ref[b])
                    def _(h_new=h_new, b=b):
                        out_ref[b:b + 1, :] = h_new[b:b + 1, :]


def question_embedding_forward(qsts, qst_len, emb_table, lstm_weights):
    """qsts: (B,T) int ids; qst_len: (B,) ints; emb_table: (V,D); lstm_weights:
    list of (w_ih [4H,in], w_hh [4H,H], b_ih [4H], b_hh [4H]) per layer (PyTorch layout).
    Returns last-layer hidden state at t = qst_len-1, shape (B, H)."""
    B, T = qsts.shape
    V, D = emb_table.shape
    num_layers = len(lstm_weights)
    H = lstm_weights[0][1].shape[1]          # w_hh: (4H, H)

    # Pre-transpose weights to (in, 4H)/(H, 4H) and fold the two biases together.
    flat_w = []
    for (w_ih, w_hh, b_ih, b_hh) in lstm_weights:
        flat_w.append(jnp.asarray(w_ih, jnp.float32).T)
        flat_w.append(jnp.asarray(w_hh, jnp.float32).T)
        flat_w.append((jnp.asarray(b_ih, jnp.float32)
                       + jnp.asarray(b_hh, jnp.float32)).reshape(1, 4 * H))

    # (V, 1, D): dynamic row gather uses the leading (untiled) axis.
    table3 = jnp.asarray(emb_table, jnp.float32).reshape(V, 1, D)

    kernel = functools.partial(
        _question_embedding_kernel, T=T, B=B, H=H, num_layers=num_layers
    )

    in_specs = (
        [pl.BlockSpec(memory_space=pltpu.MemorySpace.SMEM),   # qsts
         pl.BlockSpec(memory_space=pltpu.MemorySpace.SMEM),   # qst_len
         pl.BlockSpec(memory_space=pltpu.MemorySpace.VMEM)]   # embedding table
        + [pl.BlockSpec(memory_space=pltpu.MemorySpace.VMEM)] * (3 * num_layers)
    )

    out = pl.pallas_call(
        kernel,
        out_shape=jax.ShapeDtypeStruct((B, H), jnp.float32),
        in_specs=in_specs,
        out_specs=pl.BlockSpec(memory_space=pltpu.MemorySpace.VMEM),
        scratch_shapes=[
            pltpu.VMEM((T * B, D), jnp.float32),       # embedded inputs
            pltpu.VMEM((T * B, 4 * H), jnp.float32),   # per-layer input projections
            pltpu.VMEM((T * B, H), jnp.float32),       # previous layer hidden states
            pltpu.VMEM((B, H), jnp.float32),           # h state
            pltpu.VMEM((B, H), jnp.float32),           # c state
        ],
    )(qsts.astype(jnp.int32), qst_len.astype(jnp.int32), table3, *flat_w)
    return out


def question_embedding_reference(qsts, qst_len, emb_table, lstm_weights):
    """Pure-JAX reference (padded LSTM + gather at len-1)."""
    B, T = qsts.shape
    H = lstm_weights[0][1].shape[1]
    inp = emb_table[qsts]                               # (B, T, D)
    for (w_ih, w_hh, b_ih, b_hh) in lstm_weights:
        h = jnp.zeros((B, H), jnp.float32)
        c = jnp.zeros((B, H), jnp.float32)
        outs = []
        for t in range(T):
            gates = (jnp.dot(inp[:, t, :], w_ih.T) + b_ih
                     + jnp.dot(h, w_hh.T) + b_hh)
            i_g = jax.nn.sigmoid(gates[:, 0 * H:1 * H])
            f_g = jax.nn.sigmoid(gates[:, 1 * H:2 * H])
            g_g = jnp.tanh(gates[:, 2 * H:3 * H])
            o_g = jax.nn.sigmoid(gates[:, 3 * H:4 * H])
            c = f_g * c + i_g * g_g
            h = o_g * jnp.tanh(c)
            outs.append(h)
        inp = jnp.stack(outs, axis=1)                   # (B, T, H)
    return inp[jnp.arange(B), qst_len - 1, :]


if __name__ == "__main__":
    # Small shapes consistent with the module: vocab=10 (config default),
    # word_emb_dim=32, rnn_hidden_dim=32 (so 4H = 128 lanes), 2 LSTM layers.
    B, T = 2, 8
    V, D, H = 10, 32, 32
    num_layers = 2

    key = jax.random.PRNGKey(0)
    keys = jax.random.split(key, 12)

    emb_table = 0.1 * jax.random.normal(keys[0], (V, D), jnp.float32)
    emb_table = emb_table.at[0].set(0.0)                # padding_idx = 0 row is zero

    lstm_weights = []
    ki = 1
    for layer in range(num_layers):
        in_dim = D if layer == 0 else H
        w_ih = 0.1 * jax.random.normal(keys[ki], (4 * H, in_dim), jnp.float32); ki += 1
        w_hh = 0.1 * jax.random.normal(keys[ki], (4 * H, H), jnp.float32); ki += 1
        b_ih = 0.1 * jax.random.normal(keys[ki], (4 * H,), jnp.float32); ki += 1
        b_hh = 0.1 * jax.random.normal(keys[ki], (4 * H,), jnp.float32); ki += 1
        lstm_weights.append((w_ih, w_hh, b_ih, b_hh))

    qst_len = jnp.array([8, 5], dtype=jnp.int32)        # sorted desc, like pack_padded_sequence
    qsts = jax.random.randint(keys[ki], (B, T), 1, V).astype(jnp.int32)
    valid = jnp.arange(T)[None, :] < qst_len[:, None]
    qsts = jnp.where(valid, qsts, 0)                    # padded positions use padding_idx 0

    out = question_embedding_forward(qsts, qst_len, emb_table, lstm_weights)
    out = jax.block_until_ready(out)

    ref = question_embedding_reference(qsts, qst_len, emb_table, lstm_weights)
    assert out.shape == (B, H), out.shape
    assert jnp.allclose(out, ref, atol=1e-4, rtol=1e-4), (out, ref)

    print("KERNEL_OK")
</pallas_src>

<mosaic_0001>
module attributes {stable_mosaic.version = 11 : i64} {
  func.func @_question_embedding_kernel(%arg0: memref<2x8xi32, #tpu.memory_space<smem>>, %arg1: memref<2xi32, #tpu.memory_space<smem>>, %arg2: memref<10x1x32xf32, #tpu.memory_space<vmem>>, %arg3: memref<32x128xf32, #tpu.memory_space<vmem>>, %arg4: memref<32x128xf32, #tpu.memory_space<vmem>>, %arg5: memref<1x128xf32, #tpu.memory_space<vmem>>, %arg6: memref<32x128xf32, #tpu.memory_space<vmem>>, %arg7: memref<32x128xf32, #tpu.memory_space<vmem>>, %arg8: memref<1x128xf32, #tpu.memory_space<vmem>>, %arg9: memref<2x32xf32, #tpu.memory_space<vmem>>, %arg10: memref<16x32xf32, #tpu.memory_space<vmem>>, %arg11: memref<16x128xf32, #tpu.memory_space<vmem>>, %arg12: memref<16x32xf32, #tpu.memory_space<vmem>>, %arg13: memref<2x32xf32, #tpu.memory_space<vmem>>, %arg14: memref<2x32xf32, #tpu.memory_space<vmem>>) attributes {dimension_semantics = [], scalar_prefetch = 0 : i64, scratch_operands = 5 : i64, tpu.core_type = #tpu.core_type<tc>} {
    %c0 = arith.constant 0 : index
    %c0_0 = arith.constant 0 : index
    %0 = memref.load %arg0[%c0, %c0_0] : memref<2x8xi32, #tpu.memory_space<smem>>
    %1 = arith.index_cast %0 : i32 to index
    %c0_1 = arith.constant 0 : index
    %c0_2 = arith.constant 0 : index
    %2 = vector.load %arg2[%1, %c0_1, %c0_2] : memref<10x1x32xf32, #tpu.memory_space<vmem>>, vector<1x1x32xf32>
    %3 = vector.shape_cast %2 : vector<1x1x32xf32> to vector<1x32xf32>
    %c0_3 = arith.constant 0 : index
    %c0_4 = arith.constant 0 : index
    %4 = vector.load %arg10[%c0_3, %c0_4] : memref<16x32xf32, #tpu.memory_space<vmem>>, vector<1x32xf32>
    tpu.vector_store %arg10[%c0_3, %c0_4], %3 {strides = array<i32>} : memref<16x32xf32, #tpu.memory_space<vmem>>, vector<1x32xf32>,
    %c1 = arith.constant 1 : index
    %c0_5 = arith.constant 0 : index
    %5 = memref.load %arg0[%c1, %c0_5] : memref<2x8xi32, #tpu.memory_space<smem>>
    %6 = arith.index_cast %5 : i32 to index
    %c0_6 = arith.constant 0 : index
    %c0_7 = arith.constant 0 : index
    %7 = vector.load %arg2[%6, %c0_6, %c0_7] : memref<10x1x32xf32, #tpu.memory_space<vmem>>, vector<1x1x32xf32>
    %8 = vector.shape_cast %7 : vector<1x1x32xf32> to vector<1x32xf32>
    %c1_8 = arith.constant 1 : index
    %c0_9 = arith.constant 0 : index
    %9 = vector.load %arg10[%c1_8, %c0_9] : memref<16x32xf32, #tpu.memory_space<vmem>>, vector<1x32xf32>
    tpu.vector_store %arg10[%c1_8, %c0_9], %8 {strides = array<i32>} : memref<16x32xf32, #tpu.memory_space<vmem>>, vector<1x32xf32>,
    %c0_10 = arith.constant 0 : index
    %c1_11 = arith.constant 1 : index
    %10 = memref.load %arg0[%c0_10, %c1_11] : memref<2x8xi32, #tpu.memory_space<smem>>
    %11 = arith.index_cast %10 : i32 to index
    %c0_12 = arith.constant 0 : index
    %c0_13 = arith.constant 0 : index
    %12 = vector.load %arg2[%11, %c0_12, %c0_13] : memref<10x1x32xf32, #tpu.memory_space<vmem>>, vector<1x1x32xf32>
    %13 = vector.shape_cast %12 : vector<1x1x32xf32> to vector<1x32xf32>
    %c2 = arith.constant 2 : index
    %c0_14 = arith.constant 0 : index
    %14 = vector.load %arg10[%c2, %c0_14] : memref<16x32xf32, #tpu.memory_space<vmem>>, vector<1x32xf32>
    tpu.vector_store %arg10[%c2, %c0_14], %13 {strides = array<i32>} : memref<16x32xf32, #tpu.memory_space<vmem>>, vector<1x32xf32>,
    %c1_15 = arith.constant 1 : index
    %c1_16 = arith.constant 1 : index
    %15 = memref.load %arg0[%c1_15, %c1_16] : memref<2x8xi32, #tpu.memory_space<smem>>
    %16 = arith.index_cast %15 : i32 to index
    %c0_17 = arith.constant 0 : index
    %c0_18 = arith.constant 0 : index
    %17 = vector.load %arg2[%16, %c0_17, %c0_18] : memref<10x1x32xf32, #tpu.memory_space<vmem>>, vector<1x1x32xf32>
    %18 = vector.shape_cast %17 : vector<1x1x32xf32> to vector<1x32xf32>
    %c3 = arith.constant 3 : index
    %c0_19 = arith.constant 0 : index
    %19 = vector.load %arg10[%c3, %c0_19] : memref<16x32xf32, #tpu.memory_space<vmem>>, vector<1x32xf32>
    tpu.vector_store %arg10[%c3, %c0_19], %18 {strides = array<i32>} : memref<16x32xf32, #tpu.memory_space<vmem>>, vector<1x32xf32>,
    %c0_20 = arith.constant 0 : index
    %c2_21 = arith.constant 2 : index
    %20 = memref.load %arg0[%c0_20, %c2_21] : memref<2x8xi32, #tpu.memory_space<smem>>
    %21 = arith.index_cast %20 : i32 to index
    %c0_22 = arith.constant 0 : index
    %c0_23 = arith.constant 0 : index
    %22 = vector.load %arg2[%21, %c0_22, %c0_23] : memref<10x1x32xf32, #tpu.memory_space<vmem>>, vector<1x1x32xf32>
    %23 = vector.shape_cast %22 : vector<1x1x32xf32> to vector<1x32xf32>
    %c4 = arith.constant 4 : index
    %c0_24 = arith.constant 0 : index
    %24 = vector.load %arg10[%c4, %c0_24] : memref<16x32xf32, #tpu.memory_space<vmem>>, vector<1x32xf32>
    tpu.vector_store %arg10[%c4, %c0_24], %23 {strides = array<i32>} : memref<16x32xf32, #tpu.memory_space<vmem>>, vector<1x32xf32>,
    %c1_25 = arith.constant 1 : index
    %c2_26 = arith.constant 2 : index
    %25 = memref.load %arg0[%c1_25, %c2_26] : memref<2x8xi32, #tpu.memory_space<smem>>
    %26 = arith.index_cast %25 : i32 to index
    %c0_27 = arith.constant 0 : index
    %c0_28 = arith.constant 0 : index
    %27 = vector.load %arg2[%26, %c0_27, %c0_28] : memref<10x1x32xf32, #tpu.memory_space<vmem>>, vector<1x1x32xf32>
    %28 = vector.shape_cast %27 : vector<1x1x32xf32> to vector<1x32xf32>
    %c5 = arith.constant 5 : index
    %c0_29 = arith.constant 0 : index
    %29 = vector.load %arg10[%c5, %c0_29] : memref<16x32xf32, #tpu.memory_space<vmem>>, vector<1x32xf32>
    tpu.vector_store %arg10[%c5, %c0_29], %28 {strides = array<i32>} : memref<16x32xf32, #tpu.memory_space<vmem>>, vector<1x32xf32>,
    %c0_30 = arith.constant 0 : index
    %c3_31 = arith.constant 3 : index
    %30 = memref.load %arg0[%c0_30, %c3_31] : memref<2x8xi32, #tpu.memory_space<smem>>
    %31 = arith.index_cast %30 : i32 to index
    %c0_32 = arith.constant 0 : index
    %c0_33 = arith.constant 0 : index
    %32 = vector.load %arg2[%31, %c0_32, %c0_33] : memref<10x1x32xf32, #tpu.memory_space<vmem>>, vector<1x1x32xf32>
    %33 = vector.shape_cast %32 : vector<1x1x32xf32> to vector<1x32xf32>
    %c6 = arith.constant 6 : index
    %c0_34 = arith.constant 0 : index
    %34 = vector.load %arg10[%c6, %c0_34] : memref<16x32xf32, #tpu.memory_space<vmem>>, vector<1x32xf32>
    tpu.vector_store %arg10[%c6, %c0_34], %33 {strides = array<i32>} : memref<16x32xf32, #tpu.memory_space<vmem>>, vector<1x32xf32>,
    %c1_35 = arith.constant 1 : index
    %c3_36 = arith.constant 3 : index
    %35 = memref.load %arg0[%c1_35, %c3_36] : memref<2x8xi32, #tpu.memory_space<smem>>
    %36 = arith.index_cast %35 : i32 to index
    %c0_37 = arith.constant 0 : index
    %c0_38 = arith.constant 0 : index
    %37 = vector.load %arg2[%36, %c0_37, %c0_38] : memref<10x1x32xf32, #tpu.memory_space<vmem>>, vector<1x1x32xf32>
    %38 = vector.shape_cast %37 : vector<1x1x32xf32> to vector<1x32xf32>
    %c7 = arith.constant 7 : index
    %c0_39 = arith.constant 0 : index
    %39 = vector.load %arg10[%c7, %c0_39] : memref<16x32xf32, #tpu.memory_space<vmem>>, vector<1x32xf32>
    tpu.vector_store %arg10[%c7, %c0_39], %38 {strides = array<i32>} : memref<16x32xf32, #tpu.memory_space<vmem>>, vector<1x32xf32>,
    %c0_40 = arith.constant 0 : index
    %c4_41 = arith.constant 4 : index
    %40 = memref.load %arg0[%c0_40, %c4_41] : memref<2x8xi32, #tpu.memory_space<smem>>
    %41 = arith.index_cast %40 : i32 to index
    %c0_42 = arith.constant 0 : index
    %c0_43 = arith.constant 0 : index
    %42 = vector.load %arg2[%41, %c0_42, %c0_43] : memref<10x1x32xf32, #tpu.memory_space<vmem>>, vector<1x1x32xf32>
    %43 = vector.shape_cast %42 : vector<1x1x32xf32> to vector<1x32xf32>
    %c8 = arith.constant 8 : index
    %c0_44 = arith.constant 0 : index
    %44 = vector.load %arg10[%c8, %c0_44] : memref<16x32xf32, #tpu.memory_space<vmem>>, vector<1x32xf32>
    tpu.vector_store %arg10[%c8, %c0_44], %43 {strides = array<i32>} : memref<16x32xf32, #tpu.memory_space<vmem>>, vector<1x32xf32>,
    %c1_45 = arith.constant 1 : index
    %c4_46 = arith.constant 4 : index
    %45 = memref.load %arg0[%c1_45, %c4_46] : memref<2x8xi32, #tpu.memory_space<smem>>
    %46 = arith.index_cast %45 : i32 to index
    %c0_47 = arith.constant 0 : index
    %c0_48 = arith.constant 0 : index
    %47 = vector.load %arg2[%46, %c0_47, %c0_48] : memref<10x1x32xf32, #tpu.memory_space<vmem>>, vector<1x1x32xf32>
    %48 = vector.shape_cast %47 : vector<1x1x32xf32> to vector<1x32xf32>
    %c9 = arith.constant 9 : index
    %c0_49 = arith.constant 0 : index
    %49 = vector.load %arg10[%c9, %c0_49] : memref<16x32xf32, #tpu.memory_space<vmem>>, vector<1x32xf32>
    tpu.vector_store %arg10[%c9, %c0_49], %48 {strides = array<i32>} : memref<16x32xf32, #tpu.memory_space<vmem>>, vector<1x32xf32>,
    %c0_50 = arith.constant 0 : index
    %c5_51 = arith.constant 5 : index
    %50 = memref.load %arg0[%c0_50, %c5_51] : memref<2x8xi32, #tpu.memory_space<smem>>
    %51 = arith.index_cast %50 : i32 to index
    %c0_52 = arith.constant 0 : index
    %c0_53 = arith.constant 0 : index
    %52 = vector.load %arg2[%51, %c0_52, %c0_53] : memref<10x1x32xf32, #tpu.memory_space<vmem>>, vector<1x1x32xf32>
    %53 = vector.shape_cast %52 : vector<1x1x32xf32> to vector<1x32xf32>
    %c10 = arith.constant 10 : index
    %c0_54 = arith.constant 0 : index
    %54 = vector.load %arg10[%c10, %c0_54] : memref<16x32xf32, #tpu.memory_space<vmem>>, vector<1x32xf32>
    tpu.vector_store %arg10[%c10, %c0_54], %53 {strides = array<i32>} : memref<16x32xf32, #tpu.memory_space<vmem>>, vector<1x32xf32>,
    %c1_55 = arith.constant 1 : index
    %c5_56 = arith.constant 5 : index
    %55 = memref.load %arg0[%c1_55, %c5_56] : memref<2x8xi32, #tpu.memory_space<smem>>
    %56 = arith.index_cast %55 : i32 to index
    %c0_57 = arith.constant 0 : index
    %c0_58 = arith.constant 0 : index
    %57 = vector.load %arg2[%56, %c0_57, %c0_58] : memref<10x1x32xf32, #tpu.memory_space<vmem>>, vector<1x1x32xf32>
    %58 = vector.shape_cast %57 : vector<1x1x32xf32> to vector<1x32xf32>
    %c11 = arith.constant 11 : index
    %c0_59 = arith.constant 0 : index
    %59 = vector.load %arg10[%c11, %c0_59] : memref<16x32xf32, #tpu.memory_space<vmem>>, vector<1x32xf32>
    tpu.vector_store %arg10[%c11, %c0_59], %58 {strides = array<i32>} : memref<16x32xf32, #tpu.memory_space<vmem>>, vector<1x32xf32>,
    %c0_60 = arith.constant 0 : index
    %c6_61 = arith.constant 6 : index
    %60 = memref.load %arg0[%c0_60, %c6_61] : memref<2x8xi32, #tpu.memory_space<smem>>
    %61 = arith.index_cast %60 : i32 to index
    %c0_62 = arith.constant 0 : index
    %c0_63 = arith.constant 0 : index
    %62 = vector.load %arg2[%61, %c0_62, %c0_63] : memref<10x1x32xf32, #tpu.memory_space<vmem>>, vector<1x1x32xf32>
    %63 = vector.shape_cast %62 : vector<1x1x32xf32> to vector<1x32xf32>
    %c12 = arith.constant 12 : index
    %c0_64 = arith.constant 0 : index
    %64 = vector.load %arg10[%c12, %c0_64] : memref<16x32xf32, #tpu.memory_space<vmem>>, vector<1x32xf32>
    tpu.vector_store %arg10[%c12, %c0_64], %63 {strides = array<i32>} : memref<16x32xf32, #tpu.memory_space<vmem>>, vector<1x32xf32>,
    %c1_65 = arith.constant 1 : index
    %c6_66 = arith.constant 6 : index
    %65 = memref.load %arg0[%c1_65, %c6_66] : memref<2x8xi32, #tpu.memory_space<smem>>
    %66 = arith.index_cast %65 : i32 to index
    %c0_67 = arith.constant 0 : index
    %c0_68 = arith.constant 0 : index
    %67 = vector.load %arg2[%66, %c0_67, %c0_68] : memref<10x1x32xf32, #tpu.memory_space<vmem>>, vector<1x1x32xf32>
    %68 = vector.shape_cast %67 : vector<1x1x32xf32> to vector<1x32xf32>
    %c13 = arith.constant 13 : index
    %c0_69 = arith.constant 0 : index
    %69 = vector.load %arg10[%c13, %c0_69] : memref<16x32xf32, #tpu.memory_space<vmem>>, vector<1x32xf32>
    tpu.vector_store %arg10[%c13, %c0_69], %68 {strides = array<i32>} : memref<16x32xf32, #tpu.memory_space<vmem>>, vector<1x32xf32>,
    %c0_70 = arith.constant 0 : index
    %c7_71 = arith.constant 7 : index
    %70 = memref.load %arg0[%c0_70, %c7_71] : memref<2x8xi32, #tpu.memory_space<smem>>
    %71 = arith.index_cast %70 : i32 to index
    %c0_72 = arith.constant 0 : index
    %c0_73 = arith.constant 0 : index
    %72 = vector.load %arg2[%71, %c0_72, %c0_73] : memref<10x1x32xf32, #tpu.memory_space<vmem>>, vector<1x1x32xf32>
    %73 = vector.shape_cast %72 : vector<1x1x32xf32> to vector<1x32xf32>
    %c14 = arith.constant 14 : index
    %c0_74 = arith.constant 0 : index
    %74 = vector.load %arg10[%c14, %c0_74] : memref<16x32xf32, #tpu.memory_space<vmem>>, vector<1x32xf32>
    tpu.vector_store %arg10[%c14, %c0_74], %73 {strides = array<i32>} : memref<16x32xf32, #tpu.memory_space<vmem>>, vector<1x32xf32>,
    %c1_75 = arith.constant 1 : index
    %c7_76 = arith.constant 7 : index
    %75 = memref.load %arg0[%c1_75, %c7_76] : memref<2x8xi32, #tpu.memory_space<smem>>
    %76 = arith.index_cast %75 : i32 to index
    %c0_77 = arith.constant 0 : index
    %c0_78 = arith.constant 0 : index
    %77 = vector.load %arg2[%76, %c0_77, %c0_78] : memref<10x1x32xf32, #tpu.memory_space<vmem>>, vector<1x1x32xf32>
    %78 = vector.shape_cast %77 : vector<1x1x32xf32> to vector<1x32xf32>
    %c15 = arith.constant 15 : index
    %c0_79 = arith.constant 0 : index
    %79 = vector.load %arg10[%c15, %c0_79] : memref<16x32xf32, #tpu.memory_space<vmem>>, vector<1x32xf32>
    tpu.vector_store %arg10[%c15, %c0_79], %78 {strides = array<i32>} : memref<16x32xf32, #tpu.memory_space<vmem>>, vector<1x32xf32>,
    %cst = arith.constant 0.000000e+00 : f32
    %80 = vector.broadcast %cst : f32 to vector<2x32xf32>
    %c0_80 = arith.constant 0 : index
    %c0_81 = arith.constant 0 : index
    %81 = vector.load %arg9[%c0_80, %c0_81] : memref<2x32xf32, #tpu.memory_space<vmem>>, vector<2x32xf32>
    tpu.vector_store %arg9[%c0_80, %c0_81], %80 {strides = array<i32>} : memref<2x32xf32, #tpu.memory_space<vmem>>, vector<2x32xf32>,
    %c0_82 = arith.constant 0 : index
    %c0_83 = arith.constant 0 : index
    %82 = vector.load %arg10[%c0_82, %c0_83] : memref<16x32xf32, #tpu.memory_space<vmem>>, vector<16x32xf32>
    %c0_84 = arith.constant 0 : index
    %c0_85 = arith.constant 0 : index
    %83 = vector.load %arg3[%c0_84, %c0_85] : memref<32x128xf32, #tpu.memory_space<vmem>>, vector<32x128xf32>
    %cst_86 = arith.constant dense<0.000000e+00> : vector<16x128xf32>
    %84 = tpu.matmul %82, %83, %cst_86 {dimension_numbers = #tpu.dot_dimension_numbers<[1], [0], [0], [1], [0, 0, 1, 1], [], []>, precision = #tpu.contract_precision<fp32>} : vector<16x32xf32>, vector<32x128xf32>, vector<16x128xf32> -> vector<16x128xf32>
    %c0_87 = arith.constant 0 : index
    %c0_88 = arith.constant 0 : index
    %85 = vector.load %arg5[%c0_87, %c0_88] : memref<1x128xf32, #tpu.memory_space<vmem>>, vector<1x128xf32>
    %86 = vector.broadcast %85 : vector<1x128xf32> to vector<16x128xf32>
    %87 = arith.addf %84, %86 : vector<16x128xf32>
    %c0_89 = arith.constant 0 : index
    %c0_90 = arith.constant 0 : index
    %88 = vector.load %arg11[%c0_89, %c0_90] : memref<16x128xf32, #tpu.memory_space<vmem>>, vector<16x128xf32>
    tpu.vector_store %arg11[%c0_89, %c0_90], %87 {strides = array<i32>} : memref<16x128xf32, #tpu.memory_space<vmem>>, vector<16x128xf32>,
    %cst_91 = arith.constant 0.000000e+00 : f32
    %89 = vector.broadcast %cst_91 : f32 to vector<2x32xf32>
    %c0_92 = arith.constant 0 : index
    %c0_93 = arith.constant 0 : index
    %90 = vector.load %arg13[%c0_92, %c0_93] : memref<2x32xf32, #tpu.memory_space<vmem>>, vector<2x32xf32>
    tpu.vector_store %arg13[%c0_92, %c0_93], %89 {strides = array<i32>} : memref<2x32xf32, #tpu.memory_space<vmem>>, vector<2x32xf32>,
    %cst_94 = arith.constant 0.000000e+00 : f32
    %91 = vector.broadcast %cst_94 : f32 to vector<2x32xf32>
    %c0_95 = arith.constant 0 : index
    %c0_96 = arith.constant 0 : index
    %92 = vector.load %arg14[%c0_95, %c0_96] : memref<2x32xf32, #tpu.memory_space<vmem>>, vector<2x32xf32>
    tpu.vector_store %arg14[%c0_95, %c0_96], %91 {strides = array<i32>} : memref<2x32xf32, #tpu.memory_space<vmem>>, vector<2x32xf32>,
    %c0_97 = arith.constant 0 : index
    %c0_98 = arith.constant 0 : index
    %93 = vector.load %arg11[%c0_97, %c0_98] : memref<16x128xf32, #tpu.memory_space<vmem>>, vector<2x128xf32>
    %c0_99 = arith.constant 0 : index
    %c0_100 = arith.constant 0 : index
    %94 = vector.load %arg13[%c0_99, %c0_100] : memref<2x32xf32, #tpu.memory_space<vmem>>, vector<2x32xf32>
    %c0_101 = arith.constant 0 : index
    %c0_102 = arith.constant 0 : index
    %95 = vector.load %arg4[%c0_101, %c0_102] : memref<32x128xf32, #tpu.memory_space<vmem>>, vector<32x128xf32>
    %cst_103 = arith.constant dense<0.000000e+00> : vector<2x128xf32>
    %96 = tpu.matmul %94, %95, %cst_103 {dimension_numbers = #tpu.dot_dimension_numbers<[1], [0], [0], [1], [0, 0, 1, 1], [], []>, precision = #tpu.contract_precision<fp32>} : vector<2x32xf32>, vector<32x128xf32>, vector<2x128xf32> -> vector<2x128xf32>
    %97 = arith.addf %93, %96 : vector<2x128xf32>
    %98 = vector.extract_strided_slice %97 {offsets = [0, 0], sizes = [2, 32], strides = [1, 1]} : vector<2x128xf32> to vector<2x32xf32>
    %99 = arith.negf %98 : vector<2x32xf32>
    %100 = math.exp %99 : vector<2x32xf32>
    %cst_104 = arith.constant 1.000000e+00 : f32
    %101 = vector.broadcast %cst_104 : f32 to vector<2x32xf32>
    %102 = arith.addf %101, %100 : vector<2x32xf32>
    %103 = arith.divf %101, %102 : vector<2x32xf32>
    %104 = vector.extract_strided_slice %97 {offsets = [0, 32], sizes = [2, 32], strides = [1, 1]} : vector<2x128xf32> to vector<2x32xf32>
    %105 = arith.negf %104 : vector<2x32xf32>
    %106 = math.exp %105 : vector<2x32xf32>
    %cst_105 = arith.constant 1.000000e+00 : f32
    %107 = vector.broadcast %cst_105 : f32 to vector<2x32xf32>
    %108 = arith.addf %107, %106 : vector<2x32xf32>
    %109 = arith.divf %107, %108 : vector<2x32xf32>
    %110 = vector.extract_strided_slice %97 {offsets = [0, 64], sizes = [2, 32], strides = [1, 1]} : vector<2x128xf32> to vector<2x32xf32>
    %111 = math.tanh %110 : vector<2x32xf32>
    %112 = vector.extract_strided_slice %97 {offsets = [0, 96], sizes = [2, 32], strides = [1, 1]} : vector<2x128xf32> to vector<2x32xf32>
    %113 = arith.negf %112 : vector<2x32xf32>
    %114 = math.exp %113 : vector<2x32xf32>
    %cst_106 = arith.constant 1.000000e+00 : f32
    %115 = vector.broadcast %cst_106 : f32 to vector<2x32xf32>
    %116 = arith.addf %115, %114 : vector<2x32xf32>
    %117 = arith.divf %115, %116 : vector<2x32xf32>
    %c0_107 = arith.constant 0 : index
    %c0_108 = arith.constant 0 : index
    %118 = vector.load %arg14[%c0_107, %c0_108] : memref<2x32xf32, #tpu.memory_space<vmem>>, vector<2x32xf32>
    %119 = arith.mulf %109, %118 : vector<2x32xf32>
    %120 = arith.mulf %103, %111 : vector<2x32xf32>
    %121 = arith.addf %119, %120 : vector<2x32xf32>
    %122 = math.tanh %121 : vector<2x32xf32>
    %123 = arith.mulf %117, %122 : vector<2x32xf32>
    %c0_109 = arith.constant 0 : index
    %c0_110 = arith.constant 0 : index
    %124 = vector.load %arg14[%c0_109, %c0_110] : memref<2x32xf32, #tpu.memory_space<vmem>>, vector<2x32xf32>
    tpu.vector_store %arg14[%c0_109, %c0_110], %121 {strides = array<i32>} : memref<2x32xf32, #tpu.memory_space<vmem>>, vector<2x32xf32>,
    %c0_111 = arith.constant 0 : index
    %c0_112 = arith.constant 0 : index
    %125 = vector.load %arg13[%c0_111, %c0_112] : memref<2x32xf32, #tpu.memory_space<vmem>>, vector<2x32xf32>
    tpu.vector_store %arg13[%c0_111, %c0_112], %123 {strides = array<i32>} : memref<2x32xf32, #tpu.memory_space<vmem>>, vector<2x32xf32>,
    %c0_113 = arith.constant 0 : index
    %c0_114 = arith.constant 0 : index
    %126 = vector.load %arg12[%c0_113, %c0_114] : memref<16x32xf32, #tpu.memory_space<vmem>>, vector<2x32xf32>
    tpu.vector_store %arg12[%c0_113, %c0_114], %123 {strides = array<i32>} : memref<16x32xf32, #tpu.memory_space<vmem>>, vector<2x32xf32>,
    %c2_115 = arith.constant 2 : index
    %c0_116 = arith.constant 0 : index
    %127 = vector.load %arg11[%c2_115, %c0_116] : memref<16x128xf32, #tpu.memory_space<vmem>>, vector<2x128xf32>
    %c0_117 = arith.constant 0 : index
    %c0_118 = arith.constant 0 : index
    %128 = vector.load %arg13[%c0_117, %c0_118] : memref<2x32xf32, #tpu.memory_space<vmem>>, vector<2x32xf32>
    %c0_119 = arith.constant 0 : index
    %c0_120 = arith.constant 0 : index
    %129 = vector.load %arg4[%c0_119, %c0_120] : memref<32x128xf32, #tpu.memory_space<vmem>>, vector<32x128xf32>
    %cst_121 = arith.constant dense<0.000000e+00> : vector<2x128xf32>
    %130 = tpu.matmul %128, %129, %cst_121 {dimension_numbers = #tpu.dot_dimension_numbers<[1], [0], [0], [1], [0, 0, 1, 1], [], []>, precision = #tpu.contract_precision<fp32>} : vector<2x32xf32>, vector<32x128xf32>, vector<2x128xf32> -> vector<2x128xf32>
    %131 = arith.addf %127, %130 : vector<2x128xf32>
    %132 = vector.extract_strided_slice %131 {offsets = [0, 0], sizes = [2, 32], strides = [1, 1]} : vector<2x128xf32> to vector<2x32xf32>
    %133 = arith.negf %132 : vector<2x32xf32>
    %134 = math.exp %133 : vector<2x32xf32>
    %cst_122 = arith.constant 1.000000e+00 : f32
    %135 = vector.broadcast %cst_122 : f32 to vector<2x32xf32>
    %136 = arith.addf %135, %134 : vector<2x32xf32>
    %137 = arith.divf %135, %136 : vector<2x32xf32>
    %138 = vector.extract_strided_slice %131 {offsets = [0, 32], sizes = [2, 32], strides = [1, 1]} : vector<2x128xf32> to vector<2x32xf32>
    %139 = arith.negf %138 : vector<2x32xf32>
    %140 = math.exp %139 : vector<2x32xf32>
    %cst_123 = arith.constant 1.000000e+00 : f32
    %141 = vector.broadcast %cst_123 : f32 to vector<2x32xf32>
    %142 = arith.addf %141, %140 : vector<2x32xf32>
    %143 = arith.divf %141, %142 : vector<2x32xf32>
    %144 = vector.extract_strided_slice %131 {offsets = [0, 64], sizes = [2, 32], strides = [1, 1]} : vector<2x128xf32> to vector<2x32xf32>
    %145 = math.tanh %144 : vector<2x32xf32>
    %146 = vector.extract_strided_slice %131 {offsets = [0, 96], sizes = [2, 32], strides = [1, 1]} : vector<2x128xf32> to vector<2x32xf32>
    %147 = arith.negf %146 : vector<2x32xf32>
    %148 = math.exp %147 : vector<2x32xf32>
    %cst_124 = arith.constant 1.000000e+00 : f32
    %149 = vector.broadcast %cst_124 : f32 to vector<2x32xf32>
    %150 = arith.addf %149, %148 : vector<2x32xf32>
    %151 = arith.divf %149, %150 : vector<2x32xf32>
    %c0_125 = arith.constant 0 : index
    %c0_126 = arith.constant 0 : index
    %152 = vector.load %arg14[%c0_125, %c0_126] : memref<2x32xf32, #tpu.memory_space<vmem>>, vector<2x32xf32>
    %153 = arith.mulf %143, %152 : vector<2x32xf32>
    %154 = arith.mulf %137, %145 : vector<2x32xf32>
    %155 = arith.addf %153, %154 : vector<2x32xf32>
    %156 = math.tanh %155 : vector<2x32xf32>
    %157 = arith.mulf %151, %156 : vector<2x32xf32>
    %c0_127 = arith.constant 0 : index
    %c0_128 = arith.constant 0 : index
    %158 = vector.load %arg14[%c0_127, %c0_128] : memref<2x32xf32, #tpu.memory_space<vmem>>, vector<2x32xf32>
    tpu.vector_store %arg14[%c0_127, %c0_128], %155 {strides = array<i32>} : memref<2x32xf32, #tpu.memory_space<vmem>>, vector<2x32xf32>,
    %c0_129 = arith.constant 0 : index
    %c0_130 = arith.constant 0 : index
    %159 = vector.load %arg13[%c0_129, %c0_130] : memref<2x32xf32, #tpu.memory_space<vmem>>, vector<2x32xf32>
    tpu.vector_store %arg13[%c0_129, %c0_130], %157 {strides = array<i32>} : memref<2x32xf32, #tpu.memory_space<vmem>>, vector<2x32xf32>,
    %c2_131 = arith.constant 2 : index
    %c0_132 = arith.constant 0 : index
    %160 = vector.load %arg12[%c2_131, %c0_132] : memref<16x32xf32, #tpu.memory_space<vmem>>, vector<2x32xf32>
    tpu.vector_store %arg12[%c2_131, %c0_132], %157 {strides = array<i32>} : memref<16x32xf32, #tpu.memory_space<vmem>>, vector<2x32xf32>,
    %c4_133 = arith.constant 4 : index
    %c0_134 = arith.constant 0 : index
    %161 = vector.load %arg11[%c4_133, %c0_134] : memref<16x128xf32, #tpu.memory_space<vmem>>, vector<2x128xf32>
    %c0_135 = arith.constant 0 : index
    %c0_136 = arith.constant 0 : index
    %162 = vector.load %arg13[%c0_135, %c0_136] : memref<2x32xf32, #tpu.memory_space<vmem>>, vector<2x32xf32>
    %c0_137 = arith.constant 0 : index
    %c0_138 = arith.constant 0 : index
    %163 = vector.load %arg4[%c0_137, %c0_138] : memref<32x128xf32, #tpu.memory_space<vmem>>, vector<32x128xf32>
    %cst_139 = arith.constant dense<0.000000e+00> : vector<2x128xf32>
    %164 = tpu.matmul %162, %163, %cst_139 {dimension_numbers = #tpu.dot_dimension_numbers<[1], [0], [0], [1], [0, 0, 1, 1], [], []>, precision = #tpu.contract_precision<fp32>} : vector<2x32xf32>, vector<32x128xf32>, vector<2x128xf32> -> vector<2x128xf32>
    %165 = arith.addf %161, %164 : vector<2x128xf32>
    %166 = vector.extract_strided_slice %165 {offsets = [0, 0], sizes = [2, 32], strides = [1, 1]} : vector<2x128xf32> to vector<2x32xf32>
    %167 = arith.negf %166 : vector<2x32xf32>
    %168 = math.exp %167 : vector<2x32xf32>
    %cst_140 = arith.constant 1.000000e+00 : f32
    %169 = vector.broadcast %cst_140 : f32 to vector<2x32xf32>
    %170 = arith.addf %169, %168 : vector<2x32xf32>
    %171 = arith.divf %169, %170 : vector<2x32xf32>
    %172 = vector.extract_strided_slice %165 {offsets = [0, 32], sizes = [2, 32], strides = [1, 1]} : vector<2x128xf32> to vector<2x32xf32>
    %173 = arith.negf %172 : vector<2x32xf32>
    %174 = math.exp %173 : vector<2x32xf32>
    %cst_141 = arith.constant 1.000000e+00 : f32
    %175 = vector.broadcast %cst_141 : f32 to vector<2x32xf32>
    %176 = arith.addf %175, %174 : vector<2x32xf32>
    %177 = arith.divf %175, %176 : vector<2x32xf32>
    %178 = vector.extract_strided_slice %165 {offsets = [0, 64], sizes = [2, 32], strides = [1, 1]} : vector<2x128xf32> to vector<2x32xf32>
    %179 = math.tanh %178 : vector<2x32xf32>
    %180 = vector.extract_strided_slice %165 {offsets = [0, 96], sizes = [2, 32], strides = [1, 1]} : vector<2x128xf32> to vector<2x32xf32>
    %181 = arith.negf %180 : vector<2x32xf32>
    %182 = math.exp %181 : vector<2x32xf32>
    %cst_142 = arith.constant 1.000000e+00 : f32
    %183 = vector.broadcast %cst_142 : f32 to vector<2x32xf32>
    %184 = arith.addf %183, %182 : vector<2x32xf32>
    %185 = arith.divf %183, %184 : vector<2x32xf32>
    %c0_143 = arith.constant 0 : index
    %c0_144 = arith.constant 0 : index
    %186 = vector.load %arg14[%c0_143, %c0_144] : memref<2x32xf32, #tpu.memory_space<vmem>>, vector<2x32xf32>
    %187 = arith.mulf %177, %186 : vector<2x32xf32>
    %188 = arith.mulf %171, %179 : vector<2x32xf32>
    %189 = arith.addf %187, %188 : vector<2x32xf32>
    %190 = math.tanh %189 : vector<2x32xf32>
    %191 = arith.mulf %185, %190 : vector<2x32xf32>
    %c0_145 = arith.constant 0 : index
    %c0_146 = arith.constant 0 : index
    %192 = vector.load %arg14[%c0_145, %c0_146] : memref<2x32xf32, #tpu.memory_space<vmem>>, vector<2x32xf32>
    tpu.vector_store %arg14[%c0_145, %c0_146], %189 {strides = array<i32>} : memref<2x32xf32, #tpu.memory_space<vmem>>, vector<2x32xf32>,
    %c0_147 = arith.constant 0 : index
    %c0_148 = arith.constant 0 : index
    %193 = vector.load %arg13[%c0_147, %c0_148] : memref<2x32xf32, #tpu.memory_space<vmem>>, vector<2x32xf32>
    tpu.vector_store %arg13[%c0_147, %c0_148], %191 {strides = array<i32>} : memref<2x32xf32, #tpu.memory_space<vmem>>, vector<2x32xf32>,
    %c4_149 = arith.constant 4 : index
    %c0_150 = arith.constant 0 : index
    %194 = vector.load %arg12[%c4_149, %c0_150] : memref<16x32xf32, #tpu.memory_space<vmem>>, vector<2x32xf32>
    tpu.vector_store %arg12[%c4_149, %c0_150], %191 {strides = array<i32>} : memref<16x32xf32, #tpu.memory_space<vmem>>, vector<2x32xf32>,
    %c6_151 = arith.constant 6 : index
    %c0_152 = arith.constant 0 : index
    %195 = vector.load %arg11[%c6_151, %c0_152] : memref<16x128xf32, #tpu.memory_space<vmem>>, vector<2x128xf32>
    %c0_153 = arith.constant 0 : index
    %c0_154 = arith.constant 0 : index
    %196 = vector.load %arg13[%c0_153, %c0_154] : memref<2x32xf32, #tpu.memory_space<vmem>>, vector<2x32xf32>
    %c0_155 = arith.constant 0 : index
    %c0_156 = arith.constant 0 : index
    %197 = vector.load %arg4[%c0_155, %c0_156] : memref<32x128xf32, #tpu.memory_space<vmem>>, vector<32x128xf32>
    %cst_157 = arith.constant dense<0.000000e+00> : vector<2x128xf32>
    %198 = tpu.matmul %196, %197, %cst_157 {dimension_numbers = #tpu.dot_dimension_numbers<[1], [0], [0], [1], [0, 0, 1, 1], [], []>, precision = #tpu.contract_precision<fp32>} : vector<2x32xf32>, vector<32x128xf32>, vector<2x128xf32> -> vector<2x128xf32>
    %199 = arith.addf %195, %198 : vector<2x128xf32>
    %200 = vector.extract_strided_slice %199 {offsets = [0, 0], sizes = [2, 32], strides = [1, 1]} : vector<2x128xf32> to vector<2x32xf32>
    %201 = arith.negf %200 : vector<2x32xf32>
    %202 = math.exp %201 : vector<2x32xf32>
    %cst_158 = arith.constant 1.000000e+00 : f32
    %203 = vector.broadcast %cst_158 : f32 to vector<2x32xf32>
    %204 = arith.addf %203, %202 : vector<2x32xf32>
    %205 = arith.divf %203, %204 : vector<2x32xf32>
    %206 = vector.extract_strided_slice %199 {offsets = [0, 32], sizes = [2, 32], strides = [1, 1]} : vector<2x128xf32> to vector<2x32xf32>
    %207 = arith.negf %206 : vector<2x32xf32>
    %208 = math.exp %207 : vector<2x32xf32>
    %cst_159 = arith.constant 1.000000e+00 : f32
    %209 = vector.broadcast %cst_159 : f32 to vector<2x32xf32>
    %210 = arith.addf %209, %208 : vector<2x32xf32>
    %211 = arith.divf %209, %210 : vector<2x32xf32>
    %212 = vector.extract_strided_slice %199 {offsets = [0, 64], sizes = [2, 32], strides = [1, 1]} : vector<2x128xf32> to vector<2x32xf32>
    %213 = math.tanh %212 : vector<2x32xf32>
    %214 = vector.extract_strided_slice %199 {offsets = [0, 96], sizes = [2, 32], strides = [1, 1]} : vector<2x128xf32> to vector<2x32xf32>
    %215 = arith.negf %214 : vector<2x32xf32>
    %216 = math.exp %215 : vector<2x32xf32>
    %cst_160 = arith.constant 1.000000e+00 : f32
    %217 = vector.broadcast %cst_160 : f32 to vector<2x32xf32>
    %218 = arith.addf %217, %216 : vector<2x32xf32>
    %219 = arith.divf %217, %218 : vector<2x32xf32>
    %c0_161 = arith.constant 0 : index
    %c0_162 = arith.constant 0 : index
    %220 = vector.load %arg14[%c0_161, %c0_162] : memref<2x32xf32, #tpu.memory_space<vmem>>, vector<2x32xf32>
    %221 = arith.mulf %211, %220 : vector<2x32xf32>
    %222 = arith.mulf %205, %213 : vector<2x32xf32>
    %223 = arith.addf %221, %222 : vector<2x32xf32>
    %224 = math.tanh %223 : vector<2x32xf32>
    %225 = arith.mulf %219, %224 : vector<2x32xf32>
    %c0_163 = arith.constant 0 : index
    %c0_164 = arith.constant 0 : index
    %226 = vector.load %arg14[%c0_163, %c0_164] : memref<2x32xf32, #tpu.memory_space<vmem>>, vector<2x32xf32>
    tpu.vector_store %arg14[%c0_163, %c0_164], %223 {strides = array<i32>} : memref<2x32xf32, #tpu.memory_space<vmem>>, vector<2x32xf32>,
    %c0_165 = arith.constant 0 : index
    %c0_166 = arith.constant 0 : index
    %227 = vector.load %arg13[%c0_165, %c0_166] : memref<2x32xf32, #tpu.memory_space<vmem>>, vector<2x32xf32>
    tpu.vector_store %arg13[%c0_165, %c0_166], %225 {strides = array<i32>} : memref<2x32xf32, #tpu.memory_space<vmem>>, vector<2x32xf32>,
    %c6_167 = arith.constant 6 : index
    %c0_168 = arith.constant 0 : index
    %228 = vector.load %arg12[%c6_167, %c0_168] : memref<16x32xf32, #tpu.memory_space<vmem>>, vector<2x32xf32>
    tpu.vector_store %arg12[%c6_167, %c0_168], %225 {strides = array<i32>} : memref<16x32xf32, #tpu.memory_space<vmem>>, vector<2x32xf32>,
    %c8_169 = arith.constant 8 : index
    %c0_170 = arith.constant 0 : index
    %229 = vector.load %arg11[%c8_169, %c0_170] : memref<16x128xf32, #tpu.memory_space<vmem>>, vector<2x128xf32>
    %c0_171 = arith.constant 0 : index
    %c0_172 = arith.constant 0 : index
    %230 = vector.load %arg13[%c0_171, %c0_172] : memref<2x32xf32, #tpu.memory_space<vmem>>, vector<2x32xf32>
    %c0_173 = arith.constant 0 : index
    %c0_174 = arith.constant 0 : index
    %231 = vector.load %arg4[%c0_173, %c0_174] : memref<32x128xf32, #tpu.memory_space<vmem>>, vector<32x128xf32>
    %cst_175 = arith.constant dense<0.000000e+00> : vector<2x128xf32>
    %232 = tpu.matmul %230, %231, %cst_175 {dimension_numbers = #tpu.dot_dimension_numbers<[1], [0], [0], [1], [0, 0, 1, 1], [], []>, precision = #tpu.contract_precision<fp32>} : vector<2x32xf32>, vector<32x128xf32>, vector<2x128xf32> -> vector<2x128xf32>
    %233 = arith.addf %229, %232 : vector<2x128xf32>
    %234 = vector.extract_strided_slice %233 {offsets = [0, 0], sizes = [2, 32], strides = [1, 1]} : vector<2x128xf32> to vector<2x32xf32>
    %235 = arith.negf %234 : vector<2x32xf32>
    %236 = math.exp %235 : vector<2x32xf32>
    %cst_176 = arith.constant 1.000000e+00 : f32
    %237 = vector.broadcast %cst_176 : f32 to vector<2x32xf32>
    %238 = arith.addf %237, %236 : vector<2x32xf32>
    %239 = arith.divf %237, %238 : vector<2x32xf32>
    %240 = vector.extract_strided_slice %233 {offsets = [0, 32], sizes = [2, 32], strides = [1, 1]} : vector<2x128xf32> to vector<2x32xf32>
    %241 = arith.negf %240 : vector<2x32xf32>
    %242 = math.exp %241 : vector<2x32xf32>
    %cst_177 = arith.constant 1.000000e+00 : f32
    %243 = vector.broadcast %cst_177 : f32 to vector<2x32xf32>
    %244 = arith.addf %243, %242 : vector<2x32xf32>
    %245 = arith.divf %243, %244 : vector<2x32xf32>
    %246 = vector.extract_strided_slice %233 {offsets = [0, 64], sizes = [2, 32], strides = [1, 1]} : vector<2x128xf32> to vector<2x32xf32>
    %247 = math.tanh %246 : vector<2x32xf32>
    %248 = vector.extract_strided_slice %233 {offsets = [0, 96], sizes = [2, 32], strides = [1, 1]} : vector<2x128xf32> to vector<2x32xf32>
    %249 = arith.negf %248 : vector<2x32xf32>
    %250 = math.exp %249 : vector<2x32xf32>
    %cst_178 = arith.constant 1.000000e+00 : f32
    %251 = vector.broadcast %cst_178 : f32 to vector<2x32xf32>
    %252 = arith.addf %251, %250 : vector<2x32xf32>
    %253 = arith.divf %251, %252 : vector<2x32xf32>
    %c0_179 = arith.constant 0 : index
    %c0_180 = arith.constant 0 : index
    %254 = vector.load %arg14[%c0_179, %c0_180] : memref<2x32xf32, #tpu.memory_space<vmem>>, vector<2x32xf32>
    %255 = arith.mulf %245, %254 : vector<2x32xf32>
    %256 = arith.mulf %239, %247 : vector<2x32xf32>
    %257 = arith.addf %255, %256 : vector<2x32xf32>
    %258 = math.tanh %257 : vector<2x32xf32>
    %259 = arith.mulf %253, %258 : vector<2x32xf32>
    %c0_181 = arith.constant 0 : index
    %c0_182 = arith.constant 0 : index
    %260 = vector.load %arg14[%c0_181, %c0_182] : memref<2x32xf32, #tpu.memory_space<vmem>>, vector<2x32xf32>
    tpu.vector_store %arg14[%c0_181, %c0_182], %257 {strides = array<i32>} : memref<2x32xf32, #tpu.memory_space<vmem>>, vector<2x32xf32>,
    %c0_183 = arith.constant 0 : index
    %c0_184 = arith.constant 0 : index
    %261 = vector.load %arg13[%c0_183, %c0_184] : memref<2x32xf32, #tpu.memory_space<vmem>>, vector<2x32xf32>
    tpu.vector_store %arg13[%c0_183, %c0_184], %259 {strides = array<i32>} : memref<2x32xf32, #tpu.memory_space<vmem>>, vector<2x32xf32>,
    %c8_185 = arith.constant 8 : index
    %c0_186 = arith.constant 0 : index
    %262 = vector.load %arg12[%c8_185, %c0_186] : memref<16x32xf32, #tpu.memory_space<vmem>>, vector<2x32xf32>
    tpu.vector_store %arg12[%c8_185, %c0_186], %259 {strides = array<i32>} : memref<16x32xf32, #tpu.memory_space<vmem>>, vector<2x32xf32>,
    %c10_187 = arith.constant 10 : index
    %c0_188 = arith.constant 0 : index
    %263 = vector.load %arg11[%c10_187, %c0_188] : memref<16x128xf32, #tpu.memory_space<vmem>>, vector<2x128xf32>
    %c0_189 = arith.constant 0 : index
    %c0_190 = arith.constant 0 : index
    %264 = vector.load %arg13[%c0_189, %c0_190] : memref<2x32xf32, #tpu.memory_space<vmem>>, vector<2x32xf32>
    %c0_191 = arith.constant 0 : index
    %c0_192 = arith.constant 0 : index
    %265 = vector.load %arg4[%c0_191, %c0_192] : memref<32x128xf32, #tpu.memory_space<vmem>>, vector<32x128xf32>
    %cst_193 = arith.constant dense<0.000000e+00> : vector<2x128xf32>
    %266 = tpu.matmul %264, %265, %cst_193 {dimension_numbers = #tpu.dot_dimension_numbers<[1], [0], [0], [1], [0, 0, 1, 1], [], []>, precision = #tpu.contract_precision<fp32>} : vector<2x32xf32>, vector<32x128xf32>, vector<2x128xf32> -> vector<2x128xf32>
    %267 = arith.addf %263, %266 : vector<2x128xf32>
    %268 = vector.extract_strided_slice %267 {offsets = [0, 0], sizes = [2, 32], strides = [1, 1]} : vector<2x128xf32> to vector<2x32xf32>
    %269 = arith.negf %268 : vector<2x32xf32>
    %270 = math.exp %269 : vector<2x32xf32>
    %cst_194 = arith.constant 1.000000e+00 : f32
    %271 = vector.broadcast %cst_194 : f32 to vector<2x32xf32>
    %272 = arith.addf %271, %270 : vector<2x32xf32>
    %273 = arith.divf %271, %272 : vector<2x32xf32>
    %274 = vector.extract_strided_slice %267 {offsets = [0, 32], sizes = [2, 32], strides = [1, 1]} : vector<2x128xf32> to vector<2x32xf32>
    %275 = arith.negf %274 : vector<2x32xf32>
    %276 = math.exp %275 : vector<2x32xf32>
    %cst_195 = arith.constant 1.000000e+00 : f32
    %277 = vector.broadcast %cst_195 : f32 to vector<2x32xf32>
    %278 = arith.addf %277, %276 : vector<2x32xf32>
    %279 = arith.divf %277, %278 : vector<2x32xf32>
    %280 = vector.extract_strided_slice %267 {offsets = [0, 64], sizes = [2, 32], strides = [1, 1]} : vector<2x128xf32> to vector<2x32xf32>
    %281 = math.tanh %280 : vector<2x32xf32>
    %282 = vector.extract_strided_slice %267 {offsets = [0, 96], sizes = [2, 32], strides = [1, 1]} : vector<2x128xf32> to vector<2x32xf32>
    %283 = arith.negf %282 : vector<2x32xf32>
    %284 = math.exp %283 : vector<2x32xf32>
    %cst_196 = arith.constant 1.000000e+00 : f32
    %285 = vector.broadcast %cst_196 : f32 to vector<2x32xf32>
    %286 = arith.addf %285, %284 : vector<2x32xf32>
    %287 = arith.divf %285, %286 : vector<2x32xf32>
    %c0_197 = arith.constant 0 : index
    %c0_198 = arith.constant 0 : index
    %288 = vector.load %arg14[%c0_197, %c0_198] : memref<2x32xf32, #tpu.memory_space<vmem>>, vector<2x32xf32>
    %289 = arith.mulf %279, %288 : vector<2x32xf32>
    %290 = arith.mulf %273, %281 : vector<2x32xf32>
    %291 = arith.addf %289, %290 : vector<2x32xf32>
    %292 = math.tanh %291 : vector<2x32xf32>
    %293 = arith.mulf %287, %292 : vector<2x32xf32>
    %c0_199 = arith.constant 0 : index
    %c0_200 = arith.constant 0 : index
    %294 = vector.load %arg14[%c0_199, %c0_200] : memref<2x32xf32, #tpu.memory_space<vmem>>, vector<2x32xf32>
    tpu.vector_store %arg14[%c0_199, %c0_200], %291 {strides = array<i32>} : memref<2x32xf32, #tpu.memory_space<vmem>>, vector<2x32xf32>,
    %c0_201 = arith.constant 0 : index
    %c0_202 = arith.constant 0 : index
    %295 = vector.load %arg13[%c0_201, %c0_202] : memref<2x32xf32, #tpu.memory_space<vmem>>, vector<2x32xf32>
    tpu.vector_store %arg13[%c0_201, %c0_202], %293 {strides = array<i32>} : memref<2x32xf32, #tpu.memory_space<vmem>>, vector<2x32xf32>,
    %c10_203 = arith.constant 10 : index
    %c0_204 = arith.constant 0 : index
    %296 = vector.load %arg12[%c10_203, %c0_204] : memref<16x32xf32, #tpu.memory_space<vmem>>, vector<2x32xf32>
    tpu.vector_store %arg12[%c10_203, %c0_204], %293 {strides = array<i32>} : memref<16x32xf32, #tpu.memory_space<vmem>>, vector<2x32xf32>,
    %c12_205 = arith.constant 12 : index
    %c0_206 = arith.constant 0 : index
    %297 = vector.load %arg11[%c12_205, %c0_206] : memref<16x128xf32, #tpu.memory_space<vmem>>, vector<2x128xf32>
    %c0_207 = arith.constant 0 : index
    %c0_208 = arith.constant 0 : index
    %298 = vector.load %arg13[%c0_207, %c0_208] : memref<2x32xf32, #tpu.memory_space<vmem>>, vector<2x32xf32>
    %c0_209 = arith.constant 0 : index
    %c0_210 = arith.constant 0 : index
    %299 = vector.load %arg4[%c0_209, %c0_210] : memref<32x128xf32, #tpu.memory_space<vmem>>, vector<32x128xf32>
    %cst_211 = arith.constant dense<0.000000e+00> : vector<2x128xf32>
    %300 = tpu.matmul %298, %299, %cst_211 {dimension_numbers = #tpu.dot_dimension_numbers<[1], [0], [0], [1], [0, 0, 1, 1], [], []>, precision = #tpu.contract_precision<fp32>} : vector<2x32xf32>, vector<32x128xf32>, vector<2x128xf32> -> vector<2x128xf32>
    %301 = arith.addf %297, %300 : vector<2x128xf32>
    %302 = vector.extract_strided_slice %301 {offsets = [0, 0], sizes = [2, 32], strides = [1, 1]} : vector<2x128xf32> to vector<2x32xf32>
    %303 = arith.negf %302 : vector<2x32xf32>
    %304 = math.exp %303 : vector<2x32xf32>
    %cst_212 = arith.constant 1.000000e+00 : f32
    %305 = vector.broadcast %cst_212 : f32 to vector<2x32xf32>
    %306 = arith.addf %305, %304 : vector<2x32xf32>
    %307 = arith.divf %305, %306 : vector<2x32xf32>
    %308 = vector.extract_strided_slice %301 {offsets = [0, 32], sizes = [2, 32], strides = [1, 1]} : vector<2x128xf32> to vector<2x32xf32>
    %309 = arith.negf %308 : vector<2x32xf32>
    %310 = math.exp %309 : vector<2x32xf32>
    %cst_213 = arith.constant 1.000000e+00 : f32
    %311 = vector.broadcast %cst_213 : f32 to vector<2x32xf32>
    %312 = arith.addf %311, %310 : vector<2x32xf32>
    %313 = arith.divf %311, %312 : vector<2x32xf32>
    %314 = vector.extract_strided_slice %301 {offsets = [0, 64], sizes = [2, 32], strides = [1, 1]} : vector<2x128xf32> to vector<2x32xf32>
    %315 = math.tanh %314 : vector<2x32xf32>
    %316 = vector.extract_strided_slice %301 {offsets = [0, 96], sizes = [2, 32], strides = [1, 1]} : vector<2x128xf32> to vector<2x32xf32>
    %317 = arith.negf %316 : vector<2x32xf32>
    %318 = math.exp %317 : vector<2x32xf32>
    %cst_214 = arith.constant 1.000000e+00 : f32
    %319 = vector.broadcast %cst_214 : f32 to vector<2x32xf32>
    %320 = arith.addf %319, %318 : vector<2x32xf32>
    %321 = arith.divf %319, %320 : vector<2x32xf32>
    %c0_215 = arith.constant 0 : index
    %c0_216 = arith.constant 0 : index
    %322 = vector.load %arg14[%c0_215, %c0_216] : memref<2x32xf32, #tpu.memory_space<vmem>>, vector<2x32xf32>
    %323 = arith.mulf %313, %322 : vector<2x32xf32>
    %324 = arith.mulf %307, %315 : vector<2x32xf32>
    %325 = arith.addf %323, %324 : vector<2x32xf32>
    %326 = math.tanh %325 : vector<2x32xf32>
    %327 = arith.mulf %321, %326 : vector<2x32xf32>
    %c0_217 = arith.constant 0 : index
    %c0_218 = arith.constant 0 : index
    %328 = vector.load %arg14[%c0_217, %c0_218] : memref<2x32xf32, #tpu.memory_space<vmem>>, vector<2x32xf32>
    tpu.vector_store %arg14[%c0_217, %c0_218], %325 {strides = array<i32>} : memref<2x32xf32, #tpu.memory_space<vmem>>, vector<2x32xf32>,
    %c0_219 = arith.constant 0 : index
    %c0_220 = arith.constant 0 : index
    %329 = vector.load %arg13[%c0_219, %c0_220] : memref<2x32xf32, #tpu.memory_space<vmem>>, vector<2x32xf32>
    tpu.vector_store %arg13[%c0_219, %c0_220], %327 {strides = array<i32>} : memref<2x32xf32, #tpu.memory_space<vmem>>, vector<2x32xf32>,
    %c12_221 = arith.constant 12 : index
    %c0_222 = arith.constant 0 : index
    %330 = vector.load %arg12[%c12_221, %c0_222] : memref<16x32xf32, #tpu.memory_space<vmem>>, vector<2x32xf32>
    tpu.vector_store %arg12[%c12_221, %c0_222], %327 {strides = array<i32>} : memref<16x32xf32, #tpu.memory_space<vmem>>, vector<2x32xf32>,
    %c14_223 = arith.constant 14 : index
    %c0_224 = arith.constant 0 : index
    %331 = vector.load %arg11[%c14_223, %c0_224] : memref<16x128xf32, #tpu.memory_space<vmem>>, vector<2x128xf32>
    %c0_225 = arith.constant 0 : index
    %c0_226 = arith.constant 0 : index
    %332 = vector.load %arg13[%c0_225, %c0_226] : memref<2x32xf32, #tpu.memory_space<vmem>>, vector<2x32xf32>
    %c0_227 = arith.constant 0 : index
    %c0_228 = arith.constant 0 : index
    %333 = vector.load %arg4[%c0_227, %c0_228] : memref<32x128xf32, #tpu.memory_space<vmem>>, vector<32x128xf32>
    %cst_229 = arith.constant dense<0.000000e+00> : vector<2x128xf32>
    %334 = tpu.matmul %332, %333, %cst_229 {dimension_numbers = #tpu.dot_dimension_numbers<[1], [0], [0], [1], [0, 0, 1, 1], [], []>, precision = #tpu.contract_precision<fp32>} : vector<2x32xf32>, vector<32x128xf32>, vector<2x128xf32> -> vector<2x128xf32>
    %335 = arith.addf %331, %334 : vector<2x128xf32>
    %336 = vector.extract_strided_slice %335 {offsets = [0, 0], sizes = [2, 32], strides = [1, 1]} : vector<2x128xf32> to vector<2x32xf32>
    %337 = arith.negf %336 : vector<2x32xf32>
    %338 = math.exp %337 : vector<2x32xf32>
    %cst_230 = arith.constant 1.000000e+00 : f32
    %339 = vector.broadcast %cst_230 : f32 to vector<2x32xf32>
    %340 = arith.addf %339, %338 : vector<2x32xf32>
    %341 = arith.divf %339, %340 : vector<2x32xf32>
    %342 = vector.extract_strided_slice %335 {offsets = [0, 32], sizes = [2, 32], strides = [1, 1]} : vector<2x128xf32> to vector<2x32xf32>
    %343 = arith.negf %342 : vector<2x32xf32>
    %344 = math.exp %343 : vector<2x32xf32>
    %cst_231 = arith.constant 1.000000e+00 : f32
    %345 = vector.broadcast %cst_231 : f32 to vector<2x32xf32>
    %346 = arith.addf %345, %344 : vector<2x32xf32>
    %347 = arith.divf %345, %346 : vector<2x32xf32>
    %348 = vector.extract_strided_slice %335 {offsets = [0, 64], sizes = [2, 32], strides = [1, 1]} : vector<2x128xf32> to vector<2x32xf32>
    %349 = math.tanh %348 : vector<2x32xf32>
    %350 = vector.extract_strided_slice %335 {offsets = [0, 96], sizes = [2, 32], strides = [1, 1]} : vector<2x128xf32> to vector<2x32xf32>
    %351 = arith.negf %350 : vector<2x32xf32>
    %352 = math.exp %351 : vector<2x32xf32>
    %cst_232 = arith.constant 1.000000e+00 : f32
    %353 = vector.broadcast %cst_232 : f32 to vector<2x32xf32>
    %354 = arith.addf %353, %352 : vector<2x32xf32>
    %355 = arith.divf %353, %354 : vector<2x32xf32>
    %c0_233 = arith.constant 0 : index
    %c0_234 = arith.constant 0 : index
    %356 = vector.load %arg14[%c0_233, %c0_234] : memref<2x32xf32, #tpu.memory_space<vmem>>, vector<2x32xf32>
    %357 = arith.mulf %347, %356 : vector<2x32xf32>
    %358 = arith.mulf %341, %349 : vector<2x32xf32>
    %359 = arith.addf %357, %358 : vector<2x32xf32>
    %360 = math.tanh %359 : vector<2x32xf32>
    %361 = arith.mulf %355, %360 : vector<2x32xf32>
    %c0_235 = arith.constant 0 : index
    %c0_236 = arith.constant 0 : index
    %362 = vector.load %arg14[%c0_235, %c0_236] : memref<2x32xf32, #tpu.memory_space<vmem>>, vector<2x32xf32>
    tpu.vector_store %arg14[%c0_235, %c0_236], %359 {strides = array<i32>} : memref<2x32xf32, #tpu.memory_space<vmem>>, vector<2x32xf32>,
    %c0_237 = arith.constant 0 : index
    %c0_238 = arith.constant 0 : index
    %363 = vector.load %arg13[%c0_237, %c0_238] : memref<2x32xf32, #tpu.memory_space<vmem>>, vector<2x32xf32>
    tpu.vector_store %arg13[%c0_237, %c0_238], %361 {strides = array<i32>} : memref<2x32xf32, #tpu.memory_space<vmem>>, vector<2x32xf32>,
    %c14_239 = arith.constant 14 : index
    %c0_240 = arith.constant 0 : index
    %364 = vector.load %arg12[%c14_239, %c0_240] : memref<16x32xf32, #tpu.memory_space<vmem>>, vector<2x32xf32>
    tpu.vector_store %arg12[%c14_239, %c0_240], %361 {strides = array<i32>} : memref<16x32xf32, #tpu.memory_space<vmem>>, vector<2x32xf32>,
    %c0_241 = arith.constant 0 : index
    %c0_242 = arith.constant 0 : index
    %365 = vector.load %arg12[%c0_241, %c0_242] : memref<16x32xf32, #tpu.memory_space<vmem>>, vector<16x32xf32>
    %c0_243 = arith.constant 0 : index
    %c0_244 = arith.constant 0 : index
    %366 = vector.load %arg6[%c0_243, %c0_244] : memref<32x128xf32, #tpu.memory_space<vmem>>, vector<32x128xf32>
    %cst_245 = arith.constant dense<0.000000e+00> : vector<16x128xf32>
    %367 = tpu.matmul %365, %366, %cst_245 {dimension_numbers = #tpu.dot_dimension_numbers<[1], [0], [0], [1], [0, 0, 1, 1], [], []>, precision = #tpu.contract_precision<fp32>} : vector<16x32xf32>, vector<32x128xf32>, vector<16x128xf32> -> vector<16x128xf32>
    %c0_246 = arith.constant 0 : index
    %c0_247 = arith.constant 0 : index
    %368 = vector.load %arg8[%c0_246, %c0_247] : memref<1x128xf32, #tpu.memory_space<vmem>>, vector<1x128xf32>
    %369 = vector.broadcast %368 : vector<1x128xf32> to vector<16x128xf32>
    %370 = arith.addf %367, %369 : vector<16x128xf32>
    %c0_248 = arith.constant 0 : index
    %c0_249 = arith.constant 0 : index
    %371 = vector.load %arg11[%c0_248, %c0_249] : memref<16x128xf32, #tpu.memory_space<vmem>>, vector<16x128xf32>
    tpu.vector_store %arg11[%c0_248, %c0_249], %370 {strides = array<i32>} : memref<16x128xf32, #tpu.memory_space<vmem>>, vector<16x128xf32>,
    %cst_250 = arith.constant 0.000000e+00 : f32
    %372 = vector.broadcast %cst_250 : f32 to vector<2x32xf32>
    %c0_251 = arith.constant 0 : index
    %c0_252 = arith.constant 0 : index
    %373 = vector.load %arg13[%c0_251, %c0_252] : memref<2x32xf32, #tpu.memory_space<vmem>>, vector<2x32xf32>
    tpu.vector_store %arg13[%c0_251, %c0_252], %372 {strides = array<i32>} : memref<2x32xf32, #tpu.memory_space<vmem>>, vector<2x32xf32>,
    %cst_253 = arith.constant 0.000000e+00 : f32
    %374 = vector.broadcast %cst_253 : f32 to vector<2x32xf32>
    %c0_254 = arith.constant 0 : index
    %c0_255 = arith.constant 0 : index
    %375 = vector.load %arg14[%c0_254, %c0_255] : memref<2x32xf32, #tpu.memory_space<vmem>>, vector<2x32xf32>
    tpu.vector_store %arg14[%c0_254, %c0_255], %374 {strides = array<i32>} : memref<2x32xf32, #tpu.memory_space<vmem>>, vector<2x32xf32>,
    %c0_256 = arith.constant 0 : index
    %c0_257 = arith.constant 0 : index
    %376 = vector.load %arg11[%c0_256, %c0_257] : memref<16x128xf32, #tpu.memory_space<vmem>>, vector<2x128xf32>
    %c0_258 = arith.constant 0 : index
    %c0_259 = arith.constant 0 : index
    %377 = vector.load %arg13[%c0_258, %c0_259] : memref<2x32xf32, #tpu.memory_space<vmem>>, vector<2x32xf32>
    %c0_260 = arith.constant 0 : index
    %c0_261 = arith.constant 0 : index
    %378 = vector.load %arg7[%c0_260, %c0_261] : memref<32x128xf32, #tpu.memory_space<vmem>>, vector<32x128xf32>
    %cst_262 = arith.constant dense<0.000000e+00> : vector<2x128xf32>
    %379 = tpu.matmul %377, %378, %cst_262 {dimension_numbers = #tpu.dot_dimension_numbers<[1], [0], [0], [1], [0, 0, 1, 1], [], []>, precision = #tpu.contract_precision<fp32>} : vector<2x32xf32>, vector<32x128xf32>, vector<2x128xf32> -> vector<2x128xf32>
    %380 = arith.addf %376, %379 : vector<2x128xf32>
    %381 = vector.extract_strided_slice %380 {offsets = [0, 0], sizes = [2, 32], strides = [1, 1]} : vector<2x128xf32> to vector<2x32xf32>
    %382 = arith.negf %381 : vector<2x32xf32>
    %383 = math.exp %382 : vector<2x32xf32>
    %cst_263 = arith.constant 1.000000e+00 : f32
    %384 = vector.broadcast %cst_263 : f32 to vector<2x32xf32>
    %385 = arith.addf %384, %383 : vector<2x32xf32>
    %386 = arith.divf %384, %385 : vector<2x32xf32>
    %387 = vector.extract_strided_slice %380 {offsets = [0, 32], sizes = [2, 32], strides = [1, 1]} : vector<2x128xf32> to vector<2x32xf32>
    %388 = arith.negf %387 : vector<2x32xf32>
    %389 = math.exp %388 : vector<2x32xf32>
    %cst_264 = arith.constant 1.000000e+00 : f32
    %390 = vector.broadcast %cst_264 : f32 to vector<2x32xf32>
    %391 = arith.addf %390, %389 : vector<2x32xf32>
    %392 = arith.divf %390, %391 : vector<2x32xf32>
    %393 = vector.extract_strided_slice %380 {offsets = [0, 64], sizes = [2, 32], strides = [1, 1]} : vector<2x128xf32> to vector<2x32xf32>
    %394 = math.tanh %393 : vector<2x32xf32>
    %395 = vector.extract_strided_slice %380 {offsets = [0, 96], sizes = [2, 32], strides = [1, 1]} : vector<2x128xf32> to vector<2x32xf32>
    %396 = arith.negf %395 : vector<2x32xf32>
    %397 = math.exp %396 : vector<2x32xf32>
    %cst_265 = arith.constant 1.000000e+00 : f32
    %398 = vector.broadcast %cst_265 : f32 to vector<2x32xf32>
    %399 = arith.addf %398, %397 : vector<2x32xf32>
    %400 = arith.divf %398, %399 : vector<2x32xf32>
    %c0_266 = arith.constant 0 : index
    %c0_267 = arith.constant 0 : index
    %401 = vector.load %arg14[%c0_266, %c0_267] : memref<2x32xf32, #tpu.memory_space<vmem>>, vector<2x32xf32>
    %402 = arith.mulf %392, %401 : vector<2x32xf32>
    %403 = arith.mulf %386, %394 : vector<2x32xf32>
    %404 = arith.addf %402, %403 : vector<2x32xf32>
    %405 = math.tanh %404 : vector<2x32xf32>
    %406 = arith.mulf %400, %405 : vector<2x32xf32>
    %c0_268 = arith.constant 0 : index
    %c0_269 = arith.constant 0 : index
    %407 = vector.load %arg14[%c0_268, %c0_269] : memref<2x32xf32, #tpu.memory_space<vmem>>, vector<2x32xf32>
    tpu.vector_store %arg14[%c0_268, %c0_269], %404 {strides = array<i32>} : memref<2x32xf32, #tpu.memory_space<vmem>>, vector<2x32xf32>,
    %c0_270 = arith.constant 0 : index
    %c0_271 = arith.constant 0 : index
    %408 = vector.load %arg13[%c0_270, %c0_271] : memref<2x32xf32, #tpu.memory_space<vmem>>, vector<2x32xf32>
    tpu.vector_store %arg13[%c0_270, %c0_271], %406 {strides = array<i32>} : memref<2x32xf32, #tpu.memory_space<vmem>>, vector<2x32xf32>,
    %c0_272 = arith.constant 0 : index
    %409 = memref.load %arg1[%c0_272] : memref<2xi32, #tpu.memory_space<smem>>
    %c1_i32 = arith.constant 1 : i32
    %410 = arith.cmpi eq, %409, %c1_i32 : i32
    %411 = arith.extui %410 : i1 to i32
    %c0_i32 = arith.constant 0 : i32
    %412 = arith.cmpi ne, %411, %c0_i32 : i32
    scf.if %412 {
      %704 = vector.extract_strided_slice %406 {offsets = [0, 0], sizes = [1, 32], strides = [1, 1]} : vector<2x32xf32> to vector<1x32xf32>
      %c0_423 = arith.constant 0 : index
      %c0_424 = arith.constant 0 : index
      %705 = vector.load %arg9[%c0_423, %c0_424] : memref<2x32xf32, #tpu.memory_space<vmem>>, vector<1x32xf32>
      tpu.vector_store %arg9[%c0_423, %c0_424], %704 {strides = array<i32>} : memref<2x32xf32, #tpu.memory_space<vmem>>, vector<1x32xf32>,
    } else {
    }
    %c1_273 = arith.constant 1 : index
    %413 = memref.load %arg1[%c1_273] : memref<2xi32, #tpu.memory_space<smem>>
    %c1_i32_274 = arith.constant 1 : i32
    %414 = arith.cmpi eq, %413, %c1_i32_274 : i32
    %415 = arith.extui %414 : i1 to i32
    %c0_i32_275 = arith.constant 0 : i32
    %416 = arith.cmpi ne, %415, %c0_i32_275 : i32
    scf.if %416 {
      %704 = vector.extract_strided_slice %406 {offsets = [1, 0], sizes = [1, 32], strides = [1, 1]} : vector<2x32xf32> to vector<1x32xf32>
      %c1_423 = arith.constant 1 : index
      %c0_424 = arith.constant 0 : index
      %705 = vector.load %arg9[%c1_423, %c0_424] : memref<2x32xf32, #tpu.memory_space<vmem>>, vector<1x32xf32>
      tpu.vector_store %arg9[%c1_423, %c0_424], %704 {strides = array<i32>} : memref<2x32xf32, #tpu.memory_space<vmem>>, vector<1x32xf32>,
    } else {
    }
    %c2_276 = arith.constant 2 : index
    %c0_277 = arith.constant 0 : index
    %417 = vector.load %arg11[%c2_276, %c0_277] : memref<16x128xf32, #tpu.memory_space<vmem>>, vector<2x128xf32>
    %c0_278 = arith.constant 0 : index
    %c0_279 = arith.constant 0 : index
    %418 = vector.load %arg13[%c0_278, %c0_279] : memref<2x32xf32, #tpu.memory_space<vmem>>, vector<2x32xf32>
    %c0_280 = arith.constant 0 : index
    %c0_281 = arith.constant 0 : index
    %419 = vector.load %arg7[%c0_280, %c0_281] : memref<32x128xf32, #tpu.memory_space<vmem>>, vector<32x128xf32>
    %cst_282 = arith.constant dense<0.000000e+00> : vector<2x128xf32>
    %420 = tpu.matmul %418, %419, %cst_282 {dimension_numbers = #tpu.dot_dimension_numbers<[1], [0], [0], [1], [0, 0, 1, 1], [], []>, precision = #tpu.contract_precision<fp32>} : vector<2x32xf32>, vector<32x128xf32>, vector<2x128xf32> -> vector<2x128xf32>
    %421 = arith.addf %417, %420 : vector<2x128xf32>
    %422 = vector.extract_strided_slice %421 {offsets = [0, 0], sizes = [2, 32], strides = [1, 1]} : vector<2x128xf32> to vector<2x32xf32>
    %423 = arith.negf %422 : vector<2x32xf32>
    %424 = math.exp %423 : vector<2x32xf32>
    %cst_283 = arith.constant 1.000000e+00 : f32
    %425 = vector.broadcast %cst_283 : f32 to vector<2x32xf32>
    %426 = arith.addf %425, %424 : vector<2x32xf32>
    %427 = arith.divf %425, %426 : vector<2x32xf32>
    %428 = vector.extract_strided_slice %421 {offsets = [0, 32], sizes = [2, 32], strides = [1, 1]} : vector<2x128xf32> to vector<2x32xf32>
    %429 = arith.negf %428 : vector<2x32xf32>
    %430 = math.exp %429 : vector<2x32xf32>
    %cst_284 = arith.constant 1.000000e+00 : f32
    %431 = vector.broadcast %cst_284 : f32 to vector<2x32xf32>
    %432 = arith.addf %431, %430 : vector<2x32xf32>
    %433 = arith.divf %431, %432 : vector<2x32xf32>
    %434 = vector.extract_strided_slice %421 {offsets = [0, 64], sizes = [2, 32], strides = [1, 1]} : vector<2x128xf32> to vector<2x32xf32>
    %435 = math.tanh %434 : vector<2x32xf32>
    %436 = vector.extract_strided_slice %421 {offsets = [0, 96], sizes = [2, 32], strides = [1, 1]} : vector<2x128xf32> to vector<2x32xf32>
    %437 = arith.negf %436 : vector<2x32xf32>
    %438 = math.exp %437 : vector<2x32xf32>
    %cst_285 = arith.constant 1.000000e+00 : f32
    %439 = vector.broadcast %cst_285 : f32 to vector<2x32xf32>
    %440 = arith.addf %439, %438 : vector<2x32xf32>
    %441 = arith.divf %439, %440 : vector<2x32xf32>
    %c0_286 = arith.constant 0 : index
    %c0_287 = arith.constant 0 : index
    %442 = vector.load %arg14[%c0_286, %c0_287] : memref<2x32xf32, #tpu.memory_space<vmem>>, vector<2x32xf32>
    %443 = arith.mulf %433, %442 : vector<2x32xf32>
    %444 = arith.mulf %427, %435 : vector<2x32xf32>
    %445 = arith.addf %443, %444 : vector<2x32xf32>
    %446 = math.tanh %445 : vector<2x32xf32>
    %447 = arith.mulf %441, %446 : vector<2x32xf32>
    %c0_288 = arith.constant 0 : index
    %c0_289 = arith.constant 0 : index
    %448 = vector.load %arg14[%c0_288, %c0_289] : memref<2x32xf32, #tpu.memory_space<vmem>>, vector<2x32xf32>
    tpu.vector_store %arg14[%c0_288, %c0_289], %445 {strides = array<i32>} : memref<2x32xf32, #tpu.memory_space<vmem>>, vector<2x32xf32>,
    %c0_290 = arith.constant 0 : index
    %c0_291 = arith.constant 0 : index
    %449 = vector.load %arg13[%c0_290, %c0_291] : memref<2x32xf32, #tpu.memory_space<vmem>>, vector<2x32xf32>
    tpu.vector_store %arg13[%c0_290, %c0_291], %447 {strides = array<i32>} : memref<2x32xf32, #tpu.memory_space<vmem>>, vector<2x32xf32>,
    %c0_292 = arith.constant 0 : index
    %450 = memref.load %arg1[%c0_292] : memref<2xi32, #tpu.memory_space<smem>>
    %c2_i32 = arith.constant 2 : i32
    %451 = arith.cmpi eq, %450, %c2_i32 : i32
    %452 = arith.extui %451 : i1 to i32
    %c0_i32_293 = arith.constant 0 : i32
    %453 = arith.cmpi ne, %452, %c0_i32_293 : i32
    scf.if %453 {
      %704 = vector.extract_strided_slice %447 {offsets = [0, 0], sizes = [1, 32], strides = [1, 1]} : vector<2x32xf32> to vector<1x32xf32>
      %c0_423 = arith.constant 0 : index
      %c0_424 = arith.constant 0 : index
      %705 = vector.load %arg9[%c0_423, %c0_424] : memref<2x32xf32, #tpu.memory_space<vmem>>, vector<1x32xf32>
      tpu.vector_store %arg9[%c0_423, %c0_424], %704 {strides = array<i32>} : memref<2x32xf32, #tpu.memory_space<vmem>>, vector<1x32xf32>,
    } else {
    }
    %c1_294 = arith.constant 1 : index
    %454 = memref.load %arg1[%c1_294] : memref<2xi32, #tpu.memory_space<smem>>
    %c2_i32_295 = arith.constant 2 : i32
    %455 = arith.cmpi eq, %454, %c2_i32_295 : i32
    %456 = arith.extui %455 : i1 to i32
    %c0_i32_296 = arith.constant 0 : i32
    %457 = arith.cmpi ne, %456, %c0_i32_296 : i32
    scf.if %457 {
      %704 = vector.extract_strided_slice %447 {offsets = [1, 0], sizes = [1, 32], strides = [1, 1]} : vector<2x32xf32> to vector<1x32xf32>
      %c1_423 = arith.constant 1 : index
      %c0_424 = arith.constant 0 : index
      %705 = vector.load %arg9[%c1_423, %c0_424] : memref<2x32xf32, #tpu.memory_space<vmem>>, vector<1x32xf32>
      tpu.vector_store %arg9[%c1_423, %c0_424], %704 {strides = array<i32>} : memref<2x32xf32, #tpu.memory_space<vmem>>, vector<1x32xf32>,
    } else {
    }
    %c4_297 = arith.constant 4 : index
    %c0_298 = arith.constant 0 : index
    %458 = vector.load %arg11[%c4_297, %c0_298] : memref<16x128xf32, #tpu.memory_space<vmem>>, vector<2x128xf32>
    %c0_299 = arith.constant 0 : index
    %c0_300 = arith.constant 0 : index
    %459 = vector.load %arg13[%c0_299, %c0_300] : memref<2x32xf32, #tpu.memory_space<vmem>>, vector<2x32xf32>
    %c0_301 = arith.constant 0 : index
    %c0_302 = arith.constant 0 : index
    %460 = vector.load %arg7[%c0_301, %c0_302] : memref<32x128xf32, #tpu.memory_space<vmem>>, vector<32x128xf32>
    %cst_303 = arith.constant dense<0.000000e+00> : vector<2x128xf32>
    %461 = tpu.matmul %459, %460, %cst_303 {dimension_numbers = #tpu.dot_dimension_numbers<[1], [0], [0], [1], [0, 0, 1, 1], [], []>, precision = #tpu.contract_precision<fp32>} : vector<2x32xf32>, vector<32x128xf32>, vector<2x128xf32> -> vector<2x128xf32>
    %462 = arith.addf %458, %461 : vector<2x128xf32>
    %463 = vector.extract_strided_slice %462 {offsets = [0, 0], sizes = [2, 32], strides = [1, 1]} : vector<2x128xf32> to vector<2x32xf32>
    %464 = arith.negf %463 : vector<2x32xf32>
    %465 = math.exp %464 : vector<2x32xf32>
    %cst_304 = arith.constant 1.000000e+00 : f32
    %466 = vector.broadcast %cst_304 : f32 to vector<2x32xf32>
    %467 = arith.addf %466, %465 : vector<2x32xf32>
    %468 = arith.divf %466, %467 : vector<2x32xf32>
    %469 = vector.extract_strided_slice %462 {offsets = [0, 32], sizes = [2, 32], strides = [1, 1]} : vector<2x128xf32> to vector<2x32xf32>
    %470 = arith.negf %469 : vector<2x32xf32>
    %471 = math.exp %470 : vector<2x32xf32>
    %cst_305 = arith.constant 1.000000e+00 : f32
    %472 = vector.broadcast %cst_305 : f32 to vector<2x32xf32>
    %473 = arith.addf %472, %471 : vector<2x32xf32>
    %474 = arith.divf %472, %473 : vector<2x32xf32>
    %475 = vector.extract_strided_slice %462 {offsets = [0, 64], sizes = [2, 32], strides = [1, 1]} : vector<2x128xf32> to vector<2x32xf32>
    %476 = math.tanh %475 : vector<2x32xf32>
    %477 = vector.extract_strided_slice %462 {offsets = [0, 96], sizes = [2, 32], strides = [1, 1]} : vector<2x128xf32> to vector<2x32xf32>
    %478 = arith.negf %477 : vector<2x32xf32>
    %479 = math.exp %478 : vector<2x32xf32>
    %cst_306 = arith.constant 1.000000e+00 : f32
    %480 = vector.broadcast %cst_306 : f32 to vector<2x32xf32>
    %481 = arith.addf %480, %479 : vector<2x32xf32>
    %482 = arith.divf %480, %481 : vector<2x32xf32>
    %c0_307 = arith.constant 0 : index
    %c0_308 = arith.constant 0 : index
    %483 = vector.load %arg14[%c0_307, %c0_308] : memref<2x32xf32, #tpu.memory_space<vmem>>, vector<2x32xf32>
    %484 = arith.mulf %474, %483 : vector<2x32xf32>
    %485 = arith.mulf %468, %476 : vector<2x32xf32>
    %486 = arith.addf %484, %485 : vector<2x32xf32>
    %487 = math.tanh %486 : vector<2x32xf32>
    %488 = arith.mulf %482, %487 : vector<2x32xf32>
    %c0_309 = arith.constant 0 : index
    %c0_310 = arith.constant 0 : index
    %489 = vector.load %arg14[%c0_309, %c0_310] : memref<2x32xf32, #tpu.memory_space<vmem>>, vector<2x32xf32>
    tpu.vector_store %arg14[%c0_309, %c0_310], %486 {strides = array<i32>} : memref<2x32xf32, #tpu.memory_space<vmem>>, vector<2x32xf32>,
    %c0_311 = arith.constant 0 : index
    %c0_312 = arith.constant 0 : index
    %490 = vector.load %arg13[%c0_311, %c0_312] : memref<2x32xf32, #tpu.memory_space<vmem>>, vector<2x32xf32>
    tpu.vector_store %arg13[%c0_311, %c0_312], %488 {strides = array<i32>} : memref<2x32xf32, #tpu.memory_space<vmem>>, vector<2x32xf32>,
    %c0_313 = arith.constant 0 : index
    %491 = memref.load %arg1[%c0_313] : memref<2xi32, #tpu.memory_space<smem>>
    %c3_i32 = arith.constant 3 : i32
    %492 = arith.cmpi eq, %491, %c3_i32 : i32
    %493 = arith.extui %492 : i1 to i32
    %c0_i32_314 = arith.constant 0 : i32
    %494 = arith.cmpi ne, %493, %c0_i32_314 : i32
    scf.if %494 {
      %704 = vector.extract_strided_slice %488 {offsets = [0, 0], sizes = [1, 32], strides = [1, 1]} : vector<2x32xf32> to vector<1x32xf32>
      %c0_423 = arith.constant 0 : index
      %c0_424 = arith.constant 0 : index
      %705 = vector.load %arg9[%c0_423, %c0_424] : memref<2x32xf32, #tpu.memory_space<vmem>>, vector<1x32xf32>
      tpu.vector_store %arg9[%c0_423, %c0_424], %704 {strides = array<i32>} : memref<2x32xf32, #tpu.memory_space<vmem>>, vector<1x32xf32>,
    } else {
    }
    %c1_315 = arith.constant 1 : index
    %495 = memref.load %arg1[%c1_315] : memref<2xi32, #tpu.memory_space<smem>>
    %c3_i32_316 = arith.constant 3 : i32
    %496 = arith.cmpi eq, %495, %c3_i32_316 : i32
    %497 = arith.extui %496 : i1 to i32
    %c0_i32_317 = arith.constant 0 : i32
    %498 = arith.cmpi ne, %497, %c0_i32_317 : i32
    scf.if %498 {
      %704 = vector.extract_strided_slice %488 {offsets = [1, 0], sizes = [1, 32], strides = [1, 1]} : vector<2x32xf32> to vector<1x32xf32>
      %c1_423 = arith.constant 1 : index
      %c0_424 = arith.constant 0 : index
      %705 = vector.load %arg9[%c1_423, %c0_424] : memref<2x32xf32, #tpu.memory_space<vmem>>, vector<1x32xf32>
      tpu.vector_store %arg9[%c1_423, %c0_424], %704 {strides = array<i32>} : memref<2x32xf32, #tpu.memory_space<vmem>>, vector<1x32xf32>,
    } else {
    }
    %c6_318 = arith.constant 6 : index
    %c0_319 = arith.constant 0 : index
    %499 = vector.load %arg11[%c6_318, %c0_319] : memref<16x128xf32, #tpu.memory_space<vmem>>, vector<2x128xf32>
    %c0_320 = arith.constant 0 : index
    %c0_321 = arith.constant 0 : index
    %500 = vector.load %arg13[%c0_320, %c0_321] : memref<2x32xf32, #tpu.memory_space<vmem>>, vector<2x32xf32>
    %c0_322 = arith.constant 0 : index
    %c0_323 = arith.constant 0 : index
    %501 = vector.load %arg7[%c0_322, %c0_323] : memref<32x128xf32, #tpu.memory_space<vmem>>, vector<32x128xf32>
    %cst_324 = arith.constant dense<0.000000e+00> : vector<2x128xf32>
    %502 = tpu.matmul %500, %501, %cst_324 {dimension_numbers = #tpu.dot_dimension_numbers<[1], [0], [0], [1], [0, 0, 1, 1], [], []>, precision = #tpu.contract_precision<fp32>} : vector<2x32xf32>, vector<32x128xf32>, vector<2x128xf32> -> vector<2x128xf32>
    %503 = arith.addf %499, %502 : vector<2x128xf32>
    %504 = vector.extract_strided_slice %503 {offsets = [0, 0], sizes = [2, 32], strides = [1, 1]} : vector<2x128xf32> to vector<2x32xf32>
    %505 = arith.negf %504 : vector<2x32xf32>
    %506 = math.exp %505 : vector<2x32xf32>
    %cst_325 = arith.constant 1.000000e+00 : f32
    %507 = vector.broadcast %cst_325 : f32 to vector<2x32xf32>
    %508 = arith.addf %507, %506 : vector<2x32xf32>
    %509 = arith.divf %507, %508 : vector<2x32xf32>
    %510 = vector.extract_strided_slice %503 {offsets = [0, 32], sizes = [2, 32], strides = [1, 1]} : vector<2x128xf32> to vector<2x32xf32>
    %511 = arith.negf %510 : vector<2x32xf32>
    %512 = math.exp %511 : vector<2x32xf32>
    %cst_326 = arith.constant 1.000000e+00 : f32
    %513 = vector.broadcast %cst_326 : f32 to vector<2x32xf32>
    %514 = arith.addf %513, %512 : vector<2x32xf32>
    %515 = arith.divf %513, %514 : vector<2x32xf32>
    %516 = vector.extract_strided_slice %503 {offsets = [0, 64], sizes = [2, 32], strides = [1, 1]} : vector<2x128xf32> to vector<2x32xf32>
    %517 = math.tanh %516 : vector<2x32xf32>
    %518 = vector.extract_strided_slice %503 {offsets = [0, 96], sizes = [2, 32], strides = [1, 1]} : vector<2x128xf32> to vector<2x32xf32>
    %519 = arith.negf %518 : vector<2x32xf32>
    %520 = math.exp %519 : vector<2x32xf32>
    %cst_327 = arith.constant 1.000000e+00 : f32
    %521 = vector.broadcast %cst_327 : f32 to vector<2x32xf32>
    %522 = arith.addf %521, %520 : vector<2x32xf32>
    %523 = arith.divf %521, %522 : vector<2x32xf32>
    %c0_328 = arith.constant 0 : index
    %c0_329 = arith.constant 0 : index
    %524 = vector.load %arg14[%c0_328, %c0_329] : memref<2x32xf32, #tpu.memory_space<vmem>>, vector<2x32xf32>
    %525 = arith.mulf %515, %524 : vector<2x32xf32>
    %526 = arith.mulf %509, %517 : vector<2x32xf32>
    %527 = arith.addf %525, %526 : vector<2x32xf32>
    %528 = math.tanh %527 : vector<2x32xf32>
    %529 = arith.mulf %523, %528 : vector<2x32xf32>
    %c0_330 = arith.constant 0 : index
    %c0_331 = arith.constant 0 : index
    %530 = vector.load %arg14[%c0_330, %c0_331] : memref<2x32xf32, #tpu.memory_space<vmem>>, vector<2x32xf32>
    tpu.vector_store %arg14[%c0_330, %c0_331], %527 {strides = array<i32>} : memref<2x32xf32, #tpu.memory_space<vmem>>, vector<2x32xf32>,
    %c0_332 = arith.constant 0 : index
    %c0_333 = arith.constant 0 : index
    %531 = vector.load %arg13[%c0_332, %c0_333] : memref<2x32xf32, #tpu.memory_space<vmem>>, vector<2x32xf32>
    tpu.vector_store %arg13[%c0_332, %c0_333], %529 {strides = array<i32>} : memref<2x32xf32, #tpu.memory_space<vmem>>, vector<2x32xf32>,
    %c0_334 = arith.constant 0 : index
    %532 = memref.load %arg1[%c0_334] : memref<2xi32, #tpu.memory_space<smem>>
    %c4_i32 = arith.constant 4 : i32
    %533 = arith.cmpi eq, %532, %c4_i32 : i32
    %534 = arith.extui %533 : i1 to i32
    %c0_i32_335 = arith.constant 0 : i32
    %535 = arith.cmpi ne, %534, %c0_i32_335 : i32
    scf.if %535 {
      %704 = vector.extract_strided_slice %529 {offsets = [0, 0], sizes = [1, 32], strides = [1, 1]} : vector<2x32xf32> to vector<1x32xf32>
      %c0_423 = arith.constant 0 : index
      %c0_424 = arith.constant 0 : index
      %705 = vector.load %arg9[%c0_423, %c0_424] : memref<2x32xf32, #tpu.memory_space<vmem>>, vector<1x32xf32>
      tpu.vector_store %arg9[%c0_423, %c0_424], %704 {strides = array<i32>} : memref<2x32xf32, #tpu.memory_space<vmem>>, vector<1x32xf32>,
    } else {
    }
    %c1_336 = arith.constant 1 : index
    %536 = memref.load %arg1[%c1_336] : memref<2xi32, #tpu.memory_space<smem>>
    %c4_i32_337 = arith.constant 4 : i32
    %537 = arith.cmpi eq, %536, %c4_i32_337 : i32
    %538 = arith.extui %537 : i1 to i32
    %c0_i32_338 = arith.constant 0 : i32
    %539 = arith.cmpi ne, %538, %c0_i32_338 : i32
    scf.if %539 {
      %704 = vector.extract_strided_slice %529 {offsets = [1, 0], sizes = [1, 32], strides = [1, 1]} : vector<2x32xf32> to vector<1x32xf32>
      %c1_423 = arith.constant 1 : index
      %c0_424 = arith.constant 0 : index
      %705 = vector.load %arg9[%c1_423, %c0_424] : memref<2x32xf32, #tpu.memory_space<vmem>>, vector<1x32xf32>
      tpu.vector_store %arg9[%c1_423, %c0_424], %704 {strides = array<i32>} : memref<2x32xf32, #tpu.memory_space<vmem>>, vector<1x32xf32>,
    } else {
    }
    %c8_339 = arith.constant 8 : index
    %c0_340 = arith.constant 0 : index
    %540 = vector.load %arg11[%c8_339, %c0_340] : memref<16x128xf32, #tpu.memory_space<vmem>>, vector<2x128xf32>
    %c0_341 = arith.constant 0 : index
    %c0_342 = arith.constant 0 : index
    %541 = vector.load %arg13[%c0_341, %c0_342] : memref<2x32xf32, #tpu.memory_space<vmem>>, vector<2x32xf32>
    %c0_343 = arith.constant 0 : index
    %c0_344 = arith.constant 0 : index
    %542 = vector.load %arg7[%c0_343, %c0_344] : memref<32x128xf32, #tpu.memory_space<vmem>>, vector<32x128xf32>
    %cst_345 = arith.constant dense<0.000000e+00> : vector<2x128xf32>
    %543 = tpu.matmul %541, %542, %cst_345 {dimension_numbers = #tpu.dot_dimension_numbers<[1], [0], [0], [1], [0, 0, 1, 1], [], []>, precision = #tpu.contract_precision<fp32>} : vector<2x32xf32>, vector<32x128xf32>, vector<2x128xf32> -> vector<2x128xf32>
    %544 = arith.addf %540, %543 : vector<2x128xf32>
    %545 = vector.extract_strided_slice %544 {offsets = [0, 0], sizes = [2, 32], strides = [1, 1]} : vector<2x128xf32> to vector<2x32xf32>
    %546 = arith.negf %545 : vector<2x32xf32>
    %547 = math.exp %546 : vector<2x32xf32>
    %cst_346 = arith.constant 1.000000e+00 : f32
    %548 = vector.broadcast %cst_346 : f32 to vector<2x32xf32>
    %549 = arith.addf %548, %547 : vector<2x32xf32>
    %550 = arith.divf %548, %549 : vector<2x32xf32>
    %551 = vector.extract_strided_slice %544 {offsets = [0, 32], sizes = [2, 32], strides = [1, 1]} : vector<2x128xf32> to vector<2x32xf32>
    %552 = arith.negf %551 : vector<2x32xf32>
    %553 = math.exp %552 : vector<2x32xf32>
    %cst_347 = arith.constant 1.000000e+00 : f32
    %554 = vector.broadcast %cst_347 : f32 to vector<2x32xf32>
    %555 = arith.addf %554, %553 : vector<2x32xf32>
    %556 = arith.divf %554, %555 : vector<2x32xf32>
    %557 = vector.extract_strided_slice %544 {offsets = [0, 64], sizes = [2, 32], strides = [1, 1]} : vector<2x128xf32> to vector<2x32xf32>
    %558 = math.tanh %557 : vector<2x32xf32>
    %559 = vector.extract_strided_slice %544 {offsets = [0, 96], sizes = [2, 32], strides = [1, 1]} : vector<2x128xf32> to vector<2x32xf32>
    %560 = arith.negf %559 : vector<2x32xf32>
    %561 = math.exp %560 : vector<2x32xf32>
    %cst_348 = arith.constant 1.000000e+00 : f32
    %562 = vector.broadcast %cst_348 : f32 to vector<2x32xf32>
    %563 = arith.addf %562, %561 : vector<2x32xf32>
    %564 = arith.divf %562, %563 : vector<2x32xf32>
    %c0_349 = arith.constant 0 : index
    %c0_350 = arith.constant 0 : index
    %565 = vector.load %arg14[%c0_349, %c0_350] : memref<2x32xf32, #tpu.memory_space<vmem>>, vector<2x32xf32>
    %566 = arith.mulf %556, %565 : vector<2x32xf32>
    %567 = arith.mulf %550, %558 : vector<2x32xf32>
    %568 = arith.addf %566, %567 : vector<2x32xf32>
    %569 = math.tanh %568 : vector<2x32xf32>
    %570 = arith.mulf %564, %569 : vector<2x32xf32>
    %c0_351 = arith.constant 0 : index
    %c0_352 = arith.constant 0 : index
    %571 = vector.load %arg14[%c0_351, %c0_352] : memref<2x32xf32, #tpu.memory_space<vmem>>, vector<2x32xf32>
    tpu.vector_store %arg14[%c0_351, %c0_352], %568 {strides = array<i32>} : memref<2x32xf32, #tpu.memory_space<vmem>>, vector<2x32xf32>,
    %c0_353 = arith.constant 0 : index
    %c0_354 = arith.constant 0 : index
    %572 = vector.load %arg13[%c0_353, %c0_354] : memref<2x32xf32, #tpu.memory_space<vmem>>, vector<2x32xf32>
    tpu.vector_store %arg13[%c0_353, %c0_354], %570 {strides = array<i32>} : memref<2x32xf32, #tpu.memory_space<vmem>>, vector<2x32xf32>,
    %c0_355 = arith.constant 0 : index
    %573 = memref.load %arg1[%c0_355] : memref<2xi32, #tpu.memory_space<smem>>
    %c5_i32 = arith.constant 5 : i32
    %574 = arith.cmpi eq, %573, %c5_i32 : i32
    %575 = arith.extui %574 : i1 to i32
    %c0_i32_356 = arith.constant 0 : i32
    %576 = arith.cmpi ne, %575, %c0_i32_356 : i32
    scf.if %576 {
      %704 = vector.extract_strided_slice %570 {offsets = [0, 0], sizes = [1, 32], strides = [1, 1]} : vector<2x32xf32> to vector<1x32xf32>
      %c0_423 = arith.constant 0 : index
      %c0_424 = arith.constant 0 : index
      %705 = vector.load %arg9[%c0_423, %c0_424] : memref<2x32xf32, #tpu.memory_space<vmem>>, vector<1x32xf32>
      tpu.vector_store %arg9[%c0_423, %c0_424], %704 {strides = array<i32>} : memref<2x32xf32, #tpu.memory_space<vmem>>, vector<1x32xf32>,
    } else {
    }
    %c1_357 = arith.constant 1 : index
    %577 = memref.load %arg1[%c1_357] : memref<2xi32, #tpu.memory_space<smem>>
    %c5_i32_358 = arith.constant 5 : i32
    %578 = arith.cmpi eq, %577, %c5_i32_358 : i32
    %579 = arith.extui %578 : i1 to i32
    %c0_i32_359 = arith.constant 0 : i32
    %580 = arith.cmpi ne, %579, %c0_i32_359 : i32
    scf.if %580 {
      %704 = vector.extract_strided_slice %570 {offsets = [1, 0], sizes = [1, 32], strides = [1, 1]} : vector<2x32xf32> to vector<1x32xf32>
      %c1_423 = arith.constant 1 : index
      %c0_424 = arith.constant 0 : index
      %705 = vector.load %arg9[%c1_423, %c0_424] : memref<2x32xf32, #tpu.memory_space<vmem>>, vector<1x32xf32>
      tpu.vector_store %arg9[%c1_423, %c0_424], %704 {strides = array<i32>} : memref<2x32xf32, #tpu.memory_space<vmem>>, vector<1x32xf32>,
    } else {
    }
    %c10_360 = arith.constant 10 : index
    %c0_361 = arith.constant 0 : index
    %581 = vector.load %arg11[%c10_360, %c0_361] : memref<16x128xf32, #tpu.memory_space<vmem>>, vector<2x128xf32>
    %c0_362 = arith.constant 0 : index
    %c0_363 = arith.constant 0 : index
    %582 = vector.load %arg13[%c0_362, %c0_363] : memref<2x32xf32, #tpu.memory_space<vmem>>, vector<2x32xf32>
    %c0_364 = arith.constant 0 : index
    %c0_365 = arith.constant 0 : index
    %583 = vector.load %arg7[%c0_364, %c0_365] : memref<32x128xf32, #tpu.memory_space<vmem>>, vector<32x128xf32>
    %cst_366 = arith.constant dense<0.000000e+00> : vector<2x128xf32>
    %584 = tpu.matmul %582, %583, %cst_366 {dimension_numbers = #tpu.dot_dimension_numbers<[1], [0], [0], [1], [0, 0, 1, 1], [], []>, precision = #tpu.contract_precision<fp32>} : vector<2x32xf32>, vector<32x128xf32>, vector<2x128xf32> -> vector<2x128xf32>
    %585 = arith.addf %581, %584 : vector<2x128xf32>
    %586 = vector.extract_strided_slice %585 {offsets = [0, 0], sizes = [2, 32], strides = [1, 1]} : vector<2x128xf32> to vector<2x32xf32>
    %587 = arith.negf %586 : vector<2x32xf32>
    %588 = math.exp %587 : vector<2x32xf32>
    %cst_367 = arith.constant 1.000000e+00 : f32
    %589 = vector.broadcast %cst_367 : f32 to vector<2x32xf32>
    %590 = arith.addf %589, %588 : vector<2x32xf32>
    %591 = arith.divf %589, %590 : vector<2x32xf32>
    %592 = vector.extract_strided_slice %585 {offsets = [0, 32], sizes = [2, 32], strides = [1, 1]} : vector<2x128xf32> to vector<2x32xf32>
    %593 = arith.negf %592 : vector<2x32xf32>
    %594 = math.exp %593 : vector<2x32xf32>
    %cst_368 = arith.constant 1.000000e+00 : f32
    %595 = vector.broadcast %cst_368 : f32 to vector<2x32xf32>
    %596 = arith.addf %595, %594 : vector<2x32xf32>
    %597 = arith.divf %595, %596 : vector<2x32xf32>
    %598 = vector.extract_strided_slice %585 {offsets = [0, 64], sizes = [2, 32], strides = [1, 1]} : vector<2x128xf32> to vector<2x32xf32>
    %599 = math.tanh %598 : vector<2x32xf32>
    %600 = vector.extract_strided_slice %585 {offsets = [0, 96], sizes = [2, 32], strides = [1, 1]} : vector<2x128xf32> to vector<2x32xf32>
    %601 = arith.negf %600 : vector<2x32xf32>
    %602 = math.exp %601 : vector<2x32xf32>
    %cst_369 = arith.constant 1.000000e+00 : f32
    %603 = vector.broadcast %cst_369 : f32 to vector<2x32xf32>
    %604 = arith.addf %603, %602 : vector<2x32xf32>
    %605 = arith.divf %603, %604 : vector<2x32xf32>
    %c0_370 = arith.constant 0 : index
    %c0_371 = arith.constant 0 : index
    %606 = vector.load %arg14[%c0_370, %c0_371] : memref<2x32xf32, #tpu.memory_space<vmem>>, vector<2x32xf32>
    %607 = arith.mulf %597, %606 : vector<2x32xf32>
    %608 = arith.mulf %591, %599 : vector<2x32xf32>
    %609 = arith.addf %607, %608 : vector<2x32xf32>
    %610 = math.tanh %609 : vector<2x32xf32>
    %611 = arith.mulf %605, %610 : vector<2x32xf32>
    %c0_372 = arith.constant 0 : index
    %c0_373 = arith.constant 0 : index
    %612 = vector.load %arg14[%c0_372, %c0_373] : memref<2x32xf32, #tpu.memory_space<vmem>>, vector<2x32xf32>
    tpu.vector_store %arg14[%c0_372, %c0_373], %609 {strides = array<i32>} : memref<2x32xf32, #tpu.memory_space<vmem>>, vector<2x32xf32>,
    %c0_374 = arith.constant 0 : index
    %c0_375 = arith.constant 0 : index
    %613 = vector.load %arg13[%c0_374, %c0_375] : memref<2x32xf32, #tpu.memory_space<vmem>>, vector<2x32xf32>
    tpu.vector_store %arg13[%c0_374, %c0_375], %611 {strides = array<i32>} : memref<2x32xf32, #tpu.memory_space<vmem>>, vector<2x32xf32>,
    %c0_376 = arith.constant 0 : index
    %614 = memref.load %arg1[%c0_376] : memref<2xi32, #tpu.memory_space<smem>>
    %c6_i32 = arith.constant 6 : i32
    %615 = arith.cmpi eq, %614, %c6_i32 : i32
    %616 = arith.extui %615 : i1 to i32
    %c0_i32_377 = arith.constant 0 : i32
    %617 = arith.cmpi ne, %616, %c0_i32_377 : i32
    scf.if %617 {
      %704 = vector.extract_strided_slice %611 {offsets = [0, 0], sizes = [1, 32], strides = [1, 1]} : vector<2x32xf32> to vector<1x32xf32>
      %c0_423 = arith.constant 0 : index
      %c0_424 = arith.constant 0 : index
      %705 = vector.load %arg9[%c0_423, %c0_424] : memref<2x32xf32, #tpu.memory_space<vmem>>, vector<1x32xf32>
      tpu.vector_store %arg9[%c0_423, %c0_424], %704 {strides = array<i32>} : memref<2x32xf32, #tpu.memory_space<vmem>>, vector<1x32xf32>,
    } else {
    }
    %c1_378 = arith.constant 1 : index
    %618 = memref.load %arg1[%c1_378] : memref<2xi32, #tpu.memory_space<smem>>
    %c6_i32_379 = arith.constant 6 : i32
    %619 = arith.cmpi eq, %618, %c6_i32_379 : i32
    %620 = arith.extui %619 : i1 to i32
    %c0_i32_380 = arith.constant 0 : i32
    %621 = arith.cmpi ne, %620, %c0_i32_380 : i32
    scf.if %621 {
      %704 = vector.extract_strided_slice %611 {offsets = [1, 0], sizes = [1, 32], strides = [1, 1]} : vector<2x32xf32> to vector<1x32xf32>
      %c1_423 = arith.constant 1 : index
      %c0_424 = arith.constant 0 : index
      %705 = vector.load %arg9[%c1_423, %c0_424] : memref<2x32xf32, #tpu.memory_space<vmem>>, vector<1x32xf32>
      tpu.vector_store %arg9[%c1_423, %c0_424], %704 {strides = array<i32>} : memref<2x32xf32, #tpu.memory_space<vmem>>, vector<1x32xf32>,
    } else {
    }
    %c12_381 = arith.constant 12 : index
    %c0_382 = arith.constant 0 : index
    %622 = vector.load %arg11[%c12_381, %c0_382] : memref<16x128xf32, #tpu.memory_space<vmem>>, vector<2x128xf32>
    %c0_383 = arith.constant 0 : index
    %c0_384 = arith.constant 0 : index
    %623 = vector.load %arg13[%c0_383, %c0_384] : memref<2x32xf32, #tpu.memory_space<vmem>>, vector<2x32xf32>
    %c0_385 = arith.constant 0 : index
    %c0_386 = arith.constant 0 : index
    %624 = vector.load %arg7[%c0_385, %c0_386] : memref<32x128xf32, #tpu.memory_space<vmem>>, vector<32x128xf32>
    %cst_387 = arith.constant dense<0.000000e+00> : vector<2x128xf32>
    %625 = tpu.matmul %623, %624, %cst_387 {dimension_numbers = #tpu.dot_dimension_numbers<[1], [0], [0], [1], [0, 0, 1, 1], [], []>, precision = #tpu.contract_precision<fp32>} : vector<2x32xf32>, vector<32x128xf32>, vector<2x128xf32> -> vector<2x128xf32>
    %626 = arith.addf %622, %625 : vector<2x128xf32>
    %627 = vector.extract_strided_slice %626 {offsets = [0, 0], sizes = [2, 32], strides = [1, 1]} : vector<2x128xf32> to vector<2x32xf32>
    %628 = arith.negf %627 : vector<2x32xf32>
    %629 = math.exp %628 : vector<2x32xf32>
    %cst_388 = arith.constant 1.000000e+00 : f32
    %630 = vector.broadcast %cst_388 : f32 to vector<2x32xf32>
    %631 = arith.addf %630, %629 : vector<2x32xf32>
    %632 = arith.divf %630, %631 : vector<2x32xf32>
    %633 = vector.extract_strided_slice %626 {offsets = [0, 32], sizes = [2, 32], strides = [1, 1]} : vector<2x128xf32> to vector<2x32xf32>
    %634 = arith.negf %633 : vector<2x32xf32>
    %635 = math.exp %634 : vector<2x32xf32>
    %cst_389 = arith.constant 1.000000e+00 : f32
    %636 = vector.broadcast %cst_389 : f32 to vector<2x32xf32>
    %637 = arith.addf %636, %635 : vector<2x32xf32>
    %638 = arith.divf %636, %637 : vector<2x32xf32>
    %639 = vector.extract_strided_slice %626 {offsets = [0, 64], sizes = [2, 32], strides = [1, 1]} : vector<2x128xf32> to vector<2x32xf32>
    %640 = math.tanh %639 : vector<2x32xf32>
    %641 = vector.extract_strided_slice %626 {offsets = [0, 96], sizes = [2, 32], strides = [1, 1]} : vector<2x128xf32> to vector<2x32xf32>
    %642 = arith.negf %641 : vector<2x32xf32>
    %643 = math.exp %642 : vector<2x32xf32>
    %cst_390 = arith.constant 1.000000e+00 : f32
    %644 = vector.broadcast %cst_390 : f32 to vector<2x32xf32>
    %645 = arith.addf %644, %643 : vector<2x32xf32>
    %646 = arith.divf %644, %645 : vector<2x32xf32>
    %c0_391 = arith.constant 0 : index
    %c0_392 = arith.constant 0 : index
    %647 = vector.load %arg14[%c0_391, %c0_392] : memref<2x32xf32, #tpu.memory_space<vmem>>, vector<2x32xf32>
    %648 = arith.mulf %638, %647 : vector<2x32xf32>
    %649 = arith.mulf %632, %640 : vector<2x32xf32>
    %650 = arith.addf %648, %649 : vector<2x32xf32>
    %651 = math.tanh %650 : vector<2x32xf32>
    %652 = arith.mulf %646, %651 : vector<2x32xf32>
    %c0_393 = arith.constant 0 : index
    %c0_394 = arith.constant 0 : index
    %653 = vector.load %arg14[%c0_393, %c0_394] : memref<2x32xf32, #tpu.memory_space<vmem>>, vector<2x32xf32>
    tpu.vector_store %arg14[%c0_393, %c0_394], %650 {strides = array<i32>} : memref<2x32xf32, #tpu.memory_space<vmem>>, vector<2x32xf32>,
    %c0_395 = arith.constant 0 : index
    %c0_396 = arith.constant 0 : index
    %654 = vector.load %arg13[%c0_395, %c0_396] : memref<2x32xf32, #tpu.memory_space<vmem>>, vector<2x32xf32>
    tpu.vector_store %arg13[%c0_395, %c0_396], %652 {strides = array<i32>} : memref<2x32xf32, #tpu.memory_space<vmem>>, vector<2x32xf32>,
    %c0_397 = arith.constant 0 : index
    %655 = memref.load %arg1[%c0_397] : memref<2xi32, #tpu.memory_space<smem>>
    %c7_i32 = arith.constant 7 : i32
    %656 = arith.cmpi eq, %655, %c7_i32 : i32
    %657 = arith.extui %656 : i1 to i32
    %c0_i32_398 = arith.constant 0 : i32
    %658 = arith.cmpi ne, %657, %c0_i32_398 : i32
    scf.if %658 {
      %704 = vector.extract_strided_slice %652 {offsets = [0, 0], sizes = [1, 32], strides = [1, 1]} : vector<2x32xf32> to vector<1x32xf32>
      %c0_423 = arith.constant 0 : index
      %c0_424 = arith.constant 0 : index
      %705 = vector.load %arg9[%c0_423, %c0_424] : memref<2x32xf32, #tpu.memory_space<vmem>>, vector<1x32xf32>
      tpu.vector_store %arg9[%c0_423, %c0_424], %704 {strides = array<i32>} : memref<2x32xf32, #tpu.memory_space<vmem>>, vector<1x32xf32>,
    } else {
    }
    %c1_399 = arith.constant 1 : index
    %659 = memref.load %arg1[%c1_399] : memref<2xi32, #tpu.memory_space<smem>>
    %c7_i32_400 = arith.constant 7 : i32
    %660 = arith.cmpi eq, %659, %c7_i32_400 : i32
    %661 = arith.extui %660 : i1 to i32
    %c0_i32_401 = arith.constant 0 : i32
    %662 = arith.cmpi ne, %661, %c0_i32_401 : i32
    scf.if %662 {
      %704 = vector.extract_strided_slice %652 {offsets = [1, 0], sizes = [1, 32], strides = [1, 1]} : vector<2x32xf32> to vector<1x32xf32>
      %c1_423 = arith.constant 1 : index
      %c0_424 = arith.constant 0 : index
      %705 = vector.load %arg9[%c1_423, %c0_424] : memref<2x32xf32, #tpu.memory_space<vmem>>, vector<1x32xf32>
      tpu.vector_store %arg9[%c1_423, %c0_424], %704 {strides = array<i32>} : memref<2x32xf32, #tpu.memory_space<vmem>>, vector<1x32xf32>,
    } else {
    }
    %c14_402 = arith.constant 14 : index
    %c0_403 = arith.constant 0 : index
    %663 = vector.load %arg11[%c14_402, %c0_403] : memref<16x128xf32, #tpu.memory_space<vmem>>, vector<2x128xf32>
    %c0_404 = arith.constant 0 : index
    %c0_405 = arith.constant 0 : index
    %664 = vector.load %arg13[%c0_404, %c0_405] : memref<2x32xf32, #tpu.memory_space<vmem>>, vector<2x32xf32>
    %c0_406 = arith.constant 0 : index
    %c0_407 = arith.constant 0 : index
    %665 = vector.load %arg7[%c0_406, %c0_407] : memref<32x128xf32, #tpu.memory_space<vmem>>, vector<32x128xf32>
    %cst_408 = arith.constant dense<0.000000e+00> : vector<2x128xf32>
    %666 = tpu.matmul %664, %665, %cst_408 {dimension_numbers = #tpu.dot_dimension_numbers<[1], [0], [0], [1], [0, 0, 1, 1], [], []>, precision = #tpu.contract_precision<fp32>} : vector<2x32xf32>, vector<32x128xf32>, vector<2x128xf32> -> vector<2x128xf32>
    %667 = arith.addf %663, %666 : vector<2x128xf32>
    %668 = vector.extract_strided_slice %667 {offsets = [0, 0], sizes = [2, 32], strides = [1, 1]} : vector<2x128xf32> to vector<2x32xf32>
    %669 = arith.negf %668 : vector<2x32xf32>
    %670 = math.exp %669 : vector<2x32xf32>
    %cst_409 = arith.constant 1.000000e+00 : f32
    %671 = vector.broadcast %cst_409 : f32 to vector<2x32xf32>
    %672 = arith.addf %671, %670 : vector<2x32xf32>
    %673 = arith.divf %671, %672 : vector<2x32xf32>
    %674 = vector.extract_strided_slice %667 {offsets = [0, 32], sizes = [2, 32], strides = [1, 1]} : vector<2x128xf32> to vector<2x32xf32>
    %675 = arith.negf %674 : vector<2x32xf32>
    %676 = math.exp %675 : vector<2x32xf32>
    %cst_410 = arith.constant 1.000000e+00 : f32
    %677 = vector.broadcast %cst_410 : f32 to vector<2x32xf32>
    %678 = arith.addf %677, %676 : vector<2x32xf32>
    %679 = arith.divf %677, %678 : vector<2x32xf32>
    %680 = vector.extract_strided_slice %667 {offsets = [0, 64], sizes = [2, 32], strides = [1, 1]} : vector<2x128xf32> to vector<2x32xf32>
    %681 = math.tanh %680 : vector<2x32xf32>
    %682 = vector.extract_strided_slice %667 {offsets = [0, 96], sizes = [2, 32], strides = [1, 1]} : vector<2x128xf32> to vector<2x32xf32>
    %683 = arith.negf %682 : vector<2x32xf32>
    %684 = math.exp %683 : vector<2x32xf32>
    %cst_411 = arith.constant 1.000000e+00 : f32
    %685 = vector.broadcast %cst_411 : f32 to vector<2x32xf32>
    %686 = arith.addf %685, %684 : vector<2x32xf32>
    %687 = arith.divf %685, %686 : vector<2x32xf32>
    %c0_412 = arith.constant 0 : index
    %c0_413 = arith.constant 0 : index
    %688 = vector.load %arg14[%c0_412, %c0_413] : memref<2x32xf32, #tpu.memory_space<vmem>>, vector<2x32xf32>
    %689 = arith.mulf %679, %688 : vector<2x32xf32>
    %690 = arith.mulf %673, %681 : vector<2x32xf32>
    %691 = arith.addf %689, %690 : vector<2x32xf32>
    %692 = math.tanh %691 : vector<2x32xf32>
    %693 = arith.mulf %687, %692 : vector<2x32xf32>
    %c0_414 = arith.constant 0 : index
    %c0_415 = arith.constant 0 : index
    %694 = vector.load %arg14[%c0_414, %c0_415] : memref<2x32xf32, #tpu.memory_space<vmem>>, vector<2x32xf32>
    tpu.vector_store %arg14[%c0_414, %c0_415], %691 {strides = array<i32>} : memref<2x32xf32, #tpu.memory_space<vmem>>, vector<2x32xf32>,
    %c0_416 = arith.constant 0 : index
    %c0_417 = arith.constant 0 : index
    %695 = vector.load %arg13[%c0_416, %c0_417] : memref<2x32xf32, #tpu.memory_space<vmem>>, vector<2x32xf32>
    tpu.vector_store %arg13[%c0_416, %c0_417], %693 {strides = array<i32>} : memref<2x32xf32, #tpu.memory_space<vmem>>, vector<2x32xf32>,
    %c0_418 = arith.constant 0 : index
    %696 = memref.load %arg1[%c0_418] : memref<2xi32, #tpu.memory_space<smem>>
    %c8_i32 = arith.constant 8 : i32
    %697 = arith.cmpi eq, %696, %c8_i32 : i32
    %698 = arith.extui %697 : i1 to i32
    %c0_i32_419 = arith.constant 0 : i32
    %699 = arith.cmpi ne, %698, %c0_i32_419 : i32
    scf.if %699 {
      %704 = vector.extract_strided_slice %693 {offsets = [0, 0], sizes = [1, 32], strides = [1, 1]} : vector<2x32xf32> to vector<1x32xf32>
      %c0_423 = arith.constant 0 : index
      %c0_424 = arith.constant 0 : index
      %705 = vector.load %arg9[%c0_423, %c0_424] : memref<2x32xf32, #tpu.memory_space<vmem>>, vector<1x32xf32>
      tpu.vector_store %arg9[%c0_423, %c0_424], %704 {strides = array<i32>} : memref<2x32xf32, #tpu.memory_space<vmem>>, vector<1x32xf32>,
    } else {
    }
    %c1_420 = arith.constant 1 : index
    %700 = memref.load %arg1[%c1_420] : memref<2xi32, #tpu.memory_space<smem>>
    %c8_i32_421 = arith.constant 8 : i32
    %701 = arith.cmpi eq, %700, %c8_i32_421 : i32
    %702 = arith.extui %701 : i1 to i32
    %c0_i32_422 = arith.constant 0 : i32
    %703 = arith.cmpi ne, %702, %c0_i32_422 : i32
    scf.if %703 {
      %704 = vector.extract_strided_slice %693 {offsets = [1, 0], sizes = [1, 32], strides = [1, 1]} : vector<2x32xf32> to vector<1x32xf32>
      %c1_423 = arith.constant 1 : index
      %c0_424 = arith.constant 0 : index
      %705 = vector.load %arg9[%c1_423, %c0_424] : memref<2x32xf32, #tpu.memory_space<vmem>>, vector<1x32xf32>
      tpu.vector_store %arg9[%c1_423, %c0_424], %704 {strides = array<i32>} : memref<2x32xf32, #tpu.memory_space<vmem>>, vector<1x32xf32>,
    } else {
    }
    return
  }
}

</mosaic_0001>

<llo_original>
// kernel: tpu_custom_call.1
$region0: #{tpu_custom_call.1}
  #allocation0 [shape = 'u32[]', space=smem, size = 0x4, offset = 0x4, fixed_abs, tag = 'smem constant byte address 0x4 - core index']
  #allocation1 [shape = 'u32[144,128]{1,0:T(1,128)}', space=vmem, size = 0x12000, scoped, tag = 'internal scratch']
  #allocation2 [shape = 'f32[16,32]{1,0:T(8,128)}', space=vmem, size = 0x2000, scoped, tag = 'scratch operand']
  #allocation3 [shape = 'f32[16,128]{1,0:T(8,128)}', space=vmem, size = 0x2000, scoped, tag = 'scratch operand']
  #allocation4 [shape = 'f32[16,32]{1,0:T(8,128)}', space=vmem, size = 0x2000, scoped, tag = 'scratch operand']
  #allocation5 [shape = 'f32[2,32]{1,0:T(2,128)}', space=vmem, size = 0x400, scoped, tag = 'scratch operand']
  #allocation6 [shape = 'f32[2,32]{1,0:T(2,128)}', space=vmem, size = 0x400, scoped, tag = 'scratch operand']
  %s0 = inlined_call_operand.hbm [shape: s32[2,8], index: 0, kind: input, shape index: {}]
  %s1 = inlined_call_operand.vmem [shape: s32[2], index: 1, kind: input, shape index: {}]
  %s2 = inlined_call_operand.hbm [shape: f32[10,1,32], index: 2, kind: input, shape index: {}]
  %s3 = inlined_call_operand.hbm [shape: f32[32,128], index: 3, kind: input, shape index: {}]
  %s4 = inlined_call_operand.hbm [shape: f32[32,128], index: 4, kind: input, shape index: {}]
  %s5 = inlined_call_operand.vmem [shape: f32[1,128], index: 5, kind: input, shape index: {}]
  %s6 = inlined_call_operand.hbm [shape: f32[32,128], index: 6, kind: input, shape index: {}]
  %s7 = inlined_call_operand.hbm [shape: f32[32,128], index: 7, kind: input, shape index: {}]
  %s8 = inlined_call_operand.vmem [shape: f32[1,128], index: 8, kind: input, shape index: {}]
  %s9 = inlined_call_operand.hbm [shape: f32[2,32], index: 9, kind: output, shape index: {}]
  %s10 = sld [smem:[#allocation0]]
  $region138: #{tpu_custom_call.1} parent=0
    _
  %s12 = ssub.s32 1, %s10
  %s13 = scalar_select 0, %s12, %s10
  $region1: #{tpu_custom_call.1} parent=0
    #allocation7 [shape = 'u8[1024]{0}', space=smem, size = 0x400, scoped, tag = 'input window, operand 0, single buffered']
    #allocation8 [shape = 's32[1]{0}', space=sflag, size = 0x4, scoped, tag = 'scoped memory for tpu_custom_call.1']
    #allocation9 [shape = 's32[1]{0}', space=sflag, size = 0x4, scoped, tag = 'scoped memory for tpu_custom_call.1']
    #allocation10 [shape = 's32[1]{0}', space=sflag, size = 0x4, scoped, tag = 'scoped memory for tpu_custom_call.1']
    #allocation11 [shape = 's32[1]{0}', space=sflag, size = 0x4, scoped, tag = 'scoped memory for tpu_custom_call.1']
    #allocation12 [shape = 'u8[512]{0}', space=smem, size = 0x200, scoped, tag = 'input window, operand 1, single buffered']
    #allocation13 [shape = 'u8[5120]{0}', space=vmem, size = 0x1400, scoped, tag = 'input window, operand 2, single buffered']
    #allocation14 [shape = 'u8[16384]{0}', space=vmem, size = 0x4000, scoped, tag = 'input window, operand 3, single buffered']
    #allocation15 [shape = 's32[1]{0}', space=sflag, size = 0x4, scoped, tag = 'scoped memory for tpu_custom_call.1']
    #allocation16 [shape = 'u8[16384]{0}', space=vmem, size = 0x4000, scoped, tag = 'input window, operand 4, single buffered']
    #allocation17 [shape = 'u8[16384]{0}', space=vmem, size = 0x4000, scoped, tag = 'input window, operand 6, single buffered']
    #allocation18 [shape = 's32[1]{0}', space=sflag, size = 0x4, scoped, tag = 'scoped memory for tpu_custom_call.1']
    #allocation19 [shape = 'u8[16384]{0}', space=vmem, size = 0x4000, scoped, tag = 'input window, operand 7, single buffered']
    #allocation20 [shape = 'u8[1024]{0}', space=vmem, size = 0x400, scoped, tag = 'output window, operand 0, single buffered']
    %14 = vsyncpa [#allocation10], 0
    %15 = vsyncpa [#allocation11], 0
    %16 = vsyncpa [#allocation8], 0
    %17 = vsyncpa [#allocation15], 0
    %18 = vsyncpa [#allocation18], 0
    %19 = vsyncpa [#allocation9], 0
    // Predicated region
    $region2: #{tpu_custom_call.1} parent=1 // pred_check
      _
    $region3: #{tpu_custom_call.1} parent=1 // pred_check_branch
      %21 = sbr.rel (0) target = $region5
    $region4: #{tpu_custom_call.1} parent=1 // pred_region
      %s23 = ssub.s32 32, 32
      %24 = vsyncadd [#allocation10], %s23
      %27 = dma.hbm_to_smem %s0, 32, [#allocation7], [#allocation10]
    $region5: #{tpu_custom_call.1} parent=1 // pred_fallthru
      _
    // Predicated region
    $region6: #{tpu_custom_call.1} parent=1 // pred_check
      _
    $region7: #{tpu_custom_call.1} parent=1 // pred_check_branch
      %29 = sbr.rel (0) target = $region9
    $region8: #{tpu_custom_call.1} parent=1 // pred_region
      %s31 = ssub.s32 16, 16
      %32 = vsyncadd [#allocation11], %s31
      %s34 = sshll.u32 %s1, 4
      %s35 = int_to_ptr.vmem [resolvable:$true] %s34
      %37 = dma.vmem_to_smem %s35, 16, [#allocation12], [#allocation11]
    $region9: #{tpu_custom_call.1} parent=1 // pred_fallthru
      _
    // Predicated region
    $region10: #{tpu_custom_call.1} parent=1 // pred_check
      _
    $region11: #{tpu_custom_call.1} parent=1 // pred_check_branch
      %39 = sbr.rel (0) target = $region13
    $region12: #{tpu_custom_call.1} parent=1 // pred_region
      %s41 = ssub.s32 160, 160
      %42 = vsyncadd [#allocation8], %s41
      %s43 = sshll.u32 [#allocation13], 4
      %s44 = int_to_ptr.vmem [resolvable:$true] %s43
      %49 = dma.hbm_to_vmem [thread:$0]  %s2, 160, %s44, [#allocation8], 16, 16, 1
    $region13: #{tpu_custom_call.1} parent=1 // pred_fallthru
      _
    // Predicated region
    $region14: #{tpu_custom_call.1} parent=1 // pred_check
      _
    $region15: #{tpu_custom_call.1} parent=1 // pred_check_branch
      %51 = sbr.rel (0) target = $region17
    $region16: #{tpu_custom_call.1} parent=1 // pred_region
      %s53 = ssub.s32 512, 512
      %54 = vsyncadd [#allocation15], %s53
      %s55 = sshll.u32 [#allocation14], 4
      %s56 = int_to_ptr.vmem [resolvable:$true] %s55
      %61 = dma.hbm_to_vmem [thread:$0]  %s3, 512, %s56, [#allocation15], 128, 128, 8
    $region17: #{tpu_custom_call.1} parent=1 // pred_fallthru
      _
    // Predicated region
    $region18: #{tpu_custom_call.1} parent=1 // pred_check
      _
    $region19: #{tpu_custom_call.1} parent=1 // pred_check_branch
      %63 = sbr.rel (0) target = $region21
    $region20: #{tpu_custom_call.1} parent=1 // pred_region
      %s65 = ssub.s32 512, 512
      %66 = vsyncadd [#allocation15], %s65
      %s67 = sshll.u32 [#allocation16], 4
      %s68 = int_to_ptr.vmem [resolvable:$true] %s67
      %73 = dma.hbm_to_vmem [thread:$0]  %s4, 512, %s68, [#allocation15], 128, 128, 8
    $region21: #{tpu_custom_call.1} parent=1 // pred_fallthru
      _
    // Predicated region
    $region22: #{tpu_custom_call.1} parent=1 // pred_check
      _
    $region23: #{tpu_custom_call.1} parent=1 // pred_check_branch
      %75 = sbr.rel (0) target = $region25
    $region24: #{tpu_custom_call.1} parent=1 // pred_region
      _
    $region25: #{tpu_custom_call.1} parent=1 // pred_fallthru
      _
    // Predicated region
    $region26: #{tpu_custom_call.1} parent=1 // pred_check
      _
    $region27: #{tpu_custom_call.1} parent=1 // pred_check_branch
      %77 = sbr.rel (0) target = $region29
    $region28: #{tpu_custom_call.1} parent=1 // pred_region
      %s79 = ssub.s32 512, 512
      %80 = vsyncadd [#allocation18], %s79
      %s81 = sshll.u32 [#allocation17], 4
      %s82 = int_to_ptr.vmem [resolvable:$true] %s81
      %87 = dma.hbm_to_vmem [thread:$0]  %s6, 512, %s82, [#allocation18], 128, 128, 8
    $region29: #{tpu_custom_call.1} parent=1 // pred_fallthru
      _
    // Predicated region
    $region30: #{tpu_custom_call.1} parent=1 // pred_check
      _
    $region31: #{tpu_custom_call.1} parent=1 // pred_check_branch
      %89 = sbr.rel (0) target = $region33
    $region32: #{tpu_custom_call.1} parent=1 // pred_region
      %s91 = ssub.s32 512, 512
      %92 = vsyncadd [#allocation18], %s91
      %s93 = sshll.u32 [#allocation19], 4
      %s94 = int_to_ptr.vmem [resolvable:$true] %s93
      %99 = dma.hbm_to_vmem [thread:$0]  %s7, 512, %s94, [#allocation18], 128, 128, 8
    $region33: #{tpu_custom_call.1} parent=1 // pred_fallthru
      _
    // Predicated region
    $region34: #{tpu_custom_call.1} parent=1 // pred_check
      _
    $region35: #{tpu_custom_call.1} parent=1 // pred_check_branch
      %101 = sbr.rel (0) target = $region37
    $region36: #{tpu_custom_call.1} parent=1 // pred_region
      _
    $region37: #{tpu_custom_call.1} parent=1 // pred_fallthru
      _
    // Predicated region
    $region38: #{tpu_custom_call.1} parent=1 // pred_check
      _
    $region39: #{tpu_custom_call.1} parent=1 // pred_check_branch
      %103 = sbr.rel (0) target = $region41
    $region40: #{tpu_custom_call.1} parent=1 // pred_region
      %104 = dma.done [#allocation10], 32
    $region41: #{tpu_custom_call.1} parent=1 // pred_fallthru
      _
    // Predicated region
    $region42: #{tpu_custom_call.1} parent=1 // pred_check
      _
    $region43: #{tpu_custom_call.1} parent=1 // pred_check_branch
      %106 = sbr.rel (0) target = $region45
    $region44: #{tpu_custom_call.1} parent=1 // pred_region
      %107 = dma.done [#allocation11], 16
    $region45: #{tpu_custom_call.1} parent=1 // pred_fallthru
      _
    // Predicated region
    $region46: #{tpu_custom_call.1} parent=1 // pred_check
      _
    $region47: #{tpu_custom_call.1} parent=1 // pred_check_branch
      %109 = sbr.rel (0) target = $region49
    $region48: #{tpu_custom_call.1} parent=1 // pred_region
      %110 = dma.done [#allocation8], 160
    $region49: #{tpu_custom_call.1} parent=1 // pred_fallthru
      _
    // Predicated region
    $region50: #{tpu_custom_call.1} parent=1 // pred_check
      _
    $region51: #{tpu_custom_call.1} parent=1 // pred_check_branch
      %112 = sbr.rel (0) target = $region53
    $region52: #{tpu_custom_call.1} parent=1 // pred_region
      %113 = dma.done [#allocation15], 512
    $region53: #{tpu_custom_call.1} parent=1 // pred_fallthru
      _
    // Predicated region
    $region54: #{tpu_custom_call.1} parent=1 // pred_check
      _
    $region55: #{tpu_custom_call.1} parent=1 // pred_check_branch
      %115 = sbr.rel (0) target = $region57
    $region56: #{tpu_custom_call.1} parent=1 // pred_region
      %116 = dma.done [#allocation15], 512
    $region57: #{tpu_custom_call.1} parent=1 // pred_fallthru
      _
    // Predicated region
    $region58: #{tpu_custom_call.1} parent=1 // pred_check
      _
    $region59: #{tpu_custom_call.1} parent=1 // pred_check_branch
      %118 = sbr.rel (0) target = $region61
    $region60: #{tpu_custom_call.1} parent=1 // pred_region
      %119 = dma.done [#allocation18], 512
    $region61: #{tpu_custom_call.1} parent=1 // pred_fallthru
      _
    // Predicated region
    $region62: #{tpu_custom_call.1} parent=1 // pred_check
      _
    $region63: #{tpu_custom_call.1} parent=1 // pred_check_branch
      %121 = sbr.rel (0) target = $region65
    $region64: #{tpu_custom_call.1} parent=1 // pred_region
      %122 = dma.done [#allocation18], 512
    $region65: #{tpu_custom_call.1} parent=1 // pred_fallthru
      _
    %123 = sfence
    %s124 = sld [smem:[#allocation7]]
    %s125 = scalar_lea.vmem [#allocation13], %s124
    %v126 = vld [vmem:[%s125] sm:$0x1]
    %vm127 = vcmask 253952
    %128 = vst.msk [vmem:[#allocation2] sm:$0x1] %vm127, %v126
    %s129 = sld [smem:[#allocation7 + $0x80]]
    %s130 = scalar_lea.vmem [#allocation13], %s129
    %v131 = vld [vmem:[%s130] sm:$0x1]
    %132 = vst.msk [vmem:[#allocation2 + $0x1] sm:$0x1] %vm127, %v131
    %s133 = sld [smem:[#allocation7 + $0x1]]
    %s134 = scalar_lea.vmem [#allocation13], %s133
    %v135 = vld [vmem:[%s134] sm:$0x1]
    %136 = vst.msk [vmem:[#allocation2 + $0x2] sm:$0x1] %vm127, %v135
    %s137 = sld [smem:[#allocation7 + $0x81]]
    %s138 = scalar_lea.vmem [#allocation13], %s137
    %v139 = vld [vmem:[%s138] sm:$0x1]
    %140 = vst.msk [vmem:[#allocation2 + $0x3] sm:$0x1] %vm127, %v139
    %s141 = sld [smem:[#allocation7 + $0x2]]
    %s142 = scalar_lea.vmem [#allocation13], %s141
    %v143 = vld [vmem:[%s142] sm:$0x1]
    %144 = vst.msk [vmem:[#allocation2 + $0x4] sm:$0x1] %vm127, %v143
    %s145 = sld [smem:[#allocation7 + $0x82]]
    %s146 = scalar_lea.vmem [#allocation13], %s145
    %v147 = vld [vmem:[%s146] sm:$0x1]
    %148 = vst.msk [vmem:[#allocation2 + $0x5] sm:$0x1] %vm127, %v147
    %s149 = sld [smem:[#allocation7 + $0x3]]
    %s150 = scalar_lea.vmem [#allocation13], %s149
    %v151 = vld [vmem:[%s150] sm:$0x1]
    %152 = vst.msk [vmem:[#allocation2 + $0x6] sm:$0x1] %vm127, %v151
    %s153 = sld [smem:[#allocation7 + $0x83]]
    %s154 = scalar_lea.vmem [#allocation13], %s153
    %v155 = vld [vmem:[%s154] sm:$0x1]
    %156 = vst.msk [vmem:[#allocation2 + $0x7] sm:$0x1] %vm127, %v155
    %s157 = sld [smem:[#allocation7 + $0x4]]
    %s158 = scalar_lea.vmem [#allocation13], %s157
    %v159 = vld [vmem:[%s158] sm:$0x1]
    %160 = vst.msk [vmem:[#allocation2 + $0x8] sm:$0x1] %vm127, %v159
    %s161 = sld [smem:[#allocation7 + $0x84]]
    %s162 = scalar_lea.vmem [#allocation13], %s161
    %v163 = vld [vmem:[%s162] sm:$0x1]
    %164 = vst.msk [vmem:[#allocation2 + $0x9] sm:$0x1] %vm127, %v163
    %s165 = sld [smem:[#allocation7 + $0x5]]
    %s166 = scalar_lea.vmem [#allocation13], %s165
    %v167 = vld [vmem:[%s166] sm:$0x1]
    %168 = vst.msk [vmem:[#allocation2 + $0xa] sm:$0x1] %vm127, %v167
    %s169 = sld [smem:[#allocation7 + $0x85]]
    %s170 = scalar_lea.vmem [#allocation13], %s169
    %v171 = vld [vmem:[%s170] sm:$0x1]
    %172 = vst.msk [vmem:[#allocation2 + $0xb] sm:$0x1] %vm127, %v171
    %s173 = sld [smem:[#allocation7 + $0x6]]
    %s174 = scalar_lea.vmem [#allocation13], %s173
    %v175 = vld [vmem:[%s174] sm:$0x1]
    %176 = vst.msk [vmem:[#allocation2 + $0xc] sm:$0x1] %vm127, %v175
    %s177 = sld [smem:[#allocation7 + $0x86]]
    %s178 = scalar_lea.vmem [#allocation13], %s177
    %v179 = vld [vmem:[%s178] sm:$0x1]
    %180 = vst.msk [vmem:[#allocation2 + $0xd] sm:$0x1] %vm127, %v179
    %s181 = sld [smem:[#allocation7 + $0x7]]
    %s182 = scalar_lea.vmem [#allocation13], %s181
    %v183 = vld [vmem:[%s182] sm:$0x1]
    %184 = vst.msk [vmem:[#allocation2 + $0xe] sm:$0x1] %vm127, %v183
    %s185 = sld [smem:[#allocation7 + $0x87]]
    %s186 = scalar_lea.vmem [#allocation13], %s185
    %v187 = vld [vmem:[%s186] sm:$0x1]
    %188 = vst.msk [vmem:[#allocation2 + $0xf] sm:$0x1] %vm127, %v187
    %vm189 = vcmask 254976
    %190 = vst.msk [vmem:[#allocation20] sm:$0x3] %vm189, 0.0
    %v191 = vld [vmem:[#allocation2] sm:$0xff]
    %v192 = vld [vmem:[#allocation2 + $0x8] sm:$0xff]
    %v193 = vld [vmem:[#allocation14] sm:$0xff]
    %v194 = vld [vmem:[#allocation14 + $0x8] sm:$0xff]
    %v195 = vld [vmem:[#allocation14 + $0x10] sm:$0xff]
    %v196 = vld [vmem:[#allocation14 + $0x18] sm:$0xff]
    %v197 = vld [vmem:[%s5] sm:$0x1]
    %v199 = vlaneseq
    %v200 = vshrl.u32 %v199, 7
    %v201 = vsub.s32 0, %v200
    %v202 = vrot.slane %v197, %v201
    %vm204 = vcmask 261120
    %v206 = vsel %vm204, %v191, 0
    %v209 = vsel %vm204, %v192, 0
    %211 = vmatprep.subr.mxu0 0.0
    %v212 = vand.u32 %v193, 4294901760
    %213 = vmatpush1.msra.mxu0 %v212
    %214 = vmatprep.subr.mxu0 0.0
    %v215 = vand.u32 %v194, 4294901760
    %216 = vmatpush1.msra.mxu0 %v215
    %217 = vmatprep.subr.mxu0 0.0
    %v218 = vand.u32 %v195, 4294901760
    %219 = vmatpush1.msra.mxu0 %v218
    %220 = vmatprep.subr.mxu0 0.0
    %v221 = vand.u32 %v196, 4294901760
    %222 = vmatpush1.msra.mxu0 %v221
    %223 = vmatprep.subr.mxu0 0.0
    %224 = vmatpush1.msra.mxu0 0.0
    %225 = vmatprep.subr.mxu0 0.0
    %226 = vmatpush1.msra.mxu0 0.0
    %227 = vmatprep.subr.mxu0 0.0
    %228 = vmatpush1.msra.mxu0 0.0
    %229 = vmatprep.subr.mxu0 0.0
    %230 = vmatpush1.msra.mxu0 0.0
    %231 = vmatprep.subr.mxu0 0.0
    %232 = vmatpush1.msra.mxu0 0.0
    %233 = vmatprep.subr.mxu0 0.0
    %234 = vmatpush1.msra.mxu0 0.0
    %235 = vmatprep.subr.mxu0 0.0
    %236 = vmatpush1.msra.mxu0 0.0
    %237 = vmatprep.subr.mxu0 0.0
    %238 = vmatpush1.msra.mxu0 0.0
    %239 = vmatprep.subr.mxu0 0.0
    %240 = vmatpush1.msra.mxu0 0.0
    %241 = vmatprep.subr.mxu0 0.0
    %242 = vmatpush1.msra.mxu0 0.0
    %243 = vmatprep.subr.mxu0 0.0
    %244 = vmatpush1.msra.mxu0 0.0
    %245 = vmatprep.subr.mxu0 0.0
    %246 = vmatpush1.msra.mxu0 0.0
    %247 = vmatprep.subr.mxu0 0.0
    %248 = vmatpush1.msra.mxu0 0.0
    %249 = vmatprep.subr.mxu0 0.0
    %250 = vmatpush1.msra.mxu0 0.0
    %251 = vmatprep.subr.mxu0 0.0
    %252 = vmatpush1.msra.mxu0 0.0
    %253 = vmatprep.subr.mxu0 0.0
    %254 = vmatpush1.msra.mxu0 0.0
    %255 = vmatprep.subr.mxu0 0.0
    %256 = vmatpush1.msra.mxu0 0.0
    %257 = vmatprep.subr.mxu0 0.0
    %258 = vmatpush1.msra.mxu0 0.0
    %259 = vmatprep.subr.mxu0 0.0
    %260 = vmatpush1.msra.mxu0 0.0
    %261 = vmatprep.subr.mxu0 0.0
    %262 = vmatpush1.msra.mxu0 0.0
    %263 = vmatprep.subr.mxu0 0.0
    %264 = vmatpush1.msra.mxu0 0.0
    %265 = vmatprep.subr.mxu0 0.0
    %266 = vmatpush1.msra.mxu0 0.0
    %267 = vmatprep.subr.mxu0 0.0
    %268 = vmatpush1.msra.mxu0 0.0
    %269 = vmatprep.subr.mxu0 0.0
    %270 = vmatpush1.msra.mxu0 0.0
    %271 = vmatprep.subr.mxu0 0.0
    %272 = vmatpush1.msra.mxu0 0.0
    %273 = vmatprep.subr.mxu0 0.0
    %274 = vmatpush1.msra.mxu0 0.0
    %275 = vmatprep.subr.mxu0 0.0
    %276 = vmatpush1.msra.mxu0 0.0
    %277 = vmatprep.subr.mxu0 0.0
    %278 = vmatpush1.msra.mxu0 0.0
    %279 = vmatprep.mubr.f32.mxu0 0.0
    %v280 = vand.u32 %v206, 4294901760
    %v281 = vsub.f32 %v206, %v280
    %v282 = vand.u32 %v281, 4294901760
    %v283 = vsub.f32 %v281, %v282
    %v284 = vand.u32 %v283, 4294901760
    %285 = vmatmul.mubr.f32.gmra.mrb[0].mxu0 %v284
    %v286 = vpop.f32.mrb[0].mxu0
    %v287 = vadd.f32 %v202, %v286
    %v288 = vpop.f32.mrb[0].mxu0
    %289 = vmatprep.mubr.f32.mxu0 0.0
    %v290 = vand.u32 %v209, 4294901760
    %v291 = vsub.f32 %v209, %v290
    %v292 = vand.u32 %v291, 4294901760
    %v293 = vsub.f32 %v291, %v292
    %v294 = vand.u32 %v293, 4294901760
    %295 = vmatmul.mubr.f32.gmra.mrb[0].mxu0 %v294
    %v296 = vpop.f32.mrb[0].mxu0
    %v297 = vadd.f32 %v202, %v296
    %v298 = vpop.f32.mrb[0].mxu0
    %299 = vdwg.mxu0
    %300 = vmatprep.subr.mxu0 0.0
    %v301 = vand.u32 %v193, 4294901760
    %v302 = vsub.f32 %v193, %v301
    %v303 = vand.u32 %v302, 4294901760
    %v304 = vsub.f32 %v302, %v303
    %v305 = vand.u32 %v304, 4294901760
    %306 = vmatpush1.msra.mxu0 %v305
    %307 = vmatprep.subr.mxu0 0.0
    %v308 = vand.u32 %v194, 4294901760
    %v309 = vsub.f32 %v194, %v308
    %v310 = vand.u32 %v309, 4294901760
    %v311 = vsub.f32 %v309, %v310
    %v312 = vand.u32 %v311, 4294901760
    %313 = vmatpush1.msra.mxu0 %v312
    %314 = vmatprep.subr.mxu0 0.0
    %v315 = vand.u32 %v195, 4294901760
    %v316 = vsub.f32 %v195, %v315
    %v317 = vand.u32 %v316, 4294901760
    %v318 = vsub.f32 %v316, %v317
    %v319 = vand.u32 %v318, 4294901760
    %320 = vmatpush1.msra.mxu0 %v319
    %321 = vmatprep.subr.mxu0 0.0
    %v322 = vand.u32 %v196, 4294901760
    %v323 = vsub.f32 %v196, %v322
    %v324 = vand.u32 %v323, 4294901760
    %v325 = vsub.f32 %v323, %v324
    %v326 = vand.u32 %v325, 4294901760
    %327 = vmatpush1.msra.mxu0 %v326
    %328 = vmatprep.subr.mxu0 0.0
    %329 = vmatpush1.msra.mxu0 0.0
    %330 = vmatprep.subr.mxu0 0.0
    %331 = vmatpush1.msra.mxu0 0.0
    %332 = vmatprep.subr.mxu0 0.0
    %333 = vmatpush1.msra.mxu0 0.0
    %334 = vmatprep.subr.mxu0 0.0
    %335 = vmatpush1.msra.mxu0 0.0
    %336 = vmatprep.subr.mxu0 0.0
    %337 = vmatpush1.msra.mxu0 0.0
    %338 = vmatprep.subr.mxu0 0.0
    %339 = vmatpush1.msra.mxu0 0.0
    %340 = vmatprep.subr.mxu0 0.0
    %341 = vmatpush1.msra.mxu0 0.0
    %342 = vmatprep.subr.mxu0 0.0
    %343 = vmatpush1.msra.mxu0 0.0
    %344 = vmatprep.subr.mxu0 0.0
    %345 = vmatpush1.msra.mxu0 0.0
    %346 = vmatprep.subr.mxu0 0.0
    %347 = vmatpush1.msra.mxu0 0.0
    %348 = vmatprep.subr.mxu0 0.0
    %349 = vmatpush1.msra.mxu0 0.0
    %350 = vmatprep.subr.mxu0 0.0
    %351 = vmatpush1.msra.mxu0 0.0
    %352 = vmatprep.subr.mxu0 0.0
    %353 = vmatpush1.msra.mxu0 0.0
    %354 = vmatprep.subr.mxu0 0.0
    %355 = vmatpush1.msra.mxu0 0.0
    %356 = vmatprep.subr.mxu0 0.0
    %357 = vmatpush1.msra.mxu0 0.0
    %358 = vmatprep.subr.mxu0 0.0
    %359 = vmatpush1.msra.mxu0 0.0
    %360 = vmatprep.subr.mxu0 0.0
    %361 = vmatpush1.msra.mxu0 0.0
    %362 = vmatprep.subr.mxu0 0.0
    %363 = vmatpush1.msra.mxu0 0.0
    %364 = vmatprep.subr.mxu0 0.0
    %365 = vmatpush1.msra.mxu0 0.0
    %366 = vmatprep.subr.mxu0 0.0
    %367 = vmatpush1.msra.mxu0 0.0
    %368 = vmatprep.subr.mxu0 0.0
    %369 = vmatpush1.msra.mxu0 0.0
    %370 = vmatprep.subr.mxu0 0.0
    %371 = vmatpush1.msra.mxu0 0.0
    %372 = vmatprep.subr.mxu0 0.0
    %373 = vmatpush1.msra.mxu0 0.0
    %374 = vmatprep.subr.mxu0 0.0
    %375 = vmatpush1.msra.mxu0 0.0
    %376 = vmatprep.subr.mxu0 0.0
    %377 = vmatpush1.msra.mxu0 0.0
    %378 = vmatprep.subr.mxu0 0.0
    %379 = vmatpush1.msra.mxu0 0.0
    %380 = vmatprep.subr.mxu0 0.0
    %381 = vmatpush1.msra.mxu0 0.0
    %382 = vmatprep.subr.mxu0 0.0
    %383 = vmatpush1.msra.mxu0 0.0
    %384 = vmatprep.mubr.f32.mxu0 0.0
    %v385 = vand.u32 %v206, 4294901760
    %386 = vmatmul.mubr.f32.gmra.mrb[0].mxu0 %v385
    %v387 = vpop.f32.mrb[0].mxu0
    %v388 = vadd.f32 %v287, %v387
    %v389 = vpop.f32.mrb[0].mxu0
    %390 = vmatprep.mubr.f32.mxu0 0.0
    %v391 = vand.u32 %v209, 4294901760
    %392 = vmatmul.mubr.f32.gmra.mrb[0].mxu0 %v391
    %v393 = vpop.f32.mrb[0].mxu0
    %v394 = vadd.f32 %v297, %v393
    %v395 = vpop.f32.mrb[0].mxu0
    %396 = vdwg.mxu0
    %397 = vmatprep.subr.mxu0 0.0
    %v398 = vand.u32 %v193, 4294901760
    %v399 = vsub.f32 %v193, %v398
    %400 = vmatpush1.msra.mxu0 %v399
    %401 = vmatprep.subr.mxu0 0.0
    %v402 = vand.u32 %v194, 4294901760
    %v403 = vsub.f32 %v194, %v402
    %404 = vmatpush1.msra.mxu0 %v403
    %405 = vmatprep.subr.mxu0 0.0
    %v406 = vand.u32 %v195, 4294901760
    %v407 = vsub.f32 %v195, %v406
    %408 = vmatpush1.msra.mxu0 %v407
    %409 = vmatprep.subr.mxu0 0.0
    %v410 = vand.u32 %v196, 4294901760
    %v411 = vsub.f32 %v196, %v410
    %412 = vmatpush1.msra.mxu0 %v411
    %413 = vmatprep.subr.mxu0 0.0
    %414 = vmatpush1.msra.mxu0 0.0
    %415 = vmatprep.subr.mxu0 0.0
    %416 = vmatpush1.msra.mxu0 0.0
    %417 = vmatprep.subr.mxu0 0.0
    %418 = vmatpush1.msra.mxu0 0.0
    %419 = vmatprep.subr.mxu0 0.0
    %420 = vmatpush1.msra.mxu0 0.0
    %421 = vmatprep.subr.mxu0 0.0
    %422 = vmatpush1.msra.mxu0 0.0
    %423 = vmatprep.subr.mxu0 0.0
    %424 = vmatpush1.msra.mxu0 0.0
    %425 = vmatprep.subr.mxu0 0.0
    %426 = vmatpush1.msra.mxu0 0.0
    %427 = vmatprep.subr.mxu0 0.0
    %428 = vmatpush1.msra.mxu0 0.0
    %429 = vmatprep.subr.mxu0 0.0
    %430 = vmatpush1.msra.mxu0 0.0
    %431 = vmatprep.subr.mxu0 0.0
    %432 = vmatpush1.msra.mxu0 0.0
    %433 = vmatprep.subr.mxu0 0.0
    %434 = vmatpush1.msra.mxu0 0.0
    %435 = vmatprep.subr.mxu0 0.0
    %436 = vmatpush1.msra.mxu0 0.0
    %437 = vmatprep.subr.mxu0 0.0
    %438 = vmatpush1.msra.mxu0 0.0
    %439 = vmatprep.subr.mxu0 0.0
    %440 = vmatpush1.msra.mxu0 0.0
    %441 = vmatprep.subr.mxu0 0.0
    %442 = vmatpush1.msra.mxu0 0.0
    %443 = vmatprep.subr.mxu0 0.0
    %444 = vmatpush1.msra.mxu0 0.0
    %445 = vmatprep.subr.mxu0 0.0
    %446 = vmatpush1.msra.mxu0 0.0
    %447 = vmatprep.subr.mxu0 0.0
    %448 = vmatpush1.msra.mxu0 0.0
    %449 = vmatprep.subr.mxu0 0.0
    %450 = vmatpush1.msra.mxu0 0.0
    %451 = vmatprep.subr.mxu0 0.0
    %452 = vmatpush1.msra.mxu0 0.0
    %453 = vmatprep.subr.mxu0 0.0
    %454 = vmatpush1.msra.mxu0 0.0
    %455 = vmatprep.subr.mxu0 0.0
    %456 = vmatpush1.msra.mxu0 0.0
    %457 = vmatprep.subr.mxu0 0.0
    %458 = vmatpush1.msra.mxu0 0.0
    %459 = vmatprep.subr.mxu0 0.0
    %460 = vmatpush1.msra.mxu0 0.0
    %461 = vmatprep.subr.mxu0 0.0
    %462 = vmatpush1.msra.mxu0 0.0
    %463 = vmatprep.subr.mxu0 0.0
    %464 = vmatpush1.msra.mxu0 0.0
    %465 = vmatprep.subr.mxu0 0.0
    %466 = vmatpush1.msra.mxu0 0.0
    %467 = vmatprep.subr.mxu0 0.0
    %468 = vmatpush1.msra.mxu0 0.0
    %469 = vmatprep.mubr.f32.mxu0 0.0
    %v470 = vand.u32 %v206, 4294901760
    %v471 = vsub.f32 %v206, %v470
    %472 = vmatmul.mubr.f32.gmra.mrb[0].mxu0 %v471
    %v473 = vpop.f32.mrb[0].mxu0
    %v474 = vadd.f32 %v388, %v473
    %v475 = vpop.f32.mrb[0].mxu0
    %476 = vmatprep.mubr.f32.mxu0 0.0
    %v477 = vand.u32 %v209, 4294901760
    %v478 = vsub.f32 %v209, %v477
    %479 = vmatmul.mubr.f32.gmra.mrb[0].mxu0 %v478
    %v480 = vpop.f32.mrb[0].mxu0
    %v481 = vadd.f32 %v394, %v480
    %v482 = vpop.f32.mrb[0].mxu0
    %483 = vdwg.mxu0
    %484 = vmatprep.subr.mxu0 0.0
    %v485 = vand.u32 %v193, 4294901760
    %486 = vmatpush1.msra.mxu0 %v485
    %487 = vmatprep.subr.mxu0 0.0
    %v488 = vand.u32 %v194, 4294901760
    %489 = vmatpush1.msra.mxu0 %v488
    %490 = vmatprep.subr.mxu0 0.0
    %v491 = vand.u32 %v195, 4294901760
    %492 = vmatpush1.msra.mxu0 %v491
    %493 = vmatprep.subr.mxu0 0.0
    %v494 = vand.u32 %v196, 4294901760
    %495 = vmatpush1.msra.mxu0 %v494
    %496 = vmatprep.subr.mxu0 0.0
    %497 = vmatpush1.msra.mxu0 0.0
    %498 = vmatprep.subr.mxu0 0.0
    %499 = vmatpush1.msra.mxu0 0.0
    %500 = vmatprep.subr.mxu0 0.0
    %501 = vmatpush1.msra.mxu0 0.0
    %502 = vmatprep.subr.mxu0 0.0
    %503 = vmatpush1.msra.mxu0 0.0
    %504 = vmatprep.subr.mxu0 0.0
    %505 = vmatpush1.msra.mxu0 0.0
    %506 = vmatprep.subr.mxu0 0.0
    %507 = vmatpush1.msra.mxu0 0.0
    %508 = vmatprep.subr.mxu0 0.0
    %509 = vmatpush1.msra.mxu0 0.0
    %510 = vmatprep.subr.mxu0 0.0
    %511 = vmatpush1.msra.mxu0 0.0
    %512 = vmatprep.subr.mxu0 0.0
    %513 = vmatpush1.msra.mxu0 0.0
    %514 = vmatprep.subr.mxu0 0.0
    %515 = vmatpush1.msra.mxu0 0.0
    %516 = vmatprep.subr.mxu0 0.0
    %517 = vmatpush1.msra.mxu0 0.0
    %518 = vmatprep.subr.mxu0 0.0
    %519 = vmatpush1.msra.mxu0 0.0
    %520 = vmatprep.subr.mxu0 0.0
    %521 = vmatpush1.msra.mxu0 0.0
    %522 = vmatprep.subr.mxu0 0.0
    %523 = vmatpush1.msra.mxu0 0.0
    %524 = vmatprep.subr.mxu0 0.0
    %525 = vmatpush1.msra.mxu0 0.0
    %526 = vmatprep.subr.mxu0 0.0
    %527 = vmatpush1.msra.mxu0 0.0
    %528 = vmatprep.subr.mxu0 0.0
    %529 = vmatpush1.msra.mxu0 0.0
    %530 = vmatprep.subr.mxu0 0.0
    %531 = vmatpush1.msra.mxu0 0.0
    %532 = vmatprep.subr.mxu0 0.0
    %533 = vmatpush1.msra.mxu0 0.0
    %534 = vmatprep.subr.mxu0 0.0
    %535 = vmatpush1.msra.mxu0 0.0
    %536 = vmatprep.subr.mxu0 0.0
    %537 = vmatpush1.msra.mxu0 0.0
    %538 = vmatprep.subr.mxu0 0.0
    %539 = vmatpush1.msra.mxu0 0.0
    %540 = vmatprep.subr.mxu0 0.0
    %541 = vmatpush1.msra.mxu0 0.0
    %542 = vmatprep.subr.mxu0 0.0
    %543 = vmatpush1.msra.mxu0 0.0
    %544 = vmatprep.subr.mxu0 0.0
    %545 = vmatpush1.msra.mxu0 0.0
    %546 = vmatprep.subr.mxu0 0.0
    %547 = vmatpush1.msra.mxu0 0.0
    %548 = vmatprep.subr.mxu0 0.0
    %549 = vmatpush1.msra.mxu0 0.0
    %550 = vmatprep.subr.mxu0 0.0
    %551 = vmatpush1.msra.mxu0 0.0
    %552 = vmatprep.mubr.f32.mxu0 0.0
    %v553 = vand.u32 %v206, 4294901760
    %v554 = vsub.f32 %v206, %v553
    %v555 = vand.u32 %v554, 4294901760
    %556 = vmatmul.mubr.f32.gmra.mrb[0].mxu0 %v555
    %v557 = vpop.f32.mrb[0].mxu0
    %v558 = vadd.f32 %v474, %v557
    %v559 = vpop.f32.mrb[0].mxu0
    %560 = vmatprep.mubr.f32.mxu0 0.0
    %v561 = vand.u32 %v209, 4294901760
    %v562 = vsub.f32 %v209, %v561
    %v563 = vand.u32 %v562, 4294901760
    %564 = vmatmul.mubr.f32.gmra.mrb[0].mxu0 %v563
    %v565 = vpop.f32.mrb[0].mxu0
    %v566 = vadd.f32 %v481, %v565
    %v567 = vpop.f32.mrb[0].mxu0
    %568 = vdwg.mxu0
    %569 = vmatprep.subr.mxu0 0.0
    %v570 = vand.u32 %v193, 4294901760
    %v571 = vsub.f32 %v193, %v570
    %v572 = vand.u32 %v571, 4294901760
    %573 = vmatpush1.msra.mxu0 %v572
    %574 = vmatprep.subr.mxu0 0.0
    %v575 = vand.u32 %v194, 4294901760
    %v576 = vsub.f32 %v194, %v575
    %v577 = vand.u32 %v576, 4294901760
    %578 = vmatpush1.msra.mxu0 %v577
    %579 = vmatprep.subr.mxu0 0.0
    %v580 = vand.u32 %v195, 4294901760
    %v581 = vsub.f32 %v195, %v580
    %v582 = vand.u32 %v581, 4294901760
    %583 = vmatpush1.msra.mxu0 %v582
    %584 = vmatprep.subr.mxu0 0.0
    %v585 = vand.u32 %v196, 4294901760
    %v586 = vsub.f32 %v196, %v585
    %v587 = vand.u32 %v586, 4294901760
    %588 = vmatpush1.msra.mxu0 %v587
    %589 = vmatprep.subr.mxu0 0.0
    %590 = vmatpush1.msra.mxu0 0.0
    %591 = vmatprep.subr.mxu0 0.0
    %592 = vmatpush1.msra.mxu0 0.0
    %593 = vmatprep.subr.mxu0 0.0
    %594 = vmatpush1.msra.mxu0 0.0
    %595 = vmatprep.subr.mxu0 0.0
    %596 = vmatpush1.msra.mxu0 0.0
    %597 = vmatprep.subr.mxu0 0.0
    %598 = vmatpush1.msra.mxu0 0.0
    %599 = vmatprep.subr.mxu0 0.0
    %600 = vmatpush1.msra.mxu0 0.0
    %601 = vmatprep.subr.mxu0 0.0
    %602 = vmatpush1.msra.mxu0 0.0
    %603 = vmatprep.subr.mxu0 0.0
    %604 = vmatpush1.msra.mxu0 0.0
    %605 = vmatprep.subr.mxu0 0.0
    %606 = vmatpush1.msra.mxu0 0.0
    %607 = vmatprep.subr.mxu0 0.0
    %608 = vmatpush1.msra.mxu0 0.0
    %609 = vmatprep.subr.mxu0 0.0
    %610 = vmatpush1.msra.mxu0 0.0
    %611 = vmatprep.subr.mxu0 0.0
    %612 = vmatpush1.msra.mxu0 0.0
    %613 = vmatprep.subr.mxu0 0.0
    %614 = vmatpush1.msra.mxu0 0.0
    %615 = vmatprep.subr.mxu0 0.0
    %616 = vmatpush1.msra.mxu0 0.0
    %617 = vmatprep.subr.mxu0 0.0
    %618 = vmatpush1.msra.mxu0 0.0
    %619 = vmatprep.subr.mxu0 0.0
    %620 = vmatpush1.msra.mxu0 0.0
    %621 = vmatprep.subr.mxu0 0.0
    %622 = vmatpush1.msra.mxu0 0.0
    %623 = vmatprep.subr.mxu0 0.0
    %624 = vmatpush1.msra.mxu0 0.0
    %625 = vmatprep.subr.mxu0 0.0
    %626 = vmatpush1.msra.mxu0 0.0
    %627 = vmatprep.subr.mxu0 0.0
    %628 = vmatpush1.msra.mxu0 0.0
    %629 = vmatprep.subr.mxu0 0.0
    %630 = vmatpush1.msra.mxu0 0.0
    %631 = vmatprep.subr.mxu0 0.0
    %632 = vmatpush1.msra.mxu0 0.0
    %633 = vmatprep.subr.mxu0 0.0
    %634 = vmatpush1.msra.mxu0 0.0
    %635 = vmatprep.subr.mxu0 0.0
    %636 = vmatpush1.msra.mxu0 0.0
    %637 = vmatprep.subr.mxu0 0.0
    %638 = vmatpush1.msra.mxu0 0.0
    %639 = vmatprep.subr.mxu0 0.0
    %640 = vmatpush1.msra.mxu0 0.0
    %641 = vmatprep.subr.mxu0 0.0
    %642 = vmatpush1.msra.mxu0 0.0
    %643 = vmatprep.subr.mxu0 0.0
    %644 = vmatpush1.msra.mxu0 0.0
    %645 = vmatprep.mubr.f32.mxu0 0.0
    %v646 = vand.u32 %v206, 4294901760
    %647 = vmatmul.mubr.f32.gmra.mrb[0].mxu0 %v646
    %v648 = vpop.f32.mrb[0].mxu0
    %v649 = vadd.f32 %v558, %v648
    %v650 = vpop.f32.mrb[0].mxu0
    %651 = vmatprep.mubr.f32.mxu0 0.0
    %v652 = vand.u32 %v209, 4294901760
    %653 = vmatmul.mubr.f32.gmra.mrb[0].mxu0 %v652
    %v654 = vpop.f32.mrb[0].mxu0
    %v655 = vadd.f32 %v566, %v654
    %v656 = vpop.f32.mrb[0].mxu0
    %657 = vdwg.mxu0
    %658 = vmatprep.subr.mxu0 0.0
    %v659 = vand.u32 %v193, 4294901760
    %660 = vmatpush1.msra.mxu0 %v659
    %661 = vmatprep.subr.mxu0 0.0
    %v662 = vand.u32 %v194, 4294901760
    %663 = vmatpush1.msra.mxu0 %v662
    %664 = vmatprep.subr.mxu0 0.0
    %v665 = vand.u32 %v195, 4294901760
    %666 = vmatpush1.msra.mxu0 %v665
    %667 = vmatprep.subr.mxu0 0.0
    %v668 = vand.u32 %v196, 4294901760
    %669 = vmatpush1.msra.mxu0 %v668
    %670 = vmatprep.subr.mxu0 0.0
    %671 = vmatpush1.msra.mxu0 0.0
    %672 = vmatprep.subr.mxu0 0.0
    %673 = vmatpush1.msra.mxu0 0.0
    %674 = vmatprep.subr.mxu0 0.0
    %675 = vmatpush1.msra.mxu0 0.0
    %676 = vmatprep.subr.mxu0 0.0
    %677 = vmatpush1.msra.mxu0 0.0
    %678 = vmatprep.subr.mxu0 0.0
    %679 = vmatpush1.msra.mxu0 0.0
    %680 = vmatprep.subr.mxu0 0.0
    %681 = vmatpush1.msra.mxu0 0.0
    %682 = vmatprep.subr.mxu0 0.0
    %683 = vmatpush1.msra.mxu0 0.0
    %684 = vmatprep.subr.mxu0 0.0
    %685 = vmatpush1.msra.mxu0 0.0
    %686 = vmatprep.subr.mxu0 0.0
    %687 = vmatpush1.msra.mxu0 0.0
    %688 = vmatprep.subr.mxu0 0.0
    %689 = vmatpush1.msra.mxu0 0.0
    %690 = vmatprep.subr.mxu0 0.0
    %691 = vmatpush1.msra.mxu0 0.0
    %692 = vmatprep.subr.mxu0 0.0
    %693 = vmatpush1.msra.mxu0 0.0
    %694 = vmatprep.subr.mxu0 0.0
    %695 = vmatpush1.msra.mxu0 0.0
    %696 = vmatprep.subr.mxu0 0.0
    %697 = vmatpush1.msra.mxu0 0.0
    %698 = vmatprep.subr.mxu0 0.0
    %699 = vmatpush1.msra.mxu0 0.0
    %700 = vmatprep.subr.mxu0 0.0
    %701 = vmatpush1.msra.mxu0 0.0
    %702 = vmatprep.subr.mxu0 0.0
    %703 = vmatpush1.msra.mxu0 0.0
    %704 = vmatprep.subr.mxu0 0.0
    %705 = vmatpush1.msra.mxu0 0.0
    %706 = vmatprep.subr.mxu0 0.0
    %707 = vmatpush1.msra.mxu0 0.0
    %708 = vmatprep.subr.mxu0 0.0
    %709 = vmatpush1.msra.mxu0 0.0
    %710 = vmatprep.subr.mxu0 0.0
    %711 = vmatpush1.msra.mxu0 0.0
    %712 = vmatprep.subr.mxu0 0.0
    %713 = vmatpush1.msra.mxu0 0.0
    %714 = vmatprep.subr.mxu0 0.0
    %715 = vmatpush1.msra.mxu0 0.0
    %716 = vmatprep.subr.mxu0 0.0
    %717 = vmatpush1.msra.mxu0 0.0
    %718 = vmatprep.subr.mxu0 0.0
    %719 = vmatpush1.msra.mxu0 0.0
    %720 = vmatprep.subr.mxu0 0.0
    %721 = vmatpush1.msra.mxu0 0.0
    %722 = vmatprep.subr.mxu0 0.0
    %723 = vmatpush1.msra.mxu0 0.0
    %724 = vmatprep.subr.mxu0 0.0
    %725 = vmatpush1.msra.mxu0 0.0
    %726 = vmatprep.mubr.f32.mxu0 0.0
    %v727 = vand.u32 %v206, 4294901760
    %728 = vmatmul.mubr.f32.gmra.mrb[0].mxu0 %v727
    %v729 = vpop.f32.mrb[0].mxu0
    %v730 = vadd.f32 %v649, %v729
    %v731 = vpop.f32.mrb[0].mxu0
    %732 = vmatprep.mubr.f32.mxu0 0.0
    %v733 = vand.u32 %v209, 4294901760
    %734 = vmatmul.mubr.f32.gmra.mrb[0].mxu0 %v733
    %v735 = vpop.f32.mrb[0].mxu0
    %v736 = vadd.f32 %v655, %v735
    %v737 = vpop.f32.mrb[0].mxu0
    %738 = vdwg.mxu0
    %739 = vst [vmem:[#allocation3] sm:$0xff] %v730
    %740 = vst [vmem:[#allocation3 + $0x8] sm:$0xff] %v736
    %741 = vst.msk [vmem:[#allocation5] sm:$0x3] %vm189, 0.0
    %742 = vst.msk [vmem:[#allocation6] sm:$0x3] %vm189, 0.0
    %v743 = vld [vmem:[#allocation3] sm:$0x3]
    %v744 = vld [vmem:[#allocation5] sm:$0x3]
    %v745 = vld [vmem:[#allocation16] sm:$0xff]
    %v746 = vld [vmem:[#allocation16 + $0x8] sm:$0xff]
    %v747 = vld [vmem:[#allocation16 + $0x10] sm:$0xff]
    %v748 = vld [vmem:[#allocation16 + $0x18] sm:$0xff]
    %v750 = vsel %vm204, %v744, 0
    %752 = vmatprep.subr.mxu0 0.0
    %v753 = vand.u32 %v745, 4294901760
    %754 = vmatpush1.msra.mxu0 %v753
    %755 = vmatprep.subr.mxu0 0.0
    %v756 = vand.u32 %v746, 4294901760
    %757 = vmatpush1.msra.mxu0 %v756
    %758 = vmatprep.subr.mxu0 0.0
    %v759 = vand.u32 %v747, 4294901760
    %760 = vmatpush1.msra.mxu0 %v759
    %761 = vmatprep.subr.mxu0 0.0
    %v762 = vand.u32 %v748, 4294901760
    %763 = vmatpush1.msra.mxu0 %v762
    %764 = vmatprep.subr.mxu0 0.0
    %765 = vmatpush1.msra.mxu0 0.0
    %766 = vmatprep.subr.mxu0 0.0
    %767 = vmatpush1.msra.mxu0 0.0
    %768 = vmatprep.subr.mxu0 0.0
    %769 = vmatpush1.msra.mxu0 0.0
    %770 = vmatprep.subr.mxu0 0.0
    %771 = vmatpush1.msra.mxu0 0.0
    %772 = vmatprep.subr.mxu0 0.0
    %773 = vmatpush1.msra.mxu0 0.0
    %774 = vmatprep.subr.mxu0 0.0
    %775 = vmatpush1.msra.mxu0 0.0
    %776 = vmatprep.subr.mxu0 0.0
    %777 = vmatpush1.msra.mxu0 0.0
    %778 = vmatprep.subr.mxu0 0.0
    %779 = vmatpush1.msra.mxu0 0.0
    %780 = vmatprep.subr.mxu0 0.0
    %781 = vmatpush1.msra.mxu0 0.0
    %782 = vmatprep.subr.mxu0 0.0
    %783 = vmatpush1.msra.mxu0 0.0
    %784 = vmatprep.subr.mxu0 0.0
    %785 = vmatpush1.msra.mxu0 0.0
    %786 = vmatprep.subr.mxu0 0.0
    %787 = vmatpush1.msra.mxu0 0.0
    %788 = vmatprep.subr.mxu0 0.0
    %789 = vmatpush1.msra.mxu0 0.0
    %790 = vmatprep.subr.mxu0 0.0
    %791 = vmatpush1.msra.mxu0 0.0
    %792 = vmatprep.subr.mxu0 0.0
    %793 = vmatpush1.msra.mxu0 0.0
    %794 = vmatprep.subr.mxu0 0.0
    %795 = vmatpush1.msra.mxu0 0.0
    %796 = vmatprep.subr.mxu0 0.0
    %797 = vmatpush1.msra.mxu0 0.0
    %798 = vmatprep.subr.mxu0 0.0
    %799 = vmatpush1.msra.mxu0 0.0
    %800 = vmatprep.subr.mxu0 0.0
    %801 = vmatpush1.msra.mxu0 0.0
    %802 = vmatprep.subr.mxu0 0.0
    %803 = vmatpush1.msra.mxu0 0.0
    %804 = vmatprep.subr.mxu0 0.0
    %805 = vmatpush1.msra.mxu0 0.0
    %806 = vmatprep.subr.mxu0 0.0
    %807 = vmatpush1.msra.mxu0 0.0
    %808 = vmatprep.subr.mxu0 0.0
    %809 = vmatpush1.msra.mxu0 0.0
    %810 = vmatprep.subr.mxu0 0.0
    %811 = vmatpush1.msra.mxu0 0.0
    %812 = vmatprep.subr.mxu0 0.0
    %813 = vmatpush1.msra.mxu0 0.0
    %814 = vmatprep.subr.mxu0 0.0
    %815 = vmatpush1.msra.mxu0 0.0
    %816 = vmatprep.subr.mxu0 0.0
    %817 = vmatpush1.msra.mxu0 0.0
    %818 = vmatprep.subr.mxu0 0.0
    %819 = vmatpush1.msra.mxu0 0.0
    %820 = vmatprep.mubr.f32.mxu0 0.0
    %v821 = vand.u32 %v750, 4294901760
    %v822 = vsub.f32 %v750, %v821
    %v823 = vand.u32 %v822, 4294901760
    %v824 = vsub.f32 %v822, %v823
    %v825 = vand.u32 %v824, 4294901760
    %826 = vmatmul.mubr.f32.gmra.mrb[0].mxu0 %v825
    %v827 = vpop.f32.mrb[0].mxu0
    %v828 = vadd.f32 0.0, %v827
    %v829 = vpop.f32.mrb[0].mxu0
    %830 = vdwg.mxu0
    %831 = vmatprep.subr.mxu0 0.0
    %v832 = vand.u32 %v745, 4294901760
    %v833 = vsub.f32 %v745, %v832
    %v834 = vand.u32 %v833, 4294901760
    %v835 = vsub.f32 %v833, %v834
    %v836 = vand.u32 %v835, 4294901760
    %837 = vmatpush1.msra.mxu0 %v836
    %838 = vmatprep.subr.mxu0 0.0
    %v839 = vand.u32 %v746, 4294901760
    %v840 = vsub.f32 %v746, %v839
    %v841 = vand.u32 %v840, 4294901760
    %v842 = vsub.f32 %v840, %v841
    %v843 = vand.u32 %v842, 4294901760
    %844 = vmatpush1.msra.mxu0 %v843
    %845 = vmatprep.subr.mxu0 0.0
    %v846 = vand.u32 %v747, 4294901760
    %v847 = vsub.f32 %v747, %v846
    %v848 = vand.u32 %v847, 4294901760
    %v849 = vsub.f32 %v847, %v848
    %v850 = vand.u32 %v849, 4294901760
    %851 = vmatpush1.msra.mxu0 %v850
    %852 = vmatprep.subr.mxu0 0.0
    %v853 = vand.u32 %v748, 4294901760
    %v854 = vsub.f32 %v748, %v853
    %v855 = vand.u32 %v854, 4294901760
    %v856 = vsub.f32 %v854, %v855
    %v857 = vand.u32 %v856, 4294901760
    %858 = vmatpush1.msra.mxu0 %v857
    %859 = vmatprep.subr.mxu0 0.0
    %860 = vmatpush1.msra.mxu0 0.0
    %861 = vmatprep.subr.mxu0 0.0
    %862 = vmatpush1.msra.mxu0 0.0
    %863 = vmatprep.subr.mxu0 0.0
    %864 = vmatpush1.msra.mxu0 0.0
    %865 = vmatprep.subr.mxu0 0.0
    %866 = vmatpush1.msra.mxu0 0.0
    %867 = vmatprep.subr.mxu0 0.0
    %868 = vmatpush1.msra.mxu0 0.0
    %869 = vmatprep.subr.mxu0 0.0
    %870 = vmatpush1.msra.mxu0 0.0
    %871 = vmatprep.subr.mxu0 0.0
    %872 = vmatpush1.msra.mxu0 0.0
    %873 = vmatprep.subr.mxu0 0.0
    %874 = vmatpush1.msra.mxu0 0.0
    %875 = vmatprep.subr.mxu0 0.0
    %876 = vmatpush1.msra.mxu0 0.0
    %877 = vmatprep.subr.mxu0 0.0
    %878 = vmatpush1.msra.mxu0 0.0
    %879 = vmatprep.subr.mxu0 0.0
    %880 = vmatpush1.msra.mxu0 0.0
    %881 = vmatprep.subr.mxu0 0.0
    %882 = vmatpush1.msra.mxu0 0.0
    %883 = vmatprep.subr.mxu0 0.0
    %884 = vmatpush1.msra.mxu0 0.0
    %885 = vmatprep.subr.mxu0 0.0
    %886 = vmatpush1.msra.mxu0 0.0
    %887 = vmatprep.subr.mxu0 0.0
    %888 = vmatpush1.msra.mxu0 0.0
    %889 = vmatprep.subr.mxu0 0.0
    %890 = vmatpush1.msra.mxu0 0.0
    %891 = vmatprep.subr.mxu0 0.0
    %892 = vmatpush1.msra.mxu0 0.0
    %893 = vmatprep.subr.mxu0 0.0
    %894 = vmatpush1.msra.mxu0 0.0
    %895 = vmatprep.subr.mxu0 0.0
    %896 = vmatpush1.msra.mxu0 0.0
    %897 = vmatprep.subr.mxu0 0.0
    %898 = vmatpush1.msra.mxu0 0.0
    %899 = vmatprep.subr.mxu0 0.0
    %900 = vmatpush1.msra.mxu0 0.0
    %901 = vmatprep.subr.mxu0 0.0
    %902 = vmatpush1.msra.mxu0 0.0
    %903 = vmatprep.subr.mxu0 0.0
    %904 = vmatpush1.msra.mxu0 0.0
    %905 = vmatprep.subr.mxu0 0.0
    %906 = vmatpush1.msra.mxu0 0.0
    %907 = vmatprep.subr.mxu0 0.0
    %908 = vmatpush1.msra.mxu0 0.0
    %909 = vmatprep.subr.mxu0 0.0
    %910 = vmatpush1.msra.mxu0 0.0
    %911 = vmatprep.subr.mxu0 0.0
    %912 = vmatpush1.msra.mxu0 0.0
    %913 = vmatprep.subr.mxu0 0.0
    %914 = vmatpush1.msra.mxu0 0.0
    %915 = vmatprep.mubr.f32.mxu0 0.0
    %v916 = vand.u32 %v750, 4294901760
    %917 = vmatmul.mubr.f32.gmra.mrb[0].mxu0 %v916
    %v918 = vpop.f32.mrb[0].mxu0
    %v919 = vadd.f32 %v828, %v918
    %v920 = vpop.f32.mrb[0].mxu0
    %921 = vdwg.mxu0
    %922 = vmatprep.subr.mxu0 0.0
    %v923 = vand.u32 %v745, 4294901760
    %v924 = vsub.f32 %v745, %v923
    %925 = vmatpush1.msra.mxu0 %v924
    %926 = vmatprep.subr.mxu0 0.0
    %v927 = vand.u32 %v746, 4294901760
    %v928 = vsub.f32 %v746, %v927
    %929 = vmatpush1.msra.mxu0 %v928
    %930 = vmatprep.subr.mxu0 0.0
    %v931 = vand.u32 %v747, 4294901760
    %v932 = vsub.f32 %v747, %v931
    %933 = vmatpush1.msra.mxu0 %v932
    %934 = vmatprep.subr.mxu0 0.0
    %v935 = vand.u32 %v748, 4294901760
    %v936 = vsub.f32 %v748, %v935
    %937 = vmatpush1.msra.mxu0 %v936
    %938 = vmatprep.subr.mxu0 0.0
    %939 = vmatpush1.msra.mxu0 0.0
    %940 = vmatprep.subr.mxu0 0.0
    %941 = vmatpush1.msra.mxu0 0.0
    %942 = vmatprep.subr.mxu0 0.0
    %943 = vmatpush1.msra.mxu0 0.0
    %944 = vmatprep.subr.mxu0 0.0
    %945 = vmatpush1.msra.mxu0 0.0
    %946 = vmatprep.subr.mxu0 0.0
    %947 = vmatpush1.msra.mxu0 0.0
    %948 = vmatprep.subr.mxu0 0.0
    %949 = vmatpush1.msra.mxu0 0.0
    %950 = vmatprep.subr.mxu0 0.0
    %951 = vmatpush1.msra.mxu0 0.0
    %952 = vmatprep.subr.mxu0 0.0
    %953 = vmatpush1.msra.mxu0 0.0
    %954 = vmatprep.subr.mxu0 0.0
    %955 = vmatpush1.msra.mxu0 0.0
    %956 = vmatprep.subr.mxu0 0.0
    %957 = vmatpush1.msra.mxu0 0.0
    %958 = vmatprep.subr.mxu0 0.0
    %959 = vmatpush1.msra.mxu0 0.0
    %960 = vmatprep.subr.mxu0 0.0
    %961 = vmatpush1.msra.mxu0 0.0
    %962 = vmatprep.subr.mxu0 0.0
    %963 = vmatpush1.msra.mxu0 0.0
    %964 = vmatprep.subr.mxu0 0.0
    %965 = vmatpush1.msra.mxu0 0.0
    %966 = vmatprep.subr.mxu0 0.0
    %967 = vmatpush1.msra.mxu0 0.0
    %968 = vmatprep.subr.mxu0 0.0
    %969 = vmatpush1.msra.mxu0 0.0
    %970 = vmatprep.subr.mxu0 0.0
    %971 = vmatpush1.msra.mxu0 0.0
    %972 = vmatprep.subr.mxu0 0.0
    %973 = vmatpush1.msra.mxu0 0.0
    %974 = vmatprep.subr.mxu0 0.0
    %975 = vmatpush1.msra.mxu0 0.0
    %976 = vmatprep.subr.mxu0 0.0
    %977 = vmatpush1.msra.mxu0 0.0
    %978 = vmatprep.subr.mxu0 0.0
    %979 = vmatpush1.msra.mxu0 0.0
    %980 = vmatprep.subr.mxu0 0.0
    %981 = vmatpush1.msra.mxu0 0.0
    %982 = vmatprep.subr.mxu0 0.0
    %983 = vmatpush1.msra.mxu0 0.0
    %984 = vmatprep.subr.mxu0 0.0
    %985 = vmatpush1.msra.mxu0 0.0
    %986 = vmatprep.subr.mxu0 0.0
    %987 = vmatpush1.msra.mxu0 0.0
    %988 = vmatprep.subr.mxu0 0.0
    %989 = vmatpush1.msra.mxu0 0.0
    %990 = vmatprep.subr.mxu0 0.0
    %991 = vmatpush1.msra.mxu0 0.0
    %992 = vmatprep.subr.mxu0 0.0
    %993 = vmatpush1.msra.mxu0 0.0
    %994 = vmatprep.mubr.f32.mxu0 0.0
    %v995 = vand.u32 %v750, 4294901760
    %v996 = vsub.f32 %v750, %v995
    %997 = vmatmul.mubr.f32.gmra.mrb[0].mxu0 %v996
    %v998 = vpop.f32.mrb[0].mxu0
    %v999 = vadd.f32 %v919, %v998
    %v1000 = vpop.f32.mrb[0].mxu0
    %1001 = vdwg.mxu0
    %1002 = vmatprep.subr.mxu0 0.0
    %v1003 = vand.u32 %v745, 4294901760
    %1004 = vmatpush1.msra.mxu0 %v1003
    %1005 = vmatprep.subr.mxu0 0.0
    %v1006 = vand.u32 %v746, 4294901760
    %1007 = vmatpush1.msra.mxu0 %v1006
    %1008 = vmatprep.subr.mxu0 0.0
    %v1009 = vand.u32 %v747, 4294901760
    %1010 = vmatpush1.msra.mxu0 %v1009
    %1011 = vmatprep.subr.mxu0 0.0
    %v1012 = vand.u32 %v748, 4294901760
    %1013 = vmatpush1.msra.mxu0 %v1012
    %1014 = vmatprep.subr.mxu0 0.0
    %1015 = vmatpush1.msra.mxu0 0.0
    %1016 = vmatprep.subr.mxu0 0.0
    %1017 = vmatpush1.msra.mxu0 0.0
    %1018 = vmatprep.subr.mxu0 0.0
    %1019 = vmatpush1.msra.mxu0 0.0
    %1020 = vmatprep.subr.mxu0 0.0
    %1021 = vmatpush1.msra.mxu0 0.0
    %1022 = vmatprep.subr.mxu0 0.0
    %1023 = vmatpush1.msra.mxu0 0.0
    %1024 = vmatprep.subr.mxu0 0.0
    %1025 = vmatpush1.msra.mxu0 0.0
    %1026 = vmatprep.subr.mxu0 0.0
    %1027 = vmatpush1.msra.mxu0 0.0
    %1028 = vmatprep.subr.mxu0 0.0
    %1029 = vmatpush1.msra.mxu0 0.0
    %1030 = vmatprep.subr.mxu0 0.0
    %1031 = vmatpush1.msra.mxu0 0.0
    %1032 = vmatprep.subr.mxu0 0.0
    %1033 = vmatpush1.msra.mxu0 0.0
    %1034 = vmatprep.subr.mxu0 0.0
    %1035 = vmatpush1.msra.mxu0 0.0
    %1036 = vmatprep.subr.mxu0 0.0
    %1037 = vmatpush1.msra.mxu0 0.0
    %1038 = vmatprep.subr.mxu0 0.0
    %1039 = vmatpush1.msra.mxu0 0.0
    %1040 = vmatprep.subr.mxu0 0.0
    %1041 = vmatpush1.msra.mxu0 0.0
    %1042 = vmatprep.subr.mxu0 0.0
    %1043 = vmatpush1.msra.mxu0 0.0
    %1044 = vmatprep.subr.mxu0 0.0
    %1045 = vmatpush1.msra.mxu0 0.0
    %1046 = vmatprep.subr.mxu0 0.0
    %1047 = vmatpush1.msra.mxu0 0.0
    %1048 = vmatprep.subr.mxu0 0.0
    %1049 = vmatpush1.msra.mxu0 0.0
    %1050 = vmatprep.subr.mxu0 0.0
    %1051 = vmatpush1.msra.mxu0 0.0
    %1052 = vmatprep.subr.mxu0 0.0
    %1053 = vmatpush1.msra.mxu0 0.0
    %1054 = vmatprep.subr.mxu0 0.0
    %1055 = vmatpush1.msra.mxu0 0.0
    %1056 = vmatprep.subr.mxu0 0.0
    %1057 = vmatpush1.msra.mxu0 0.0
    %1058 = vmatprep.subr.mxu0 0.0
    %1059 = vmatpush1.msra.mxu0 0.0
    %1060 = vmatprep.subr.mxu0 0.0
    %1061 = vmatpush1.msra.mxu0 0.0
    %1062 = vmatprep.subr.mxu0 0.0
    %1063 = vmatpush1.msra.mxu0 0.0
    %1064 = vmatprep.subr.mxu0 0.0
    %1065 = vmatpush1.msra.mxu0 0.0
    %1066 = vmatprep.subr.mxu0 0.0
    %1067 = vmatpush1.msra.mxu0 0.0
    %1068 = vmatprep.subr.mxu0 0.0
    %1069 = vmatpush1.msra.mxu0 0.0
    %1070 = vmatprep.mubr.f32.mxu0 0.0
    %v1071 = vand.u32 %v750, 4294901760
    %v1072 = vsub.f32 %v750, %v1071
    %v1073 = vand.u32 %v1072, 4294901760
    %1074 = vmatmul.mubr.f32.gmra.mrb[0].mxu0 %v1073
    %v1075 = vpop.f32.mrb[0].mxu0
    %v1076 = vadd.f32 %v999, %v1075
    %v1077 = vpop.f32.mrb[0].mxu0
    %1078 = vdwg.mxu0
    %1079 = vmatprep.subr.mxu0 0.0
    %v1080 = vand.u32 %v745, 4294901760
    %v1081 = vsub.f32 %v745, %v1080
    %v1082 = vand.u32 %v1081, 4294901760
    %1083 = vmatpush1.msra.mxu0 %v1082
    %1084 = vmatprep.subr.mxu0 0.0
    %v1085 = vand.u32 %v746, 4294901760
    %v1086 = vsub.f32 %v746, %v1085
    %v1087 = vand.u32 %v1086, 4294901760
    %1088 = vmatpush1.msra.mxu0 %v1087
    %1089 = vmatprep.subr.mxu0 0.0
    %v1090 = vand.u32 %v747, 4294901760
    %v1091 = vsub.f32 %v747, %v1090
    %v1092 = vand.u32 %v1091, 4294901760
    %1093 = vmatpush1.msra.mxu0 %v1092
    %1094 = vmatprep.subr.mxu0 0.0
    %v1095 = vand.u32 %v748, 4294901760
    %v1096 = vsub.f32 %v748, %v1095
    %v1097 = vand.u32 %v1096, 4294901760
    %1098 = vmatpush1.msra.mxu0 %v1097
    %1099 = vmatprep.subr.mxu0 0.0
    %1100 = vmatpush1.msra.mxu0 0.0
    %1101 = vmatprep.subr.mxu0 0.0
    %1102 = vmatpush1.msra.mxu0 0.0
    %1103 = vmatprep.subr.mxu0 0.0
    %1104 = vmatpush1.msra.mxu0 0.0
    %1105 = vmatprep.subr.mxu0 0.0
    %1106 = vmatpush1.msra.mxu0 0.0
    %1107 = vmatprep.subr.mxu0 0.0
    %1108 = vmatpush1.msra.mxu0 0.0
    %1109 = vmatprep.subr.mxu0 0.0
    %1110 = vmatpush1.msra.mxu0 0.0
    %1111 = vmatprep.subr.mxu0 0.0
    %1112 = vmatpush1.msra.mxu0 0.0
    %1113 = vmatprep.subr.mxu0 0.0
    %1114 = vmatpush1.msra.mxu0 0.0
    %1115 = vmatprep.subr.mxu0 0.0
    %1116 = vmatpush1.msra.mxu0 0.0
    %1117 = vmatprep.subr.mxu0 0.0
    %1118 = vmatpush1.msra.mxu0 0.0
    %1119 = vmatprep.subr.mxu0 0.0
    %1120 = vmatpush1.msra.mxu0 0.0
    %1121 = vmatprep.subr.mxu0 0.0
    %1122 = vmatpush1.msra.mxu0 0.0
    %1123 = vmatprep.subr.mxu0 0.0
    %1124 = vmatpush1.msra.mxu0 0.0
    %1125 = vmatprep.subr.mxu0 0.0
    %1126 = vmatpush1.msra.mxu0 0.0
    %1127 = vmatprep.subr.mxu0 0.0
    %1128 = vmatpush1.msra.mxu0 0.0
    %1129 = vmatprep.subr.mxu0 0.0
    %1130 = vmatpush1.msra.mxu0 0.0
    %1131 = vmatprep.subr.mxu0 0.0
    %1132 = vmatpush1.msra.mxu0 0.0
    %1133 = vmatprep.subr.mxu0 0.0
    %1134 = vmatpush1.msra.mxu0 0.0
    %1135 = vmatprep.subr.mxu0 0.0
    %1136 = vmatpush1.msra.mxu0 0.0
    %1137 = vmatprep.subr.mxu0 0.0
    %1138 = vmatpush1.msra.mxu0 0.0
    %1139 = vmatprep.subr.mxu0 0.0
    %1140 = vmatpush1.msra.mxu0 0.0
    %1141 = vmatprep.subr.mxu0 0.0
    %1142 = vmatpush1.msra.mxu0 0.0
    %1143 = vmatprep.subr.mxu0 0.0
    %1144 = vmatpush1.msra.mxu0 0.0
    %1145 = vmatprep.subr.mxu0 0.0
    %1146 = vmatpush1.msra.mxu0 0.0
    %1147 = vmatprep.subr.mxu0 0.0
    %1148 = vmatpush1.msra.mxu0 0.0
    %1149 = vmatprep.subr.mxu0 0.0
    %1150 = vmatpush1.msra.mxu0 0.0
    %1151 = vmatprep.subr.mxu0 0.0
    %1152 = vmatpush1.msra.mxu0 0.0
    %1153 = vmatprep.subr.mxu0 0.0
    %1154 = vmatpush1.msra.mxu0 0.0
    %1155 = vmatprep.mubr.f32.mxu0 0.0
    %v1156 = vand.u32 %v750, 4294901760
    %1157 = vmatmul.mubr.f32.gmra.mrb[0].mxu0 %v1156
    %v1158 = vpop.f32.mrb[0].mxu0
    %v1159 = vadd.f32 %v1076, %v1158
    %v1160 = vpop.f32.mrb[0].mxu0
    %1161 = vdwg.mxu0
    %1162 = vmatprep.subr.mxu0 0.0
    %v1163 = vand.u32 %v745, 4294901760
    %1164 = vmatpush1.msra.mxu0 %v1163
    %1165 = vmatprep.subr.mxu0 0.0
    %v1166 = vand.u32 %v746, 4294901760
    %1167 = vmatpush1.msra.mxu0 %v1166
    %1168 = vmatprep.subr.mxu0 0.0
    %v1169 = vand.u32 %v747, 4294901760
    %1170 = vmatpush1.msra.mxu0 %v1169
    %1171 = vmatprep.subr.mxu0 0.0
    %v1172 = vand.u32 %v748, 4294901760
    %1173 = vmatpush1.msra.mxu0 %v1172
    %1174 = vmatprep.subr.mxu0 0.0
    %1175 = vmatpush1.msra.mxu0 0.0
    %1176 = vmatprep.subr.mxu0 0.0
    %1177 = vmatpush1.msra.mxu0 0.0
    %1178 = vmatprep.subr.mxu0 0.0
    %1179 = vmatpush1.msra.mxu0 0.0
    %1180 = vmatprep.subr.mxu0 0.0
    %1181 = vmatpush1.msra.mxu0 0.0
    %1182 = vmatprep.subr.mxu0 0.0
    %1183 = vmatpush1.msra.mxu0 0.0
    %1184 = vmatprep.subr.mxu0 0.0
    %1185 = vmatpush1.msra.mxu0 0.0
    %1186 = vmatprep.subr.mxu0 0.0
    %1187 = vmatpush1.msra.mxu0 0.0
    %1188 = vmatprep.subr.mxu0 0.0
    %1189 = vmatpush1.msra.mxu0 0.0
    %1190 = vmatprep.subr.mxu0 0.0
    %1191 = vmatpush1.msra.mxu0 0.0
    %1192 = vmatprep.subr.mxu0 0.0
    %1193 = vmatpush1.msra.mxu0 0.0
    %1194 = vmatprep.subr.mxu0 0.0
    %1195 = vmatpush1.msra.mxu0 0.0
    %1196 = vmatprep.subr.mxu0 0.0
    %1197 = vmatpush1.msra.mxu0 0.0
    %1198 = vmatprep.subr.mxu0 0.0
    %1199 = vmatpush1.msra.mxu0 0.0
    %1200 = vmatprep.subr.mxu0 0.0
    %1201 = vmatpush1.msra.mxu0 0.0
    %1202 = vmatprep.subr.mxu0 0.0
    %1203 = vmatpush1.msra.mxu0 0.0
    %1204 = vmatprep.subr.mxu0 0.0
    %1205 = vmatpush1.msra.mxu0 0.0
    %1206 = vmatprep.subr.mxu0 0.0
    %1207 = vmatpush1.msra.mxu0 0.0
    %1208 = vmatprep.subr.mxu0 0.0
    %1209 = vmatpush1.msra.mxu0 0.0
    %1210 = vmatprep.subr.mxu0 0.0
    %1211 = vmatpush1.msra.mxu0 0.0
    %1212 = vmatprep.subr.mxu0 0.0
    %1213 = vmatpush1.msra.mxu0 0.0
    %1214 = vmatprep.subr.mxu0 0.0
    %1215 = vmatpush1.msra.mxu0 0.0
    %1216 = vmatprep.subr.mxu0 0.0
    %1217 = vmatpush1.msra.mxu0 0.0
    %1218 = vmatprep.subr.mxu0 0.0
    %1219 = vmatpush1.msra.mxu0 0.0
    %1220 = vmatprep.subr.mxu0 0.0
    %1221 = vmatpush1.msra.mxu0 0.0
    %1222 = vmatprep.subr.mxu0 0.0
    %1223 = vmatpush1.msra.mxu0 0.0
    %1224 = vmatprep.subr.mxu0 0.0
    %1225 = vmatpush1.msra.mxu0 0.0
    %1226 = vmatprep.subr.mxu0 0.0
    %1227 = vmatpush1.msra.mxu0 0.0
    %1228 = vmatprep.subr.mxu0 0.0
    %1229 = vmatpush1.msra.mxu0 0.0
    %1230 = vmatprep.mubr.f32.mxu0 0.0
    %v1231 = vand.u32 %v750, 4294901760
    %1232 = vmatmul.mubr.f32.gmra.mrb[0].mxu0 %v1231
    %v1233 = vpop.f32.mrb[0].mxu0
    %v1234 = vadd.f32 %v1159, %v1233
    %v1235 = vpop.f32.mrb[0].mxu0
    %1236 = vdwg.mxu0
    %v1237 = vadd.f32 %v743, %v1234
    %v1238 = vxor.u32 %v1237, 2147483648
    %v1239 = vmul.f32 %v1238, 1.442695
    %v1240 = vpow.pop %v1239
    %v1241 = vadd.f32 %v1240, 1.0
    %v1242 = vrcp.pop %v1241
    %v1243 = vmul.f32 1.0, %v1242
    %v1244 = vtanh.pop %v1237
    %v1245 = vld [vmem:[#allocation6] sm:$0x3]
    %1247 = vrot.lane.b32.xlu0 %v1245, 32
    %v1248 = vpop.permute.xlu0 %1247
    %v1250 = vmul.f32 %v1243, %v1248
    %1252 = vrot.lane.b32.xlu0 %v1244, 64
    %v1253 = vpop.permute.xlu0 %1252
    %v1255 = vmul.f32 %v1243, %v1253
    %1257 = vrot.lane.b32.xlu0 %v1255, 32
    %v1258 = vpop.permute.xlu0 %1257
    %v1260 = vadd.f32 %v1250, %v1258
    %v1261 = vtanh.pop %v1260
    %1263 = vrot.lane.b32.xlu0 %v1261, 64
    %v1264 = vpop.permute.xlu0 %1263
    %v1266 = vmul.f32 %v1243, %v1264
    %1268 = vrot.lane.b32.xlu0 %v1260, 96
    %v1269 = vpop.permute.xlu0 %1268
    %1271 = vst.msk [vmem:[#allocation6] sm:$0x3] %vm189, %v1269
    %1273 = vrot.lane.b32.xlu0 %v1266, 32
    %v1274 = vpop.permute.xlu0 %1273
    %1276 = vst.msk [vmem:[#allocation5] sm:$0x3] %vm189, %v1274
    %1277 = vst.msk [vmem:[#allocation4] sm:$0x3] %vm189, %v1274
    %v1278 = vld [vmem:[#allocation3 + $0x2] sm:$0x3]
    %v1279 = vld [vmem:[#allocation5] sm:$0x3]
    %v1280 = vld [vmem:[#allocation16] sm:$0xff]
    %v1281 = vld [vmem:[#allocation16 + $0x8] sm:$0xff]
    %v1282 = vld [vmem:[#allocation16 + $0x10] sm:$0xff]
    %v1283 = vld [vmem:[#allocation16 + $0x18] sm:$0xff]
    %v1285 = vsel %vm204, %v1279, 0
    %1287 = vmatprep.subr.mxu0 0.0
    %v1288 = vand.u32 %v1280, 4294901760
    %1289 = vmatpush1.msra.mxu0 %v1288
    %1290 = vmatprep.subr.mxu0 0.0
    %v1291 = vand.u32 %v1281, 4294901760
    %1292 = vmatpush1.msra.mxu0 %v1291
    %1293 = vmatprep.subr.mxu0 0.0
    %v1294 = vand.u32 %v1282, 4294901760
    %1295 = vmatpush1.msra.mxu0 %v1294
    %1296 = vmatprep.subr.mxu0 0.0
    %v1297 = vand.u32 %v1283, 4294901760
    %1298 = vmatpush1.msra.mxu0 %v1297
    %1299 = vmatprep.subr.mxu0 0.0
    %1300 = vmatpush1.msra.mxu0 0.0
    %1301 = vmatprep.subr.mxu0 0.0
    %1302 = vmatpush1.msra.mxu0 0.0
    %1303 = vmatprep.subr.mxu0 0.0
    %1304 = vmatpush1.msra.mxu0 0.0
    %1305 = vmatprep.subr.mxu0 0.0
    %1306 = vmatpush1.msra.mxu0 0.0
    %1307 = vmatprep.subr.mxu0 0.0
    %1308 = vmatpush1.msra.mxu0 0.0
    %1309 = vmatprep.subr.mxu0 0.0
    %1310 = vmatpush1.msra.mxu0 0.0
    %1311 = vmatprep.subr.mxu0 0.0
    %1312 = vmatpush1.msra.mxu0 0.0
    %1313 = vmatprep.subr.mxu0 0.0
    %1314 = vmatpush1.msra.mxu0 0.0
    %1315 = vmatprep.subr.mxu0 0.0
    %1316 = vmatpush1.msra.mxu0 0.0
    %1317 = vmatprep.subr.mxu0 0.0
    %1318 = vmatpush1.msra.mxu0 0.0
    %1319 = vmatprep.subr.mxu0 0.0
    %1320 = vmatpush1.msra.mxu0 0.0
    %1321 = vmatprep.subr.mxu0 0.0
    %1322 = vmatpush1.msra.mxu0 0.0
    %1323 = vmatprep.subr.mxu0 0.0
    %1324 = vmatpush1.msra.mxu0 0.0
    %1325 = vmatprep.subr.mxu0 0.0
    %1326 = vmatpush1.msra.mxu0 0.0
    %1327 = vmatprep.subr.mxu0 0.0
    %1328 = vmatpush1.msra.mxu0 0.0
    %1329 = vmatprep.subr.mxu0 0.0
    %1330 = vmatpush1.msra.mxu0 0.0
    %1331 = vmatprep.subr.mxu0 0.0
    %1332 = vmatpush1.msra.mxu0 0.0
    %1333 = vmatprep.subr.mxu0 0.0
    %1334 = vmatpush1.msra.mxu0 0.0
    %1335 = vmatprep.subr.mxu0 0.0
    %1336 = vmatpush1.msra.mxu0 0.0
    %1337 = vmatprep.subr.mxu0 0.0
    %1338 = vmatpush1.msra.mxu0 0.0
    %1339 = vmatprep.subr.mxu0 0.0
    %1340 = vmatpush1.msra.mxu0 0.0
    %1341 = vmatprep.subr.mxu0 0.0
    %1342 = vmatpush1.msra.mxu0 0.0
    %1343 = vmatprep.subr.mxu0 0.0
    %1344 = vmatpush1.msra.mxu0 0.0
    %1345 = vmatprep.subr.mxu0 0.0
    %1346 = vmatpush1.msra.mxu0 0.0
    %1347 = vmatprep.subr.mxu0 0.0
    %1348 = vmatpush1.msra.mxu0 0.0
    %1349 = vmatprep.subr.mxu0 0.0
    %1350 = vmatpush1.msra.mxu0 0.0
    %1351 = vmatprep.subr.mxu0 0.0
    %1352 = vmatpush1.msra.mxu0 0.0
    %1353 = vmatprep.subr.mxu0 0.0
    %1354 = vmatpush1.msra.mxu0 0.0
    %1355 = vmatprep.mubr.f32.mxu0 0.0
    %v1356 = vand.u32 %v1285, 4294901760
    %v1357 = vsub.f32 %v1285, %v1356
    %v1358 = vand.u32 %v1357, 4294901760
    %v1359 = vsub.f32 %v1357, %v1358
    %v1360 = vand.u32 %v1359, 4294901760
    %1361 = vmatmul.mubr.f32.gmra.mrb[0].mxu0 %v1360
    %v1362 = vpop.f32.mrb[0].mxu0
    %v1363 = vadd.f32 0.0, %v1362
    %v1364 = vpop.f32.mrb[0].mxu0
    %1365 = vdwg.mxu0
    %1366 = vmatprep.subr.mxu0 0.0
    %v1367 = vand.u32 %v1280, 4294901760
    %v1368 = vsub.f32 %v1280, %v1367
    %v1369 = vand.u32 %v1368, 4294901760
    %v1370 = vsub.f32 %v1368, %v1369
    %v1371 = vand.u32 %v1370, 4294901760
    %1372 = vmatpush1.msra.mxu0 %v1371
    %1373 = vmatprep.subr.mxu0 0.0
    %v1374 = vand.u32 %v1281, 4294901760
    %v1375 = vsub.f32 %v1281, %v1374
    %v1376 = vand.u32 %v1375, 4294901760
    %v1377 = vsub.f32 %v1375, %v1376
    %v1378 = vand.u32 %v1377, 4294901760
    %1379 = vmatpush1.msra.mxu0 %v1378
    %1380 = vmatprep.subr.mxu0 0.0
    %v1381 = vand.u32 %v1282, 4294901760
    %v1382 = vsub.f32 %v1282, %v1381
    %v1383 = vand.u32 %v1382, 4294901760
    %v1384 = vsub.f32 %v1382, %v1383
    %v1385 = vand.u32 %v1384, 4294901760
    %1386 = vmatpush1.msra.mxu0 %v1385
    %1387 = vmatprep.subr.mxu0 0.0
    %v1388 = vand.u32 %v1283, 4294901760
    %v1389 = vsub.f32 %v1283, %v1388
    %v1390 = vand.u32 %v1389, 4294901760
    %v1391 = vsub.f32 %v1389, %v1390
    %v1392 = vand.u32 %v1391, 4294901760
    %1393 = vmatpush1.msra.mxu0 %v1392
    %1394 = vmatprep.subr.mxu0 0.0
    %1395 = vmatpush1.msra.mxu0 0.0
    %1396 = vmatprep.subr.mxu0 0.0
    %1397 = vmatpush1.msra.mxu0 0.0
    %1398 = vmatprep.subr.mxu0 0.0
    %1399 = vmatpush1.msra.mxu0 0.0
    %1400 = vmatprep.subr.mxu0 0.0
    %1401 = vmatpush1.msra.mxu0 0.0
    %1402 = vmatprep.subr.mxu0 0.0
    %1403 = vmatpush1.msra.mxu0 0.0
    %1404 = vmatprep.subr.mxu0 0.0
    %1405 = vmatpush1.msra.mxu0 0.0
    %1406 = vmatprep.subr.mxu0 0.0
    %1407 = vmatpush1.msra.mxu0 0.0
    %1408 = vmatprep.subr.mxu0 0.0
    %1409 = vmatpush1.msra.mxu0 0.0
    %1410 = vmatprep.subr.mxu0 0.0
    %1411 = vmatpush1.msra.mxu0 0.0
    %1412 = vmatprep.subr.mxu0 0.0
    %1413 = vmatpush1.msra.mxu0 0.0
    %1414 = vmatprep.subr.mxu0 0.0
    %1415 = vmatpush1.msra.mxu0 0.0
    %1416 = vmatprep.subr.mxu0 0.0
    %1417 = vmatpush1.msra.mxu0 0.0
    %1418 = vmatprep.subr.mxu0 0.0
    %1419 = vmatpush1.msra.mxu0 0.0
    %1420 = vmatprep.subr.mxu0 0.0
    %1421 = vmatpush1.msra.mxu0 0.0
    %1422 = vmatprep.subr.mxu0 0.0
    %1423 = vmatpush1.msra.mxu0 0.0
    %1424 = vmatprep.subr.mxu0 0.0
    %1425 = vmatpush1.msra.mxu0 0.0
    %1426 = vmatprep.subr.mxu0 0.0
    %1427 = vmatpush1.msra.mxu0 0.0
    %1428 = vmatprep.subr.mxu0 0.0
    %1429 = vmatpush1.msra.mxu0 0.0
    %1430 = vmatprep.subr.mxu0 0.0
    %1431 = vmatpush1.msra.mxu0 0.0
    %1432 = vmatprep.subr.mxu0 0.0
    %1433 = vmatpush1.msra.mxu0 0.0
    %1434 = vmatprep.subr.mxu0 0.0
    %1435 = vmatpush1.msra.mxu0 0.0
    %1436 = vmatprep.subr.mxu0 0.0
    %1437 = vmatpush1.msra.mxu0 0.0
    %1438 = vmatprep.subr.mxu0 0.0
    %1439 = vmatpush1.msra.mxu0 0.0
    %1440 = vmatprep.subr.mxu0 0.0
    %1441 = vmatpush1.msra.mxu0 0.0
    %1442 = vmatprep.subr.mxu0 0.0
    %1443 = vmatpush1.msra.mxu0 0.0
    %1444 = vmatprep.subr.mxu0 0.0
    %1445 = vmatpush1.msra.mxu0 0.0
    %1446 = vmatprep.subr.mxu0 0.0
    %1447 = vmatpush1.msra.mxu0 0.0
    %1448 = vmatprep.subr.mxu0 0.0
    %1449 = vmatpush1.msra.mxu0 0.0
    %1450 = vmatprep.mubr.f32.mxu0 0.0
    %v1451 = vand.u32 %v1285, 4294901760
    %1452 = vmatmul.mubr.f32.gmra.mrb[0].mxu0 %v1451
    %v1453 = vpop.f32.mrb[0].mxu0
    %v1454 = vadd.f32 %v1363, %v1453
    %v1455 = vpop.f32.mrb[0].mxu0
    %1456 = vdwg.mxu0
    %1457 = vmatprep.subr.mxu0 0.0
    %v1458 = vand.u32 %v1280, 4294901760
    %v1459 = vsub.f32 %v1280, %v1458
    %1460 = vmatpush1.msra.mxu0 %v1459
    %1461 = vmatprep.subr.mxu0 0.0
    %v1462 = vand.u32 %v1281, 4294901760
    %v1463 = vsub.f32 %v1281, %v1462
    %1464 = vmatpush1.msra.mxu0 %v1463
    %1465 = vmatprep.subr.mxu0 0.0
    %v1466 = vand.u32 %v1282, 4294901760
    %v1467 = vsub.f32 %v1282, %v1466
    %1468 = vmatpush1.msra.mxu0 %v1467
    %1469 = vmatprep.subr.mxu0 0.0
    %v1470 = vand.u32 %v1283, 4294901760
    %v1471 = vsub.f32 %v1283, %v1470
    %1472 = vmatpush1.msra.mxu0 %v1471
    %1473 = vmatprep.subr.mxu0 0.0
    %1474 = vmatpush1.msra.mxu0 0.0
    %1475 = vmatprep.subr.mxu0 0.0
    %1476 = vmatpush1.msra.mxu0 0.0
    %1477 = vmatprep.subr.mxu0 0.0
    %1478 = vmatpush1.msra.mxu0 0.0
    %1479 = vmatprep.subr.mxu0 0.0
    %1480 = vmatpush1.msra.mxu0 0.0
    %1481 = vmatprep.subr.mxu0 0.0
    %1482 = vmatpush1.msra.mxu0 0.0
    %1483 = vmatprep.subr.mxu0 0.0
    %1484 = vmatpush1.msra.mxu0 0.0
    %1485 = vmatprep.subr.mxu0 0.0
    %1486 = vmatpush1.msra.mxu0 0.0
    %1487 = vmatprep.subr.mxu0 0.0
    %1488 = vmatpush1.msra.mxu0 0.0
    %1489 = vmatprep.subr.mxu0 0.0
    %1490 = vmatpush1.msra.mxu0 0.0
    %1491 = vmatprep.subr.mxu0 0.0
    %1492 = vmatpush1.msra.mxu0 0.0
    %1493 = vmatprep.subr.mxu0 0.0
    %1494 = vmatpush1.msra.mxu0 0.0
    %1495 = vmatprep.subr.mxu0 0.0
    %1496 = vmatpush1.msra.mxu0 0.0
    %1497 = vmatprep.subr.mxu0 0.0
    %1498 = vmatpush1.msra.mxu0 0.0
    %1499 = vmatprep.subr.mxu0 0.0
    %1500 = vmatpush1.msra.mxu0 0.0
    %1501 = vmatprep.subr.mxu0 0.0
    %1502 = vmatpush1.msra.mxu0 0.0
    %1503 = vmatprep.subr.mxu0 0.0
    %1504 = vmatpush1.msra.mxu0 0.0
    %1505 = vmatprep.subr.mxu0 0.0
    %1506 = vmatpush1.msra.mxu0 0.0
    %1507 = vmatprep.subr.mxu0 0.0
    %1508 = vmatpush1.msra.mxu0 0.0
    %1509 = vmatprep.subr.mxu0 0.0
    %1510 = vmatpush1.msra.mxu0 0.0
    %1511 = vmatprep.subr.mxu0 0.0
    %1512 = vmatpush1.msra.mxu0 0.0
    %1513 = vmatprep.subr.mxu0 0.0
    %1514 = vmatpush1.msra.mxu0 0.0
    %1515 = vmatprep.subr.mxu0 0.0
    %1516 = vmatpush1.msra.mxu0 0.0
    %1517 = vmatprep.subr.mxu0 0.0
    %1518 = vmatpush1.msra.mxu0 0.0
    %1519 = vmatprep.subr.mxu0 0.0
    %1520 = vmatpush1.msra.mxu0 0.0
    %1521 = vmatprep.subr.mxu0 0.0
    %1522 = vmatpush1.msra.mxu0 0.0
    %1523 = vmatprep.subr.mxu0 0.0
    %1524 = vmatpush1.msra.mxu0 0.0
    %1525 = vmatprep.subr.mxu0 0.0
    %1526 = vmatpush1.msra.mxu0 0.0
    %1527 = vmatprep.subr.mxu0 0.0
    %1528 = vmatpush1.msra.mxu0 0.0
    %1529 = vmatprep.mubr.f32.mxu0 0.0
    %v1530 = vand.u32 %v1285, 4294901760
    %v1531 = vsub.f32 %v1285, %v1530
    %1532 = vmatmul.mubr.f32.gmra.mrb[0].mxu0 %v1531
    %v1533 = vpop.f32.mrb[0].mxu0
    %v1534 = vadd.f32 %v1454, %v1533
    %v1535 = vpop.f32.mrb[0].mxu0
    %1536 = vdwg.mxu0
    %1537 = vmatprep.subr.mxu0 0.0
    %v1538 = vand.u32 %v1280, 4294901760
    %1539 = vmatpush1.msra.mxu0 %v1538
    %1540 = vmatprep.subr.mxu0 0.0
    %v1541 = vand.u32 %v1281, 4294901760
    %1542 = vmatpush1.msra.mxu0 %v1541
    %1543 = vmatprep.subr.mxu0 0.0
    %v1544 = vand.u32 %v1282, 4294901760
    %1545 = vmatpush1.msra.mxu0 %v1544
    %1546 = vmatprep.subr.mxu0 0.0
    %v1547 = vand.u32 %v1283, 4294901760
    %1548 = vmatpush1.msra.mxu0 %v1547
    %1549 = vmatprep.subr.mxu0 0.0
    %1550 = vmatpush1.msra.mxu0 0.0
    %1551 = vmatprep.subr.mxu0 0.0
    %1552 = vmatpush1.msra.mxu0 0.0
    %1553 = vmatprep.subr.mxu0 0.0
    %1554 = vmatpush1.msra.mxu0 0.0
    %1555 = vmatprep.subr.mxu0 0.0
    %1556 = vmatpush1.msra.mxu0 0.0
    %1557 = vmatprep.subr.mxu0 0.0
    %1558 = vmatpush1.msra.mxu0 0.0
    %1559 = vmatprep.subr.mxu0 0.0
    %1560 = vmatpush1.msra.mxu0 0.0
    %1561 = vmatprep.subr.mxu0 0.0
    %1562 = vmatpush1.msra.mxu0 0.0
    %1563 = vmatprep.subr.mxu0 0.0
    %1564 = vmatpush1.msra.mxu0 0.0
    %1565 = vmatprep.subr.mxu0 0.0
    %1566 = vmatpush1.msra.mxu0 0.0
    %1567 = vmatprep.subr.mxu0 0.0
    %1568 = vmatpush1.msra.mxu0 0.0
    %1569 = vmatprep.subr.mxu0 0.0
    %1570 = vmatpush1.msra.mxu0 0.0
    %1571 = vmatprep.subr.mxu0 0.0
    %1572 = vmatpush1.msra.mxu0 0.0
    %1573 = vmatprep.subr.mxu0 0.0
    %1574 = vmatpush1.msra.mxu0 0.0
    %1575 = vmatprep.subr.mxu0 0.0
    %1576 = vmatpush1.msra.mxu0 0.0
    %1577 = vmatprep.subr.mxu0 0.0
    %1578 = vmatpush1.msra.mxu0 0.0
    %1579 = vmatprep.subr.mxu0 0.0
    %1580 = vmatpush1.msra.mxu0 0.0
    %1581 = vmatprep.subr.mxu0 0.0
    %1582 = vmatpush1.msra.mxu0 0.0
    %1583 = vmatprep.subr.mxu0 0.0
    %1584 = vmatpush1.msra.mxu0 0.0
    %1585 = vmatprep.subr.mxu0 0.0
    %1586 = vmatpush1.msra.mxu0 0.0
    %1587 = vmatprep.subr.mxu0 0.0
    %1588 = vmatpush1.msra.mxu0 0.0
    %1589 = vmatprep.subr.mxu0 0.0
    %1590 = vmatpush1.msra.mxu0 0.0
    %1591 = vmatprep.subr.mxu0 0.0
    %1592 = vmatpush1.msra.mxu0 0.0
    %1593 = vmatprep.subr.mxu0 0.0
    %1594 = vmatpush1.msra.mxu0 0.0
    %1595 = vmatprep.subr.mxu0 0.0
    %1596 = vmatpush1.msra.mxu0 0.0
    %1597 = vmatprep.subr.mxu0 0.0
    %1598 = vmatpush1.msra.mxu0 0.0
    %1599 = vmatprep.subr.mxu0 0.0
    %1600 = vmatpush1.msra.mxu0 0.0
    %1601 = vmatprep.subr.mxu0 0.0
    %1602 = vmatpush1.msra.mxu0 0.0
    %1603 = vmatprep.subr.mxu0 0.0
    %1604 = vmatpush1.msra.mxu0 0.0
    %1605 = vmatprep.mubr.f32.mxu0 0.0
    %v1606 = vand.u32 %v1285, 4294901760
    %v1607 = vsub.f32 %v1285, %v1606
    %v1608 = vand.u32 %v1607, 4294901760
    %1609 = vmatmul.mubr.f32.gmra.mrb[0].mxu0 %v1608
    %v1610 = vpop.f32.mrb[0].mxu0
    %v1611 = vadd.f32 %v1534, %v1610
    %v1612 = vpop.f32.mrb[0].mxu0
    %1613 = vdwg.mxu0
    %1614 = vmatprep.subr.mxu0 0.0
    %v1615 = vand.u32 %v1280, 4294901760
    %v1616 = vsub.f32 %v1280, %v1615
    %v1617 = vand.u32 %v1616, 4294901760
    %1618 = vmatpush1.msra.mxu0 %v1617
    %1619 = vmatprep.subr.mxu0 0.0
    %v1620 = vand.u32 %v1281, 4294901760
    %v1621 = vsub.f32 %v1281, %v1620
    %v1622 = vand.u32 %v1621, 4294901760
    %1623 = vmatpush1.msra.mxu0 %v1622
    %1624 = vmatprep.subr.mxu0 0.0
    %v1625 = vand.u32 %v1282, 4294901760
    %v1626 = vsub.f32 %v1282, %v1625
    %v1627 = vand.u32 %v1626, 4294901760
    %1628 = vmatpush1.msra.mxu0 %v1627
    %1629 = vmatprep.subr.mxu0 0.0
    %v1630 = vand.u32 %v1283, 4294901760
    %v1631 = vsub.f32 %v1283, %v1630
    %v1632 = vand.u32 %v1631, 4294901760
    %1633 = vmatpush1.msra.mxu0 %v1632
    %1634 = vmatprep.subr.mxu0 0.0
    %1635 = vmatpush1.msra.mxu0 0.0
    %1636 = vmatprep.subr.mxu0 0.0
    %1637 = vmatpush1.msra.mxu0 0.0
    %1638 = vmatprep.subr.mxu0 0.0
    %1639 = vmatpush1.msra.mxu0 0.0
    %1640 = vmatprep.subr.mxu0 0.0
    %1641 = vmatpush1.msra.mxu0 0.0
    %1642 = vmatprep.subr.mxu0 0.0
    %1643 = vmatpush1.msra.mxu0 0.0
    %1644 = vmatprep.subr.mxu0 0.0
    %1645 = vmatpush1.msra.mxu0 0.0
    %1646 = vmatprep.subr.mxu0 0.0
    %1647 = vmatpush1.msra.mxu0 0.0
    %1648 = vmatprep.subr.mxu0 0.0
    %1649 = vmatpush1.msra.mxu0 0.0
    %1650 = vmatprep.subr.mxu0 0.0
    %1651 = vmatpush1.msra.mxu0 0.0
    %1652 = vmatprep.subr.mxu0 0.0
    %1653 = vmatpush1.msra.mxu0 0.0
    %1654 = vmatprep.subr.mxu0 0.0
    %1655 = vmatpush1.msra.mxu0 0.0
    %1656 = vmatprep.subr.mxu0 0.0
    %1657 = vmatpush1.msra.mxu0 0.0
    %1658 = vmatprep.subr.mxu0 0.0
    %1659 = vmatpush1.msra.mxu0 0.0
    %1660 = vmatprep.subr.mxu0 0.0
    %1661 = vmatpush1.msra.mxu0 0.0
    %1662 = vmatprep.subr.mxu0 0.0
    %1663 = vmatpush1.msra.mxu0 0.0
    %1664 = vmatprep.subr.mxu0 0.0
    %1665 = vmatpush1.msra.mxu0 0.0
    %1666 = vmatprep.subr.mxu0 0.0
    %1667 = vmatpush1.msra.mxu0 0.0
    %1668 = vmatprep.subr.mxu0 0.0
    %1669 = vmatpush1.msra.mxu0 0.0
    %1670 = vmatprep.subr.mxu0 0.0
    %1671 = vmatpush1.msra.mxu0 0.0
    %1672 = vmatprep.subr.mxu0 0.0
    %1673 = vmatpush1.msra.mxu0 0.0
    %1674 = vmatprep.subr.mxu0 0.0
    %1675 = vmatpush1.msra.mxu0 0.0
    %1676 = vmatprep.subr.mxu0 0.0
    %1677 = vmatpush1.msra.mxu0 0.0
    %1678 = vmatprep.subr.mxu0 0.0
    %1679 = vmatpush1.msra.mxu0 0.0
    %1680 = vmatprep.subr.mxu0 0.0
    %1681 = vmatpush1.msra.mxu0 0.0
    %1682 = vmatprep.subr.mxu0 0.0
    %1683 = vmatpush1.msra.mxu0 0.0
    %1684 = vmatprep.subr.mxu0 0.0
    %1685 = vmatpush1.msra.mxu0 0.0
    %1686 = vmatprep.subr.mxu0 0.0
    %1687 = vmatpush1.msra.mxu0 0.0
    %1688 = vmatprep.subr.mxu0 0.0
    %1689 = vmatpush1.msra.mxu0 0.0
    %1690 = vmatprep.mubr.f32.mxu0 0.0
    %v1691 = vand.u32 %v1285, 4294901760
    %1692 = vmatmul.mubr.f32.gmra.mrb[0].mxu0 %v1691
    %v1693 = vpop.f32.mrb[0].mxu0
    %v1694 = vadd.f32 %v1611, %v1693
    %v1695 = vpop.f32.mrb[0].mxu0
    %1696 = vdwg.mxu0
    %1697 = vmatprep.subr.mxu0 0.0
    %v1698 = vand.u32 %v1280, 4294901760
    %1699 = vmatpush1.msra.mxu0 %v1698
    %1700 = vmatprep.subr.mxu0 0.0
    %v1701 = vand.u32 %v1281, 4294901760
    %1702 = vmatpush1.msra.mxu0 %v1701
    %1703 = vmatprep.subr.mxu0 0.0
    %v1704 = vand.u32 %v1282, 4294901760
    %1705 = vmatpush1.msra.mxu0 %v1704
    %1706 = vmatprep.subr.mxu0 0.0
    %v1707 = vand.u32 %v1283, 4294901760
    %1708 = vmatpush1.msra.mxu0 %v1707
    %1709 = vmatprep.subr.mxu0 0.0
    %1710 = vmatpush1.msra.mxu0 0.0
    %1711 = vmatprep.subr.mxu0 0.0
    %1712 = vmatpush1.msra.mxu0 0.0
    %1713 = vmatprep.subr.mxu0 0.0
    %1714 = vmatpush1.msra.mxu0 0.0
    %1715 = vmatprep.subr.mxu0 0.0
    %1716 = vmatpush1.msra.mxu0 0.0
    %1717 = vmatprep.subr.mxu0 0.0
    %1718 = vmatpush1.msra.mxu0 0.0
    %1719 = vmatprep.subr.mxu0 0.0
    %1720 = vmatpush1.msra.mxu0 0.0
    %1721 = vmatprep.subr.mxu0 0.0
    %1722 = vmatpush1.msra.mxu0 0.0
    %1723 = vmatprep.subr.mxu0 0.0
    %1724 = vmatpush1.msra.mxu0 0.0
    %1725 = vmatprep.subr.mxu0 0.0
    %1726 = vmatpush1.msra.mxu0 0.0
    %1727 = vmatprep.subr.mxu0 0.0
    %1728 = vmatpush1.msra.mxu0 0.0
    %1729 = vmatprep.subr.mxu0 0.0
    %1730 = vmatpush1.msra.mxu0 0.0
    %1731 = vmatprep.subr.mxu0 0.0
    %1732 = vmatpush1.msra.mxu0 0.0
    %1733 = vmatprep.subr.mxu0 0.0
    %1734 = vmatpush1.msra.mxu0 0.0
    %1735 = vmatprep.subr.mxu0 0.0
    %1736 = vmatpush1.msra.mxu0 0.0
    %1737 = vmatprep.subr.mxu0 0.0
    %1738 = vmatpush1.msra.mxu0 0.0
    %1739 = vmatprep.subr.mxu0 0.0
    %1740 = vmatpush1.msra.mxu0 0.0
    %1741 = vmatprep.subr.mxu0 0.0
    %1742 = vmatpush1.msra.mxu0 0.0
    %1743 = vmatprep.subr.mxu0 0.0
    %1744 = vmatpush1.msra.mxu0 0.0
    %1745 = vmatprep.subr.mxu0 0.0
    %1746 = vmatpush1.msra.mxu0 0.0
    %1747 = vmatprep.subr.mxu0 0.0
    %1748 = vmatpush1.msra.mxu0 0.0
    %1749 = vmatprep.subr.mxu0 0.0
    %1750 = vmatpush1.msra.mxu0 0.0
    %1751 = vmatprep.subr.mxu0 0.0
    %1752 = vmatpush1.msra.mxu0 0.0
    %1753 = vmatprep.subr.mxu0 0.0
    %1754 = vmatpush1.msra.mxu0 0.0
    %1755 = vmatprep.subr.mxu0 0.0
    %1756 = vmatpush1.msra.mxu0 0.0
    %1757 = vmatprep.subr.mxu0 0.0
    %1758 = vmatpush1.msra.mxu0 0.0
    %1759 = vmatprep.subr.mxu0 0.0
    %1760 = vmatpush1.msra.mxu0 0.0
    %1761 = vmatprep.subr.mxu0 0.0
    %1762 = vmatpush1.msra.mxu0 0.0
    %1763 = vmatprep.subr.mxu0 0.0
    %1764 = vmatpush1.msra.mxu0 0.0
    %1765 = vmatprep.mubr.f32.mxu0 0.0
    %v1766 = vand.u32 %v1285, 4294901760
    %1767 = vmatmul.mubr.f32.gmra.mrb[0].mxu0 %v1766
    %v1768 = vpop.f32.mrb[0].mxu0
    %v1769 = vadd.f32 %v1694, %v1768
    %v1770 = vpop.f32.mrb[0].mxu0
    %1771 = vdwg.mxu0
    %v1772 = vadd.f32 %v1278, %v1769
    %v1773 = vxor.u32 %v1772, 2147483648
    %v1774 = vmul.f32 %v1773, 1.442695
    %v1775 = vpow.pop %v1774
    %v1776 = vadd.f32 %v1775, 1.0
    %v1777 = vrcp.pop %v1776
    %v1778 = vmul.f32 1.0, %v1777
    %v1779 = vtanh.pop %v1772
    %v1780 = vld [vmem:[#allocation6] sm:$0x3]
    %1782 = vrot.lane.b32.xlu0 %v1780, 32
    %v1783 = vpop.permute.xlu0 %1782
    %v1785 = vmul.f32 %v1778, %v1783
    %1787 = vrot.lane.b32.xlu0 %v1779, 64
    %v1788 = vpop.permute.xlu0 %1787
    %v1790 = vmul.f32 %v1778, %v1788
    %1792 = vrot.lane.b32.xlu0 %v1790, 32
    %v1793 = vpop.permute.xlu0 %1792
    %v1795 = vadd.f32 %v1785, %v1793
    %v1796 = vtanh.pop %v1795
    %1798 = vrot.lane.b32.xlu0 %v1796, 64
    %v1799 = vpop.permute.xlu0 %1798
    %v1801 = vmul.f32 %v1778, %v1799
    %1803 = vrot.lane.b32.xlu0 %v1795, 96
    %v1804 = vpop.permute.xlu0 %1803
    %1806 = vst.msk [vmem:[#allocation6] sm:$0x3] %vm189, %v1804
    %1808 = vrot.lane.b32.xlu0 %v1801, 32
    %v1809 = vpop.permute.xlu0 %1808
    %1811 = vst.msk [vmem:[#allocation5] sm:$0x3] %vm189, %v1809
    %1812 = vst.msk [vmem:[#allocation4 + $0x2] sm:$0x3] %vm189, %v1809
    %v1813 = vld [vmem:[#allocation3 + $0x4] sm:$0x3]
    %v1814 = vld [vmem:[#allocation5] sm:$0x3]
    %v1815 = vld [vmem:[#allocation16] sm:$0xff]
    %v1816 = vld [vmem:[#allocation16 + $0x8] sm:$0xff]
    %v1817 = vld [vmem:[#allocation16 + $0x10] sm:$0xff]
    %v1818 = vld [vmem:[#allocation16 + $0x18] sm:$0xff]
    %v1820 = vsel %vm204, %v1814, 0
    %1822 = vmatprep.subr.mxu0 0.0
    %v1823 = vand.u32 %v1815, 4294901760
    %1824 = vmatpush1.msra.mxu0 %v1823
    %1825 = vmatprep.subr.mxu0 0.0
    %v1826 = vand.u32 %v1816, 4294901760
    %1827 = vmatpush1.msra.mxu0 %v1826
    %1828 = vmatprep.subr.mxu0 0.0
    %v1829 = vand.u32 %v1817, 4294901760
    %1830 = vmatpush1.msra.mxu0 %v1829
    %1831 = vmatprep.subr.mxu0 0.0
    %v1832 = vand.u32 %v1818, 4294901760
    %1833 = vmatpush1.msra.mxu0 %v1832
    %1834 = vmatprep.subr.mxu0 0.0
    %1835 = vmatpush1.msra.mxu0 0.0
    %1836 = vmatprep.subr.mxu0 0.0
    %1837 = vmatpush1.msra.mxu0 0.0
    %1838 = vmatprep.subr.mxu0 0.0
    %1839 = vmatpush1.msra.mxu0 0.0
    %1840 = vmatprep.subr.mxu0 0.0
    %1841 = vmatpush1.msra.mxu0 0.0
    %1842 = vmatprep.subr.mxu0 0.0
    %1843 = vmatpush1.msra.mxu0 0.0
    %1844 = vmatprep.subr.mxu0 0.0
    %1845 = vmatpush1.msra.mxu0 0.0
    %1846 = vmatprep.subr.mxu0 0.0
    %1847 = vmatpush1.msra.mxu0 0.0
    %1848 = vmatprep.subr.mxu0 0.0
    %1849 = vmatpush1.msra.mxu0 0.0
    %1850 = vmatprep.subr.mxu0 0.0
    %1851 = vmatpush1.msra.mxu0 0.0
    %1852 = vmatprep.subr.mxu0 0.0
    %1853 = vmatpush1.msra.mxu0 0.0
    %1854 = vmatprep.subr.mxu0 0.0
    %1855 = vmatpush1.msra.mxu0 0.0
    %1856 = vmatprep.subr.mxu0 0.0
    %1857 = vmatpush1.msra.mxu0 0.0
    %1858 = vmatprep.subr.mxu0 0.0
    %1859 = vmatpush1.msra.mxu0 0.0
    %1860 = vmatprep.subr.mxu0 0.0
    %1861 = vmatpush1.msra.mxu0 0.0
    %1862 = vmatprep.subr.mxu0 0.0
    %1863 = vmatpush1.msra.mxu0 0.0
    %1864 = vmatprep.subr.mxu0 0.0
    %1865 = vmatpush1.msra.mxu0 0.0
    %1866 = vmatprep.subr.mxu0 0.0
    %1867 = vmatpush1.msra.mxu0 0.0
    %1868 = vmatprep.subr.mxu0 0.0
    %1869 = vmatpush1.msra.mxu0 0.0
    %1870 = vmatprep.subr.mxu0 0.0
    %1871 = vmatpush1.msra.mxu0 0.0
    %1872 = vmatprep.subr.mxu0 0.0
    %1873 = vmatpush1.msra.mxu0 0.0
    %1874 = vmatprep.subr.mxu0 0.0
    %1875 = vmatpush1.msra.mxu0 0.0
    %1876 = vmatprep.subr.mxu0 0.0
    %1877 = vmatpush1.msra.mxu0 0.0
    %1878 = vmatprep.subr.mxu0 0.0
    %1879 = vmatpush1.msra.mxu0 0.0
    %1880 = vmatprep.subr.mxu0 0.0
    %1881 = vmatpush1.msra.mxu0 0.0
    %1882 = vmatprep.subr.mxu0 0.0
    %1883 = vmatpush1.msra.mxu0 0.0
    %1884 = vmatprep.subr.mxu0 0.0
    %1885 = vmatpush1.msra.mxu0 0.0
    %1886 = vmatprep.subr.mxu0 0.0
    %1887 = vmatpush1.msra.mxu0 0.0
    %1888 = vmatprep.subr.mxu0 0.0
    %1889 = vmatpush1.msra.mxu0 0.0
    %1890 = vmatprep.mubr.f32.mxu0 0.0
    %v1891 = vand.u32 %v1820, 4294901760
    %v1892 = vsub.f32 %v1820, %v1891
    %v1893 = vand.u32 %v1892, 4294901760
    %v1894 = vsub.f32 %v1892, %v1893
    %v1895 = vand.u32 %v1894, 4294901760
    %1896 = vmatmul.mubr.f32.gmra.mrb[0].mxu0 %v1895
    %v1897 = vpop.f32.mrb[0].mxu0
    %v1898 = vadd.f32 0.0, %v1897
    %v1899 = vpop.f32.mrb[0].mxu0
    %1900 = vdwg.mxu0
    %1901 = vmatprep.subr.mxu0 0.0
    %v1902 = vand.u32 %v1815, 4294901760
    %v1903 = vsub.f32 %v1815, %v1902
    %v1904 = vand.u32 %v1903, 4294901760
    %v1905 = vsub.f32 %v1903, %v1904
    %v1906 = vand.u32 %v1905, 4294901760
    %1907 = vmatpush1.msra.mxu0 %v1906
    %1908 = vmatprep.subr.mxu0 0.0
    %v1909 = vand.u32 %v1816, 4294901760
    %v1910 = vsub.f32 %v1816, %v1909
    %v1911 = vand.u32 %v1910, 4294901760
    %v1912 = vsub.f32 %v1910, %v1911
    %v1913 = vand.u32 %v1912, 4294901760
    %1914 = vmatpush1.msra.mxu0 %v1913
    %1915 = vmatprep.subr.mxu0 0.0
    %v1916 = vand.u32 %v1817, 4294901760
    %v1917 = vsub.f32 %v1817, %v1916
    %v1918 = vand.u32 %v1917, 4294901760
    %v1919 = vsub.f32 %v1917, %v1918
    %v1920 = vand.u32 %v1919, 4294901760
    %1921 = vmatpush1.msra.mxu0 %v1920
    %1922 = vmatprep.subr.mxu0 0.0
    %v1923 = vand.u32 %v1818, 4294901760
    %v1924 = vsub.f32 %v1818, %v1923
    %v1925 = vand.u32 %v1924, 4294901760
    %v1926 = vsub.f32 %v1924, %v1925
    %v1927 = vand.u32 %v1926, 4294901760
    %1928 = vmatpush1.msra.mxu0 %v1927
    %1929 = vmatprep.subr.mxu0 0.0
    %1930 = vmatpush1.msra.mxu0 0.0
    %1931 = vmatprep.subr.mxu0 0.0
    %1932 = vmatpush1.msra.mxu0 0.0
    %1933 = vmatprep.subr.mxu0 0.0
    %1934 = vmatpush1.msra.mxu0 0.0
    %1935 = vmatprep.subr.mxu0 0.0
    %1936 = vmatpush1.msra.mxu0 0.0
    %1937 = vmatprep.subr.mxu0 0.0
    %1938 = vmatpush1.msra.mxu0 0.0
    %1939 = vmatprep.subr.mxu0 0.0
    %1940 = vmatpush1.msra.mxu0 0.0
    %1941 = vmatprep.subr.mxu0 0.0
    %1942 = vmatpush1.msra.mxu0 0.0
    %1943 = vmatprep.subr.mxu0 0.0
    %1944 = vmatpush1.msra.mxu0 0.0
    %1945 = vmatprep.subr.mxu0 0.0
    %1946 = vmatpush1.msra.mxu0 0.0
    %1947 = vmatprep.subr.mxu0 0.0
    %1948 = vmatpush1.msra.mxu0 0.0
    %1949 = vmatprep.subr.mxu0 0.0
    %1950 = vmatpush1.msra.mxu0 0.0
    %1951 = vmatprep.subr.mxu0 0.0
    %1952 = vmatpush1.msra.mxu0 0.0
    %1953 = vmatprep.subr.mxu0 0.0
    %1954 = vmatpush1.msra.mxu0 0.0
    %1955 = vmatprep.subr.mxu0 0.0
    %1956 = vmatpush1.msra.mxu0 0.0
    %1957 = vmatprep.subr.mxu0 0.0
    %1958 = vmatpush1.msra.mxu0 0.0
    %1959 = vmatprep.subr.mxu0 0.0
    %1960 = vmatpush1.msra.mxu0 0.0
    %1961 = vmatprep.subr.mxu0 0.0
    %1962 = vmatpush1.msra.mxu0 0.0
    %1963 = vmatprep.subr.mxu0 0.0
    %1964 = vmatpush1.msra.mxu0 0.0
    %1965 = vmatprep.subr.mxu0 0.0
    %1966 = vmatpush1.msra.mxu0 0.0
    %1967 = vmatprep.subr.mxu0 0.0
    %1968 = vmatpush1.msra.mxu0 0.0
    %1969 = vmatprep.subr.mxu0 0.0
    %1970 = vmatpush1.msra.mxu0 0.0
    %1971 = vmatprep.subr.mxu0 0.0
    %1972 = vmatpush1.msra.mxu0 0.0
    %1973 = vmatprep.subr.mxu0 0.0
    %1974 = vmatpush1.msra.mxu0 0.0
    %1975 = vmatprep.subr.mxu0 0.0
    %1976 = vmatpush1.msra.mxu0 0.0
    %1977 = vmatprep.subr.mxu0 0.0
    %1978 = vmatpush1.msra.mxu0 0.0
    %1979 = vmatprep.subr.mxu0 0.0
    %1980 = vmatpush1.msra.mxu0 0.0
    %1981 = vmatprep.subr.mxu0 0.0
    %1982 = vmatpush1.msra.mxu0 0.0
    %1983 = vmatprep.subr.mxu0 0.0
    %1984 = vmatpush1.msra.mxu0 0.0
    %1985 = vmatprep.mubr.f32.mxu0 0.0
    %v1986 = vand.u32 %v1820, 4294901760
    %1987 = vmatmul.mubr.f32.gmra.mrb[0].mxu0 %v1986
    %v1988 = vpop.f32.mrb[0].mxu0
    %v1989 = vadd.f32 %v1898, %v1988
    %v1990 = vpop.f32.mrb[0].mxu0
    %1991 = vdwg.mxu0
    %1992 = vmatprep.subr.mxu0 0.0
    %v1993 = vand.u32 %v1815, 4294901760
    %v1994 = vsub.f32 %v1815, %v1993
    %1995 = vmatpush1.msra.mxu0 %v1994
    %1996 = vmatprep.subr.mxu0 0.0
    %v1997 = vand.u32 %v1816, 4294901760
    %v1998 = vsub.f32 %v1816, %v1997
    %1999 = vmatpush1.msra.mxu0 %v1998
    %2000 = vmatprep.subr.mxu0 0.0
    %v2001 = vand.u32 %v1817, 4294901760
    %v2002 = vsub.f32 %v1817, %v2001
    %2003 = vmatpush1.msra.mxu0 %v2002
    %2004 = vmatprep.subr.mxu0 0.0
    %v2005 = vand.u32 %v1818, 4294901760
    %v2006 = vsub.f32 %v1818, %v2005
    %2007 = vmatpush1.msra.mxu0 %v2006
    %2008 = vmatprep.subr.mxu0 0.0
    %2009 = vmatpush1.msra.mxu0 0.0
    %2010 = vmatprep.subr.mxu0 0.0
    %2011 = vmatpush1.msra.mxu0 0.0
    %2012 = vmatprep.subr.mxu0 0.0
    %2013 = vmatpush1.msra.mxu0 0.0
    %2014 = vmatprep.subr.mxu0 0.0
    %2015 = vmatpush1.msra.mxu0 0.0
    %2016 = vmatprep.subr.mxu0 0.0
    %2017 = vmatpush1.msra.mxu0 0.0
    %2018 = vmatprep.subr.mxu0 0.0
    %2019 = vmatpush1.msra.mxu0 0.0
    %2020 = vmatprep.subr.mxu0 0.0
    %2021 = vmatpush1.msra.mxu0 0.0
    %2022 = vmatprep.subr.mxu0 0.0
    %2023 = vmatpush1.msra.mxu0 0.0
    %2024 = vmatprep.subr.mxu0 0.0
    %2025 = vmatpush1.msra.mxu0 0.0
    %2026 = vmatprep.subr.mxu0 0.0
    %2027 = vmatpush1.msra.mxu0 0.0
    %2028 = vmatprep.subr.mxu0 0.0
    %2029 = vmatpush1.msra.mxu0 0.0
    %2030 = vmatprep.subr.mxu0 0.0
    %2031 = vmatpush1.msra.mxu0 0.0
    %2032 = vmatprep.subr.mxu0 0.0
    %2033 = vmatpush1.msra.mxu0 0.0
    %2034 = vmatprep.subr.mxu0 0.0
    %2035 = vmatpush1.msra.mxu0 0.0
    %2036 = vmatprep.subr.mxu0 0.0
    %2037 = vmatpush1.msra.mxu0 0.0
    %2038 = vmatprep.subr.mxu0 0.0
    %2039 = vmatpush1.msra.mxu0 0.0
    %2040 = vmatprep.subr.mxu0 0.0
    %2041 = vmatpush1.msra.mxu0 0.0
    %2042 = vmatprep.subr.mxu0 0.0
    %2043 = vmatpush1.msra.mxu0 0.0
    %2044 = vmatprep.subr.mxu0 0.0
    %2045 = vmatpush1.msra.mxu0 0.0
    %2046 = vmatprep.subr.mxu0 0.0
    %2047 = vmatpush1.msra.mxu0 0.0
    %2048 = vmatprep.subr.mxu0 0.0
    %2049 = vmatpush1.msra.mxu0 0.0
    %2050 = vmatprep.subr.mxu0 0.0
    %2051 = vmatpush1.msra.mxu0 0.0
    %2052 = vmatprep.subr.mxu0 0.0
    %2053 = vmatpush1.msra.mxu0 0.0
    %2054 = vmatprep.subr.mxu0 0.0
    %2055 = vmatpush1.msra.mxu0 0.0
    %2056 = vmatprep.subr.mxu0 0.0
    %2057 = vmatpush1.msra.mxu0 0.0
    %2058 = vmatprep.subr.mxu0 0.0
    %2059 = vmatpush1.msra.mxu0 0.0
    %2060 = vmatprep.subr.mxu0 0.0
    %2061 = vmatpush1.msra.mxu0 0.0
    %2062 = vmatprep.subr.mxu0 0.0
    %2063 = vmatpush1.msra.mxu0 0.0
    %2064 = vmatprep.mubr.f32.mxu0 0.0
    %v2065 = vand.u32 %v1820, 4294901760
    %v2066 = vsub.f32 %v1820, %v2065
    %2067 = vmatmul.mubr.f32.gmra.mrb[0].mxu0 %v2066
    %v2068 = vpop.f32.mrb[0].mxu0
    %v2069 = vadd.f32 %v1989, %v2068
    %v2070 = vpop.f32.mrb[0].mxu0
    %2071 = vdwg.mxu0
    %2072 = vmatprep.subr.mxu0 0.0
    %v2073 = vand.u32 %v1815, 4294901760
    %2074 = vmatpush1.msra.mxu0 %v2073
    %2075 = vmatprep.subr.mxu0 0.0
    %v2076 = vand.u32 %v1816, 4294901760
    %2077 = vmatpush1.msra.mxu0 %v2076
    %2078 = vmatprep.subr.mxu0 0.0
    %v2079 = vand.u32 %v1817, 4294901760
    %2080 = vmatpush1.msra.mxu0 %v2079
    %2081 = vmatprep.subr.mxu0 0.0
    %v2082 = vand.u32 %v1818, 4294901760
    %2083 = vmatpush1.msra.mxu0 %v2082
    %2084 = vmatprep.subr.mxu0 0.0
    %2085 = vmatpush1.msra.mxu0 0.0
    %2086 = vmatprep.subr.mxu0 0.0
    %2087 = vmatpush1.msra.mxu0 0.0
    %2088 = vmatprep.subr.mxu0 0.0
    %2089 = vmatpush1.msra.mxu0 0.0
    %2090 = vmatprep.subr.mxu0 0.0
    %2091 = vmatpush1.msra.mxu0 0.0
    %2092 = vmatprep.subr.mxu0 0.0
    %2093 = vmatpush1.msra.mxu0 0.0
    %2094 = vmatprep.subr.mxu0 0.0
    %2095 = vmatpush1.msra.mxu0 0.0
    %2096 = vmatprep.subr.mxu0 0.0
    %2097 = vmatpush1.msra.mxu0 0.0
    %2098 = vmatprep.subr.mxu0 0.0
    %2099 = vmatpush1.msra.mxu0 0.0
    %2100 = vmatprep.subr.mxu0 0.0
    %2101 = vmatpush1.msra.mxu0 0.0
    %2102 = vmatprep.subr.mxu0 0.0
    %2103 = vmatpush1.msra.mxu0 0.0
    %2104 = vmatprep.subr.mxu0 0.0
    %2105 = vmatpush1.msra.mxu0 0.0
    %2106 = vmatprep.subr.mxu0 0.0
    %2107 = vmatpush1.msra.mxu0 0.0
    %2108 = vmatprep.subr.mxu0 0.0
    %2109 = vmatpush1.msra.mxu0 0.0
    %2110 = vmatprep.subr.mxu0 0.0
    %2111 = vmatpush1.msra.mxu0 0.0
    %2112 = vmatprep.subr.mxu0 0.0
    %2113 = vmatpush1.msra.mxu0 0.0
    %2114 = vmatprep.subr.mxu0 0.0
    %2115 = vmatpush1.msra.mxu0 0.0
    %2116 = vmatprep.subr.mxu0 0.0
    %2117 = vmatpush1.msra.mxu0 0.0
    %2118 = vmatprep.subr.mxu0 0.0
    %2119 = vmatpush1.msra.mxu0 0.0
    %2120 = vmatprep.subr.mxu0 0.0
    %2121 = vmatpush1.msra.mxu0 0.0
    %2122 = vmatprep.subr.mxu0 0.0
    %2123 = vmatpush1.msra.mxu0 0.0
    %2124 = vmatprep.subr.mxu0 0.0
    %2125 = vmatpush1.msra.mxu0 0.0
    %2126 = vmatprep.subr.mxu0 0.0
    %2127 = vmatpush1.msra.mxu0 0.0
    %2128 = vmatprep.subr.mxu0 0.0
    %2129 = vmatpush1.msra.mxu0 0.0
    %2130 = vmatprep.subr.mxu0 0.0
    %2131 = vmatpush1.msra.mxu0 0.0
    %2132 = vmatprep.subr.mxu0 0.0
    %2133 = vmatpush1.msra.mxu0 0.0
    %2134 = vmatprep.subr.mxu0 0.0
    %2135 = vmatpush1.msra.mxu0 0.0
    %2136 = vmatprep.subr.mxu0 0.0
    %2137 = vmatpush1.msra.mxu0 0.0
    %2138 = vmatprep.subr.mxu0 0.0
    %2139 = vmatpush1.msra.mxu0 0.0
    %2140 = vmatprep.mubr.f32.mxu0 0.0
    %v2141 = vand.u32 %v1820, 4294901760
    %v2142 = vsub.f32 %v1820, %v2141
    %v2143 = vand.u32 %v2142, 4294901760
    %2144 = vmatmul.mubr.f32.gmra.mrb[0].mxu0 %v2143
    %v2145 = vpop.f32.mrb[0].mxu0
    %v2146 = vadd.f32 %v2069, %v2145
    %v2147 = vpop.f32.mrb[0].mxu0
    %2148 = vdwg.mxu0
    %2149 = vmatprep.subr.mxu0 0.0
    %v2150 = vand.u32 %v1815, 4294901760
    %v2151 = vsub.f32 %v1815, %v2150
    %v2152 = vand.u32 %v2151, 4294901760
    %2153 = vmatpush1.msra.mxu0 %v2152
    %2154 = vmatprep.subr.mxu0 0.0
    %v2155 = vand.u32 %v1816, 4294901760
    %v2156 = vsub.f32 %v1816, %v2155
    %v2157 = vand.u32 %v2156, 4294901760
    %2158 = vmatpush1.msra.mxu0 %v2157
    %2159 = vmatprep.subr.mxu0 0.0
    %v2160 = vand.u32 %v1817, 4294901760
    %v2161 = vsub.f32 %v1817, %v2160
    %v2162 = vand.u32 %v2161, 4294901760
    %2163 = vmatpush1.msra.mxu0 %v2162
    %2164 = vmatprep.subr.mxu0 0.0
    %v2165 = vand.u32 %v1818, 4294901760
    %v2166 = vsub.f32 %v1818, %v2165
    %v2167 = vand.u32 %v2166, 4294901760
    %2168 = vmatpush1.msra.mxu0 %v2167
    %2169 = vmatprep.subr.mxu0 0.0
    %2170 = vmatpush1.msra.mxu0 0.0
    %2171 = vmatprep.subr.mxu0 0.0
    %2172 = vmatpush1.msra.mxu0 0.0
    %2173 = vmatprep.subr.mxu0 0.0
    %2174 = vmatpush1.msra.mxu0 0.0
    %2175 = vmatprep.subr.mxu0 0.0
    %2176 = vmatpush1.msra.mxu0 0.0
    %2177 = vmatprep.subr.mxu0 0.0
    %2178 = vmatpush1.msra.mxu0 0.0
    %2179 = vmatprep.subr.mxu0 0.0
    %2180 = vmatpush1.msra.mxu0 0.0
    %2181 = vmatprep.subr.mxu0 0.0
    %2182 = vmatpush1.msra.mxu0 0.0
    %2183 = vmatprep.subr.mxu0 0.0
    %2184 = vmatpush1.msra.mxu0 0.0
    %2185 = vmatprep.subr.mxu0 0.0
    %2186 = vmatpush1.msra.mxu0 0.0
    %2187 = vmatprep.subr.mxu0 0.0
    %2188 = vmatpush1.msra.mxu0 0.0
    %2189 = vmatprep.subr.mxu0 0.0
    %2190 = vmatpush1.msra.mxu0 0.0
    %2191 = vmatprep.subr.mxu0 0.0
    %2192 = vmatpush1.msra.mxu0 0.0
    %2193 = vmatprep.subr.mxu0 0.0
    %2194 = vmatpush1.msra.mxu0 0.0
    %2195 = vmatprep.subr.mxu0 0.0
    %2196 = vmatpush1.msra.mxu0 0.0
    %2197 = vmatprep.subr.mxu0 0.0
    %2198 = vmatpush1.msra.mxu0 0.0
    %2199 = vmatprep.subr.mxu0 0.0
    %2200 = vmatpush1.msra.mxu0 0.0
    %2201 = vmatprep.subr.mxu0 0.0
    %2202 = vmatpush1.msra.mxu0 0.0
    %2203 = vmatprep.subr.mxu0 0.0
    %2204 = vmatpush1.msra.mxu0 0.0
    %2205 = vmatprep.subr.mxu0 0.0
    %2206 = vmatpush1.msra.mxu0 0.0
    %2207 = vmatprep.subr.mxu0 0.0
    %2208 = vmatpush1.msra.mxu0 0.0
    %2209 = vmatprep.subr.mxu0 0.0
    %2210 = vmatpush1.msra.mxu0 0.0
    %2211 = vmatprep.subr.mxu0 0.0
    %2212 = vmatpush1.msra.mxu0 0.0
    %2213 = vmatprep.subr.mxu0 0.0
    %2214 = vmatpush1.msra.mxu0 0.0
    %2215 = vmatprep.subr.mxu0 0.0
    %2216 = vmatpush1.msra.mxu0 0.0
    %2217 = vmatprep.subr.mxu0 0.0
    %2218 = vmatpush1.msra.mxu0 0.0
    %2219 = vmatprep.subr.mxu0 0.0
    %2220 = vmatpush1.msra.mxu0 0.0
    %2221 = vmatprep.subr.mxu0 0.0
    %2222 = vmatpush1.msra.mxu0 0.0
    %2223 = vmatprep.subr.mxu0 0.0
    %2224 = vmatpush1.msra.mxu0 0.0
    %2225 = vmatprep.mubr.f32.mxu0 0.0
    %v2226 = vand.u32 %v1820, 4294901760
    %2227 = vmatmul.mubr.f32.gmra.mrb[0].mxu0 %v2226
    %v2228 = vpop.f32.mrb[0].mxu0
    %v2229 = vadd.f32 %v2146, %v2228
    %v2230 = vpop.f32.mrb[0].mxu0
    %2231 = vdwg.mxu0
    %2232 = vmatprep.subr.mxu0 0.0
    %v2233 = vand.u32 %v1815, 4294901760
    %2234 = vmatpush1.msra.mxu0 %v2233
    %2235 = vmatprep.subr.mxu0 0.0
    %v2236 = vand.u32 %v1816, 4294901760
    %2237 = vmatpush1.msra.mxu0 %v2236
    %2238 = vmatprep.subr.mxu0 0.0
    %v2239 = vand.u32 %v1817, 4294901760
    %2240 = vmatpush1.msra.mxu0 %v2239
    %2241 = vmatprep.subr.mxu0 0.0
    %v2242 = vand.u32 %v1818, 4294901760
    %2243 = vmatpush1.msra.mxu0 %v2242
    %2244 = vmatprep.subr.mxu0 0.0
    %2245 = vmatpush1.msra.mxu0 0.0
    %2246 = vmatprep.subr.mxu0 0.0
    %2247 = vmatpush1.msra.mxu0 0.0
    %2248 = vmatprep.subr.mxu0 0.0
    %2249 = vmatpush1.msra.mxu0 0.0
    %2250 = vmatprep.subr.mxu0 0.0
    %2251 = vmatpush1.msra.mxu0 0.0
    %2252 = vmatprep.subr.mxu0 0.0
    %2253 = vmatpush1.msra.mxu0 0.0
    %2254 = vmatprep.subr.mxu0 0.0
    %2255 = vmatpush1.msra.mxu0 0.0
    %2256 = vmatprep.subr.mxu0 0.0
    %2257 = vmatpush1.msra.mxu0 0.0
    %2258 = vmatprep.subr.mxu0 0.0
    %2259 = vmatpush1.msra.mxu0 0.0
    %2260 = vmatprep.subr.mxu0 0.0
    %2261 = vmatpush1.msra.mxu0 0.0
    %2262 = vmatprep.subr.mxu0 0.0
    %2263 = vmatpush1.msra.mxu0 0.0
    %2264 = vmatprep.subr.mxu0 0.0
    %2265 = vmatpush1.msra.mxu0 0.0
    %2266 = vmatprep.subr.mxu0 0.0
    %2267 = vmatpush1.msra.mxu0 0.0
    %2268 = vmatprep.subr.mxu0 0.0
    %2269 = vmatpush1.msra.mxu0 0.0
    %2270 = vmatprep.subr.mxu0 0.0
    %2271 = vmatpush1.msra.mxu0 0.0
    %2272 = vmatprep.subr.mxu0 0.0
    %2273 = vmatpush1.msra.mxu0 0.0
    %2274 = vmatprep.subr.mxu0 0.0
    %2275 = vmatpush1.msra.mxu0 0.0
    %2276 = vmatprep.subr.mxu0 0.0
    %2277 = vmatpush1.msra.mxu0 0.0
    %2278 = vmatprep.subr.mxu0 0.0
    %2279 = vmatpush1.msra.mxu0 0.0
    %2280 = vmatprep.subr.mxu0 0.0
    %2281 = vmatpush1.msra.mxu0 0.0
    %2282 = vmatprep.subr.mxu0 0.0
    %2283 = vmatpush1.msra.mxu0 0.0
    %2284 = vmatprep.subr.mxu0 0.0
    %2285 = vmatpush1.msra.mxu0 0.0
    %2286 = vmatprep.subr.mxu0 0.0
    %2287 = vmatpush1.msra.mxu0 0.0
    %2288 = vmatprep.subr.mxu0 0.0
    %2289 = vmatpush1.msra.mxu0 0.0
    %2290 = vmatprep.subr.mxu0 0.0
    %2291 = vmatpush1.msra.mxu0 0.0
    %2292 = vmatprep.subr.mxu0 0.0
    %2293 = vmatpush1.msra.mxu0 0.0
    %2294 = vmatprep.subr.mxu0 0.0
    %2295 = vmatpush1.msra.mxu0 0.0
    %2296 = vmatprep.subr.mxu0 0.0
    %2297 = vmatpush1.msra.mxu0 0.0
    %2298 = vmatprep.subr.mxu0 0.0
    %2299 = vmatpush1.msra.mxu0 0.0
    %2300 = vmatprep.mubr.f32.mxu0 0.0
    %v2301 = vand.u32 %v1820, 4294901760
    %2302 = vmatmul.mubr.f32.gmra.mrb[0].mxu0 %v2301
    %v2303 = vpop.f32.mrb[0].mxu0
    %v2304 = vadd.f32 %v2229, %v2303
    %v2305 = vpop.f32.mrb[0].mxu0
    %2306 = vdwg.mxu0
    %v2307 = vadd.f32 %v1813, %v2304
    %v2308 = vxor.u32 %v2307, 2147483648
    %v2309 = vmul.f32 %v2308, 1.442695
    %v2310 = vpow.pop %v2309
    %v2311 = vadd.f32 %v2310, 1.0
    %v2312 = vrcp.pop %v2311
    %v2313 = vmul.f32 1.0, %v2312
    %v2314 = vtanh.pop %v2307
    %v2315 = vld [vmem:[#allocation6] sm:$0x3]
    %2317 = vrot.lane.b32.xlu0 %v2315, 32
    %v2318 = vpop.permute.xlu0 %2317
    %v2320 = vmul.f32 %v2313, %v2318
    %2322 = vrot.lane.b32.xlu0 %v2314, 64
    %v2323 = vpop.permute.xlu0 %2322
    %v2325 = vmul.f32 %v2313, %v2323
    %2327 = vrot.lane.b32.xlu0 %v2325, 32
    %v2328 = vpop.permute.xlu0 %2327
    %v2330 = vadd.f32 %v2320, %v2328
    %v2331 = vtanh.pop %v2330
    %2333 = vrot.lane.b32.xlu0 %v2331, 64
    %v2334 = vpop.permute.xlu0 %2333
    %v2336 = vmul.f32 %v2313, %v2334
    %2338 = vrot.lane.b32.xlu0 %v2330, 96
    %v2339 = vpop.permute.xlu0 %2338
    %2341 = vst.msk [vmem:[#allocation6] sm:$0x3] %vm189, %v2339
    %2343 = vrot.lane.b32.xlu0 %v2336, 32
    %v2344 = vpop.permute.xlu0 %2343
    %2346 = vst.msk [vmem:[#allocation5] sm:$0x3] %vm189, %v2344
    %2347 = vst.msk [vmem:[#allocation4 + $0x4] sm:$0x3] %vm189, %v2344
    %v2348 = vld [vmem:[#allocation3 + $0x6] sm:$0x3]
    %v2349 = vld [vmem:[#allocation5] sm:$0x3]
    %v2350 = vld [vmem:[#allocation16] sm:$0xff]
    %v2351 = vld [vmem:[#allocation16 + $0x8] sm:$0xff]
    %v2352 = vld [vmem:[#allocation16 + $0x10] sm:$0xff]
    %v2353 = vld [vmem:[#allocation16 + $0x18] sm:$0xff]
    %v2355 = vsel %vm204, %v2349, 0
    %2357 = vmatprep.subr.mxu0 0.0
    %v2358 = vand.u32 %v2350, 4294901760
    %2359 = vmatpush1.msra.mxu0 %v2358
    %2360 = vmatprep.subr.mxu0 0.0
    %v2361 = vand.u32 %v2351, 4294901760
    %2362 = vmatpush1.msra.mxu0 %v2361
    %2363 = vmatprep.subr.mxu0 0.0
    %v2364 = vand.u32 %v2352, 4294901760
    %2365 = vmatpush1.msra.mxu0 %v2364
    %2366 = vmatprep.subr.mxu0 0.0
    %v2367 = vand.u32 %v2353, 4294901760
    %2368 = vmatpush1.msra.mxu0 %v2367
    %2369 = vmatprep.subr.mxu0 0.0
    %2370 = vmatpush1.msra.mxu0 0.0
    %2371 = vmatprep.subr.mxu0 0.0
    %2372 = vmatpush1.msra.mxu0 0.0
    %2373 = vmatprep.subr.mxu0 0.0
    %2374 = vmatpush1.msra.mxu0 0.0
    %2375 = vmatprep.subr.mxu0 0.0
    %2376 = vmatpush1.msra.mxu0 0.0
    %2377 = vmatprep.subr.mxu0 0.0
    %2378 = vmatpush1.msra.mxu0 0.0
    %2379 = vmatprep.subr.mxu0 0.0
    %2380 = vmatpush1.msra.mxu0 0.0
    %2381 = vmatprep.subr.mxu0 0.0
    %2382 = vmatpush1.msra.mxu0 0.0
    %2383 = vmatprep.subr.mxu0 0.0
    %2384 = vmatpush1.msra.mxu0 0.0
    %2385 = vmatprep.subr.mxu0 0.0
    %2386 = vmatpush1.msra.mxu0 0.0
    %2387 = vmatprep.subr.mxu0 0.0
    %2388 = vmatpush1.msra.mxu0 0.0
    %2389 = vmatprep.subr.mxu0 0.0
    %2390 = vmatpush1.msra.mxu0 0.0
    %2391 = vmatprep.subr.mxu0 0.0
    %2392 = vmatpush1.msra.mxu0 0.0
    %2393 = vmatprep.subr.mxu0 0.0
    %2394 = vmatpush1.msra.mxu0 0.0
    %2395 = vmatprep.subr.mxu0 0.0
    %2396 = vmatpush1.msra.mxu0 0.0
    %2397 = vmatprep.subr.mxu0 0.0
    %2398 = vmatpush1.msra.mxu0 0.0
    %2399 = vmatprep.subr.mxu0 0.0
    %2400 = vmatpush1.msra.mxu0 0.0
    %2401 = vmatprep.subr.mxu0 0.0
    %2402 = vmatpush1.msra.mxu0 0.0
    %2403 = vmatprep.subr.mxu0 0.0
    %2404 = vmatpush1.msra.mxu0 0.0
    %2405 = vmatprep.subr.mxu0 0.0
    %2406 = vmatpush1.msra.mxu0 0.0
    %2407 = vmatprep.subr.mxu0 0.0
    %2408 = vmatpush1.msra.mxu0 0.0
    %2409 = vmatprep.subr.mxu0 0.0
    %2410 = vmatpush1.msra.mxu0 0.0
    %2411 = vmatprep.subr.mxu0 0.0
    %2412 = vmatpush1.msra.mxu0 0.0
    %2413 = vmatprep.subr.mxu0 0.0
    %2414 = vmatpush1.msra.mxu0 0.0
    %2415 = vmatprep.subr.mxu0 0.0
    %2416 = vmatpush1.msra.mxu0 0.0
    %2417 = vmatprep.subr.mxu0 0.0
    %2418 = vmatpush1.msra.mxu0 0.0
    %2419 = vmatprep.subr.mxu0 0.0
    %2420 = vmatpush1.msra.mxu0 0.0
    %2421 = vmatprep.subr.mxu0 0.0
    %2422 = vmatpush1.msra.mxu0 0.0
    %2423 = vmatprep.subr.mxu0 0.0
    %2424 = vmatpush1.msra.mxu0 0.0
    %2425 = vmatprep.mubr.f32.mxu0 0.0
    %v2426 = vand.u32 %v2355, 4294901760
    %v2427 = vsub.f32 %v2355, %v2426
    %v2428 = vand.u32 %v2427, 4294901760
    %v2429 = vsub.f32 %v2427, %v2428
    %v2430 = vand.u32 %v2429, 4294901760
    %2431 = vmatmul.mubr.f32.gmra.mrb[0].mxu0 %v2430
    %v2432 = vpop.f32.mrb[0].mxu0
    %v2433 = vadd.f32 0.0, %v2432
    %v2434 = vpop.f32.mrb[0].mxu0
    %2435 = vdwg.mxu0
    %2436 = vmatprep.subr.mxu0 0.0
    %v2437 = vand.u32 %v2350, 4294901760
    %v2438 = vsub.f32 %v2350, %v2437
    %v2439 = vand.u32 %v2438, 4294901760
    %v2440 = vsub.f32 %v2438, %v2439
    %v2441 = vand.u32 %v2440, 4294901760
    %2442 = vmatpush1.msra.mxu0 %v2441
    %2443 = vmatprep.subr.mxu0 0.0
    %v2444 = vand.u32 %v2351, 4294901760
    %v2445 = vsub.f32 %v2351, %v2444
    %v2446 = vand.u32 %v2445, 4294901760
    %v2447 = vsub.f32 %v2445, %v2446
    %v2448 = vand.u32 %v2447, 4294901760
    %2449 = vmatpush1.msra.mxu0 %v2448
    %2450 = vmatprep.subr.mxu0 0.0
    %v2451 = vand.u32 %v2352, 4294901760
    %v2452 = vsub.f32 %v2352, %v2451
    %v2453 = vand.u32 %v2452, 4294901760
    %v2454 = vsub.f32 %v2452, %v2453
    %v2455 = vand.u32 %v2454, 4294901760
    %2456 = vmatpush1.msra.mxu0 %v2455
    %2457 = vmatprep.subr.mxu0 0.0
    %v2458 = vand.u32 %v2353, 4294901760
    %v2459 = vsub.f32 %v2353, %v2458
    %v2460 = vand.u32 %v2459, 4294901760
    %v2461 = vsub.f32 %v2459, %v2460
    %v2462 = vand.u32 %v2461, 4294901760
    %2463 = vmatpush1.msra.mxu0 %v2462
    %2464 = vmatprep.subr.mxu0 0.0
    %2465 = vmatpush1.msra.mxu0 0.0
    %2466 = vmatprep.subr.mxu0 0.0
    %2467 = vmatpush1.msra.mxu0 0.0
    %2468 = vmatprep.subr.mxu0 0.0
    %2469 = vmatpush1.msra.mxu0 0.0
    %2470 = vmatprep.subr.mxu0 0.0
    %2471 = vmatpush1.msra.mxu0 0.0
    %2472 = vmatprep.subr.mxu0 0.0
    %2473 = vmatpush1.msra.mxu0 0.0
    %2474 = vmatprep.subr.mxu0 0.0
    %2475 = vmatpush1.msra.mxu0 0.0
    %2476 = vmatprep.subr.mxu0 0.0
    %2477 = vmatpush1.msra.mxu0 0.0
    %2478 = vmatprep.subr.mxu0 0.0
    %2479 = vmatpush1.msra.mxu0 0.0
    %2480 = vmatprep.subr.mxu0 0.0
    %2481 = vmatpush1.msra.mxu0 0.0
    %2482 = vmatprep.subr.mxu0 0.0
    %2483 = vmatpush1.msra.mxu0 0.0
    %2484 = vmatprep.subr.mxu0 0.0
    %2485 = vmatpush1.msra.mxu0 0.0
    %2486 = vmatprep.subr.mxu0 0.0
    %2487 = vmatpush1.msra.mxu0 0.0
    %2488 = vmatprep.subr.mxu0 0.0
    %2489 = vmatpush1.msra.mxu0 0.0
    %2490 = vmatprep.subr.mxu0 0.0
    %2491 = vmatpush1.msra.mxu0 0.0
    %2492 = vmatprep.subr.mxu0 0.0
    %2493 = vmatpush1.msra.mxu0 0.0
    %2494 = vmatprep.subr.mxu0 0.0
    %2495 = vmatpush1.msra.mxu0 0.0
    %2496 = vmatprep.subr.mxu0 0.0
    %2497 = vmatpush1.msra.mxu0 0.0
    %2498 = vmatprep.subr.mxu0 0.0
    %2499 = vmatpush1.msra.mxu0 0.0
    %2500 = vmatprep.subr.mxu0 0.0
    %2501 = vmatpush1.msra.mxu0 0.0
    %2502 = vmatprep.subr.mxu0 0.0
    %2503 = vmatpush1.msra.mxu0 0.0
    %2504 = vmatprep.subr.mxu0 0.0
    %2505 = vmatpush1.msra.mxu0 0.0
    %2506 = vmatprep.subr.mxu0 0.0
    %2507 = vmatpush1.msra.mxu0 0.0
    %2508 = vmatprep.subr.mxu0 0.0
    %2509 = vmatpush1.msra.mxu0 0.0
    %2510 = vmatprep.subr.mxu0 0.0
    %2511 = vmatpush1.msra.mxu0 0.0
    %2512 = vmatprep.subr.mxu0 0.0
    %2513 = vmatpush1.msra.mxu0 0.0
    %2514 = vmatprep.subr.mxu0 0.0
    %2515 = vmatpush1.msra.mxu0 0.0
    %2516 = vmatprep.subr.mxu0 0.0
    %2517 = vmatpush1.msra.mxu0 0.0
    %2518 = vmatprep.subr.mxu0 0.0
    %2519 = vmatpush1.msra.mxu0 0.0
    %2520 = vmatprep.mubr.f32.mxu0 0.0
    %v2521 = vand.u32 %v2355, 4294901760
    %2522 = vmatmul.mubr.f32.gmra.mrb[0].mxu0 %v2521
    %v2523 = vpop.f32.mrb[0].mxu0
    %v2524 = vadd.f32 %v2433, %v2523
    %v2525 = vpop.f32.mrb[0].mxu0
    %2526 = vdwg.mxu0
    %2527 = vmatprep.subr.mxu0 0.0
    %v2528 = vand.u32 %v2350, 4294901760
    %v2529 = vsub.f32 %v2350, %v2528
    %2530 = vmatpush1.msra.mxu0 %v2529
    %2531 = vmatprep.subr.mxu0 0.0
    %v2532 = vand.u32 %v2351, 4294901760
    %v2533 = vsub.f32 %v2351, %v2532
    %2534 = vmatpush1.msra.mxu0 %v2533
    %2535 = vmatprep.subr.mxu0 0.0
    %v2536 = vand.u32 %v2352, 4294901760
    %v2537 = vsub.f32 %v2352, %v2536
    %2538 = vmatpush1.msra.mxu0 %v2537
    %2539 = vmatprep.subr.mxu0 0.0
    %v2540 = vand.u32 %v2353, 4294901760
    %v2541 = vsub.f32 %v2353, %v2540
    %2542 = vmatpush1.msra.mxu0 %v2541
    %2543 = vmatprep.subr.mxu0 0.0
    %2544 = vmatpush1.msra.mxu0 0.0
    %2545 = vmatprep.subr.mxu0 0.0
    %2546 = vmatpush1.msra.mxu0 0.0
    %2547 = vmatprep.subr.mxu0 0.0
    %2548 = vmatpush1.msra.mxu0 0.0
    %2549 = vmatprep.subr.mxu0 0.0
    %2550 = vmatpush1.msra.mxu0 0.0
    %2551 = vmatprep.subr.mxu0 0.0
    %2552 = vmatpush1.msra.mxu0 0.0
    %2553 = vmatprep.subr.mxu0 0.0
    %2554 = vmatpush1.msra.mxu0 0.0
    %2555 = vmatprep.subr.mxu0 0.0
    %2556 = vmatpush1.msra.mxu0 0.0
    %2557 = vmatprep.subr.mxu0 0.0
    %2558 = vmatpush1.msra.mxu0 0.0
    %2559 = vmatprep.subr.mxu0 0.0
    %2560 = vmatpush1.msra.mxu0 0.0
    %2561 = vmatprep.subr.mxu0 0.0
    %2562 = vmatpush1.msra.mxu0 0.0
    %2563 = vmatprep.subr.mxu0 0.0
    %2564 = vmatpush1.msra.mxu0 0.0
    %2565 = vmatprep.subr.mxu0 0.0
    %2566 = vmatpush1.msra.mxu0 0.0
    %2567 = vmatprep.subr.mxu0 0.0
    %2568 = vmatpush1.msra.mxu0 0.0
    %2569 = vmatprep.subr.mxu0 0.0
    %2570 = vmatpush1.msra.mxu0 0.0
    %2571 = vmatprep.subr.mxu0 0.0
    %2572 = vmatpush1.msra.mxu0 0.0
    %2573 = vmatprep.subr.mxu0 0.0
    %2574 = vmatpush1.msra.mxu0 0.0
    %2575 = vmatprep.subr.mxu0 0.0
    %2576 = vmatpush1.msra.mxu0 0.0
    %2577 = vmatprep.subr.mxu0 0.0
    %2578 = vmatpush1.msra.mxu0 0.0
    %2579 = vmatprep.subr.mxu0 0.0
    %2580 = vmatpush1.msra.mxu0 0.0
    %2581 = vmatprep.subr.mxu0 0.0
    %2582 = vmatpush1.msra.mxu0 0.0
    %2583 = vmatprep.subr.mxu0 0.0
    %2584 = vmatpush1.msra.mxu0 0.0
    %2585 = vmatprep.subr.mxu0 0.0
    %2586 = vmatpush1.msra.mxu0 0.0
    %2587 = vmatprep.subr.mxu0 0.0
    %2588 = vmatpush1.msra.mxu0 0.0
    %2589 = vmatprep.subr.mxu0 0.0
    %2590 = vmatpush1.msra.mxu0 0.0
    %2591 = vmatprep.subr.mxu0 0.0
    %2592 = vmatpush1.msra.mxu0 0.0
    %2593 = vmatprep.subr.mxu0 0.0
    %2594 = vmatpush1.msra.mxu0 0.0
    %2595 = vmatprep.subr.mxu0 0.0
    %2596 = vmatpush1.msra.mxu0 0.0
    %2597 = vmatprep.subr.mxu0 0.0
    %2598 = vmatpush1.msra.mxu0 0.0
    %2599 = vmatprep.mubr.f32.mxu0 0.0
    %v2600 = vand.u32 %v2355, 4294901760
    %v2601 = vsub.f32 %v2355, %v2600
    %2602 = vmatmul.mubr.f32.gmra.mrb[0].mxu0 %v2601
    %v2603 = vpop.f32.mrb[0].mxu0
    %v2604 = vadd.f32 %v2524, %v2603
    %v2605 = vpop.f32.mrb[0].mxu0
    %2606 = vdwg.mxu0
    %2607 = vmatprep.subr.mxu0 0.0
    %v2608 = vand.u32 %v2350, 4294901760
    %2609 = vmatpush1.msra.mxu0 %v2608
    %2610 = vmatprep.subr.mxu0 0.0
    %v2611 = vand.u32 %v2351, 4294901760
    %2612 = vmatpush1.msra.mxu0 %v2611
    %2613 = vmatprep.subr.mxu0 0.0
    %v2614 = vand.u32 %v2352, 4294901760
    %2615 = vmatpush1.msra.mxu0 %v2614
    %2616 = vmatprep.subr.mxu0 0.0
    %v2617 = vand.u32 %v2353, 4294901760
    %2618 = vmatpush1.msra.mxu0 %v2617
    %2619 = vmatprep.subr.mxu0 0.0
    %2620 = vmatpush1.msra.mxu0 0.0
    %2621 = vmatprep.subr.mxu0 0.0
    %2622 = vmatpush1.msra.mxu0 0.0
    %2623 = vmatprep.subr.mxu0 0.0
    %2624 = vmatpush1.msra.mxu0 0.0
    %2625 = vmatprep.subr.mxu0 0.0
    %2626 = vmatpush1.msra.mxu0 0.0
    %2627 = vmatprep.subr.mxu0 0.0
    %2628 = vmatpush1.msra.mxu0 0.0
    %2629 = vmatprep.subr.mxu0 0.0
    %2630 = vmatpush1.msra.mxu0 0.0
    %2631 = vmatprep.subr.mxu0 0.0
    %2632 = vmatpush1.msra.mxu0 0.0
    %2633 = vmatprep.subr.mxu0 0.0
    %2634 = vmatpush1.msra.mxu0 0.0
    %2635 = vmatprep.subr.mxu0 0.0
    %2636 = vmatpush1.msra.mxu0 0.0
    %2637 = vmatprep.subr.mxu0 0.0
    %2638 = vmatpush1.msra.mxu0 0.0
    %2639 = vmatprep.subr.mxu0 0.0
    %2640 = vmatpush1.msra.mxu0 0.0
    %2641 = vmatprep.subr.mxu0 0.0
    %2642 = vmatpush1.msra.mxu0 0.0
    %2643 = vmatprep.subr.mxu0 0.0
    %2644 = vmatpush1.msra.mxu0 0.0
    %2645 = vmatprep.subr.mxu0 0.0
    %2646 = vmatpush1.msra.mxu0 0.0
    %2647 = vmatprep.subr.mxu0 0.0
    %2648 = vmatpush1.msra.mxu0 0.0
    %2649 = vmatprep.subr.mxu0 0.0
    %2650 = vmatpush1.msra.mxu0 0.0
    %2651 = vmatprep.subr.mxu0 0.0
    %2652 = vmatpush1.msra.mxu0 0.0
    %2653 = vmatprep.subr.mxu0 0.0
    %2654 = vmatpush1.msra.mxu0 0.0
    %2655 = vmatprep.subr.mxu0 0.0
    %2656 = vmatpush1.msra.mxu0 0.0
    %2657 = vmatprep.subr.mxu0 0.0
    %2658 = vmatpush1.msra.mxu0 0.0
    %2659 = vmatprep.subr.mxu0 0.0
    %2660 = vmatpush1.msra.mxu0 0.0
    %2661 = vmatprep.subr.mxu0 0.0
    %2662 = vmatpush1.msra.mxu0 0.0
    %2663 = vmatprep.subr.mxu0 0.0
    %2664 = vmatpush1.msra.mxu0 0.0
    %2665 = vmatprep.subr.mxu0 0.0
    %2666 = vmatpush1.msra.mxu0 0.0
    %2667 = vmatprep.subr.mxu0 0.0
    %2668 = vmatpush1.msra.mxu0 0.0
    %2669 = vmatprep.subr.mxu0 0.0
    %2670 = vmatpush1.msra.mxu0 0.0
    %2671 = vmatprep.subr.mxu0 0.0
    %2672 = vmatpush1.msra.mxu0 0.0
    %2673 = vmatprep.subr.mxu0 0.0
    %2674 = vmatpush1.msra.mxu0 0.0
    %2675 = vmatprep.mubr.f32.mxu0 0.0
    %v2676 = vand.u32 %v2355, 4294901760
    %v2677 = vsub.f32 %v2355, %v2676
    %v2678 = vand.u32 %v2677, 4294901760
    %2679 = vmatmul.mubr.f32.gmra.mrb[0].mxu0 %v2678
    %v2680 = vpop.f32.mrb[0].mxu0
    %v2681 = vadd.f32 %v2604, %v2680
    %v2682 = vpop.f32.mrb[0].mxu0
    %2683 = vdwg.mxu0
    %2684 = vmatprep.subr.mxu0 0.0
    %v2685 = vand.u32 %v2350, 4294901760
    %v2686 = vsub.f32 %v2350, %v2685
    %v2687 = vand.u32 %v2686, 4294901760
    %2688 = vmatpush1.msra.mxu0 %v2687
    %2689 = vmatprep.subr.mxu0 0.0
    %v2690 = vand.u32 %v2351, 4294901760
    %v2691 = vsub.f32 %v2351, %v2690
    %v2692 = vand.u32 %v2691, 4294901760
    %2693 = vmatpush1.msra.mxu0 %v2692
    %2694 = vmatprep.subr.mxu0 0.0
    %v2695 = vand.u32 %v2352, 4294901760
    %v2696 = vsub.f32 %v2352, %v2695
    %v2697 = vand.u32 %v2696, 4294901760
    %2698 = vmatpush1.msra.mxu0 %v2697
    %2699 = vmatprep.subr.mxu0 0.0
    %v2700 = vand.u32 %v2353, 4294901760
    %v2701 = vsub.f32 %v2353, %v2700
    %v2702 = vand.u32 %v2701, 4294901760
    %2703 = vmatpush1.msra.mxu0 %v2702
    %2704 = vmatprep.subr.mxu0 0.0
    %2705 = vmatpush1.msra.mxu0 0.0
    %2706 = vmatprep.subr.mxu0 0.0
    %2707 = vmatpush1.msra.mxu0 0.0
    %2708 = vmatprep.subr.mxu0 0.0
    %2709 = vmatpush1.msra.mxu0 0.0
    %2710 = vmatprep.subr.mxu0 0.0
    %2711 = vmatpush1.msra.mxu0 0.0
    %2712 = vmatprep.subr.mxu0 0.0
    %2713 = vmatpush1.msra.mxu0 0.0
    %2714 = vmatprep.subr.mxu0 0.0
    %2715 = vmatpush1.msra.mxu0 0.0
    %2716 = vmatprep.subr.mxu0 0.0
    %2717 = vmatpush1.msra.mxu0 0.0
    %2718 = vmatprep.subr.mxu0 0.0
    %2719 = vmatpush1.msra.mxu0 0.0
    %2720 = vmatprep.subr.mxu0 0.0
    %2721 = vmatpush1.msra.mxu0 0.0
    %2722 = vmatprep.subr.mxu0 0.0
    %2723 = vmatpush1.msra.mxu0 0.0
    %2724 = vmatprep.subr.mxu0 0.0
    %2725 = vmatpush1.msra.mxu0 0.0
    %2726 = vmatprep.subr.mxu0 0.0
    %2727 = vmatpush1.msra.mxu0 0.0
    %2728 = vmatprep.subr.mxu0 0.0
    %2729 = vmatpush1.msra.mxu0 0.0
    %2730 = vmatprep.subr.mxu0 0.0
    %2731 = vmatpush1.msra.mxu0 0.0
    %2732 = vmatprep.subr.mxu0 0.0
    %2733 = vmatpush1.msra.mxu0 0.0
    %2734 = vmatprep.subr.mxu0 0.0
    %2735 = vmatpush1.msra.mxu0 0.0
    %2736 = vmatprep.subr.mxu0 0.0
    %2737 = vmatpush1.msra.mxu0 0.0
    %2738 = vmatprep.subr.mxu0 0.0
    %2739 = vmatpush1.msra.mxu0 0.0
    %2740 = vmatprep.subr.mxu0 0.0
    %2741 = vmatpush1.msra.mxu0 0.0
    %2742 = vmatprep.subr.mxu0 0.0
    %2743 = vmatpush1.msra.mxu0 0.0
    %2744 = vmatprep.subr.mxu0 0.0
    %2745 = vmatpush1.msra.mxu0 0.0
    %2746 = vmatprep.subr.mxu0 0.0
    %2747 = vmatpush1.msra.mxu0 0.0
    %2748 = vmatprep.subr.mxu0 0.0
    %2749 = vmatpush1.msra.mxu0 0.0
    %2750 = vmatprep.subr.mxu0 0.0
    %2751 = vmatpush1.msra.mxu0 0.0
    %2752 = vmatprep.subr.mxu0 0.0
    %2753 = vmatpush1.msra.mxu0 0.0
    %2754 = vmatprep.subr.mxu0 0.0
    %2755 = vmatpush1.msra.mxu0 0.0
    %2756 = vmatprep.subr.mxu0 0.0
    %2757 = vmatpush1.msra.mxu0 0.0
    %2758 = vmatprep.subr.mxu0 0.0
    %2759 = vmatpush1.msra.mxu0 0.0
    %2760 = vmatprep.mubr.f32.mxu0 0.0
    %v2761 = vand.u32 %v2355, 4294901760
    %2762 = vmatmul.mubr.f32.gmra.mrb[0].mxu0 %v2761
    %v2763 = vpop.f32.mrb[0].mxu0
    %v2764 = vadd.f32 %v2681, %v2763
    %v2765 = vpop.f32.mrb[0].mxu0
    %2766 = vdwg.mxu0
    %2767 = vmatprep.subr.mxu0 0.0
    %v2768 = vand.u32 %v2350, 4294901760
    %2769 = vmatpush1.msra.mxu0 %v2768
    %2770 = vmatprep.subr.mxu0 0.0
    %v2771 = vand.u32 %v2351, 4294901760
    %2772 = vmatpush1.msra.mxu0 %v2771
    %2773 = vmatprep.subr.mxu0 0.0
    %v2774 = vand.u32 %v2352, 4294901760
    %2775 = vmatpush1.msra.mxu0 %v2774
    %2776 = vmatprep.subr.mxu0 0.0
    %v2777 = vand.u32 %v2353, 4294901760
    %2778 = vmatpush1.msra.mxu0 %v2777
    %2779 = vmatprep.subr.mxu0 0.0
    %2780 = vmatpush1.msra.mxu0 0.0
    %2781 = vmatprep.subr.mxu0 0.0
    %2782 = vmatpush1.msra.mxu0 0.0
    %2783 = vmatprep.subr.mxu0 0.0
    %2784 = vmatpush1.msra.mxu0 0.0
    %2785 = vmatprep.subr.mxu0 0.0
    %2786 = vmatpush1.msra.mxu0 0.0
    %2787 = vmatprep.subr.mxu0 0.0
    %2788 = vmatpush1.msra.mxu0 0.0
    %2789 = vmatprep.subr.mxu0 0.0
    %2790 = vmatpush1.msra.mxu0 0.0
    %2791 = vmatprep.subr.mxu0 0.0
    %2792 = vmatpush1.msra.mxu0 0.0
    %2793 = vmatprep.subr.mxu0 0.0
    %2794 = vmatpush1.msra.mxu0 0.0
    %2795 = vmatprep.subr.mxu0 0.0
    %2796 = vmatpush1.msra.mxu0 0.0
    %2797 = vmatprep.subr.mxu0 0.0
    %2798 = vmatpush1.msra.mxu0 0.0
    %2799 = vmatprep.subr.mxu0 0.0
    %2800 = vmatpush1.msra.mxu0 0.0
    %2801 = vmatprep.subr.mxu0 0.0
    %2802 = vmatpush1.msra.mxu0 0.0
    %2803 = vmatprep.subr.mxu0 0.0
    %2804 = vmatpush1.msra.mxu0 0.0
    %2805 = vmatprep.subr.mxu0 0.0
    %2806 = vmatpush1.msra.mxu0 0.0
    %2807 = vmatprep.subr.mxu0 0.0
    %2808 = vmatpush1.msra.mxu0 0.0
    %2809 = vmatprep.subr.mxu0 0.0
    %2810 = vmatpush1.msra.mxu0 0.0
    %2811 = vmatprep.subr.mxu0 0.0
    %2812 = vmatpush1.msra.mxu0 0.0
    %2813 = vmatprep.subr.mxu0 0.0
    %2814 = vmatpush1.msra.mxu0 0.0
    %2815 = vmatprep.subr.mxu0 0.0
    %2816 = vmatpush1.msra.mxu0 0.0
    %2817 = vmatprep.subr.mxu0 0.0
    %2818 = vmatpush1.msra.mxu0 0.0
    %2819 = vmatprep.subr.mxu0 0.0
    %2820 = vmatpush1.msra.mxu0 0.0
    %2821 = vmatprep.subr.mxu0 0.0
    %2822 = vmatpush1.msra.mxu0 0.0
    %2823 = vmatprep.subr.mxu0 0.0
    %2824 = vmatpush1.msra.mxu0 0.0
    %2825 = vmatprep.subr.mxu0 0.0
    %2826 = vmatpush1.msra.mxu0 0.0
    %2827 = vmatprep.subr.mxu0 0.0
    %2828 = vmatpush1.msra.mxu0 0.0
    %2829 = vmatprep.subr.mxu0 0.0
    %2830 = vmatpush1.msra.mxu0 0.0
    %2831 = vmatprep.subr.mxu0 0.0
    %2832 = vmatpush1.msra.mxu0 0.0
    %2833 = vmatprep.subr.mxu0 0.0
    %2834 = vmatpush1.msra.mxu0 0.0
    %2835 = vmatprep.mubr.f32.mxu0 0.0
    %v2836 = vand.u32 %v2355, 4294901760
    %2837 = vmatmul.mubr.f32.gmra.mrb[0].mxu0 %v2836
    %v2838 = vpop.f32.mrb[0].mxu0
    %v2839 = vadd.f32 %v2764, %v2838
    %v2840 = vpop.f32.mrb[0].mxu0
    %2841 = vdwg.mxu0
    %v2842 = vadd.f32 %v2348, %v2839
    %v2843 = vxor.u32 %v2842, 2147483648
    %v2844 = vmul.f32 %v2843, 1.442695
    %v2845 = vpow.pop %v2844
    %v2846 = vadd.f32 %v2845, 1.0
    %v2847 = vrcp.pop %v2846
    %v2848 = vmul.f32 1.0, %v2847
    %v2849 = vtanh.pop %v2842
    %v2850 = vld [vmem:[#allocation6] sm:$0x3]
    %2852 = vrot.lane.b32.xlu0 %v2850, 32
    %v2853 = vpop.permute.xlu0 %2852
    %v2855 = vmul.f32 %v2848, %v2853
    %2857 = vrot.lane.b32.xlu0 %v2849, 64
    %v2858 = vpop.permute.xlu0 %2857
    %v2860 = vmul.f32 %v2848, %v2858
    %2862 = vrot.lane.b32.xlu0 %v2860, 32
    %v2863 = vpop.permute.xlu0 %2862
    %v2865 = vadd.f32 %v2855, %v2863
    %v2866 = vtanh.pop %v2865
    %2868 = vrot.lane.b32.xlu0 %v2866, 64
    %v2869 = vpop.permute.xlu0 %2868
    %v2871 = vmul.f32 %v2848, %v2869
    %2873 = vrot.lane.b32.xlu0 %v2865, 96
    %v2874 = vpop.permute.xlu0 %2873
    %2876 = vst.msk [vmem:[#allocation6] sm:$0x3] %vm189, %v2874
    %2878 = vrot.lane.b32.xlu0 %v2871, 32
    %v2879 = vpop.permute.xlu0 %2878
    %2881 = vst.msk [vmem:[#allocation5] sm:$0x3] %vm189, %v2879
    %2882 = vst.msk [vmem:[#allocation4 + $0x6] sm:$0x3] %vm189, %v2879
    %v2883 = vld [vmem:[#allocation3 + $0x8] sm:$0x3]
    %v2884 = vld [vmem:[#allocation5] sm:$0x3]
    %v2885 = vld [vmem:[#allocation16] sm:$0xff]
    %v2886 = vld [vmem:[#allocation16 + $0x8] sm:$0xff]
    %v2887 = vld [vmem:[#allocation16 + $0x10] sm:$0xff]
    %v2888 = vld [vmem:[#allocation16 + $0x18] sm:$0xff]
    %v2890 = vsel %vm204, %v2884, 0
    %2892 = vmatprep.subr.mxu0 0.0
    %v2893 = vand.u32 %v2885, 4294901760
    %2894 = vmatpush1.msra.mxu0 %v2893
    %2895 = vmatprep.subr.mxu0 0.0
    %v2896 = vand.u32 %v2886, 4294901760
    %2897 = vmatpush1.msra.mxu0 %v2896
    %2898 = vmatprep.subr.mxu0 0.0
    %v2899 = vand.u32 %v2887, 4294901760
    %2900 = vmatpush1.msra.mxu0 %v2899
    %2901 = vmatprep.subr.mxu0 0.0
    %v2902 = vand.u32 %v2888, 4294901760
    %2903 = vmatpush1.msra.mxu0 %v2902
    %2904 = vmatprep.subr.mxu0 0.0
    %2905 = vmatpush1.msra.mxu0 0.0
    %2906 = vmatprep.subr.mxu0 0.0
    %2907 = vmatpush1.msra.mxu0 0.0
    %2908 = vmatprep.subr.mxu0 0.0
    %2909 = vmatpush1.msra.mxu0 0.0
    %2910 = vmatprep.subr.mxu0 0.0
    %2911 = vmatpush1.msra.mxu0 0.0
    %2912 = vmatprep.subr.mxu0 0.0
    %2913 = vmatpush1.msra.mxu0 0.0
    %2914 = vmatprep.subr.mxu0 0.0
    %2915 = vmatpush1.msra.mxu0 0.0
    %2916 = vmatprep.subr.mxu0 0.0
    %2917 = vmatpush1.msra.mxu0 0.0
    %2918 = vmatprep.subr.mxu0 0.0
    %2919 = vmatpush1.msra.mxu0 0.0
    %2920 = vmatprep.subr.mxu0 0.0
    %2921 = vmatpush1.msra.mxu0 0.0
    %2922 = vmatprep.subr.mxu0 0.0
    %2923 = vmatpush1.msra.mxu0 0.0
    %2924 = vmatprep.subr.mxu0 0.0
    %2925 = vmatpush1.msra.mxu0 0.0
    %2926 = vmatprep.subr.mxu0 0.0
    %2927 = vmatpush1.msra.mxu0 0.0
    %2928 = vmatprep.subr.mxu0 0.0
    %2929 = vmatpush1.msra.mxu0 0.0
    %2930 = vmatprep.subr.mxu0 0.0
    %2931 = vmatpush1.msra.mxu0 0.0
    %2932 = vmatprep.subr.mxu0 0.0
    %2933 = vmatpush1.msra.mxu0 0.0
    %2934 = vmatprep.subr.mxu0 0.0
    %2935 = vmatpush1.msra.mxu0 0.0
    %2936 = vmatprep.subr.mxu0 0.0
    %2937 = vmatpush1.msra.mxu0 0.0
    %2938 = vmatprep.subr.mxu0 0.0
    %2939 = vmatpush1.msra.mxu0 0.0
    %2940 = vmatprep.subr.mxu0 0.0
    %2941 = vmatpush1.msra.mxu0 0.0
    %2942 = vmatprep.subr.mxu0 0.0
    %2943 = vmatpush1.msra.mxu0 0.0
    %2944 = vmatprep.subr.mxu0 0.0
    %2945 = vmatpush1.msra.mxu0 0.0
    %2946 = vmatprep.subr.mxu0 0.0
    %2947 = vmatpush1.msra.mxu0 0.0
    %2948 = vmatprep.subr.mxu0 0.0
    %2949 = vmatpush1.msra.mxu0 0.0
    %2950 = vmatprep.subr.mxu0 0.0
    %2951 = vmatpush1.msra.mxu0 0.0
    %2952 = vmatprep.subr.mxu0 0.0
    %2953 = vmatpush1.msra.mxu0 0.0
    %2954 = vmatprep.subr.mxu0 0.0
    %2955 = vmatpush1.msra.mxu0 0.0
    %2956 = vmatprep.subr.mxu0 0.0
    %2957 = vmatpush1.msra.mxu0 0.0
    %2958 = vmatprep.subr.mxu0 0.0
    %2959 = vmatpush1.msra.mxu0 0.0
    %2960 = vmatprep.mubr.f32.mxu0 0.0
    %v2961 = vand.u32 %v2890, 4294901760
    %v2962 = vsub.f32 %v2890, %v2961
    %v2963 = vand.u32 %v2962, 4294901760
    %v2964 = vsub.f32 %v2962, %v2963
    %v2965 = vand.u32 %v2964, 4294901760
    %2966 = vmatmul.mubr.f32.gmra.mrb[0].mxu0 %v2965
    %v2967 = vpop.f32.mrb[0].mxu0
    %v2968 = vadd.f32 0.0, %v2967
    %v2969 = vpop.f32.mrb[0].mxu0
    %2970 = vdwg.mxu0
    %2971 = vmatprep.subr.mxu0 0.0
    %v2972 = vand.u32 %v2885, 4294901760
    %v2973 = vsub.f32 %v2885, %v2972
    %v2974 = vand.u32 %v2973, 4294901760
    %v2975 = vsub.f32 %v2973, %v2974
    %v2976 = vand.u32 %v2975, 4294901760
    %2977 = vmatpush1.msra.mxu0 %v2976
    %2978 = vmatprep.subr.mxu0 0.0
    %v2979 = vand.u32 %v2886, 4294901760
    %v2980 = vsub.f32 %v2886, %v2979
    %v2981 = vand.u32 %v2980, 4294901760
    %v2982 = vsub.f32 %v2980, %v2981
    %v2983 = vand.u32 %v2982, 4294901760
    %2984 = vmatpush1.msra.mxu0 %v2983
    %2985 = vmatprep.subr.mxu0 0.0
    %v2986 = vand.u32 %v2887, 4294901760
    %v2987 = vsub.f32 %v2887, %v2986
    %v2988 = vand.u32 %v2987, 4294901760
    %v2989 = vsub.f32 %v2987, %v2988
    %v2990 = vand.u32 %v2989, 4294901760
    %2991 = vmatpush1.msra.mxu0 %v2990
    %2992 = vmatprep.subr.mxu0 0.0
    %v2993 = vand.u32 %v2888, 4294901760
    %v2994 = vsub.f32 %v2888, %v2993
    %v2995 = vand.u32 %v2994, 4294901760
    %v2996 = vsub.f32 %v2994, %v2995
    %v2997 = vand.u32 %v2996, 4294901760
    %2998 = vmatpush1.msra.mxu0 %v2997
    %2999 = vmatprep.subr.mxu0 0.0
    %3000 = vmatpush1.msra.mxu0 0.0
    %3001 = vmatprep.subr.mxu0 0.0
    %3002 = vmatpush1.msra.mxu0 0.0
    %3003 = vmatprep.subr.mxu0 0.0
    %3004 = vmatpush1.msra.mxu0 0.0
    %3005 = vmatprep.subr.mxu0 0.0
    %3006 = vmatpush1.msra.mxu0 0.0
    %3007 = vmatprep.subr.mxu0 0.0
    %3008 = vmatpush1.msra.mxu0 0.0
    %3009 = vmatprep.subr.mxu0 0.0
    %3010 = vmatpush1.msra.mxu0 0.0
    %3011 = vmatprep.subr.mxu0 0.0
    %3012 = vmatpush1.msra.mxu0 0.0
    %3013 = vmatprep.subr.mxu0 0.0
    %3014 = vmatpush1.msra.mxu0 0.0
    %3015 = vmatprep.subr.mxu0 0.0
    %3016 = vmatpush1.msra.mxu0 0.0
    %3017 = vmatprep.subr.mxu0 0.0
    %3018 = vmatpush1.msra.mxu0 0.0
    %3019 = vmatprep.subr.mxu0 0.0
    %3020 = vmatpush1.msra.mxu0 0.0
    %3021 = vmatprep.subr.mxu0 0.0
    %3022 = vmatpush1.msra.mxu0 0.0
    %3023 = vmatprep.subr.mxu0 0.0
    %3024 = vmatpush1.msra.mxu0 0.0
    %3025 = vmatprep.subr.mxu0 0.0
    %3026 = vmatpush1.msra.mxu0 0.0
    %3027 = vmatprep.subr.mxu0 0.0
    %3028 = vmatpush1.msra.mxu0 0.0
    %3029 = vmatprep.subr.mxu0 0.0
    %3030 = vmatpush1.msra.mxu0 0.0
    %3031 = vmatprep.subr.mxu0 0.0
    %3032 = vmatpush1.msra.mxu0 0.0
    %3033 = vmatprep.subr.mxu0 0.0
    %3034 = vmatpush1.msra.mxu0 0.0
    %3035 = vmatprep.subr.mxu0 0.0
    %3036 = vmatpush1.msra.mxu0 0.0
    %3037 = vmatprep.subr.mxu0 0.0
    %3038 = vmatpush1.msra.mxu0 0.0
    %3039 = vmatprep.subr.mxu0 0.0
    %3040 = vmatpush1.msra.mxu0 0.0
    %3041 = vmatprep.subr.mxu0 0.0
    %3042 = vmatpush1.msra.mxu0 0.0
    %3043 = vmatprep.subr.mxu0 0.0
    %3044 = vmatpush1.msra.mxu0 0.0
    %3045 = vmatprep.subr.mxu0 0.0
    %3046 = vmatpush1.msra.mxu0 0.0
    %3047 = vmatprep.subr.mxu0 0.0
    %3048 = vmatpush1.msra.mxu0 0.0
    %3049 = vmatprep.subr.mxu0 0.0
    %3050 = vmatpush1.msra.mxu0 0.0
    %3051 = vmatprep.subr.mxu0 0.0
    %3052 = vmatpush1.msra.mxu0 0.0
    %3053 = vmatprep.subr.mxu0 0.0
    %3054 = vmatpush1.msra.mxu0 0.0
    %3055 = vmatprep.mubr.f32.mxu0 0.0
    %v3056 = vand.u32 %v2890, 4294901760
    %3057 = vmatmul.mubr.f32.gmra.mrb[0].mxu0 %v3056
    %v3058 = vpop.f32.mrb[0].mxu0
    %v3059 = vadd.f32 %v2968, %v3058
    %v3060 = vpop.f32.mrb[0].mxu0
    %3061 = vdwg.mxu0
    %3062 = vmatprep.subr.mxu0 0.0
    %v3063 = vand.u32 %v2885, 4294901760
    %v3064 = vsub.f32 %v2885, %v3063
    %3065 = vmatpush1.msra.mxu0 %v3064
    %3066 = vmatprep.subr.mxu0 0.0
    %v3067 = vand.u32 %v2886, 4294901760
    %v3068 = vsub.f32 %v2886, %v3067
    %3069 = vmatpush1.msra.mxu0 %v3068
    %3070 = vmatprep.subr.mxu0 0.0
    %v3071 = vand.u32 %v2887, 4294901760
    %v3072 = vsub.f32 %v2887, %v3071
    %3073 = vmatpush1.msra.mxu0 %v3072
    %3074 = vmatprep.subr.mxu0 0.0
    %v3075 = vand.u32 %v2888, 4294901760
    %v3076 = vsub.f32 %v2888, %v3075
    %3077 = vmatpush1.msra.mxu0 %v3076
    %3078 = vmatprep.subr.mxu0 0.0
    %3079 = vmatpush1.msra.mxu0 0.0
    %3080 = vmatprep.subr.mxu0 0.0
    %3081 = vmatpush1.msra.mxu0 0.0
    %3082 = vmatprep.subr.mxu0 0.0
    %3083 = vmatpush1.msra.mxu0 0.0
    %3084 = vmatprep.subr.mxu0 0.0
    %3085 = vmatpush1.msra.mxu0 0.0
    %3086 = vmatprep.subr.mxu0 0.0
    %3087 = vmatpush1.msra.mxu0 0.0
    %3088 = vmatprep.subr.mxu0 0.0
    %3089 = vmatpush1.msra.mxu0 0.0
    %3090 = vmatprep.subr.mxu0 0.0
    %3091 = vmatpush1.msra.mxu0 0.0
    %3092 = vmatprep.subr.mxu0 0.0
    %3093 = vmatpush1.msra.mxu0 0.0
    %3094 = vmatprep.subr.mxu0 0.0
    %3095 = vmatpush1.msra.mxu0 0.0
    %3096 = vmatprep.subr.mxu0 0.0
    %3097 = vmatpush1.msra.mxu0 0.0
    %3098 = vmatprep.subr.mxu0 0.0
    %3099 = vmatpush1.msra.mxu0 0.0
    %3100 = vmatprep.subr.mxu0 0.0
    %3101 = vmatpush1.msra.mxu0 0.0
    %3102 = vmatprep.subr.mxu0 0.0
    %3103 = vmatpush1.msra.mxu0 0.0
    %3104 = vmatprep.subr.mxu0 0.0
    %3105 = vmatpush1.msra.mxu0 0.0
    %3106 = vmatprep.subr.mxu0 0.0
    %3107 = vmatpush1.msra.mxu0 0.0
    %3108 = vmatprep.subr.mxu0 0.0
    %3109 = vmatpush1.msra.mxu0 0.0
    %3110 = vmatprep.subr.mxu0 0.0
    %3111 = vmatpush1.msra.mxu0 0.0
    %3112 = vmatprep.subr.mxu0 0.0
    %3113 = vmatpush1.msra.mxu0 0.0
    %3114 = vmatprep.subr.mxu0 0.0
    %3115 = vmatpush1.msra.mxu0 0.0
    %3116 = vmatprep.subr.mxu0 0.0
    %3117 = vmatpush1.msra.mxu0 0.0
    %3118 = vmatprep.subr.mxu0 0.0
    %3119 = vmatpush1.msra.mxu0 0.0
    %3120 = vmatprep.subr.mxu0 0.0
    %3121 = vmatpush1.msra.mxu0 0.0
    %3122 = vmatprep.subr.mxu0 0.0
    %3123 = vmatpush1.msra.mxu0 0.0
    %3124 = vmatprep.subr.mxu0 0.0
    %3125 = vmatpush1.msra.mxu0 0.0
    %3126 = vmatprep.subr.mxu0 0.0
    %3127 = vmatpush1.msra.mxu0 0.0
    %3128 = vmatprep.subr.mxu0 0.0
    %3129 = vmatpush1.msra.mxu0 0.0
    %3130 = vmatprep.subr.mxu0 0.0
    %3131 = vmatpush1.msra.mxu0 0.0
    %3132 = vmatprep.subr.mxu0 0.0
    %3133 = vmatpush1.msra.mxu0 0.0
    %3134 = vmatprep.mubr.f32.mxu0 0.0
    %v3135 = vand.u32 %v2890, 4294901760
    %v3136 = vsub.f32 %v2890, %v3135
    %3137 = vmatmul.mubr.f32.gmra.mrb[0].mxu0 %v3136
    %v3138 = vpop.f32.mrb[0].mxu0
    %v3139 = vadd.f32 %v3059, %v3138
    %v3140 = vpop.f32.mrb[0].mxu0
    %3141 = vdwg.mxu0
    %3142 = vmatprep.subr.mxu0 0.0
    %v3143 = vand.u32 %v2885, 4294901760
    %3144 = vmatpush1.msra.mxu0 %v3143
    %3145 = vmatprep.subr.mxu0 0.0
    %v3146 = vand.u32 %v2886, 4294901760
    %3147 = vmatpush1.msra.mxu0 %v3146
    %3148 = vmatprep.subr.mxu0 0.0
    %v3149 = vand.u32 %v2887, 4294901760
    %3150 = vmatpush1.msra.mxu0 %v3149
    %3151 = vmatprep.subr.mxu0 0.0
    %v3152 = vand.u32 %v2888, 4294901760
    %3153 = vmatpush1.msra.mxu0 %v3152
    %3154 = vmatprep.subr.mxu0 0.0
    %3155 = vmatpush1.msra.mxu0 0.0
    %3156 = vmatprep.subr.mxu0 0.0
    %3157 = vmatpush1.msra.mxu0 0.0
    %3158 = vmatprep.subr.mxu0 0.0
    %3159 = vmatpush1.msra.mxu0 0.0
    %3160 = vmatprep.subr.mxu0 0.0
    %3161 = vmatpush1.msra.mxu0 0.0
    %3162 = vmatprep.subr.mxu0 0.0
    %3163 = vmatpush1.msra.mxu0 0.0
    %3164 = vmatprep.subr.mxu0 0.0
    %3165 = vmatpush1.msra.mxu0 0.0
    %3166 = vmatprep.subr.mxu0 0.0
    %3167 = vmatpush1.msra.mxu0 0.0
    %3168 = vmatprep.subr.mxu0 0.0
    %3169 = vmatpush1.msra.mxu0 0.0
    %3170 = vmatprep.subr.mxu0 0.0
    %3171 = vmatpush1.msra.mxu0 0.0
    %3172 = vmatprep.subr.mxu0 0.0
    %3173 = vmatpush1.msra.mxu0 0.0
    %3174 = vmatprep.subr.mxu0 0.0
    %3175 = vmatpush1.msra.mxu0 0.0
    %3176 = vmatprep.subr.mxu0 0.0
    %3177 = vmatpush1.msra.mxu0 0.0
    %3178 = vmatprep.subr.mxu0 0.0
    %3179 = vmatpush1.msra.mxu0 0.0
    %3180 = vmatprep.subr.mxu0 0.0
    %3181 = vmatpush1.msra.mxu0 0.0
    %3182 = vmatprep.subr.mxu0 0.0
    %3183 = vmatpush1.msra.mxu0 0.0
    %3184 = vmatprep.subr.mxu0 0.0
    %3185 = vmatpush1.msra.mxu0 0.0
    %3186 = vmatprep.subr.mxu0 0.0
    %3187 = vmatpush1.msra.mxu0 0.0
    %3188 = vmatprep.subr.mxu0 0.0
    %3189 = vmatpush1.msra.mxu0 0.0
    %3190 = vmatprep.subr.mxu0 0.0
    %3191 = vmatpush1.msra.mxu0 0.0
    %3192 = vmatprep.subr.mxu0 0.0
    %3193 = vmatpush1.msra.mxu0 0.0
    %3194 = vmatprep.subr.mxu0 0.0
    %3195 = vmatpush1.msra.mxu0 0.0
    %3196 = vmatprep.subr.mxu0 0.0
    %3197 = vmatpush1.msra.mxu0 0.0
    %3198 = vmatprep.subr.mxu0 0.0
    %3199 = vmatpush1.msra.mxu0 0.0
    %3200 = vmatprep.subr.mxu0 0.0
    %3201 = vmatpush1.msra.mxu0 0.0
    %3202 = vmatprep.subr.mxu0 0.0
    %3203 = vmatpush1.msra.mxu0 0.0
    %3204 = vmatprep.subr.mxu0 0.0
    %3205 = vmatpush1.msra.mxu0 0.0
    %3206 = vmatprep.subr.mxu0 0.0
    %3207 = vmatpush1.msra.mxu0 0.0
    %3208 = vmatprep.subr.mxu0 0.0
    %3209 = vmatpush1.msra.mxu0 0.0
    %3210 = vmatprep.mubr.f32.mxu0 0.0
    %v3211 = vand.u32 %v2890, 4294901760
    %v3212 = vsub.f32 %v2890, %v3211
    %v3213 = vand.u32 %v3212, 4294901760
    %3214 = vmatmul.mubr.f32.gmra.mrb[0].mxu0 %v3213
    %v3215 = vpop.f32.mrb[0].mxu0
    %v3216 = vadd.f32 %v3139, %v3215
    %v3217 = vpop.f32.mrb[0].mxu0
    %3218 = vdwg.mxu0
    %3219 = vmatprep.subr.mxu0 0.0
    %v3220 = vand.u32 %v2885, 4294901760
    %v3221 = vsub.f32 %v2885, %v3220
    %v3222 = vand.u32 %v3221, 4294901760
    %3223 = vmatpush1.msra.mxu0 %v3222
    %3224 = vmatprep.subr.mxu0 0.0
    %v3225 = vand.u32 %v2886, 4294901760
    %v3226 = vsub.f32 %v2886, %v3225
    %v3227 = vand.u32 %v3226, 4294901760
    %3228 = vmatpush1.msra.mxu0 %v3227
    %3229 = vmatprep.subr.mxu0 0.0
    %v3230 = vand.u32 %v2887, 4294901760
    %v3231 = vsub.f32 %v2887, %v3230
    %v3232 = vand.u32 %v3231, 4294901760
    %3233 = vmatpush1.msra.mxu0 %v3232
    %3234 = vmatprep.subr.mxu0 0.0
    %v3235 = vand.u32 %v2888, 4294901760
    %v3236 = vsub.f32 %v2888, %v3235
    %v3237 = vand.u32 %v3236, 4294901760
    %3238 = vmatpush1.msra.mxu0 %v3237
    %3239 = vmatprep.subr.mxu0 0.0
    %3240 = vmatpush1.msra.mxu0 0.0
    %3241 = vmatprep.subr.mxu0 0.0
    %3242 = vmatpush1.msra.mxu0 0.0
    %3243 = vmatprep.subr.mxu0 0.0
    %3244 = vmatpush1.msra.mxu0 0.0
    %3245 = vmatprep.subr.mxu0 0.0
    %3246 = vmatpush1.msra.mxu0 0.0
    %3247 = vmatprep.subr.mxu0 0.0
    %3248 = vmatpush1.msra.mxu0 0.0
    %3249 = vmatprep.subr.mxu0 0.0
    %3250 = vmatpush1.msra.mxu0 0.0
    %3251 = vmatprep.subr.mxu0 0.0
    %3252 = vmatpush1.msra.mxu0 0.0
    %3253 = vmatprep.subr.mxu0 0.0
    %3254 = vmatpush1.msra.mxu0 0.0
    %3255 = vmatprep.subr.mxu0 0.0
    %3256 = vmatpush1.msra.mxu0 0.0
    %3257 = vmatprep.subr.mxu0 0.0
    %3258 = vmatpush1.msra.mxu0 0.0
    %3259 = vmatprep.subr.mxu0 0.0
    %3260 = vmatpush1.msra.mxu0 0.0
    %3261 = vmatprep.subr.mxu0 0.0
    %3262 = vmatpush1.msra.mxu0 0.0
    %3263 = vmatprep.subr.mxu0 0.0
    %3264 = vmatpush1.msra.mxu0 0.0
    %3265 = vmatprep.subr.mxu0 0.0
    %3266 = vmatpush1.msra.mxu0 0.0
    %3267 = vmatprep.subr.mxu0 0.0
    %3268 = vmatpush1.msra.mxu0 0.0
    %3269 = vmatprep.subr.mxu0 0.0
    %3270 = vmatpush1.msra.mxu0 0.0
    %3271 = vmatprep.subr.mxu0 0.0
    %3272 = vmatpush1.msra.mxu0 0.0
    %3273 = vmatprep.subr.mxu0 0.0
    %3274 = vmatpush1.msra.mxu0 0.0
    %3275 = vmatprep.subr.mxu0 0.0
    %3276 = vmatpush1.msra.mxu0 0.0
    %3277 = vmatprep.subr.mxu0 0.0
    %3278 = vmatpush1.msra.mxu0 0.0
    %3279 = vmatprep.subr.mxu0 0.0
    %3280 = vmatpush1.msra.mxu0 0.0
    %3281 = vmatprep.subr.mxu0 0.0
    %3282 = vmatpush1.msra.mxu0 0.0
    %3283 = vmatprep.subr.mxu0 0.0
    %3284 = vmatpush1.msra.mxu0 0.0
    %3285 = vmatprep.subr.mxu0 0.0
    %3286 = vmatpush1.msra.mxu0 0.0
    %3287 = vmatprep.subr.mxu0 0.0
    %3288 = vmatpush1.msra.mxu0 0.0
    %3289 = vmatprep.subr.mxu0 0.0
    %3290 = vmatpush1.msra.mxu0 0.0
    %3291 = vmatprep.subr.mxu0 0.0
    %3292 = vmatpush1.msra.mxu0 0.0
    %3293 = vmatprep.subr.mxu0 0.0
    %3294 = vmatpush1.msra.mxu0 0.0
    %3295 = vmatprep.mubr.f32.mxu0 0.0
    %v3296 = vand.u32 %v2890, 4294901760
    %3297 = vmatmul.mubr.f32.gmra.mrb[0].mxu0 %v3296
    %v3298 = vpop.f32.mrb[0].mxu0
    %v3299 = vadd.f32 %v3216, %v3298
    %v3300 = vpop.f32.mrb[0].mxu0
    %3301 = vdwg.mxu0
    %3302 = vmatprep.subr.mxu0 0.0
    %v3303 = vand.u32 %v2885, 4294901760
    %3304 = vmatpush1.msra.mxu0 %v3303
    %3305 = vmatprep.subr.mxu0 0.0
    %v3306 = vand.u32 %v2886, 4294901760
    %3307 = vmatpush1.msra.mxu0 %v3306
    %3308 = vmatprep.subr.mxu0 0.0
    %v3309 = vand.u32 %v2887, 4294901760
    %3310 = vmatpush1.msra.mxu0 %v3309
    %3311 = vmatprep.subr.mxu0 0.0
    %v3312 = vand.u32 %v2888, 4294901760
    %3313 = vmatpush1.msra.mxu0 %v3312
    %3314 = vmatprep.subr.mxu0 0.0
    %3315 = vmatpush1.msra.mxu0 0.0
    %3316 = vmatprep.subr.mxu0 0.0
    %3317 = vmatpush1.msra.mxu0 0.0
    %3318 = vmatprep.subr.mxu0 0.0
    %3319 = vmatpush1.msra.mxu0 0.0
    %3320 = vmatprep.subr.mxu0 0.0
    %3321 = vmatpush1.msra.mxu0 0.0
    %3322 = vmatprep.subr.mxu0 0.0
    %3323 = vmatpush1.msra.mxu0 0.0
    %3324 = vmatprep.subr.mxu0 0.0
    %3325 = vmatpush1.msra.mxu0 0.0
    %3326 = vmatprep.subr.mxu0 0.0
    %3327 = vmatpush1.msra.mxu0 0.0
    %3328 = vmatprep.subr.mxu0 0.0
    %3329 = vmatpush1.msra.mxu0 0.0
    %3330 = vmatprep.subr.mxu0 0.0
    %3331 = vmatpush1.msra.mxu0 0.0
    %3332 = vmatprep.subr.mxu0 0.0
    %3333 = vmatpush1.msra.mxu0 0.0
    %3334 = vmatprep.subr.mxu0 0.0
    %3335 = vmatpush1.msra.mxu0 0.0
    %3336 = vmatprep.subr.mxu0 0.0
    %3337 = vmatpush1.msra.mxu0 0.0
    %3338 = vmatprep.subr.mxu0 0.0
    %3339 = vmatpush1.msra.mxu0 0.0
    %3340 = vmatprep.subr.mxu0 0.0
    %3341 = vmatpush1.msra.mxu0 0.0
    %3342 = vmatprep.subr.mxu0 0.0
    %3343 = vmatpush1.msra.mxu0 0.0
    %3344 = vmatprep.subr.mxu0 0.0
    %3345 = vmatpush1.msra.mxu0 0.0
    %3346 = vmatprep.subr.mxu0 0.0
    %3347 = vmatpush1.msra.mxu0 0.0
    %3348 = vmatprep.subr.mxu0 0.0
    %3349 = vmatpush1.msra.mxu0 0.0
    %3350 = vmatprep.subr.mxu0 0.0
    %3351 = vmatpush1.msra.mxu0 0.0
    %3352 = vmatprep.subr.mxu0 0.0
    %3353 = vmatpush1.msra.mxu0 0.0
    %3354 = vmatprep.subr.mxu0 0.0
    %3355 = vmatpush1.msra.mxu0 0.0
    %3356 = vmatprep.subr.mxu0 0.0
    %3357 = vmatpush1.msra.mxu0 0.0
    %3358 = vmatprep.subr.mxu0 0.0
    %3359 = vmatpush1.msra.mxu0 0.0
    %3360 = vmatprep.subr.mxu0 0.0
    %3361 = vmatpush1.msra.mxu0 0.0
    %3362 = vmatprep.subr.mxu0 0.0
    %3363 = vmatpush1.msra.mxu0 0.0
    %3364 = vmatprep.subr.mxu0 0.0
    %3365 = vmatpush1.msra.mxu0 0.0
    %3366 = vmatprep.subr.mxu0 0.0
    %3367 = vmatpush1.msra.mxu0 0.0
    %3368 = vmatprep.subr.mxu0 0.0
    %3369 = vmatpush1.msra.mxu0 0.0
    %3370 = vmatprep.mubr.f32.mxu0 0.0
    %v3371 = vand.u32 %v2890, 4294901760
    %3372 = vmatmul.mubr.f32.gmra.mrb[0].mxu0 %v3371
    %v3373 = vpop.f32.mrb[0].mxu0
    %v3374 = vadd.f32 %v3299, %v3373
    %v3375 = vpop.f32.mrb[0].mxu0
    %3376 = vdwg.mxu0
    %v3377 = vadd.f32 %v2883, %v3374
    %v3378 = vxor.u32 %v3377, 2147483648
    %v3379 = vmul.f32 %v3378, 1.442695
    %v3380 = vpow.pop %v3379
    %v3381 = vadd.f32 %v3380, 1.0
    %v3382 = vrcp.pop %v3381
    %v3383 = vmul.f32 1.0, %v3382
    %v3384 = vtanh.pop %v3377
    %v3385 = vld [vmem:[#allocation6] sm:$0x3]
    %3387 = vrot.lane.b32.xlu0 %v3385, 32
    %v3388 = vpop.permute.xlu0 %3387
    %v3390 = vmul.f32 %v3383, %v3388
    %3392 = vrot.lane.b32.xlu0 %v3384, 64
    %v3393 = vpop.permute.xlu0 %3392
    %v3395 = vmul.f32 %v3383, %v3393
    %3397 = vrot.lane.b32.xlu0 %v3395, 32
    %v3398 = vpop.permute.xlu0 %3397
    %v3400 = vadd.f32 %v3390, %v3398
    %v3401 = vtanh.pop %v3400
    %3403 = vrot.lane.b32.xlu0 %v3401, 64
    %v3404 = vpop.permute.xlu0 %3403
    %v3406 = vmul.f32 %v3383, %v3404
    %3408 = vrot.lane.b32.xlu0 %v3400, 96
    %v3409 = vpop.permute.xlu0 %3408
    %3411 = vst.msk [vmem:[#allocation6] sm:$0x3] %vm189, %v3409
    %3413 = vrot.lane.b32.xlu0 %v3406, 32
    %v3414 = vpop.permute.xlu0 %3413
    %3416 = vst.msk [vmem:[#allocation5] sm:$0x3] %vm189, %v3414
    %3417 = vst.msk [vmem:[#allocation4 + $0x8] sm:$0x3] %vm189, %v3414
    %v3418 = vld [vmem:[#allocation3 + $0xa] sm:$0x3]
    %v3419 = vld [vmem:[#allocation5] sm:$0x3]
    %v3420 = vld [vmem:[#allocation16] sm:$0xff]
    %v3421 = vld [vmem:[#allocation16 + $0x8] sm:$0xff]
    %v3422 = vld [vmem:[#allocation16 + $0x10] sm:$0xff]
    %v3423 = vld [vmem:[#allocation16 + $0x18] sm:$0xff]
    %v3425 = vsel %vm204, %v3419, 0
    %3427 = vmatprep.subr.mxu0 0.0
    %v3428 = vand.u32 %v3420, 4294901760
    %3429 = vmatpush1.msra.mxu0 %v3428
    %3430 = vmatprep.subr.mxu0 0.0
    %v3431 = vand.u32 %v3421, 4294901760
    %3432 = vmatpush1.msra.mxu0 %v3431
    %3433 = vmatprep.subr.mxu0 0.0
    %v3434 = vand.u32 %v3422, 4294901760
    %3435 = vmatpush1.msra.mxu0 %v3434
    %3436 = vmatprep.subr.mxu0 0.0
    %v3437 = vand.u32 %v3423, 4294901760
    %3438 = vmatpush1.msra.mxu0 %v3437
    %3439 = vmatprep.subr.mxu0 0.0
    %3440 = vmatpush1.msra.mxu0 0.0
    %3441 = vmatprep.subr.mxu0 0.0
    %3442 = vmatpush1.msra.mxu0 0.0
    %3443 = vmatprep.subr.mxu0 0.0
    %3444 = vmatpush1.msra.mxu0 0.0
    %3445 = vmatprep.subr.mxu0 0.0
    %3446 = vmatpush1.msra.mxu0 0.0
    %3447 = vmatprep.subr.mxu0 0.0
    %3448 = vmatpush1.msra.mxu0 0.0
    %3449 = vmatprep.subr.mxu0 0.0
    %3450 = vmatpush1.msra.mxu0 0.0
    %3451 = vmatprep.subr.mxu0 0.0
    %3452 = vmatpush1.msra.mxu0 0.0
    %3453 = vmatprep.subr.mxu0 0.0
    %3454 = vmatpush1.msra.mxu0 0.0
    %3455 = vmatprep.subr.mxu0 0.0
    %3456 = vmatpush1.msra.mxu0 0.0
    %3457 = vmatprep.subr.mxu0 0.0
    %3458 = vmatpush1.msra.mxu0 0.0
    %3459 = vmatprep.subr.mxu0 0.0
    %3460 = vmatpush1.msra.mxu0 0.0
    %3461 = vmatprep.subr.mxu0 0.0
    %3462 = vmatpush1.msra.mxu0 0.0
    %3463 = vmatprep.subr.mxu0 0.0
    %3464 = vmatpush1.msra.mxu0 0.0
    %3465 = vmatprep.subr.mxu0 0.0
    %3466 = vmatpush1.msra.mxu0 0.0
    %3467 = vmatprep.subr.mxu0 0.0
    %3468 = vmatpush1.msra.mxu0 0.0
    %3469 = vmatprep.subr.mxu0 0.0
    %3470 = vmatpush1.msra.mxu0 0.0
    %3471 = vmatprep.subr.mxu0 0.0
    %3472 = vmatpush1.msra.mxu0 0.0
    %3473 = vmatprep.subr.mxu0 0.0
    %3474 = vmatpush1.msra.mxu0 0.0
    %3475 = vmatprep.subr.mxu0 0.0
    %3476 = vmatpush1.msra.mxu0 0.0
    %3477 = vmatprep.subr.mxu0 0.0
    %3478 = vmatpush1.msra.mxu0 0.0
    %3479 = vmatprep.subr.mxu0 0.0
    %3480 = vmatpush1.msra.mxu0 0.0
    %3481 = vmatprep.subr.mxu0 0.0
    %3482 = vmatpush1.msra.mxu0 0.0
    %3483 = vmatprep.subr.mxu0 0.0
    %3484 = vmatpush1.msra.mxu0 0.0
    %3485 = vmatprep.subr.mxu0 0.0
    %3486 = vmatpush1.msra.mxu0 0.0
    %3487 = vmatprep.subr.mxu0 0.0
    %3488 = vmatpush1.msra.mxu0 0.0
    %3489 = vmatprep.subr.mxu0 0.0
    %3490 = vmatpush1.msra.mxu0 0.0
    %3491 = vmatprep.subr.mxu0 0.0
    %3492 = vmatpush1.msra.mxu0 0.0
    %3493 = vmatprep.subr.mxu0 0.0
    %3494 = vmatpush1.msra.mxu0 0.0
    %3495 = vmatprep.mubr.f32.mxu0 0.0
    %v3496 = vand.u32 %v3425, 4294901760
    %v3497 = vsub.f32 %v3425, %v3496
    %v3498 = vand.u32 %v3497, 4294901760
    %v3499 = vsub.f32 %v3497, %v3498
    %v3500 = vand.u32 %v3499, 4294901760
    %3501 = vmatmul.mubr.f32.gmra.mrb[0].mxu0 %v3500
    %v3502 = vpop.f32.mrb[0].mxu0
    %v3503 = vadd.f32 0.0, %v3502
    %v3504 = vpop.f32.mrb[0].mxu0
    %3505 = vdwg.mxu0
    %3506 = vmatprep.subr.mxu0 0.0
    %v3507 = vand.u32 %v3420, 4294901760
    %v3508 = vsub.f32 %v3420, %v3507
    %v3509 = vand.u32 %v3508, 4294901760
    %v3510 = vsub.f32 %v3508, %v3509
    %v3511 = vand.u32 %v3510, 4294901760
    %3512 = vmatpush1.msra.mxu0 %v3511
    %3513 = vmatprep.subr.mxu0 0.0
    %v3514 = vand.u32 %v3421, 4294901760
    %v3515 = vsub.f32 %v3421, %v3514
    %v3516 = vand.u32 %v3515, 4294901760
    %v3517 = vsub.f32 %v3515, %v3516
    %v3518 = vand.u32 %v3517, 4294901760
    %3519 = vmatpush1.msra.mxu0 %v3518
    %3520 = vmatprep.subr.mxu0 0.0
    %v3521 = vand.u32 %v3422, 4294901760
    %v3522 = vsub.f32 %v3422, %v3521
    %v3523 = vand.u32 %v3522, 4294901760
    %v3524 = vsub.f32 %v3522, %v3523
    %v3525 = vand.u32 %v3524, 4294901760
    %3526 = vmatpush1.msra.mxu0 %v3525
    %3527 = vmatprep.subr.mxu0 0.0
    %v3528 = vand.u32 %v3423, 4294901760
    %v3529 = vsub.f32 %v3423, %v3528
    %v3530 = vand.u32 %v3529, 4294901760
    %v3531 = vsub.f32 %v3529, %v3530
    %v3532 = vand.u32 %v3531, 4294901760
    %3533 = vmatpush1.msra.mxu0 %v3532
    %3534 = vmatprep.subr.mxu0 0.0
    %3535 = vmatpush1.msra.mxu0 0.0
    %3536 = vmatprep.subr.mxu0 0.0
    %3537 = vmatpush1.msra.mxu0 0.0
    %3538 = vmatprep.subr.mxu0 0.0
    %3539 = vmatpush1.msra.mxu0 0.0
    %3540 = vmatprep.subr.mxu0 0.0
    %3541 = vmatpush1.msra.mxu0 0.0
    %3542 = vmatprep.subr.mxu0 0.0
    %3543 = vmatpush1.msra.mxu0 0.0
    %3544 = vmatprep.subr.mxu0 0.0
    %3545 = vmatpush1.msra.mxu0 0.0
    %3546 = vmatprep.subr.mxu0 0.0
    %3547 = vmatpush1.msra.mxu0 0.0
    %3548 = vmatprep.subr.mxu0 0.0
    %3549 = vmatpush1.msra.mxu0 0.0
    %3550 = vmatprep.subr.mxu0 0.0
    %3551 = vmatpush1.msra.mxu0 0.0
    %3552 = vmatprep.subr.mxu0 0.0
    %3553 = vmatpush1.msra.mxu0 0.0
    %3554 = vmatprep.subr.mxu0 0.0
    %3555 = vmatpush1.msra.mxu0 0.0
    %3556 = vmatprep.subr.mxu0 0.0
    %3557 = vmatpush1.msra.mxu0 0.0
    %3558 = vmatprep.subr.mxu0 0.0
    %3559 = vmatpush1.msra.mxu0 0.0
    %3560 = vmatprep.subr.mxu0 0.0
    %3561 = vmatpush1.msra.mxu0 0.0
    %3562 = vmatprep.subr.mxu0 0.0
    %3563 = vmatpush1.msra.mxu0 0.0
    %3564 = vmatprep.subr.mxu0 0.0
    %3565 = vmatpush1.msra.mxu0 0.0
    %3566 = vmatprep.subr.mxu0 0.0
    %3567 = vmatpush1.msra.mxu0 0.0
    %3568 = vmatprep.subr.mxu0 0.0
    %3569 = vmatpush1.msra.mxu0 0.0
    %3570 = vmatprep.subr.mxu0 0.0
    %3571 = vmatpush1.msra.mxu0 0.0
    %3572 = vmatprep.subr.mxu0 0.0
    %3573 = vmatpush1.msra.mxu0 0.0
    %3574 = vmatprep.subr.mxu0 0.0
    %3575 = vmatpush1.msra.mxu0 0.0
    %3576 = vmatprep.subr.mxu0 0.0
    %3577 = vmatpush1.msra.mxu0 0.0
    %3578 = vmatprep.subr.mxu0 0.0
    %3579 = vmatpush1.msra.mxu0 0.0
    %3580 = vmatprep.subr.mxu0 0.0
    %3581 = vmatpush1.msra.mxu0 0.0
    %3582 = vmatprep.subr.mxu0 0.0
    %3583 = vmatpush1.msra.mxu0 0.0
    %3584 = vmatprep.subr.mxu0 0.0
    %3585 = vmatpush1.msra.mxu0 0.0
    %3586 = vmatprep.subr.mxu0 0.0
    %3587 = vmatpush1.msra.mxu0 0.0
    %3588 = vmatprep.subr.mxu0 0.0
    %3589 = vmatpush1.msra.mxu0 0.0
    %3590 = vmatprep.mubr.f32.mxu0 0.0
    %v3591 = vand.u32 %v3425, 4294901760
    %3592 = vmatmul.mubr.f32.gmra.mrb[0].mxu0 %v3591
    %v3593 = vpop.f32.mrb[0].mxu0
    %v3594 = vadd.f32 %v3503, %v3593
    %v3595 = vpop.f32.mrb[0].mxu0
    %3596 = vdwg.mxu0
    %3597 = vmatprep.subr.mxu0 0.0
    %v3598 = vand.u32 %v3420, 4294901760
    %v3599 = vsub.f32 %v3420, %v3598
    %3600 = vmatpush1.msra.mxu0 %v3599
    %3601 = vmatprep.subr.mxu0 0.0
    %v3602 = vand.u32 %v3421, 4294901760
    %v3603 = vsub.f32 %v3421, %v3602
    %3604 = vmatpush1.msra.mxu0 %v3603
    %3605 = vmatprep.subr.mxu0 0.0
    %v3606 = vand.u32 %v3422, 4294901760
    %v3607 = vsub.f32 %v3422, %v3606
    %3608 = vmatpush1.msra.mxu0 %v3607
    %3609 = vmatprep.subr.mxu0 0.0
    %v3610 = vand.u32 %v3423, 4294901760
    %v3611 = vsub.f32 %v3423, %v3610
    %3612 = vmatpush1.msra.mxu0 %v3611
    %3613 = vmatprep.subr.mxu0 0.0
    %3614 = vmatpush1.msra.mxu0 0.0
    %3615 = vmatprep.subr.mxu0 0.0
    %3616 = vmatpush1.msra.mxu0 0.0
    %3617 = vmatprep.subr.mxu0 0.0
    %3618 = vmatpush1.msra.mxu0 0.0
    %3619 = vmatprep.subr.mxu0 0.0
    %3620 = vmatpush1.msra.mxu0 0.0
    %3621 = vmatprep.subr.mxu0 0.0
    %3622 = vmatpush1.msra.mxu0 0.0
    %3623 = vmatprep.subr.mxu0 0.0
    %3624 = vmatpush1.msra.mxu0 0.0
    %3625 = vmatprep.subr.mxu0 0.0
    %3626 = vmatpush1.msra.mxu0 0.0
    %3627 = vmatprep.subr.mxu0 0.0
    %3628 = vmatpush1.msra.mxu0 0.0
    %3629 = vmatprep.subr.mxu0 0.0
    %3630 = vmatpush1.msra.mxu0 0.0
    %3631 = vmatprep.subr.mxu0 0.0
    %3632 = vmatpush1.msra.mxu0 0.0
    %3633 = vmatprep.subr.mxu0 0.0
    %3634 = vmatpush1.msra.mxu0 0.0
    %3635 = vmatprep.subr.mxu0 0.0
    %3636 = vmatpush1.msra.mxu0 0.0
    %3637 = vmatprep.subr.mxu0 0.0
    %3638 = vmatpush1.msra.mxu0 0.0
    %3639 = vmatprep.subr.mxu0 0.0
    %3640 = vmatpush1.msra.mxu0 0.0
    %3641 = vmatprep.subr.mxu0 0.0
    %3642 = vmatpush1.msra.mxu0 0.0
    %3643 = vmatprep.subr.mxu0 0.0
    %3644 = vmatpush1.msra.mxu0 0.0
    %3645 = vmatprep.subr.mxu0 0.0
    %3646 = vmatpush1.msra.mxu0 0.0
    %3647 = vmatprep.subr.mxu0 0.0
    %3648 = vmatpush1.msra.mxu0 0.0
    %3649 = vmatprep.subr.mxu0 0.0
    %3650 = vmatpush1.msra.mxu0 0.0
    %3651 = vmatprep.subr.mxu0 0.0
    %3652 = vmatpush1.msra.mxu0 0.0
    %3653 = vmatprep.subr.mxu0 0.0
    %3654 = vmatpush1.msra.mxu0 0.0
    %3655 = vmatprep.subr.mxu0 0.0
    %3656 = vmatpush1.msra.mxu0 0.0
    %3657 = vmatprep.subr.mxu0 0.0
    %3658 = vmatpush1.msra.mxu0 0.0
    %3659 = vmatprep.subr.mxu0 0.0
    %3660 = vmatpush1.msra.mxu0 0.0
    %3661 = vmatprep.subr.mxu0 0.0
    %3662 = vmatpush1.msra.mxu0 0.0
    %3663 = vmatprep.subr.mxu0 0.0
    %3664 = vmatpush1.msra.mxu0 0.0
    %3665 = vmatprep.subr.mxu0 0.0
    %3666 = vmatpush1.msra.mxu0 0.0
    %3667 = vmatprep.subr.mxu0 0.0
    %3668 = vmatpush1.msra.mxu0 0.0
    %3669 = vmatprep.mubr.f32.mxu0 0.0
    %v3670 = vand.u32 %v3425, 4294901760
    %v3671 = vsub.f32 %v3425, %v3670
    %3672 = vmatmul.mubr.f32.gmra.mrb[0].mxu0 %v3671
    %v3673 = vpop.f32.mrb[0].mxu0
    %v3674 = vadd.f32 %v3594, %v3673
    %v3675 = vpop.f32.mrb[0].mxu0
    %3676 = vdwg.mxu0
    %3677 = vmatprep.subr.mxu0 0.0
    %v3678 = vand.u32 %v3420, 4294901760
    %3679 = vmatpush1.msra.mxu0 %v3678
    %3680 = vmatprep.subr.mxu0 0.0
    %v3681 = vand.u32 %v3421, 4294901760
    %3682 = vmatpush1.msra.mxu0 %v3681
    %3683 = vmatprep.subr.mxu0 0.0
    %v3684 = vand.u32 %v3422, 4294901760
    %3685 = vmatpush1.msra.mxu0 %v3684
    %3686 = vmatprep.subr.mxu0 0.0
    %v3687 = vand.u32 %v3423, 4294901760
    %3688 = vmatpush1.msra.mxu0 %v3687
    %3689 = vmatprep.subr.mxu0 0.0
    %3690 = vmatpush1.msra.mxu0 0.0
    %3691 = vmatprep.subr.mxu0 0.0
    %3692 = vmatpush1.msra.mxu0 0.0
    %3693 = vmatprep.subr.mxu0 0.0
    %3694 = vmatpush1.msra.mxu0 0.0
    %3695 = vmatprep.subr.mxu0 0.0
    %3696 = vmatpush1.msra.mxu0 0.0
    %3697 = vmatprep.subr.mxu0 0.0
    %3698 = vmatpush1.msra.mxu0 0.0
    %3699 = vmatprep.subr.mxu0 0.0
    %3700 = vmatpush1.msra.mxu0 0.0
    %3701 = vmatprep.subr.mxu0 0.0
    %3702 = vmatpush1.msra.mxu0 0.0
    %3703 = vmatprep.subr.mxu0 0.0
    %3704 = vmatpush1.msra.mxu0 0.0
    %3705 = vmatprep.subr.mxu0 0.0
    %3706 = vmatpush1.msra.mxu0 0.0
    %3707 = vmatprep.subr.mxu0 0.0
    %3708 = vmatpush1.msra.mxu0 0.0
    %3709 = vmatprep.subr.mxu0 0.0
    %3710 = vmatpush1.msra.mxu0 0.0
    %3711 = vmatprep.subr.mxu0 0.0
    %3712 = vmatpush1.msra.mxu0 0.0
    %3713 = vmatprep.subr.mxu0 0.0
    %3714 = vmatpush1.msra.mxu0 0.0
    %3715 = vmatprep.subr.mxu0 0.0
    %3716 = vmatpush1.msra.mxu0 0.0
    %3717 = vmatprep.subr.mxu0 0.0
    %3718 = vmatpush1.msra.mxu0 0.0
    %3719 = vmatprep.subr.mxu0 0.0
    %3720 = vmatpush1.msra.mxu0 0.0
    %3721 = vmatprep.subr.mxu0 0.0
    %3722 = vmatpush1.msra.mxu0 0.0
    %3723 = vmatprep.subr.mxu0 0.0
    %3724 = vmatpush1.msra.mxu0 0.0
    %3725 = vmatprep.subr.mxu0 0.0
    %3726 = vmatpush1.msra.mxu0 0.0
    %3727 = vmatprep.subr.mxu0 0.0
    %3728 = vmatpush1.msra.mxu0 0.0
    %3729 = vmatprep.subr.mxu0 0.0
    %3730 = vmatpush1.msra.mxu0 0.0
    %3731 = vmatprep.subr.mxu0 0.0
    %3732 = vmatpush1.msra.mxu0 0.0
    %3733 = vmatprep.subr.mxu0 0.0
    %3734 = vmatpush1.msra.mxu0 0.0
    %3735 = vmatprep.subr.mxu0 0.0
    %3736 = vmatpush1.msra.mxu0 0.0
    %3737 = vmatprep.subr.mxu0 0.0
    %3738 = vmatpush1.msra.mxu0 0.0
    %3739 = vmatprep.subr.mxu0 0.0
    %3740 = vmatpush1.msra.mxu0 0.0
    %3741 = vmatprep.subr.mxu0 0.0
    %3742 = vmatpush1.msra.mxu0 0.0
    %3743 = vmatprep.subr.mxu0 0.0
    %3744 = vmatpush1.msra.mxu0 0.0
    %3745 = vmatprep.mubr.f32.mxu0 0.0
    %v3746 = vand.u32 %v3425, 4294901760
    %v3747 = vsub.f32 %v3425, %v3746
    %v3748 = vand.u32 %v3747, 4294901760
    %3749 = vmatmul.mubr.f32.gmra.mrb[0].mxu0 %v3748
    %v3750 = vpop.f32.mrb[0].mxu0
    %v3751 = vadd.f32 %v3674, %v3750
    %v3752 = vpop.f32.mrb[0].mxu0
    %3753 = vdwg.mxu0
    %3754 = vmatprep.subr.mxu0 0.0
    %v3755 = vand.u32 %v3420, 4294901760
    %v3756 = vsub.f32 %v3420, %v3755
    %v3757 = vand.u32 %v3756, 4294901760
    %3758 = vmatpush1.msra.mxu0 %v3757
    %3759 = vmatprep.subr.mxu0 0.0
    %v3760 = vand.u32 %v3421, 4294901760
    %v3761 = vsub.f32 %v3421, %v3760
    %v3762 = vand.u32 %v3761, 4294901760
    %3763 = vmatpush1.msra.mxu0 %v3762
    %3764 = vmatprep.subr.mxu0 0.0
    %v3765 = vand.u32 %v3422, 4294901760
    %v3766 = vsub.f32 %v3422, %v3765
    %v3767 = vand.u32 %v3766, 4294901760
    %3768 = vmatpush1.msra.mxu0 %v3767
    %3769 = vmatprep.subr.mxu0 0.0
    %v3770 = vand.u32 %v3423, 4294901760
    %v3771 = vsub.f32 %v3423, %v3770
    %v3772 = vand.u32 %v3771, 4294901760
    %3773 = vmatpush1.msra.mxu0 %v3772
    %3774 = vmatprep.subr.mxu0 0.0
    %3775 = vmatpush1.msra.mxu0 0.0
    %3776 = vmatprep.subr.mxu0 0.0
    %3777 = vmatpush1.msra.mxu0 0.0
    %3778 = vmatprep.subr.mxu0 0.0
    %3779 = vmatpush1.msra.mxu0 0.0
    %3780 = vmatprep.subr.mxu0 0.0
    %3781 = vmatpush1.msra.mxu0 0.0
    %3782 = vmatprep.subr.mxu0 0.0
    %3783 = vmatpush1.msra.mxu0 0.0
    %3784 = vmatprep.subr.mxu0 0.0
    %3785 = vmatpush1.msra.mxu0 0.0
    %3786 = vmatprep.subr.mxu0 0.0
    %3787 = vmatpush1.msra.mxu0 0.0
    %3788 = vmatprep.subr.mxu0 0.0
    %3789 = vmatpush1.msra.mxu0 0.0
    %3790 = vmatprep.subr.mxu0 0.0
    %3791 = vmatpush1.msra.mxu0 0.0
    %3792 = vmatprep.subr.mxu0 0.0
    %3793 = vmatpush1.msra.mxu0 0.0
    %3794 = vmatprep.subr.mxu0 0.0
    %3795 = vmatpush1.msra.mxu0 0.0
    %3796 = vmatprep.subr.mxu0 0.0
    %3797 = vmatpush1.msra.mxu0 0.0
    %3798 = vmatprep.subr.mxu0 0.0
    %3799 = vmatpush1.msra.mxu0 0.0
    %3800 = vmatprep.subr.mxu0 0.0
    %3801 = vmatpush1.msra.mxu0 0.0
    %3802 = vmatprep.subr.mxu0 0.0
    %3803 = vmatpush1.msra.mxu0 0.0
    %3804 = vmatprep.subr.mxu0 0.0
    %3805 = vmatpush1.msra.mxu0 0.0
    %3806 = vmatprep.subr.mxu0 0.0
    %3807 = vmatpush1.msra.mxu0 0.0
    %3808 = vmatprep.subr.mxu0 0.0
    %3809 = vmatpush1.msra.mxu0 0.0
    %3810 = vmatprep.subr.mxu0 0.0
    %3811 = vmatpush1.msra.mxu0 0.0
    %3812 = vmatprep.subr.mxu0 0.0
    %3813 = vmatpush1.msra.mxu0 0.0
    %3814 = vmatprep.subr.mxu0 0.0
    %3815 = vmatpush1.msra.mxu0 0.0
    %3816 = vmatprep.subr.mxu0 0.0
    %3817 = vmatpush1.msra.mxu0 0.0
    %3818 = vmatprep.subr.mxu0 0.0
    %3819 = vmatpush1.msra.mxu0 0.0
    %3820 = vmatprep.subr.mxu0 0.0
    %3821 = vmatpush1.msra.mxu0 0.0
    %3822 = vmatprep.subr.mxu0 0.0
    %3823 = vmatpush1.msra.mxu0 0.0
    %3824 = vmatprep.subr.mxu0 0.0
    %3825 = vmatpush1.msra.mxu0 0.0
    %3826 = vmatprep.subr.mxu0 0.0
    %3827 = vmatpush1.msra.mxu0 0.0
    %3828 = vmatprep.subr.mxu0 0.0
    %3829 = vmatpush1.msra.mxu0 0.0
    %3830 = vmatprep.mubr.f32.mxu0 0.0
    %v3831 = vand.u32 %v3425, 4294901760
    %3832 = vmatmul.mubr.f32.gmra.mrb[0].mxu0 %v3831
    %v3833 = vpop.f32.mrb[0].mxu0
    %v3834 = vadd.f32 %v3751, %v3833
    %v3835 = vpop.f32.mrb[0].mxu0
    %3836 = vdwg.mxu0
    %3837 = vmatprep.subr.mxu0 0.0
    %v3838 = vand.u32 %v3420, 4294901760
    %3839 = vmatpush1.msra.mxu0 %v3838
    %3840 = vmatprep.subr.mxu0 0.0
    %v3841 = vand.u32 %v3421, 4294901760
    %3842 = vmatpush1.msra.mxu0 %v3841
    %3843 = vmatprep.subr.mxu0 0.0
    %v3844 = vand.u32 %v3422, 4294901760
    %3845 = vmatpush1.msra.mxu0 %v3844
    %3846 = vmatprep.subr.mxu0 0.0
    %v3847 = vand.u32 %v3423, 4294901760
    %3848 = vmatpush1.msra.mxu0 %v3847
    %3849 = vmatprep.subr.mxu0 0.0
    %3850 = vmatpush1.msra.mxu0 0.0
    %3851 = vmatprep.subr.mxu0 0.0
    %3852 = vmatpush1.msra.mxu0 0.0
    %3853 = vmatprep.subr.mxu0 0.0
    %3854 = vmatpush1.msra.mxu0 0.0
    %3855 = vmatprep.subr.mxu0 0.0
    %3856 = vmatpush1.msra.mxu0 0.0
    %3857 = vmatprep.subr.mxu0 0.0
    %3858 = vmatpush1.msra.mxu0 0.0
    %3859 = vmatprep.subr.mxu0 0.0
    %3860 = vmatpush1.msra.mxu0 0.0
    %3861 = vmatprep.subr.mxu0 0.0
    %3862 = vmatpush1.msra.mxu0 0.0
    %3863 = vmatprep.subr.mxu0 0.0
    %3864 = vmatpush1.msra.mxu0 0.0
    %3865 = vmatprep.subr.mxu0 0.0
    %3866 = vmatpush1.msra.mxu0 0.0
    %3867 = vmatprep.subr.mxu0 0.0
    %3868 = vmatpush1.msra.mxu0 0.0
    %3869 = vmatprep.subr.mxu0 0.0
    %3870 = vmatpush1.msra.mxu0 0.0
    %3871 = vmatprep.subr.mxu0 0.0
    %3872 = vmatpush1.msra.mxu0 0.0
    %3873 = vmatprep.subr.mxu0 0.0
    %3874 = vmatpush1.msra.mxu0 0.0
    %3875 = vmatprep.subr.mxu0 0.0
    %3876 = vmatpush1.msra.mxu0 0.0
    %3877 = vmatprep.subr.mxu0 0.0
    %3878 = vmatpush1.msra.mxu0 0.0
    %3879 = vmatprep.subr.mxu0 0.0
    %3880 = vmatpush1.msra.mxu0 0.0
    %3881 = vmatprep.subr.mxu0 0.0
    %3882 = vmatpush1.msra.mxu0 0.0
    %3883 = vmatprep.subr.mxu0 0.0
    %3884 = vmatpush1.msra.mxu0 0.0
    %3885 = vmatprep.subr.mxu0 0.0
    %3886 = vmatpush1.msra.mxu0 0.0
    %3887 = vmatprep.subr.mxu0 0.0
    %3888 = vmatpush1.msra.mxu0 0.0
    %3889 = vmatprep.subr.mxu0 0.0
    %3890 = vmatpush1.msra.mxu0 0.0
    %3891 = vmatprep.subr.mxu0 0.0
    %3892 = vmatpush1.msra.mxu0 0.0
    %3893 = vmatprep.subr.mxu0 0.0
    %3894 = vmatpush1.msra.mxu0 0.0
    %3895 = vmatprep.subr.mxu0 0.0
    %3896 = vmatpush1.msra.mxu0 0.0
    %3897 = vmatprep.subr.mxu0 0.0
    %3898 = vmatpush1.msra.mxu0 0.0
    %3899 = vmatprep.subr.mxu0 0.0
    %3900 = vmatpush1.msra.mxu0 0.0
    %3901 = vmatprep.subr.mxu0 0.0
    %3902 = vmatpush1.msra.mxu0 0.0
    %3903 = vmatprep.subr.mxu0 0.0
    %3904 = vmatpush1.msra.mxu0 0.0
    %3905 = vmatprep.mubr.f32.mxu0 0.0
    %v3906 = vand.u32 %v3425, 4294901760
    %3907 = vmatmul.mubr.f32.gmra.mrb[0].mxu0 %v3906
    %v3908 = vpop.f32.mrb[0].mxu0
    %v3909 = vadd.f32 %v3834, %v3908
    %v3910 = vpop.f32.mrb[0].mxu0
    %3911 = vdwg.mxu0
    %v3912 = vadd.f32 %v3418, %v3909
    %v3913 = vxor.u32 %v3912, 2147483648
    %v3914 = vmul.f32 %v3913, 1.442695
    %v3915 = vpow.pop %v3914
    %v3916 = vadd.f32 %v3915, 1.0
    %v3917 = vrcp.pop %v3916
    %v3918 = vmul.f32 1.0, %v3917
    %v3919 = vtanh.pop %v3912
    %v3920 = vld [vmem:[#allocation6] sm:$0x3]
    %3922 = vrot.lane.b32.xlu0 %v3920, 32
    %v3923 = vpop.permute.xlu0 %3922
    %v3925 = vmul.f32 %v3918, %v3923
    %3927 = vrot.lane.b32.xlu0 %v3919, 64
    %v3928 = vpop.permute.xlu0 %3927
    %v3930 = vmul.f32 %v3918, %v3928
    %3932 = vrot.lane.b32.xlu0 %v3930, 32
    %v3933 = vpop.permute.xlu0 %3932
    %v3935 = vadd.f32 %v3925, %v3933
    %v3936 = vtanh.pop %v3935
    %3938 = vrot.lane.b32.xlu0 %v3936, 64
    %v3939 = vpop.permute.xlu0 %3938
    %v3941 = vmul.f32 %v3918, %v3939
    %3943 = vrot.lane.b32.xlu0 %v3935, 96
    %v3944 = vpop.permute.xlu0 %3943
    %3946 = vst.msk [vmem:[#allocation6] sm:$0x3] %vm189, %v3944
    %3948 = vrot.lane.b32.xlu0 %v3941, 32
    %v3949 = vpop.permute.xlu0 %3948
    %3951 = vst.msk [vmem:[#allocation5] sm:$0x3] %vm189, %v3949
    %3952 = vst.msk [vmem:[#allocation4 + $0xa] sm:$0x3] %vm189, %v3949
    %v3953 = vld [vmem:[#allocation3 + $0xc] sm:$0x3]
    %v3954 = vld [vmem:[#allocation5] sm:$0x3]
    %v3955 = vld [vmem:[#allocation16] sm:$0xff]
    %v3956 = vld [vmem:[#allocation16 + $0x8] sm:$0xff]
    %v3957 = vld [vmem:[#allocation16 + $0x10] sm:$0xff]
    %v3958 = vld [vmem:[#allocation16 + $0x18] sm:$0xff]
    %v3960 = vsel %vm204, %v3954, 0
    %3962 = vmatprep.subr.mxu0 0.0
    %v3963 = vand.u32 %v3955, 4294901760
    %3964 = vmatpush1.msra.mxu0 %v3963
    %3965 = vmatprep.subr.mxu0 0.0
    %v3966 = vand.u32 %v3956, 4294901760
    %3967 = vmatpush1.msra.mxu0 %v3966
    %3968 = vmatprep.subr.mxu0 0.0
    %v3969 = vand.u32 %v3957, 4294901760
    %3970 = vmatpush1.msra.mxu0 %v3969
    %3971 = vmatprep.subr.mxu0 0.0
    %v3972 = vand.u32 %v3958, 4294901760
    %3973 = vmatpush1.msra.mxu0 %v3972
    %3974 = vmatprep.subr.mxu0 0.0
    %3975 = vmatpush1.msra.mxu0 0.0
    %3976 = vmatprep.subr.mxu0 0.0
    %3977 = vmatpush1.msra.mxu0 0.0
    %3978 = vmatprep.subr.mxu0 0.0
    %3979 = vmatpush1.msra.mxu0 0.0
    %3980 = vmatprep.subr.mxu0 0.0
    %3981 = vmatpush1.msra.mxu0 0.0
    %3982 = vmatprep.subr.mxu0 0.0
    %3983 = vmatpush1.msra.mxu0 0.0
    %3984 = vmatprep.subr.mxu0 0.0
    %3985 = vmatpush1.msra.mxu0 0.0
    %3986 = vmatprep.subr.mxu0 0.0
    %3987 = vmatpush1.msra.mxu0 0.0
    %3988 = vmatprep.subr.mxu0 0.0
    %3989 = vmatpush1.msra.mxu0 0.0
    %3990 = vmatprep.subr.mxu0 0.0
    %3991 = vmatpush1.msra.mxu0 0.0
    %3992 = vmatprep.subr.mxu0 0.0
    %3993 = vmatpush1.msra.mxu0 0.0
    %3994 = vmatprep.subr.mxu0 0.0
    %3995 = vmatpush1.msra.mxu0 0.0
    %3996 = vmatprep.subr.mxu0 0.0
    %3997 = vmatpush1.msra.mxu0 0.0
    %3998 = vmatprep.subr.mxu0 0.0
    %3999 = vmatpush1.msra.mxu0 0.0
    %4000 = vmatprep.subr.mxu0 0.0
    %4001 = vmatpush1.msra.mxu0 0.0
    %4002 = vmatprep.subr.mxu0 0.0
    %4003 = vmatpush1.msra.mxu0 0.0
    %4004 = vmatprep.subr.mxu0 0.0
    %4005 = vmatpush1.msra.mxu0 0.0
    %4006 = vmatprep.subr.mxu0 0.0
    %4007 = vmatpush1.msra.mxu0 0.0
    %4008 = vmatprep.subr.mxu0 0.0
    %4009 = vmatpush1.msra.mxu0 0.0
    %4010 = vmatprep.subr.mxu0 0.0
    %4011 = vmatpush1.msra.mxu0 0.0
    %4012 = vmatprep.subr.mxu0 0.0
    %4013 = vmatpush1.msra.mxu0 0.0
    %4014 = vmatprep.subr.mxu0 0.0
    %4015 = vmatpush1.msra.mxu0 0.0
    %4016 = vmatprep.subr.mxu0 0.0
    %4017 = vmatpush1.msra.mxu0 0.0
    %4018 = vmatprep.subr.mxu0 0.0
    %4019 = vmatpush1.msra.mxu0 0.0
    %4020 = vmatprep.subr.mxu0 0.0
    %4021 = vmatpush1.msra.mxu0 0.0
    %4022 = vmatprep.subr.mxu0 0.0
    %4023 = vmatpush1.msra.mxu0 0.0
    %4024 = vmatprep.subr.mxu0 0.0
    %4025 = vmatpush1.msra.mxu0 0.0
    %4026 = vmatprep.subr.mxu0 0.0
    %4027 = vmatpush1.msra.mxu0 0.0
    %4028 = vmatprep.subr.mxu0 0.0
    %4029 = vmatpush1.msra.mxu0 0.0
    %4030 = vmatprep.mubr.f32.mxu0 0.0
    %v4031 = vand.u32 %v3960, 4294901760
    %v4032 = vsub.f32 %v3960, %v4031
    %v4033 = vand.u32 %v4032, 4294901760
    %v4034 = vsub.f32 %v4032, %v4033
    %v4035 = vand.u32 %v4034, 4294901760
    %4036 = vmatmul.mubr.f32.gmra.mrb[0].mxu0 %v4035
    %v4037 = vpop.f32.mrb[0].mxu0
    %v4038 = vadd.f32 0.0, %v4037
    %v4039 = vpop.f32.mrb[0].mxu0
    %4040 = vdwg.mxu0
    %4041 = vmatprep.subr.mxu0 0.0
    %v4042 = vand.u32 %v3955, 4294901760
    %v4043 = vsub.f32 %v3955, %v4042
    %v4044 = vand.u32 %v4043, 4294901760
    %v4045 = vsub.f32 %v4043, %v4044
    %v4046 = vand.u32 %v4045, 4294901760
    %4047 = vmatpush1.msra.mxu0 %v4046
    %4048 = vmatprep.subr.mxu0 0.0
    %v4049 = vand.u32 %v3956, 4294901760
    %v4050 = vsub.f32 %v3956, %v4049
    %v4051 = vand.u32 %v4050, 4294901760
    %v4052 = vsub.f32 %v4050, %v4051
    %v4053 = vand.u32 %v4052, 4294901760
    %4054 = vmatpush1.msra.mxu0 %v4053
    %4055 = vmatprep.subr.mxu0 0.0
    %v4056 = vand.u32 %v3957, 4294901760
    %v4057 = vsub.f32 %v3957, %v4056
    %v4058 = vand.u32 %v4057, 4294901760
    %v4059 = vsub.f32 %v4057, %v4058
    %v4060 = vand.u32 %v4059, 4294901760
    %4061 = vmatpush1.msra.mxu0 %v4060
    %4062 = vmatprep.subr.mxu0 0.0
    %v4063 = vand.u32 %v3958, 4294901760
    %v4064 = vsub.f32 %v3958, %v4063
    %v4065 = vand.u32 %v4064, 4294901760
    %v4066 = vsub.f32 %v4064, %v4065
    %v4067 = vand.u32 %v4066, 4294901760
    %4068 = vmatpush1.msra.mxu0 %v4067
    %4069 = vmatprep.subr.mxu0 0.0
    %4070 = vmatpush1.msra.mxu0 0.0
    %4071 = vmatprep.subr.mxu0 0.0
    %4072 = vmatpush1.msra.mxu0 0.0
    %4073 = vmatprep.subr.mxu0 0.0
    %4074 = vmatpush1.msra.mxu0 0.0
    %4075 = vmatprep.subr.mxu0 0.0
    %4076 = vmatpush1.msra.mxu0 0.0
    %4077 = vmatprep.subr.mxu0 0.0
    %4078 = vmatpush1.msra.mxu0 0.0
    %4079 = vmatprep.subr.mxu0 0.0
    %4080 = vmatpush1.msra.mxu0 0.0
    %4081 = vmatprep.subr.mxu0 0.0
    %4082 = vmatpush1.msra.mxu0 0.0
    %4083 = vmatprep.subr.mxu0 0.0
    %4084 = vmatpush1.msra.mxu0 0.0
    %4085 = vmatprep.subr.mxu0 0.0
    %4086 = vmatpush1.msra.mxu0 0.0
    %4087 = vmatprep.subr.mxu0 0.0
    %4088 = vmatpush1.msra.mxu0 0.0
    %4089 = vmatprep.subr.mxu0 0.0
    %4090 = vmatpush1.msra.mxu0 0.0
    %4091 = vmatprep.subr.mxu0 0.0
    %4092 = vmatpush1.msra.mxu0 0.0
    %4093 = vmatprep.subr.mxu0 0.0
    %4094 = vmatpush1.msra.mxu0 0.0
    %4095 = vmatprep.subr.mxu0 0.0
    %4096 = vmatpush1.msra.mxu0 0.0
    %4097 = vmatprep.subr.mxu0 0.0
    %4098 = vmatpush1.msra.mxu0 0.0
    %4099 = vmatprep.subr.mxu0 0.0
    %4100 = vmatpush1.msra.mxu0 0.0
    %4101 = vmatprep.subr.mxu0 0.0
    %4102 = vmatpush1.msra.mxu0 0.0
    %4103 = vmatprep.subr.mxu0 0.0
    %4104 = vmatpush1.msra.mxu0 0.0
    %4105 = vmatprep.subr.mxu0 0.0
    %4106 = vmatpush1.msra.mxu0 0.0
    %4107 = vmatprep.subr.mxu0 0.0
    %4108 = vmatpush1.msra.mxu0 0.0
    %4109 = vmatprep.subr.mxu0 0.0
    %4110 = vmatpush1.msra.mxu0 0.0
    %4111 = vmatprep.subr.mxu0 0.0
    %4112 = vmatpush1.msra.mxu0 0.0
    %4113 = vmatprep.subr.mxu0 0.0
    %4114 = vmatpush1.msra.mxu0 0.0
    %4115 = vmatprep.subr.mxu0 0.0
    %4116 = vmatpush1.msra.mxu0 0.0
    %4117 = vmatprep.subr.mxu0 0.0
    %4118 = vmatpush1.msra.mxu0 0.0
    %4119 = vmatprep.subr.mxu0 0.0
    %4120 = vmatpush1.msra.mxu0 0.0
    %4121 = vmatprep.subr.mxu0 0.0
    %4122 = vmatpush1.msra.mxu0 0.0
    %4123 = vmatprep.subr.mxu0 0.0
    %4124 = vmatpush1.msra.mxu0 0.0
    %4125 = vmatprep.mubr.f32.mxu0 0.0
    %v4126 = vand.u32 %v3960, 4294901760
    %4127 = vmatmul.mubr.f32.gmra.mrb[0].mxu0 %v4126
    %v4128 = vpop.f32.mrb[0].mxu0
    %v4129 = vadd.f32 %v4038, %v4128
    %v4130 = vpop.f32.mrb[0].mxu0
    %4131 = vdwg.mxu0
    %4132 = vmatprep.subr.mxu0 0.0
    %v4133 = vand.u32 %v3955, 4294901760
    %v4134 = vsub.f32 %v3955, %v4133
    %4135 = vmatpush1.msra.mxu0 %v4134
    %4136 = vmatprep.subr.mxu0 0.0
    %v4137 = vand.u32 %v3956, 4294901760
    %v4138 = vsub.f32 %v3956, %v4137
    %4139 = vmatpush1.msra.mxu0 %v4138
    %4140 = vmatprep.subr.mxu0 0.0
    %v4141 = vand.u32 %v3957, 4294901760
    %v4142 = vsub.f32 %v3957, %v4141
    %4143 = vmatpush1.msra.mxu0 %v4142
    %4144 = vmatprep.subr.mxu0 0.0
    %v4145 = vand.u32 %v3958, 4294901760
    %v4146 = vsub.f32 %v3958, %v4145
    %4147 = vmatpush1.msra.mxu0 %v4146
    %4148 = vmatprep.subr.mxu0 0.0
    %4149 = vmatpush1.msra.mxu0 0.0
    %4150 = vmatprep.subr.mxu0 0.0
    %4151 = vmatpush1.msra.mxu0 0.0
    %4152 = vmatprep.subr.mxu0 0.0
    %4153 = vmatpush1.msra.mxu0 0.0
    %4154 = vmatprep.subr.mxu0 0.0
    %4155 = vmatpush1.msra.mxu0 0.0
    %4156 = vmatprep.subr.mxu0 0.0
    %4157 = vmatpush1.msra.mxu0 0.0
    %4158 = vmatprep.subr.mxu0 0.0
    %4159 = vmatpush1.msra.mxu0 0.0
    %4160 = vmatprep.subr.mxu0 0.0
    %4161 = vmatpush1.msra.mxu0 0.0
    %4162 = vmatprep.subr.mxu0 0.0
    %4163 = vmatpush1.msra.mxu0 0.0
    %4164 = vmatprep.subr.mxu0 0.0
    %4165 = vmatpush1.msra.mxu0 0.0
    %4166 = vmatprep.subr.mxu0 0.0
    %4167 = vmatpush1.msra.mxu0 0.0
    %4168 = vmatprep.subr.mxu0 0.0
    %4169 = vmatpush1.msra.mxu0 0.0
    %4170 = vmatprep.subr.mxu0 0.0
    %4171 = vmatpush1.msra.mxu0 0.0
    %4172 = vmatprep.subr.mxu0 0.0
    %4173 = vmatpush1.msra.mxu0 0.0
    %4174 = vmatprep.subr.mxu0 0.0
    %4175 = vmatpush1.msra.mxu0 0.0
    %4176 = vmatprep.subr.mxu0 0.0
    %4177 = vmatpush1.msra.mxu0 0.0
    %4178 = vmatprep.subr.mxu0 0.0
    %4179 = vmatpush1.msra.mxu0 0.0
    %4180 = vmatprep.subr.mxu0 0.0
    %4181 = vmatpush1.msra.mxu0 0.0
    %4182 = vmatprep.subr.mxu0 0.0
    %4183 = vmatpush1.msra.mxu0 0.0
    %4184 = vmatprep.subr.mxu0 0.0
    %4185 = vmatpush1.msra.mxu0 0.0
    %4186 = vmatprep.subr.mxu0 0.0
    %4187 = vmatpush1.msra.mxu0 0.0
    %4188 = vmatprep.subr.mxu0 0.0
    %4189 = vmatpush1.msra.mxu0 0.0
    %4190 = vmatprep.subr.mxu0 0.0
    %4191 = vmatpush1.msra.mxu0 0.0
    %4192 = vmatprep.subr.mxu0 0.0
    %4193 = vmatpush1.msra.mxu0 0.0
    %4194 = vmatprep.subr.mxu0 0.0
    %4195 = vmatpush1.msra.mxu0 0.0
    %4196 = vmatprep.subr.mxu0 0.0
    %4197 = vmatpush1.msra.mxu0 0.0
    %4198 = vmatprep.subr.mxu0 0.0
    %4199 = vmatpush1.msra.mxu0 0.0
    %4200 = vmatprep.subr.mxu0 0.0
    %4201 = vmatpush1.msra.mxu0 0.0
    %4202 = vmatprep.subr.mxu0 0.0
    %4203 = vmatpush1.msra.mxu0 0.0
    %4204 = vmatprep.mubr.f32.mxu0 0.0
    %v4205 = vand.u32 %v3960, 4294901760
    %v4206 = vsub.f32 %v3960, %v4205
    %4207 = vmatmul.mubr.f32.gmra.mrb[0].mxu0 %v4206
    %v4208 = vpop.f32.mrb[0].mxu0
    %v4209 = vadd.f32 %v4129, %v4208
    %v4210 = vpop.f32.mrb[0].mxu0
    %4211 = vdwg.mxu0
    %4212 = vmatprep.subr.mxu0 0.0
    %v4213 = vand.u32 %v3955, 4294901760
    %4214 = vmatpush1.msra.mxu0 %v4213
    %4215 = vmatprep.subr.mxu0 0.0
    %v4216 = vand.u32 %v3956, 4294901760
    %4217 = vmatpush1.msra.mxu0 %v4216
    %4218 = vmatprep.subr.mxu0 0.0
    %v4219 = vand.u32 %v3957, 4294901760
    %4220 = vmatpush1.msra.mxu0 %v4219
    %4221 = vmatprep.subr.mxu0 0.0
    %v4222 = vand.u32 %v3958, 4294901760
    %4223 = vmatpush1.msra.mxu0 %v4222
    %4224 = vmatprep.subr.mxu0 0.0
    %4225 = vmatpush1.msra.mxu0 0.0
    %4226 = vmatprep.subr.mxu0 0.0
    %4227 = vmatpush1.msra.mxu0 0.0
    %4228 = vmatprep.subr.mxu0 0.0
    %4229 = vmatpush1.msra.mxu0 0.0
    %4230 = vmatprep.subr.mxu0 0.0
    %4231 = vmatpush1.msra.mxu0 0.0
    %4232 = vmatprep.subr.mxu0 0.0
    %4233 = vmatpush1.msra.mxu0 0.0
    %4234 = vmatprep.subr.mxu0 0.0
    %4235 = vmatpush1.msra.mxu0 0.0
    %4236 = vmatprep.subr.mxu0 0.0
    %4237 = vmatpush1.msra.mxu0 0.0
    %4238 = vmatprep.subr.mxu0 0.0
    %4239 = vmatpush1.msra.mxu0 0.0
    %4240 = vmatprep.subr.mxu0 0.0
    %4241 = vmatpush1.msra.mxu0 0.0
    %4242 = vmatprep.subr.mxu0 0.0
    %4243 = vmatpush1.msra.mxu0 0.0
    %4244 = vmatprep.subr.mxu0 0.0
    %4245 = vmatpush1.msra.mxu0 0.0
    %4246 = vmatprep.subr.mxu0 0.0
    %4247 = vmatpush1.msra.mxu0 0.0
    %4248 = vmatprep.subr.mxu0 0.0
    %4249 = vmatpush1.msra.mxu0 0.0
    %4250 = vmatprep.subr.mxu0 0.0
    %4251 = vmatpush1.msra.mxu0 0.0
    %4252 = vmatprep.subr.mxu0 0.0
    %4253 = vmatpush1.msra.mxu0 0.0
    %4254 = vmatprep.subr.mxu0 0.0
    %4255 = vmatpush1.msra.mxu0 0.0
    %4256 = vmatprep.subr.mxu0 0.0
    %4257 = vmatpush1.msra.mxu0 0.0
    %4258 = vmatprep.subr.mxu0 0.0
    %4259 = vmatpush1.msra.mxu0 0.0
    %4260 = vmatprep.subr.mxu0 0.0
    %4261 = vmatpush1.msra.mxu0 0.0
    %4262 = vmatprep.subr.mxu0 0.0
    %4263 = vmatpush1.msra.mxu0 0.0
    %4264 = vmatprep.subr.mxu0 0.0
    %4265 = vmatpush1.msra.mxu0 0.0
    %4266 = vmatprep.subr.mxu0 0.0
    %4267 = vmatpush1.msra.mxu0 0.0
    %4268 = vmatprep.subr.mxu0 0.0
    %4269 = vmatpush1.msra.mxu0 0.0
    %4270 = vmatprep.subr.mxu0 0.0
    %4271 = vmatpush1.msra.mxu0 0.0
    %4272 = vmatprep.subr.mxu0 0.0
    %4273 = vmatpush1.msra.mxu0 0.0
    %4274 = vmatprep.subr.mxu0 0.0
    %4275 = vmatpush1.msra.mxu0 0.0
    %4276 = vmatprep.subr.mxu0 0.0
    %4277 = vmatpush1.msra.mxu0 0.0
    %4278 = vmatprep.subr.mxu0 0.0
    %4279 = vmatpush1.msra.mxu0 0.0
    %4280 = vmatprep.mubr.f32.mxu0 0.0
    %v4281 = vand.u32 %v3960, 4294901760
    %v4282 = vsub.f32 %v3960, %v4281
    %v4283 = vand.u32 %v4282, 4294901760
    %4284 = vmatmul.mubr.f32.gmra.mrb[0].mxu0 %v4283
    %v4285 = vpop.f32.mrb[0].mxu0
    %v4286 = vadd.f32 %v4209, %v4285
    %v4287 = vpop.f32.mrb[0].mxu0
    %4288 = vdwg.mxu0
    %4289 = vmatprep.subr.mxu0 0.0
    %v4290 = vand.u32 %v3955, 4294901760
    %v4291 = vsub.f32 %v3955, %v4290
    %v4292 = vand.u32 %v4291, 4294901760
    %4293 = vmatpush1.msra.mxu0 %v4292
    %4294 = vmatprep.subr.mxu0 0.0
    %v4295 = vand.u32 %v3956, 4294901760
    %v4296 = vsub.f32 %v3956, %v4295
    %v4297 = vand.u32 %v4296, 4294901760
    %4298 = vmatpush1.msra.mxu0 %v4297
    %4299 = vmatprep.subr.mxu0 0.0
    %v4300 = vand.u32 %v3957, 4294901760
    %v4301 = vsub.f32 %v3957, %v4300
    %v4302 = vand.u32 %v4301, 4294901760
    %4303 = vmatpush1.msra.mxu0 %v4302
    %4304 = vmatprep.subr.mxu0 0.0
    %v4305 = vand.u32 %v3958, 4294901760
    %v4306 = vsub.f32 %v3958, %v4305
    %v4307 = vand.u32 %v4306, 4294901760
    %4308 = vmatpush1.msra.mxu0 %v4307
    %4309 = vmatprep.subr.mxu0 0.0
    %4310 = vmatpush1.msra.mxu0 0.0
    %4311 = vmatprep.subr.mxu0 0.0
    %4312 = vmatpush1.msra.mxu0 0.0
    %4313 = vmatprep.subr.mxu0 0.0
    %4314 = vmatpush1.msra.mxu0 0.0
    %4315 = vmatprep.subr.mxu0 0.0
    %4316 = vmatpush1.msra.mxu0 0.0
    %4317 = vmatprep.subr.mxu0 0.0
    %4318 = vmatpush1.msra.mxu0 0.0
    %4319 = vmatprep.subr.mxu0 0.0
    %4320 = vmatpush1.msra.mxu0 0.0
    %4321 = vmatprep.subr.mxu0 0.0
    %4322 = vmatpush1.msra.mxu0 0.0
    %4323 = vmatprep.subr.mxu0 0.0
    %4324 = vmatpush1.msra.mxu0 0.0
    %4325 = vmatprep.subr.mxu0 0.0
    %4326 = vmatpush1.msra.mxu0 0.0
    %4327 = vmatprep.subr.mxu0 0.0
    %4328 = vmatpush1.msra.mxu0 0.0
    %4329 = vmatprep.subr.mxu0 0.0
    %4330 = vmatpush1.msra.mxu0 0.0
    %4331 = vmatprep.subr.mxu0 0.0
    %4332 = vmatpush1.msra.mxu0 0.0
    %4333 = vmatprep.subr.mxu0 0.0
    %4334 = vmatpush1.msra.mxu0 0.0
    %4335 = vmatprep.subr.mxu0 0.0
    %4336 = vmatpush1.msra.mxu0 0.0
    %4337 = vmatprep.subr.mxu0 0.0
    %4338 = vmatpush1.msra.mxu0 0.0
    %4339 = vmatprep.subr.mxu0 0.0
    %4340 = vmatpush1.msra.mxu0 0.0
    %4341 = vmatprep.subr.mxu0 0.0
    %4342 = vmatpush1.msra.mxu0 0.0
    %4343 = vmatprep.subr.mxu0 0.0
    %4344 = vmatpush1.msra.mxu0 0.0
    %4345 = vmatprep.subr.mxu0 0.0
    %4346 = vmatpush1.msra.mxu0 0.0
    %4347 = vmatprep.subr.mxu0 0.0
    %4348 = vmatpush1.msra.mxu0 0.0
    %4349 = vmatprep.subr.mxu0 0.0
    %4350 = vmatpush1.msra.mxu0 0.0
    %4351 = vmatprep.subr.mxu0 0.0
    %4352 = vmatpush1.msra.mxu0 0.0
    %4353 = vmatprep.subr.mxu0 0.0
    %4354 = vmatpush1.msra.mxu0 0.0
    %4355 = vmatprep.subr.mxu0 0.0
    %4356 = vmatpush1.msra.mxu0 0.0
    %4357 = vmatprep.subr.mxu0 0.0
    %4358 = vmatpush1.msra.mxu0 0.0
    %4359 = vmatprep.subr.mxu0 0.0
    %4360 = vmatpush1.msra.mxu0 0.0
    %4361 = vmatprep.subr.mxu0 0.0
    %4362 = vmatpush1.msra.mxu0 0.0
    %4363 = vmatprep.subr.mxu0 0.0
    %4364 = vmatpush1.msra.mxu0 0.0
    %4365 = vmatprep.mubr.f32.mxu0 0.0
    %v4366 = vand.u32 %v3960, 4294901760
    %4367 = vmatmul.mubr.f32.gmra.mrb[0].mxu0 %v4366
    %v4368 = vpop.f32.mrb[0].mxu0
    %v4369 = vadd.f32 %v4286, %v4368
    %v4370 = vpop.f32.mrb[0].mxu0
    %4371 = vdwg.mxu0
    %4372 = vmatprep.subr.mxu0 0.0
    %v4373 = vand.u32 %v3955, 4294901760
    %4374 = vmatpush1.msra.mxu0 %v4373
    %4375 = vmatprep.subr.mxu0 0.0
    %v4376 = vand.u32 %v3956, 4294901760
    %4377 = vmatpush1.msra.mxu0 %v4376
    %4378 = vmatprep.subr.mxu0 0.0
    %v4379 = vand.u32 %v3957, 4294901760
    %4380 = vmatpush1.msra.mxu0 %v4379
    %4381 = vmatprep.subr.mxu0 0.0
    %v4382 = vand.u32 %v3958, 4294901760
    %4383 = vmatpush1.msra.mxu0 %v4382
    %4384 = vmatprep.subr.mxu0 0.0
    %4385 = vmatpush1.msra.mxu0 0.0
    %4386 = vmatprep.subr.mxu0 0.0
    %4387 = vmatpush1.msra.mxu0 0.0
    %4388 = vmatprep.subr.mxu0 0.0
    %4389 = vmatpush1.msra.mxu0 0.0
    %4390 = vmatprep.subr.mxu0 0.0
    %4391 = vmatpush1.msra.mxu0 0.0
    %4392 = vmatprep.subr.mxu0 0.0
    %4393 = vmatpush1.msra.mxu0 0.0
    %4394 = vmatprep.subr.mxu0 0.0
    %4395 = vmatpush1.msra.mxu0 0.0
    %4396 = vmatprep.subr.mxu0 0.0
    %4397 = vmatpush1.msra.mxu0 0.0
    %4398 = vmatprep.subr.mxu0 0.0
    %4399 = vmatpush1.msra.mxu0 0.0
    %4400 = vmatprep.subr.mxu0 0.0
    %4401 = vmatpush1.msra.mxu0 0.0
    %4402 = vmatprep.subr.mxu0 0.0
    %4403 = vmatpush1.msra.mxu0 0.0
    %4404 = vmatprep.subr.mxu0 0.0
    %4405 = vmatpush1.msra.mxu0 0.0
    %4406 = vmatprep.subr.mxu0 0.0
    %4407 = vmatpush1.msra.mxu0 0.0
    %4408 = vmatprep.subr.mxu0 0.0
    %4409 = vmatpush1.msra.mxu0 0.0
    %4410 = vmatprep.subr.mxu0 0.0
    %4411 = vmatpush1.msra.mxu0 0.0
    %4412 = vmatprep.subr.mxu0 0.0
    %4413 = vmatpush1.msra.mxu0 0.0
    %4414 = vmatprep.subr.mxu0 0.0
    %4415 = vmatpush1.msra.mxu0 0.0
    %4416 = vmatprep.subr.mxu0 0.0
    %4417 = vmatpush1.msra.mxu0 0.0
    %4418 = vmatprep.subr.mxu0 0.0
    %4419 = vmatpush1.msra.mxu0 0.0
    %4420 = vmatprep.subr.mxu0 0.0
    %4421 = vmatpush1.msra.mxu0 0.0
    %4422 = vmatprep.subr.mxu0 0.0
    %4423 = vmatpush1.msra.mxu0 0.0
    %4424 = vmatprep.subr.mxu0 0.0
    %4425 = vmatpush1.msra.mxu0 0.0
    %4426 = vmatprep.subr.mxu0 0.0
    %4427 = vmatpush1.msra.mxu0 0.0
    %4428 = vmatprep.subr.mxu0 0.0
    %4429 = vmatpush1.msra.mxu0 0.0
    %4430 = vmatprep.subr.mxu0 0.0
    %4431 = vmatpush1.msra.mxu0 0.0
    %4432 = vmatprep.subr.mxu0 0.0
    %4433 = vmatpush1.msra.mxu0 0.0
    %4434 = vmatprep.subr.mxu0 0.0
    %4435 = vmatpush1.msra.mxu0 0.0
    %4436 = vmatprep.subr.mxu0 0.0
    %4437 = vmatpush1.msra.mxu0 0.0
    %4438 = vmatprep.subr.mxu0 0.0
    %4439 = vmatpush1.msra.mxu0 0.0
    %4440 = vmatprep.mubr.f32.mxu0 0.0
    %v4441 = vand.u32 %v3960, 4294901760
    %4442 = vmatmul.mubr.f32.gmra.mrb[0].mxu0 %v4441
    %v4443 = vpop.f32.mrb[0].mxu0
    %v4444 = vadd.f32 %v4369, %v4443
    %v4445 = vpop.f32.mrb[0].mxu0
    %4446 = vdwg.mxu0
    %v4447 = vadd.f32 %v3953, %v4444
    %v4448 = vxor.u32 %v4447, 2147483648
    %v4449 = vmul.f32 %v4448, 1.442695
    %v4450 = vpow.pop %v4449
    %v4451 = vadd.f32 %v4450, 1.0
    %v4452 = vrcp.pop %v4451
    %v4453 = vmul.f32 1.0, %v4452
    %v4454 = vtanh.pop %v4447
    %v4455 = vld [vmem:[#allocation6] sm:$0x3]
    %4457 = vrot.lane.b32.xlu0 %v4455, 32
    %v4458 = vpop.permute.xlu0 %4457
    %v4460 = vmul.f32 %v4453, %v4458
    %4462 = vrot.lane.b32.xlu0 %v4454, 64
    %v4463 = vpop.permute.xlu0 %4462
    %v4465 = vmul.f32 %v4453, %v4463
    %4467 = vrot.lane.b32.xlu0 %v4465, 32
    %v4468 = vpop.permute.xlu0 %4467
    %v4470 = vadd.f32 %v4460, %v4468
    %v4471 = vtanh.pop %v4470
    %4473 = vrot.lane.b32.xlu0 %v4471, 64
    %v4474 = vpop.permute.xlu0 %4473
    %v4476 = vmul.f32 %v4453, %v4474
    %4478 = vrot.lane.b32.xlu0 %v4470, 96
    %v4479 = vpop.permute.xlu0 %4478
    %4481 = vst.msk [vmem:[#allocation6] sm:$0x3] %vm189, %v4479
    %4483 = vrot.lane.b32.xlu0 %v4476, 32
    %v4484 = vpop.permute.xlu0 %4483
    %4486 = vst.msk [vmem:[#allocation5] sm:$0x3] %vm189, %v4484
    %4487 = vst.msk [vmem:[#allocation4 + $0xc] sm:$0x3] %vm189, %v4484
    %v4488 = vld [vmem:[#allocation3 + $0xe] sm:$0x3]
    %v4489 = vld [vmem:[#allocation5] sm:$0x3]
    %v4490 = vld [vmem:[#allocation16] sm:$0xff]
    %v4491 = vld [vmem:[#allocation16 + $0x8] sm:$0xff]
    %v4492 = vld [vmem:[#allocation16 + $0x10] sm:$0xff]
    %v4493 = vld [vmem:[#allocation16 + $0x18] sm:$0xff]
    %v4495 = vsel %vm204, %v4489, 0
    %4497 = vmatprep.subr.mxu0 0.0
    %v4498 = vand.u32 %v4490, 4294901760
    %4499 = vmatpush1.msra.mxu0 %v4498
    %4500 = vmatprep.subr.mxu0 0.0
    %v4501 = vand.u32 %v4491, 4294901760
    %4502 = vmatpush1.msra.mxu0 %v4501
    %4503 = vmatprep.subr.mxu0 0.0
    %v4504 = vand.u32 %v4492, 4294901760
    %4505 = vmatpush1.msra.mxu0 %v4504
    %4506 = vmatprep.subr.mxu0 0.0
    %v4507 = vand.u32 %v4493, 4294901760
    %4508 = vmatpush1.msra.mxu0 %v4507
    %4509 = vmatprep.subr.mxu0 0.0
    %4510 = vmatpush1.msra.mxu0 0.0
    %4511 = vmatprep.subr.mxu0 0.0
    %4512 = vmatpush1.msra.mxu0 0.0
    %4513 = vmatprep.subr.mxu0 0.0
    %4514 = vmatpush1.msra.mxu0 0.0
    %4515 = vmatprep.subr.mxu0 0.0
    %4516 = vmatpush1.msra.mxu0 0.0
    %4517 = vmatprep.subr.mxu0 0.0
    %4518 = vmatpush1.msra.mxu0 0.0
    %4519 = vmatprep.subr.mxu0 0.0
    %4520 = vmatpush1.msra.mxu0 0.0
    %4521 = vmatprep.subr.mxu0 0.0
    %4522 = vmatpush1.msra.mxu0 0.0
    %4523 = vmatprep.subr.mxu0 0.0
    %4524 = vmatpush1.msra.mxu0 0.0
    %4525 = vmatprep.subr.mxu0 0.0
    %4526 = vmatpush1.msra.mxu0 0.0
    %4527 = vmatprep.subr.mxu0 0.0
    %4528 = vmatpush1.msra.mxu0 0.0
    %4529 = vmatprep.subr.mxu0 0.0
    %4530 = vmatpush1.msra.mxu0 0.0
    %4531 = vmatprep.subr.mxu0 0.0
    %4532 = vmatpush1.msra.mxu0 0.0
    %4533 = vmatprep.subr.mxu0 0.0
    %4534 = vmatpush1.msra.mxu0 0.0
    %4535 = vmatprep.subr.mxu0 0.0
    %4536 = vmatpush1.msra.mxu0 0.0
    %4537 = vmatprep.subr.mxu0 0.0
    %4538 = vmatpush1.msra.mxu0 0.0
    %4539 = vmatprep.subr.mxu0 0.0
    %4540 = vmatpush1.msra.mxu0 0.0
    %4541 = vmatprep.subr.mxu0 0.0
    %4542 = vmatpush1.msra.mxu0 0.0
    %4543 = vmatprep.subr.mxu0 0.0
    %4544 = vmatpush1.msra.mxu0 0.0
    %4545 = vmatprep.subr.mxu0 0.0
    %4546 = vmatpush1.msra.mxu0 0.0
    %4547 = vmatprep.subr.mxu0 0.0
    %4548 = vmatpush1.msra.mxu0 0.0
    %4549 = vmatprep.subr.mxu0 0.0
    %4550 = vmatpush1.msra.mxu0 0.0
    %4551 = vmatprep.subr.mxu0 0.0
    %4552 = vmatpush1.msra.mxu0 0.0
    %4553 = vmatprep.subr.mxu0 0.0
    %4554 = vmatpush1.msra.mxu0 0.0
    %4555 = vmatprep.subr.mxu0 0.0
    %4556 = vmatpush1.msra.mxu0 0.0
    %4557 = vmatprep.subr.mxu0 0.0
    %4558 = vmatpush1.msra.mxu0 0.0
    %4559 = vmatprep.subr.mxu0 0.0
    %4560 = vmatpush1.msra.mxu0 0.0
    %4561 = vmatprep.subr.mxu0 0.0
    %4562 = vmatpush1.msra.mxu0 0.0
    %4563 = vmatprep.subr.mxu0 0.0
    %4564 = vmatpush1.msra.mxu0 0.0
    %4565 = vmatprep.mubr.f32.mxu0 0.0
    %v4566 = vand.u32 %v4495, 4294901760
    %v4567 = vsub.f32 %v4495, %v4566
    %v4568 = vand.u32 %v4567, 4294901760
    %v4569 = vsub.f32 %v4567, %v4568
    %v4570 = vand.u32 %v4569, 4294901760
    %4571 = vmatmul.mubr.f32.gmra.mrb[0].mxu0 %v4570
    %v4572 = vpop.f32.mrb[0].mxu0
    %v4573 = vadd.f32 0.0, %v4572
    %v4574 = vpop.f32.mrb[0].mxu0
    %4575 = vdwg.mxu0
    %4576 = vmatprep.subr.mxu0 0.0
    %v4577 = vand.u32 %v4490, 4294901760
    %v4578 = vsub.f32 %v4490, %v4577
    %v4579 = vand.u32 %v4578, 4294901760
    %v4580 = vsub.f32 %v4578, %v4579
    %v4581 = vand.u32 %v4580, 4294901760
    %4582 = vmatpush1.msra.mxu0 %v4581
    %4583 = vmatprep.subr.mxu0 0.0
    %v4584 = vand.u32 %v4491, 4294901760
    %v4585 = vsub.f32 %v4491, %v4584
    %v4586 = vand.u32 %v4585, 4294901760
    %v4587 = vsub.f32 %v4585, %v4586
    %v4588 = vand.u32 %v4587, 4294901760
    %4589 = vmatpush1.msra.mxu0 %v4588
    %4590 = vmatprep.subr.mxu0 0.0
    %v4591 = vand.u32 %v4492, 4294901760
    %v4592 = vsub.f32 %v4492, %v4591
    %v4593 = vand.u32 %v4592, 4294901760
    %v4594 = vsub.f32 %v4592, %v4593
    %v4595 = vand.u32 %v4594, 4294901760
    %4596 = vmatpush1.msra.mxu0 %v4595
    %4597 = vmatprep.subr.mxu0 0.0
    %v4598 = vand.u32 %v4493, 4294901760
    %v4599 = vsub.f32 %v4493, %v4598
    %v4600 = vand.u32 %v4599, 4294901760
    %v4601 = vsub.f32 %v4599, %v4600
    %v4602 = vand.u32 %v4601, 4294901760
    %4603 = vmatpush1.msra.mxu0 %v4602
    %4604 = vmatprep.subr.mxu0 0.0
    %4605 = vmatpush1.msra.mxu0 0.0
    %4606 = vmatprep.subr.mxu0 0.0
    %4607 = vmatpush1.msra.mxu0 0.0
    %4608 = vmatprep.subr.mxu0 0.0
    %4609 = vmatpush1.msra.mxu0 0.0
    %4610 = vmatprep.subr.mxu0 0.0
    %4611 = vmatpush1.msra.mxu0 0.0
    %4612 = vmatprep.subr.mxu0 0.0
    %4613 = vmatpush1.msra.mxu0 0.0
    %4614 = vmatprep.subr.mxu0 0.0
    %4615 = vmatpush1.msra.mxu0 0.0
    %4616 = vmatprep.subr.mxu0 0.0
    %4617 = vmatpush1.msra.mxu0 0.0
    %4618 = vmatprep.subr.mxu0 0.0
    %4619 = vmatpush1.msra.mxu0 0.0
    %4620 = vmatprep.subr.mxu0 0.0
    %4621 = vmatpush1.msra.mxu0 0.0
    %4622 = vmatprep.subr.mxu0 0.0
    %4623 = vmatpush1.msra.mxu0 0.0
    %4624 = vmatprep.subr.mxu0 0.0
    %4625 = vmatpush1.msra.mxu0 0.0
    %4626 = vmatprep.subr.mxu0 0.0
    %4627 = vmatpush1.msra.mxu0 0.0
    %4628 = vmatprep.subr.mxu0 0.0
    %4629 = vmatpush1.msra.mxu0 0.0
    %4630 = vmatprep.subr.mxu0 0.0
    %4631 = vmatpush1.msra.mxu0 0.0
    %4632 = vmatprep.subr.mxu0 0.0
    %4633 = vmatpush1.msra.mxu0 0.0
    %4634 = vmatprep.subr.mxu0 0.0
    %4635 = vmatpush1.msra.mxu0 0.0
    %4636 = vmatprep.subr.mxu0 0.0
    %4637 = vmatpush1.msra.mxu0 0.0
    %4638 = vmatprep.subr.mxu0 0.0
    %4639 = vmatpush1.msra.mxu0 0.0
    %4640 = vmatprep.subr.mxu0 0.0
    %4641 = vmatpush1.msra.mxu0 0.0
    %4642 = vmatprep.subr.mxu0 0.0
    %4643 = vmatpush1.msra.mxu0 0.0
    %4644 = vmatprep.subr.mxu0 0.0
    %4645 = vmatpush1.msra.mxu0 0.0
    %4646 = vmatprep.subr.mxu0 0.0
    %4647 = vmatpush1.msra.mxu0 0.0
    %4648 = vmatprep.subr.mxu0 0.0
    %4649 = vmatpush1.msra.mxu0 0.0
    %4650 = vmatprep.subr.mxu0 0.0
    %4651 = vmatpush1.msra.mxu0 0.0
    %4652 = vmatprep.subr.mxu0 0.0
    %4653 = vmatpush1.msra.mxu0 0.0
    %4654 = vmatprep.subr.mxu0 0.0
    %4655 = vmatpush1.msra.mxu0 0.0
    %4656 = vmatprep.subr.mxu0 0.0
    %4657 = vmatpush1.msra.mxu0 0.0
    %4658 = vmatprep.subr.mxu0 0.0
    %4659 = vmatpush1.msra.mxu0 0.0
    %4660 = vmatprep.mubr.f32.mxu0 0.0
    %v4661 = vand.u32 %v4495, 4294901760
    %4662 = vmatmul.mubr.f32.gmra.mrb[0].mxu0 %v4661
    %v4663 = vpop.f32.mrb[0].mxu0
    %v4664 = vadd.f32 %v4573, %v4663
    %v4665 = vpop.f32.mrb[0].mxu0
    %4666 = vdwg.mxu0
    %4667 = vmatprep.subr.mxu0 0.0
    %v4668 = vand.u32 %v4490, 4294901760
    %v4669 = vsub.f32 %v4490, %v4668
    %4670 = vmatpush1.msra.mxu0 %v4669
    %4671 = vmatprep.subr.mxu0 0.0
    %v4672 = vand.u32 %v4491, 4294901760
    %v4673 = vsub.f32 %v4491, %v4672
    %4674 = vmatpush1.msra.mxu0 %v4673
    %4675 = vmatprep.subr.mxu0 0.0
    %v4676 = vand.u32 %v4492, 4294901760
    %v4677 = vsub.f32 %v4492, %v4676
    %4678 = vmatpush1.msra.mxu0 %v4677
    %4679 = vmatprep.subr.mxu0 0.0
    %v4680 = vand.u32 %v4493, 4294901760
    %v4681 = vsub.f32 %v4493, %v4680
    %4682 = vmatpush1.msra.mxu0 %v4681
    %4683 = vmatprep.subr.mxu0 0.0
    %4684 = vmatpush1.msra.mxu0 0.0
    %4685 = vmatprep.subr.mxu0 0.0
    %4686 = vmatpush1.msra.mxu0 0.0
    %4687 = vmatprep.subr.mxu0 0.0
    %4688 = vmatpush1.msra.mxu0 0.0
    %4689 = vmatprep.subr.mxu0 0.0
    %4690 = vmatpush1.msra.mxu0 0.0
    %4691 = vmatprep.subr.mxu0 0.0
    %4692 = vmatpush1.msra.mxu0 0.0
    %4693 = vmatprep.subr.mxu0 0.0
    %4694 = vmatpush1.msra.mxu0 0.0
    %4695 = vmatprep.subr.mxu0 0.0
    %4696 = vmatpush1.msra.mxu0 0.0
    %4697 = vmatprep.subr.mxu0 0.0
    %4698 = vmatpush1.msra.mxu0 0.0
    %4699 = vmatprep.subr.mxu0 0.0
    %4700 = vmatpush1.msra.mxu0 0.0
    %4701 = vmatprep.subr.mxu0 0.0
    %4702 = vmatpush1.msra.mxu0 0.0
    %4703 = vmatprep.subr.mxu0 0.0
    %4704 = vmatpush1.msra.mxu0 0.0
    %4705 = vmatprep.subr.mxu0 0.0
    %4706 = vmatpush1.msra.mxu0 0.0
    %4707 = vmatprep.subr.mxu0 0.0
    %4708 = vmatpush1.msra.mxu0 0.0
    %4709 = vmatprep.subr.mxu0 0.0
    %4710 = vmatpush1.msra.mxu0 0.0
    %4711 = vmatprep.subr.mxu0 0.0
    %4712 = vmatpush1.msra.mxu0 0.0
    %4713 = vmatprep.subr.mxu0 0.0
    %4714 = vmatpush1.msra.mxu0 0.0
    %4715 = vmatprep.subr.mxu0 0.0
    %4716 = vmatpush1.msra.mxu0 0.0
    %4717 = vmatprep.subr.mxu0 0.0
    %4718 = vmatpush1.msra.mxu0 0.0
    %4719 = vmatprep.subr.mxu0 0.0
    %4720 = vmatpush1.msra.mxu0 0.0
    %4721 = vmatprep.subr.mxu0 0.0
    %4722 = vmatpush1.msra.mxu0 0.0
    %4723 = vmatprep.subr.mxu0 0.0
    %4724 = vmatpush1.msra.mxu0 0.0
    %4725 = vmatprep.subr.mxu0 0.0
    %4726 = vmatpush1.msra.mxu0 0.0
    %4727 = vmatprep.subr.mxu0 0.0
    %4728 = vmatpush1.msra.mxu0 0.0
    %4729 = vmatprep.subr.mxu0 0.0
    %4730 = vmatpush1.msra.mxu0 0.0
    %4731 = vmatprep.subr.mxu0 0.0
    %4732 = vmatpush1.msra.mxu0 0.0
    %4733 = vmatprep.subr.mxu0 0.0
    %4734 = vmatpush1.msra.mxu0 0.0
    %4735 = vmatprep.subr.mxu0 0.0
    %4736 = vmatpush1.msra.mxu0 0.0
    %4737 = vmatprep.subr.mxu0 0.0
    %4738 = vmatpush1.msra.mxu0 0.0
    %4739 = vmatprep.mubr.f32.mxu0 0.0
    %v4740 = vand.u32 %v4495, 4294901760
    %v4741 = vsub.f32 %v4495, %v4740
    %4742 = vmatmul.mubr.f32.gmra.mrb[0].mxu0 %v4741
    %v4743 = vpop.f32.mrb[0].mxu0
    %v4744 = vadd.f32 %v4664, %v4743
    %v4745 = vpop.f32.mrb[0].mxu0
    %4746 = vdwg.mxu0
    %4747 = vmatprep.subr.mxu0 0.0
    %v4748 = vand.u32 %v4490, 4294901760
    %4749 = vmatpush1.msra.mxu0 %v4748
    %4750 = vmatprep.subr.mxu0 0.0
    %v4751 = vand.u32 %v4491, 4294901760
    %4752 = vmatpush1.msra.mxu0 %v4751
    %4753 = vmatprep.subr.mxu0 0.0
    %v4754 = vand.u32 %v4492, 4294901760
    %4755 = vmatpush1.msra.mxu0 %v4754
    %4756 = vmatprep.subr.mxu0 0.0
    %v4757 = vand.u32 %v4493, 4294901760
    %4758 = vmatpush1.msra.mxu0 %v4757
    %4759 = vmatprep.subr.mxu0 0.0
    %4760 = vmatpush1.msra.mxu0 0.0
    %4761 = vmatprep.subr.mxu0 0.0
    %4762 = vmatpush1.msra.mxu0 0.0
    %4763 = vmatprep.subr.mxu0 0.0
    %4764 = vmatpush1.msra.mxu0 0.0
    %4765 = vmatprep.subr.mxu0 0.0
    %4766 = vmatpush1.msra.mxu0 0.0
    %4767 = vmatprep.subr.mxu0 0.0
    %4768 = vmatpush1.msra.mxu0 0.0
    %4769 = vmatprep.subr.mxu0 0.0
    %4770 = vmatpush1.msra.mxu0 0.0
    %4771 = vmatprep.subr.mxu0 0.0
    %4772 = vmatpush1.msra.mxu0 0.0
    %4773 = vmatprep.subr.mxu0 0.0
    %4774 = vmatpush1.msra.mxu0 0.0
    %4775 = vmatprep.subr.mxu0 0.0
    %4776 = vmatpush1.msra.mxu0 0.0
    %4777 = vmatprep.subr.mxu0 0.0
    %4778 = vmatpush1.msra.mxu0 0.0
    %4779 = vmatprep.subr.mxu0 0.0
    %4780 = vmatpush1.msra.mxu0 0.0
    %4781 = vmatprep.subr.mxu0 0.0
    %4782 = vmatpush1.msra.mxu0 0.0
    %4783 = vmatprep.subr.mxu0 0.0
    %4784 = vmatpush1.msra.mxu0 0.0
    %4785 = vmatprep.subr.mxu0 0.0
    %4786 = vmatpush1.msra.mxu0 0.0
    %4787 = vmatprep.subr.mxu0 0.0
    %4788 = vmatpush1.msra.mxu0 0.0
    %4789 = vmatprep.subr.mxu0 0.0
    %4790 = vmatpush1.msra.mxu0 0.0
    %4791 = vmatprep.subr.mxu0 0.0
    %4792 = vmatpush1.msra.mxu0 0.0
    %4793 = vmatprep.subr.mxu0 0.0
    %4794 = vmatpush1.msra.mxu0 0.0
    %4795 = vmatprep.subr.mxu0 0.0
    %4796 = vmatpush1.msra.mxu0 0.0
    %4797 = vmatprep.subr.mxu0 0.0
    %4798 = vmatpush1.msra.mxu0 0.0
    %4799 = vmatprep.subr.mxu0 0.0
    %4800 = vmatpush1.msra.mxu0 0.0
    %4801 = vmatprep.subr.mxu0 0.0
    %4802 = vmatpush1.msra.mxu0 0.0
    %4803 = vmatprep.subr.mxu0 0.0
    %4804 = vmatpush1.msra.mxu0 0.0
    %4805 = vmatprep.subr.mxu0 0.0
    %4806 = vmatpush1.msra.mxu0 0.0
    %4807 = vmatprep.subr.mxu0 0.0
    %4808 = vmatpush1.msra.mxu0 0.0
    %4809 = vmatprep.subr.mxu0 0.0
    %4810 = vmatpush1.msra.mxu0 0.0
    %4811 = vmatprep.subr.mxu0 0.0
    %4812 = vmatpush1.msra.mxu0 0.0
    %4813 = vmatprep.subr.mxu0 0.0
    %4814 = vmatpush1.msra.mxu0 0.0
    %4815 = vmatprep.mubr.f32.mxu0 0.0
    %v4816 = vand.u32 %v4495, 4294901760
    %v4817 = vsub.f32 %v4495, %v4816
    %v4818 = vand.u32 %v4817, 4294901760
    %4819 = vmatmul.mubr.f32.gmra.mrb[0].mxu0 %v4818
    %v4820 = vpop.f32.mrb[0].mxu0
    %v4821 = vadd.f32 %v4744, %v4820
    %v4822 = vpop.f32.mrb[0].mxu0
    %4823 = vdwg.mxu0
    %4824 = vmatprep.subr.mxu0 0.0
    %v4825 = vand.u32 %v4490, 4294901760
    %v4826 = vsub.f32 %v4490, %v4825
    %v4827 = vand.u32 %v4826, 4294901760
    %4828 = vmatpush1.msra.mxu0 %v4827
    %4829 = vmatprep.subr.mxu0 0.0
    %v4830 = vand.u32 %v4491, 4294901760
    %v4831 = vsub.f32 %v4491, %v4830
    %v4832 = vand.u32 %v4831, 4294901760
    %4833 = vmatpush1.msra.mxu0 %v4832
    %4834 = vmatprep.subr.mxu0 0.0
    %v4835 = vand.u32 %v4492, 4294901760
    %v4836 = vsub.f32 %v4492, %v4835
    %v4837 = vand.u32 %v4836, 4294901760
    %4838 = vmatpush1.msra.mxu0 %v4837
    %4839 = vmatprep.subr.mxu0 0.0
    %v4840 = vand.u32 %v4493, 4294901760
    %v4841 = vsub.f32 %v4493, %v4840
    %v4842 = vand.u32 %v4841, 4294901760
    %4843 = vmatpush1.msra.mxu0 %v4842
    %4844 = vmatprep.subr.mxu0 0.0
    %4845 = vmatpush1.msra.mxu0 0.0
    %4846 = vmatprep.subr.mxu0 0.0
    %4847 = vmatpush1.msra.mxu0 0.0
    %4848 = vmatprep.subr.mxu0 0.0
    %4849 = vmatpush1.msra.mxu0 0.0
    %4850 = vmatprep.subr.mxu0 0.0
    %4851 = vmatpush1.msra.mxu0 0.0
    %4852 = vmatprep.subr.mxu0 0.0
    %4853 = vmatpush1.msra.mxu0 0.0
    %4854 = vmatprep.subr.mxu0 0.0
    %4855 = vmatpush1.msra.mxu0 0.0
    %4856 = vmatprep.subr.mxu0 0.0
    %4857 = vmatpush1.msra.mxu0 0.0
    %4858 = vmatprep.subr.mxu0 0.0
    %4859 = vmatpush1.msra.mxu0 0.0
    %4860 = vmatprep.subr.mxu0 0.0
    %4861 = vmatpush1.msra.mxu0 0.0
    %4862 = vmatprep.subr.mxu0 0.0
    %4863 = vmatpush1.msra.mxu0 0.0
    %4864 = vmatprep.subr.mxu0 0.0
    %4865 = vmatpush1.msra.mxu0 0.0
    %4866 = vmatprep.subr.mxu0 0.0
    %4867 = vmatpush1.msra.mxu0 0.0
    %4868 = vmatprep.subr.mxu0 0.0
    %4869 = vmatpush1.msra.mxu0 0.0
    %4870 = vmatprep.subr.mxu0 0.0
    %4871 = vmatpush1.msra.mxu0 0.0
    %4872 = vmatprep.subr.mxu0 0.0
    %4873 = vmatpush1.msra.mxu0 0.0
    %4874 = vmatprep.subr.mxu0 0.0
    %4875 = vmatpush1.msra.mxu0 0.0
    %4876 = vmatprep.subr.mxu0 0.0
    %4877 = vmatpush1.msra.mxu0 0.0
    %4878 = vmatprep.subr.mxu0 0.0
    %4879 = vmatpush1.msra.mxu0 0.0
    %4880 = vmatprep.subr.mxu0 0.0
    %4881 = vmatpush1.msra.mxu0 0.0
    %4882 = vmatprep.subr.mxu0 0.0
    %4883 = vmatpush1.msra.mxu0 0.0
    %4884 = vmatprep.subr.mxu0 0.0
    %4885 = vmatpush1.msra.mxu0 0.0
    %4886 = vmatprep.subr.mxu0 0.0
    %4887 = vmatpush1.msra.mxu0 0.0
    %4888 = vmatprep.subr.mxu0 0.0
    %4889 = vmatpush1.msra.mxu0 0.0
    %4890 = vmatprep.subr.mxu0 0.0
    %4891 = vmatpush1.msra.mxu0 0.0
    %4892 = vmatprep.subr.mxu0 0.0
    %4893 = vmatpush1.msra.mxu0 0.0
    %4894 = vmatprep.subr.mxu0 0.0
    %4895 = vmatpush1.msra.mxu0 0.0
    %4896 = vmatprep.subr.mxu0 0.0
    %4897 = vmatpush1.msra.mxu0 0.0
    %4898 = vmatprep.subr.mxu0 0.0
    %4899 = vmatpush1.msra.mxu0 0.0
    %4900 = vmatprep.mubr.f32.mxu0 0.0
    %v4901 = vand.u32 %v4495, 4294901760
    %4902 = vmatmul.mubr.f32.gmra.mrb[0].mxu0 %v4901
    %v4903 = vpop.f32.mrb[0].mxu0
    %v4904 = vadd.f32 %v4821, %v4903
    %v4905 = vpop.f32.mrb[0].mxu0
    %4906 = vdwg.mxu0
    %4907 = vmatprep.subr.mxu0 0.0
    %v4908 = vand.u32 %v4490, 4294901760
    %4909 = vmatpush1.msra.mxu0 %v4908
    %4910 = vmatprep.subr.mxu0 0.0
    %v4911 = vand.u32 %v4491, 4294901760
    %4912 = vmatpush1.msra.mxu0 %v4911
    %4913 = vmatprep.subr.mxu0 0.0
    %v4914 = vand.u32 %v4492, 4294901760
    %4915 = vmatpush1.msra.mxu0 %v4914
    %4916 = vmatprep.subr.mxu0 0.0
    %v4917 = vand.u32 %v4493, 4294901760
    %4918 = vmatpush1.msra.mxu0 %v4917
    %4919 = vmatprep.subr.mxu0 0.0
    %4920 = vmatpush1.msra.mxu0 0.0
    %4921 = vmatprep.subr.mxu0 0.0
    %4922 = vmatpush1.msra.mxu0 0.0
    %4923 = vmatprep.subr.mxu0 0.0
    %4924 = vmatpush1.msra.mxu0 0.0
    %4925 = vmatprep.subr.mxu0 0.0
    %4926 = vmatpush1.msra.mxu0 0.0
    %4927 = vmatprep.subr.mxu0 0.0
    %4928 = vmatpush1.msra.mxu0 0.0
    %4929 = vmatprep.subr.mxu0 0.0
    %4930 = vmatpush1.msra.mxu0 0.0
    %4931 = vmatprep.subr.mxu0 0.0
    %4932 = vmatpush1.msra.mxu0 0.0
    %4933 = vmatprep.subr.mxu0 0.0
    %4934 = vmatpush1.msra.mxu0 0.0
    %4935 = vmatprep.subr.mxu0 0.0
    %4936 = vmatpush1.msra.mxu0 0.0
    %4937 = vmatprep.subr.mxu0 0.0
    %4938 = vmatpush1.msra.mxu0 0.0
    %4939 = vmatprep.subr.mxu0 0.0
    %4940 = vmatpush1.msra.mxu0 0.0
    %4941 = vmatprep.subr.mxu0 0.0
    %4942 = vmatpush1.msra.mxu0 0.0
    %4943 = vmatprep.subr.mxu0 0.0
    %4944 = vmatpush1.msra.mxu0 0.0
    %4945 = vmatprep.subr.mxu0 0.0
    %4946 = vmatpush1.msra.mxu0 0.0
    %4947 = vmatprep.subr.mxu0 0.0
    %4948 = vmatpush1.msra.mxu0 0.0
    %4949 = vmatprep.subr.mxu0 0.0
    %4950 = vmatpush1.msra.mxu0 0.0
    %4951 = vmatprep.subr.mxu0 0.0
    %4952 = vmatpush1.msra.mxu0 0.0
    %4953 = vmatprep.subr.mxu0 0.0
    %4954 = vmatpush1.msra.mxu0 0.0
    %4955 = vmatprep.subr.mxu0 0.0
    %4956 = vmatpush1.msra.mxu0 0.0
    %4957 = vmatprep.subr.mxu0 0.0
    %4958 = vmatpush1.msra.mxu0 0.0
    %4959 = vmatprep.subr.mxu0 0.0
    %4960 = vmatpush1.msra.mxu0 0.0
    %4961 = vmatprep.subr.mxu0 0.0
    %4962 = vmatpush1.msra.mxu0 0.0
    %4963 = vmatprep.subr.mxu0 0.0
    %4964 = vmatpush1.msra.mxu0 0.0
    %4965 = vmatprep.subr.mxu0 0.0
    %4966 = vmatpush1.msra.mxu0 0.0
    %4967 = vmatprep.subr.mxu0 0.0
    %4968 = vmatpush1.msra.mxu0 0.0
    %4969 = vmatprep.subr.mxu0 0.0
    %4970 = vmatpush1.msra.mxu0 0.0
    %4971 = vmatprep.subr.mxu0 0.0
    %4972 = vmatpush1.msra.mxu0 0.0
    %4973 = vmatprep.subr.mxu0 0.0
    %4974 = vmatpush1.msra.mxu0 0.0
    %4975 = vmatprep.mubr.f32.mxu0 0.0
    %v4976 = vand.u32 %v4495, 4294901760
    %4977 = vmatmul.mubr.f32.gmra.mrb[0].mxu0 %v4976
    %v4978 = vpop.f32.mrb[0].mxu0
    %v4979 = vadd.f32 %v4904, %v4978
    %v4980 = vpop.f32.mrb[0].mxu0
    %4981 = vdwg.mxu0
    %v4982 = vadd.f32 %v4488, %v4979
    %v4983 = vxor.u32 %v4982, 2147483648
    %v4984 = vmul.f32 %v4983, 1.442695
    %v4985 = vpow.pop %v4984
    %v4986 = vadd.f32 %v4985, 1.0
    %v4987 = vrcp.pop %v4986
    %v4988 = vmul.f32 1.0, %v4987
    %v4989 = vtanh.pop %v4982
    %v4990 = vld [vmem:[#allocation6] sm:$0x3]
    %4992 = vrot.lane.b32.xlu0 %v4990, 32
    %v4993 = vpop.permute.xlu0 %4992
    %v4995 = vmul.f32 %v4988, %v4993
    %4997 = vrot.lane.b32.xlu0 %v4989, 64
    %v4998 = vpop.permute.xlu0 %4997
    %v5000 = vmul.f32 %v4988, %v4998
    %5002 = vrot.lane.b32.xlu0 %v5000, 32
    %v5003 = vpop.permute.xlu0 %5002
    %v5005 = vadd.f32 %v4995, %v5003
    %v5006 = vtanh.pop %v5005
    %5008 = vrot.lane.b32.xlu0 %v5006, 64
    %v5009 = vpop.permute.xlu0 %5008
    %v5011 = vmul.f32 %v4988, %v5009
    %5013 = vrot.lane.b32.xlu0 %v5005, 96
    %v5014 = vpop.permute.xlu0 %5013
    %5016 = vst.msk [vmem:[#allocation6] sm:$0x3] %vm189, %v5014
    %5018 = vrot.lane.b32.xlu0 %v5011, 32
    %v5019 = vpop.permute.xlu0 %5018
    %5021 = vst.msk [vmem:[#allocation5] sm:$0x3] %vm189, %v5019
    %5022 = vst.msk [vmem:[#allocation4 + $0xe] sm:$0x3] %vm189, %v5019
    %v5023 = vld [vmem:[#allocation4] sm:$0xff]
    %v5024 = vld [vmem:[#allocation4 + $0x8] sm:$0xff]
    %v5025 = vld [vmem:[#allocation17] sm:$0xff]
    %v5026 = vld [vmem:[#allocation17 + $0x8] sm:$0xff]
    %v5027 = vld [vmem:[#allocation17 + $0x10] sm:$0xff]
    %v5028 = vld [vmem:[#allocation17 + $0x18] sm:$0xff]
    %v5029 = vld [vmem:[%s8] sm:$0x1]
    %v5031 = vlaneseq
    %v5032 = vshrl.u32 %v5031, 7
    %v5033 = vsub.s32 0, %v5032
    %v5034 = vrot.slane %v5029, %v5033
    %v5037 = vsel %vm204, %v5023, 0
    %v5040 = vsel %vm204, %v5024, 0
    %5042 = vmatprep.subr.mxu0 0.0
    %v5043 = vand.u32 %v5025, 4294901760
    %5044 = vmatpush1.msra.mxu0 %v5043
    %5045 = vmatprep.subr.mxu0 0.0
    %v5046 = vand.u32 %v5026, 4294901760
    %5047 = vmatpush1.msra.mxu0 %v5046
    %5048 = vmatprep.subr.mxu0 0.0
    %v5049 = vand.u32 %v5027, 4294901760
    %5050 = vmatpush1.msra.mxu0 %v5049
    %5051 = vmatprep.subr.mxu0 0.0
    %v5052 = vand.u32 %v5028, 4294901760
    %5053 = vmatpush1.msra.mxu0 %v5052
    %5054 = vmatprep.subr.mxu0 0.0
    %5055 = vmatpush1.msra.mxu0 0.0
    %5056 = vmatprep.subr.mxu0 0.0
    %5057 = vmatpush1.msra.mxu0 0.0
    %5058 = vmatprep.subr.mxu0 0.0
    %5059 = vmatpush1.msra.mxu0 0.0
    %5060 = vmatprep.subr.mxu0 0.0
    %5061 = vmatpush1.msra.mxu0 0.0
    %5062 = vmatprep.subr.mxu0 0.0
    %5063 = vmatpush1.msra.mxu0 0.0
    %5064 = vmatprep.subr.mxu0 0.0
    %5065 = vmatpush1.msra.mxu0 0.0
    %5066 = vmatprep.subr.mxu0 0.0
    %5067 = vmatpush1.msra.mxu0 0.0
    %5068 = vmatprep.subr.mxu0 0.0
    %5069 = vmatpush1.msra.mxu0 0.0
    %5070 = vmatprep.subr.mxu0 0.0
    %5071 = vmatpush1.msra.mxu0 0.0
    %5072 = vmatprep.subr.mxu0 0.0
    %5073 = vmatpush1.msra.mxu0 0.0
    %5074 = vmatprep.subr.mxu0 0.0
    %5075 = vmatpush1.msra.mxu0 0.0
    %5076 = vmatprep.subr.mxu0 0.0
    %5077 = vmatpush1.msra.mxu0 0.0
    %5078 = vmatprep.subr.mxu0 0.0
    %5079 = vmatpush1.msra.mxu0 0.0
    %5080 = vmatprep.subr.mxu0 0.0
    %5081 = vmatpush1.msra.mxu0 0.0
    %5082 = vmatprep.subr.mxu0 0.0
    %5083 = vmatpush1.msra.mxu0 0.0
    %5084 = vmatprep.subr.mxu0 0.0
    %5085 = vmatpush1.msra.mxu0 0.0
    %5086 = vmatprep.subr.mxu0 0.0
    %5087 = vmatpush1.msra.mxu0 0.0
    %5088 = vmatprep.subr.mxu0 0.0
    %5089 = vmatpush1.msra.mxu0 0.0
    %5090 = vmatprep.subr.mxu0 0.0
    %5091 = vmatpush1.msra.mxu0 0.0
    %5092 = vmatprep.subr.mxu0 0.0
    %5093 = vmatpush1.msra.mxu0 0.0
    %5094 = vmatprep.subr.mxu0 0.0
    %5095 = vmatpush1.msra.mxu0 0.0
    %5096 = vmatprep.subr.mxu0 0.0
    %5097 = vmatpush1.msra.mxu0 0.0
    %5098 = vmatprep.subr.mxu0 0.0
    %5099 = vmatpush1.msra.mxu0 0.0
    %5100 = vmatprep.subr.mxu0 0.0
    %5101 = vmatpush1.msra.mxu0 0.0
    %5102 = vmatprep.subr.mxu0 0.0
    %5103 = vmatpush1.msra.mxu0 0.0
    %5104 = vmatprep.subr.mxu0 0.0
    %5105 = vmatpush1.msra.mxu0 0.0
    %5106 = vmatprep.subr.mxu0 0.0
    %5107 = vmatpush1.msra.mxu0 0.0
    %5108 = vmatprep.subr.mxu0 0.0
    %5109 = vmatpush1.msra.mxu0 0.0
    %5110 = vmatprep.mubr.f32.mxu0 0.0
    %v5111 = vand.u32 %v5037, 4294901760
    %v5112 = vsub.f32 %v5037, %v5111
    %v5113 = vand.u32 %v5112, 4294901760
    %v5114 = vsub.f32 %v5112, %v5113
    %v5115 = vand.u32 %v5114, 4294901760
    %5116 = vmatmul.mubr.f32.gmra.mrb[0].mxu0 %v5115
    %v5117 = vpop.f32.mrb[0].mxu0
    %v5118 = vadd.f32 %v5034, %v5117
    %v5119 = vpop.f32.mrb[0].mxu0
    %5120 = vmatprep.mubr.f32.mxu0 0.0
    %v5121 = vand.u32 %v5040, 4294901760
    %v5122 = vsub.f32 %v5040, %v5121
    %v5123 = vand.u32 %v5122, 4294901760
    %v5124 = vsub.f32 %v5122, %v5123
    %v5125 = vand.u32 %v5124, 4294901760
    %5126 = vmatmul.mubr.f32.gmra.mrb[0].mxu0 %v5125
    %v5127 = vpop.f32.mrb[0].mxu0
    %v5128 = vadd.f32 %v5034, %v5127
    %v5129 = vpop.f32.mrb[0].mxu0
    %5130 = vdwg.mxu0
    %5131 = vmatprep.subr.mxu0 0.0
    %v5132 = vand.u32 %v5025, 4294901760
    %v5133 = vsub.f32 %v5025, %v5132
    %v5134 = vand.u32 %v5133, 4294901760
    %v5135 = vsub.f32 %v5133, %v5134
    %v5136 = vand.u32 %v5135, 4294901760
    %5137 = vmatpush1.msra.mxu0 %v5136
    %5138 = vmatprep.subr.mxu0 0.0
    %v5139 = vand.u32 %v5026, 4294901760
    %v5140 = vsub.f32 %v5026, %v5139
    %v5141 = vand.u32 %v5140, 4294901760
    %v5142 = vsub.f32 %v5140, %v5141
    %v5143 = vand.u32 %v5142, 4294901760
    %5144 = vmatpush1.msra.mxu0 %v5143
    %5145 = vmatprep.subr.mxu0 0.0
    %v5146 = vand.u32 %v5027, 4294901760
    %v5147 = vsub.f32 %v5027, %v5146
    %v5148 = vand.u32 %v5147, 4294901760
    %v5149 = vsub.f32 %v5147, %v5148
    %v5150 = vand.u32 %v5149, 4294901760
    %5151 = vmatpush1.msra.mxu0 %v5150
    %5152 = vmatprep.subr.mxu0 0.0
    %v5153 = vand.u32 %v5028, 4294901760
    %v5154 = vsub.f32 %v5028, %v5153
    %v5155 = vand.u32 %v5154, 4294901760
    %v5156 = vsub.f32 %v5154, %v5155
    %v5157 = vand.u32 %v5156, 4294901760
    %5158 = vmatpush1.msra.mxu0 %v5157
    %5159 = vmatprep.subr.mxu0 0.0
    %5160 = vmatpush1.msra.mxu0 0.0
    %5161 = vmatprep.subr.mxu0 0.0
    %5162 = vmatpush1.msra.mxu0 0.0
    %5163 = vmatprep.subr.mxu0 0.0
    %5164 = vmatpush1.msra.mxu0 0.0
    %5165 = vmatprep.subr.mxu0 0.0
    %5166 = vmatpush1.msra.mxu0 0.0
    %5167 = vmatprep.subr.mxu0 0.0
    %5168 = vmatpush1.msra.mxu0 0.0
    %5169 = vmatprep.subr.mxu0 0.0
    %5170 = vmatpush1.msra.mxu0 0.0
    %5171 = vmatprep.subr.mxu0 0.0
    %5172 = vmatpush1.msra.mxu0 0.0
    %5173 = vmatprep.subr.mxu0 0.0
    %5174 = vmatpush1.msra.mxu0 0.0
    %5175 = vmatprep.subr.mxu0 0.0
    %5176 = vmatpush1.msra.mxu0 0.0
    %5177 = vmatprep.subr.mxu0 0.0
    %5178 = vmatpush1.msra.mxu0 0.0
    %5179 = vmatprep.subr.mxu0 0.0
    %5180 = vmatpush1.msra.mxu0 0.0
    %5181 = vmatprep.subr.mxu0 0.0
    %5182 = vmatpush1.msra.mxu0 0.0
    %5183 = vmatprep.subr.mxu0 0.0
    %5184 = vmatpush1.msra.mxu0 0.0
    %5185 = vmatprep.subr.mxu0 0.0
    %5186 = vmatpush1.msra.mxu0 0.0
    %5187 = vmatprep.subr.mxu0 0.0
    %5188 = vmatpush1.msra.mxu0 0.0
    %5189 = vmatprep.subr.mxu0 0.0
    %5190 = vmatpush1.msra.mxu0 0.0
    %5191 = vmatprep.subr.mxu0 0.0
    %5192 = vmatpush1.msra.mxu0 0.0
    %5193 = vmatprep.subr.mxu0 0.0
    %5194 = vmatpush1.msra.mxu0 0.0
    %5195 = vmatprep.subr.mxu0 0.0
    %5196 = vmatpush1.msra.mxu0 0.0
    %5197 = vmatprep.subr.mxu0 0.0
    %5198 = vmatpush1.msra.mxu0 0.0
    %5199 = vmatprep.subr.mxu0 0.0
    %5200 = vmatpush1.msra.mxu0 0.0
    %5201 = vmatprep.subr.mxu0 0.0
    %5202 = vmatpush1.msra.mxu0 0.0
    %5203 = vmatprep.subr.mxu0 0.0
    %5204 = vmatpush1.msra.mxu0 0.0
    %5205 = vmatprep.subr.mxu0 0.0
    %5206 = vmatpush1.msra.mxu0 0.0
    %5207 = vmatprep.subr.mxu0 0.0
    %5208 = vmatpush1.msra.mxu0 0.0
    %5209 = vmatprep.subr.mxu0 0.0
    %5210 = vmatpush1.msra.mxu0 0.0
    %5211 = vmatprep.subr.mxu0 0.0
    %5212 = vmatpush1.msra.mxu0 0.0
    %5213 = vmatprep.subr.mxu0 0.0
    %5214 = vmatpush1.msra.mxu0 0.0
    %5215 = vmatprep.mubr.f32.mxu0 0.0
    %v5216 = vand.u32 %v5037, 4294901760
    %5217 = vmatmul.mubr.f32.gmra.mrb[0].mxu0 %v5216
    %v5218 = vpop.f32.mrb[0].mxu0
    %v5219 = vadd.f32 %v5118, %v5218
    %v5220 = vpop.f32.mrb[0].mxu0
    %5221 = vmatprep.mubr.f32.mxu0 0.0
    %v5222 = vand.u32 %v5040, 4294901760
    %5223 = vmatmul.mubr.f32.gmra.mrb[0].mxu0 %v5222
    %v5224 = vpop.f32.mrb[0].mxu0
    %v5225 = vadd.f32 %v5128, %v5224
    %v5226 = vpop.f32.mrb[0].mxu0
    %5227 = vdwg.mxu0
    %5228 = vmatprep.subr.mxu0 0.0
    %v5229 = vand.u32 %v5025, 4294901760
    %v5230 = vsub.f32 %v5025, %v5229
    %5231 = vmatpush1.msra.mxu0 %v5230
    %5232 = vmatprep.subr.mxu0 0.0
    %v5233 = vand.u32 %v5026, 4294901760
    %v5234 = vsub.f32 %v5026, %v5233
    %5235 = vmatpush1.msra.mxu0 %v5234
    %5236 = vmatprep.subr.mxu0 0.0
    %v5237 = vand.u32 %v5027, 4294901760
    %v5238 = vsub.f32 %v5027, %v5237
    %5239 = vmatpush1.msra.mxu0 %v5238
    %5240 = vmatprep.subr.mxu0 0.0
    %v5241 = vand.u32 %v5028, 4294901760
    %v5242 = vsub.f32 %v5028, %v5241
    %5243 = vmatpush1.msra.mxu0 %v5242
    %5244 = vmatprep.subr.mxu0 0.0
    %5245 = vmatpush1.msra.mxu0 0.0
    %5246 = vmatprep.subr.mxu0 0.0
    %5247 = vmatpush1.msra.mxu0 0.0
    %5248 = vmatprep.subr.mxu0 0.0
    %5249 = vmatpush1.msra.mxu0 0.0
    %5250 = vmatprep.subr.mxu0 0.0
    %5251 = vmatpush1.msra.mxu0 0.0
    %5252 = vmatprep.subr.mxu0 0.0
    %5253 = vmatpush1.msra.mxu0 0.0
    %5254 = vmatprep.subr.mxu0 0.0
    %5255 = vmatpush1.msra.mxu0 0.0
    %5256 = vmatprep.subr.mxu0 0.0
    %5257 = vmatpush1.msra.mxu0 0.0
    %5258 = vmatprep.subr.mxu0 0.0
    %5259 = vmatpush1.msra.mxu0 0.0
    %5260 = vmatprep.subr.mxu0 0.0
    %5261 = vmatpush1.msra.mxu0 0.0
    %5262 = vmatprep.subr.mxu0 0.0
    %5263 = vmatpush1.msra.mxu0 0.0
    %5264 = vmatprep.subr.mxu0 0.0
    %5265 = vmatpush1.msra.mxu0 0.0
    %5266 = vmatprep.subr.mxu0 0.0
    %5267 = vmatpush1.msra.mxu0 0.0
    %5268 = vmatprep.subr.mxu0 0.0
    %5269 = vmatpush1.msra.mxu0 0.0
    %5270 = vmatprep.subr.mxu0 0.0
    %5271 = vmatpush1.msra.mxu0 0.0
    %5272 = vmatprep.subr.mxu0 0.0
    %5273 = vmatpush1.msra.mxu0 0.0
    %5274 = vmatprep.subr.mxu0 0.0
    %5275 = vmatpush1.msra.mxu0 0.0
    %5276 = vmatprep.subr.mxu0 0.0
    %5277 = vmatpush1.msra.mxu0 0.0
    %5278 = vmatprep.subr.mxu0 0.0
    %5279 = vmatpush1.msra.mxu0 0.0
    %5280 = vmatprep.subr.mxu0 0.0
    %5281 = vmatpush1.msra.mxu0 0.0
    %5282 = vmatprep.subr.mxu0 0.0
    %5283 = vmatpush1.msra.mxu0 0.0
    %5284 = vmatprep.subr.mxu0 0.0
    %5285 = vmatpush1.msra.mxu0 0.0
    %5286 = vmatprep.subr.mxu0 0.0
    %5287 = vmatpush1.msra.mxu0 0.0
    %5288 = vmatprep.subr.mxu0 0.0
    %5289 = vmatpush1.msra.mxu0 0.0
    %5290 = vmatprep.subr.mxu0 0.0
    %5291 = vmatpush1.msra.mxu0 0.0
    %5292 = vmatprep.subr.mxu0 0.0
    %5293 = vmatpush1.msra.mxu0 0.0
    %5294 = vmatprep.subr.mxu0 0.0
    %5295 = vmatpush1.msra.mxu0 0.0
    %5296 = vmatprep.subr.mxu0 0.0
    %5297 = vmatpush1.msra.mxu0 0.0
    %5298 = vmatprep.subr.mxu0 0.0
    %5299 = vmatpush1.msra.mxu0 0.0
    %5300 = vmatprep.mubr.f32.mxu0 0.0
    %v5301 = vand.u32 %v5037, 4294901760
    %v5302 = vsub.f32 %v5037, %v5301
    %5303 = vmatmul.mubr.f32.gmra.mrb[0].mxu0 %v5302
    %v5304 = vpop.f32.mrb[0].mxu0
    %v5305 = vadd.f32 %v5219, %v5304
    %v5306 = vpop.f32.mrb[0].mxu0
    %5307 = vmatprep.mubr.f32.mxu0 0.0
    %v5308 = vand.u32 %v5040, 4294901760
    %v5309 = vsub.f32 %v5040, %v5308
    %5310 = vmatmul.mubr.f32.gmra.mrb[0].mxu0 %v5309
    %v5311 = vpop.f32.mrb[0].mxu0
    %v5312 = vadd.f32 %v5225, %v5311
    %v5313 = vpop.f32.mrb[0].mxu0
    %5314 = vdwg.mxu0
    %5315 = vmatprep.subr.mxu0 0.0
    %v5316 = vand.u32 %v5025, 4294901760
    %5317 = vmatpush1.msra.mxu0 %v5316
    %5318 = vmatprep.subr.mxu0 0.0
    %v5319 = vand.u32 %v5026, 4294901760
    %5320 = vmatpush1.msra.mxu0 %v5319
    %5321 = vmatprep.subr.mxu0 0.0
    %v5322 = vand.u32 %v5027, 4294901760
    %5323 = vmatpush1.msra.mxu0 %v5322
    %5324 = vmatprep.subr.mxu0 0.0
    %v5325 = vand.u32 %v5028, 4294901760
    %5326 = vmatpush1.msra.mxu0 %v5325
    %5327 = vmatprep.subr.mxu0 0.0
    %5328 = vmatpush1.msra.mxu0 0.0
    %5329 = vmatprep.subr.mxu0 0.0
    %5330 = vmatpush1.msra.mxu0 0.0
    %5331 = vmatprep.subr.mxu0 0.0
    %5332 = vmatpush1.msra.mxu0 0.0
    %5333 = vmatprep.subr.mxu0 0.0
    %5334 = vmatpush1.msra.mxu0 0.0
    %5335 = vmatprep.subr.mxu0 0.0
    %5336 = vmatpush1.msra.mxu0 0.0
    %5337 = vmatprep.subr.mxu0 0.0
    %5338 = vmatpush1.msra.mxu0 0.0
    %5339 = vmatprep.subr.mxu0 0.0
    %5340 = vmatpush1.msra.mxu0 0.0
    %5341 = vmatprep.subr.mxu0 0.0
    %5342 = vmatpush1.msra.mxu0 0.0
    %5343 = vmatprep.subr.mxu0 0.0
    %5344 = vmatpush1.msra.mxu0 0.0
    %5345 = vmatprep.subr.mxu0 0.0
    %5346 = vmatpush1.msra.mxu0 0.0
    %5347 = vmatprep.subr.mxu0 0.0
    %5348 = vmatpush1.msra.mxu0 0.0
    %5349 = vmatprep.subr.mxu0 0.0
    %5350 = vmatpush1.msra.mxu0 0.0
    %5351 = vmatprep.subr.mxu0 0.0
    %5352 = vmatpush1.msra.mxu0 0.0
    %5353 = vmatprep.subr.mxu0 0.0
    %5354 = vmatpush1.msra.mxu0 0.0
    %5355 = vmatprep.subr.mxu0 0.0
    %5356 = vmatpush1.msra.mxu0 0.0
    %5357 = vmatprep.subr.mxu0 0.0
    %5358 = vmatpush1.msra.mxu0 0.0
    %5359 = vmatprep.subr.mxu0 0.0
    %5360 = vmatpush1.msra.mxu0 0.0
    %5361 = vmatprep.subr.mxu0 0.0
    %5362 = vmatpush1.msra.mxu0 0.0
    %5363 = vmatprep.subr.mxu0 0.0
    %5364 = vmatpush1.msra.mxu0 0.0
    %5365 = vmatprep.subr.mxu0 0.0
    %5366 = vmatpush1.msra.mxu0 0.0
    %5367 = vmatprep.subr.mxu0 0.0
    %5368 = vmatpush1.msra.mxu0 0.0
    %5369 = vmatprep.subr.mxu0 0.0
    %5370 = vmatpush1.msra.mxu0 0.0
    %5371 = vmatprep.subr.mxu0 0.0
    %5372 = vmatpush1.msra.mxu0 0.0
    %5373 = vmatprep.subr.mxu0 0.0
    %5374 = vmatpush1.msra.mxu0 0.0
    %5375 = vmatprep.subr.mxu0 0.0
    %5376 = vmatpush1.msra.mxu0 0.0
    %5377 = vmatprep.subr.mxu0 0.0
    %5378 = vmatpush1.msra.mxu0 0.0
    %5379 = vmatprep.subr.mxu0 0.0
    %5380 = vmatpush1.msra.mxu0 0.0
    %5381 = vmatprep.subr.mxu0 0.0
    %5382 = vmatpush1.msra.mxu0 0.0
    %5383 = vmatprep.mubr.f32.mxu0 0.0
    %v5384 = vand.u32 %v5037, 4294901760
    %v5385 = vsub.f32 %v5037, %v5384
    %v5386 = vand.u32 %v5385, 4294901760
    %5387 = vmatmul.mubr.f32.gmra.mrb[0].mxu0 %v5386
    %v5388 = vpop.f32.mrb[0].mxu0
    %v5389 = vadd.f32 %v5305, %v5388
    %v5390 = vpop.f32.mrb[0].mxu0
    %5391 = vmatprep.mubr.f32.mxu0 0.0
    %v5392 = vand.u32 %v5040, 4294901760
    %v5393 = vsub.f32 %v5040, %v5392
    %v5394 = vand.u32 %v5393, 4294901760
    %5395 = vmatmul.mubr.f32.gmra.mrb[0].mxu0 %v5394
    %v5396 = vpop.f32.mrb[0].mxu0
    %v5397 = vadd.f32 %v5312, %v5396
    %v5398 = vpop.f32.mrb[0].mxu0
    %5399 = vdwg.mxu0
    %5400 = vmatprep.subr.mxu0 0.0
    %v5401 = vand.u32 %v5025, 4294901760
    %v5402 = vsub.f32 %v5025, %v5401
    %v5403 = vand.u32 %v5402, 4294901760
    %5404 = vmatpush1.msra.mxu0 %v5403
    %5405 = vmatprep.subr.mxu0 0.0
    %v5406 = vand.u32 %v5026, 4294901760
    %v5407 = vsub.f32 %v5026, %v5406
    %v5408 = vand.u32 %v5407, 4294901760
    %5409 = vmatpush1.msra.mxu0 %v5408
    %5410 = vmatprep.subr.mxu0 0.0
    %v5411 = vand.u32 %v5027, 4294901760
    %v5412 = vsub.f32 %v5027, %v5411
    %v5413 = vand.u32 %v5412, 4294901760
    %5414 = vmatpush1.msra.mxu0 %v5413
    %5415 = vmatprep.subr.mxu0 0.0
    %v5416 = vand.u32 %v5028, 4294901760
    %v5417 = vsub.f32 %v5028, %v5416
    %v5418 = vand.u32 %v5417, 4294901760
    %5419 = vmatpush1.msra.mxu0 %v5418
    %5420 = vmatprep.subr.mxu0 0.0
    %5421 = vmatpush1.msra.mxu0 0.0
    %5422 = vmatprep.subr.mxu0 0.0
    %5423 = vmatpush1.msra.mxu0 0.0
    %5424 = vmatprep.subr.mxu0 0.0
    %5425 = vmatpush1.msra.mxu0 0.0
    %5426 = vmatprep.subr.mxu0 0.0
    %5427 = vmatpush1.msra.mxu0 0.0
    %5428 = vmatprep.subr.mxu0 0.0
    %5429 = vmatpush1.msra.mxu0 0.0
    %5430 = vmatprep.subr.mxu0 0.0
    %5431 = vmatpush1.msra.mxu0 0.0
    %5432 = vmatprep.subr.mxu0 0.0
    %5433 = vmatpush1.msra.mxu0 0.0
    %5434 = vmatprep.subr.mxu0 0.0
    %5435 = vmatpush1.msra.mxu0 0.0
    %5436 = vmatprep.subr.mxu0 0.0
    %5437 = vmatpush1.msra.mxu0 0.0
    %5438 = vmatprep.subr.mxu0 0.0
    %5439 = vmatpush1.msra.mxu0 0.0
    %5440 = vmatprep.subr.mxu0 0.0
    %5441 = vmatpush1.msra.mxu0 0.0
    %5442 = vmatprep.subr.mxu0 0.0
    %5443 = vmatpush1.msra.mxu0 0.0
    %5444 = vmatprep.subr.mxu0 0.0
    %5445 = vmatpush1.msra.mxu0 0.0
    %5446 = vmatprep.subr.mxu0 0.0
    %5447 = vmatpush1.msra.mxu0 0.0
    %5448 = vmatprep.subr.mxu0 0.0
    %5449 = vmatpush1.msra.mxu0 0.0
    %5450 = vmatprep.subr.mxu0 0.0
    %5451 = vmatpush1.msra.mxu0 0.0
    %5452 = vmatprep.subr.mxu0 0.0
    %5453 = vmatpush1.msra.mxu0 0.0
    %5454 = vmatprep.subr.mxu0 0.0
    %5455 = vmatpush1.msra.mxu0 0.0
    %5456 = vmatprep.subr.mxu0 0.0
    %5457 = vmatpush1.msra.mxu0 0.0
    %5458 = vmatprep.subr.mxu0 0.0
    %5459 = vmatpush1.msra.mxu0 0.0
    %5460 = vmatprep.subr.mxu0 0.0
    %5461 = vmatpush1.msra.mxu0 0.0
    %5462 = vmatprep.subr.mxu0 0.0
    %5463 = vmatpush1.msra.mxu0 0.0
    %5464 = vmatprep.subr.mxu0 0.0
    %5465 = vmatpush1.msra.mxu0 0.0
    %5466 = vmatprep.subr.mxu0 0.0
    %5467 = vmatpush1.msra.mxu0 0.0
    %5468 = vmatprep.subr.mxu0 0.0
    %5469 = vmatpush1.msra.mxu0 0.0
    %5470 = vmatprep.subr.mxu0 0.0
    %5471 = vmatpush1.msra.mxu0 0.0
    %5472 = vmatprep.subr.mxu0 0.0
    %5473 = vmatpush1.msra.mxu0 0.0
    %5474 = vmatprep.subr.mxu0 0.0
    %5475 = vmatpush1.msra.mxu0 0.0
    %5476 = vmatprep.mubr.f32.mxu0 0.0
    %v5477 = vand.u32 %v5037, 4294901760
    %5478 = vmatmul.mubr.f32.gmra.mrb[0].mxu0 %v5477
    %v5479 = vpop.f32.mrb[0].mxu0
    %v5480 = vadd.f32 %v5389, %v5479
    %v5481 = vpop.f32.mrb[0].mxu0
    %5482 = vmatprep.mubr.f32.mxu0 0.0
    %v5483 = vand.u32 %v5040, 4294901760
    %5484 = vmatmul.mubr.f32.gmra.mrb[0].mxu0 %v5483
    %v5485 = vpop.f32.mrb[0].mxu0
    %v5486 = vadd.f32 %v5397, %v5485
    %v5487 = vpop.f32.mrb[0].mxu0
    %5488 = vdwg.mxu0
    %5489 = vmatprep.subr.mxu0 0.0
    %v5490 = vand.u32 %v5025, 4294901760
    %5491 = vmatpush1.msra.mxu0 %v5490
    %5492 = vmatprep.subr.mxu0 0.0
    %v5493 = vand.u32 %v5026, 4294901760
    %5494 = vmatpush1.msra.mxu0 %v5493
    %5495 = vmatprep.subr.mxu0 0.0
    %v5496 = vand.u32 %v5027, 4294901760
    %5497 = vmatpush1.msra.mxu0 %v5496
    %5498 = vmatprep.subr.mxu0 0.0
    %v5499 = vand.u32 %v5028, 4294901760
    %5500 = vmatpush1.msra.mxu0 %v5499
    %5501 = vmatprep.subr.mxu0 0.0
    %5502 = vmatpush1.msra.mxu0 0.0
    %5503 = vmatprep.subr.mxu0 0.0
    %5504 = vmatpush1.msra.mxu0 0.0
    %5505 = vmatprep.subr.mxu0 0.0
    %5506 = vmatpush1.msra.mxu0 0.0
    %5507 = vmatprep.subr.mxu0 0.0
    %5508 = vmatpush1.msra.mxu0 0.0
    %5509 = vmatprep.subr.mxu0 0.0
    %5510 = vmatpush1.msra.mxu0 0.0
    %5511 = vmatprep.subr.mxu0 0.0
    %5512 = vmatpush1.msra.mxu0 0.0
    %5513 = vmatprep.subr.mxu0 0.0
    %5514 = vmatpush1.msra.mxu0 0.0
    %5515 = vmatprep.subr.mxu0 0.0
    %5516 = vmatpush1.msra.mxu0 0.0
    %5517 = vmatprep.subr.mxu0 0.0
    %5518 = vmatpush1.msra.mxu0 0.0
    %5519 = vmatprep.subr.mxu0 0.0
    %5520 = vmatpush1.msra.mxu0 0.0
    %5521 = vmatprep.subr.mxu0 0.0
    %5522 = vmatpush1.msra.mxu0 0.0
    %5523 = vmatprep.subr.mxu0 0.0
    %5524 = vmatpush1.msra.mxu0 0.0
    %5525 = vmatprep.subr.mxu0 0.0
    %5526 = vmatpush1.msra.mxu0 0.0
    %5527 = vmatprep.subr.mxu0 0.0
    %5528 = vmatpush1.msra.mxu0 0.0
    %5529 = vmatprep.subr.mxu0 0.0
    %5530 = vmatpush1.msra.mxu0 0.0
    %5531 = vmatprep.subr.mxu0 0.0
    %5532 = vmatpush1.msra.mxu0 0.0
    %5533 = vmatprep.subr.mxu0 0.0
    %5534 = vmatpush1.msra.mxu0 0.0
    %5535 = vmatprep.subr.mxu0 0.0
    %5536 = vmatpush1.msra.mxu0 0.0
    %5537 = vmatprep.subr.mxu0 0.0
    %5538 = vmatpush1.msra.mxu0 0.0
    %5539 = vmatprep.subr.mxu0 0.0
    %5540 = vmatpush1.msra.mxu0 0.0
    %5541 = vmatprep.subr.mxu0 0.0
    %5542 = vmatpush1.msra.mxu0 0.0
    %5543 = vmatprep.subr.mxu0 0.0
    %5544 = vmatpush1.msra.mxu0 0.0
    %5545 = vmatprep.subr.mxu0 0.0
    %5546 = vmatpush1.msra.mxu0 0.0
    %5547 = vmatprep.subr.mxu0 0.0
    %5548 = vmatpush1.msra.mxu0 0.0
    %5549 = vmatprep.subr.mxu0 0.0
    %5550 = vmatpush1.msra.mxu0 0.0
    %5551 = vmatprep.subr.mxu0 0.0
    %5552 = vmatpush1.msra.mxu0 0.0
    %5553 = vmatprep.subr.mxu0 0.0
    %5554 = vmatpush1.msra.mxu0 0.0
    %5555 = vmatprep.subr.mxu0 0.0
    %5556 = vmatpush1.msra.mxu0 0.0
    %5557 = vmatprep.mubr.f32.mxu0 0.0
    %v5558 = vand.u32 %v5037, 4294901760
    %5559 = vmatmul.mubr.f32.gmra.mrb[0].mxu0 %v5558
    %v5560 = vpop.f32.mrb[0].mxu0
    %v5561 = vadd.f32 %v5480, %v5560
    %v5562 = vpop.f32.mrb[0].mxu0
    %5563 = vmatprep.mubr.f32.mxu0 0.0
    %v5564 = vand.u32 %v5040, 4294901760
    %5565 = vmatmul.mubr.f32.gmra.mrb[0].mxu0 %v5564
    %v5566 = vpop.f32.mrb[0].mxu0
    %v5567 = vadd.f32 %v5486, %v5566
    %v5568 = vpop.f32.mrb[0].mxu0
    %5569 = vdwg.mxu0
    %5570 = vst [vmem:[#allocation3] sm:$0xff] %v5561
    %5571 = vst [vmem:[#allocation3 + $0x8] sm:$0xff] %v5567
    %5572 = vst.msk [vmem:[#allocation5] sm:$0x3] %vm189, 0.0
    %5573 = vst.msk [vmem:[#allocation6] sm:$0x3] %vm189, 0.0
    %v5574 = vld [vmem:[#allocation3] sm:$0x3]
    %v5575 = vld [vmem:[#allocation5] sm:$0x3]
    %v5576 = vld [vmem:[#allocation19] sm:$0xff]
    %v5577 = vld [vmem:[#allocation19 + $0x8] sm:$0xff]
    %v5578 = vld [vmem:[#allocation19 + $0x10] sm:$0xff]
    %v5579 = vld [vmem:[#allocation19 + $0x18] sm:$0xff]
    %v5581 = vsel %vm204, %v5575, 0
    %5583 = vmatprep.subr.mxu0 0.0
    %v5584 = vand.u32 %v5576, 4294901760
    %5585 = vmatpush1.msra.mxu0 %v5584
    %5586 = vmatprep.subr.mxu0 0.0
    %v5587 = vand.u32 %v5577, 4294901760
    %5588 = vmatpush1.msra.mxu0 %v5587
    %5589 = vmatprep.subr.mxu0 0.0
    %v5590 = vand.u32 %v5578, 4294901760
    %5591 = vmatpush1.msra.mxu0 %v5590
    %5592 = vmatprep.subr.mxu0 0.0
    %v5593 = vand.u32 %v5579, 4294901760
    %5594 = vmatpush1.msra.mxu0 %v5593
    %5595 = vmatprep.subr.mxu0 0.0
    %5596 = vmatpush1.msra.mxu0 0.0
    %5597 = vmatprep.subr.mxu0 0.0
    %5598 = vmatpush1.msra.mxu0 0.0
    %5599 = vmatprep.subr.mxu0 0.0
    %5600 = vmatpush1.msra.mxu0 0.0
    %5601 = vmatprep.subr.mxu0 0.0
    %5602 = vmatpush1.msra.mxu0 0.0
    %5603 = vmatprep.subr.mxu0 0.0
    %5604 = vmatpush1.msra.mxu0 0.0
    %5605 = vmatprep.subr.mxu0 0.0
    %5606 = vmatpush1.msra.mxu0 0.0
    %5607 = vmatprep.subr.mxu0 0.0
    %5608 = vmatpush1.msra.mxu0 0.0
    %5609 = vmatprep.subr.mxu0 0.0
    %5610 = vmatpush1.msra.mxu0 0.0
    %5611 = vmatprep.subr.mxu0 0.0
    %5612 = vmatpush1.msra.mxu0 0.0
    %5613 = vmatprep.subr.mxu0 0.0
    %5614 = vmatpush1.msra.mxu0 0.0
    %5615 = vmatprep.subr.mxu0 0.0
    %5616 = vmatpush1.msra.mxu0 0.0
    %5617 = vmatprep.subr.mxu0 0.0
    %5618 = vmatpush1.msra.mxu0 0.0
    %5619 = vmatprep.subr.mxu0 0.0
    %5620 = vmatpush1.msra.mxu0 0.0
    %5621 = vmatprep.subr.mxu0 0.0
    %5622 = vmatpush1.msra.mxu0 0.0
    %5623 = vmatprep.subr.mxu0 0.0
    %5624 = vmatpush1.msra.mxu0 0.0
    %5625 = vmatprep.subr.mxu0 0.0
    %5626 = vmatpush1.msra.mxu0 0.0
    %5627 = vmatprep.subr.mxu0 0.0
    %5628 = vmatpush1.msra.mxu0 0.0
    %5629 = vmatprep.subr.mxu0 0.0
    %5630 = vmatpush1.msra.mxu0 0.0
    %5631 = vmatprep.subr.mxu0 0.0
    %5632 = vmatpush1.msra.mxu0 0.0
    %5633 = vmatprep.subr.mxu0 0.0
    %5634 = vmatpush1.msra.mxu0 0.0
    %5635 = vmatprep.subr.mxu0 0.0
    %5636 = vmatpush1.msra.mxu0 0.0
    %5637 = vmatprep.subr.mxu0 0.0
    %5638 = vmatpush1.msra.mxu0 0.0
    %5639 = vmatprep.subr.mxu0 0.0
    %5640 = vmatpush1.msra.mxu0 0.0
    %5641 = vmatprep.subr.mxu0 0.0
    %5642 = vmatpush1.msra.mxu0 0.0
    %5643 = vmatprep.subr.mxu0 0.0
    %5644 = vmatpush1.msra.mxu0 0.0
    %5645 = vmatprep.subr.mxu0 0.0
    %5646 = vmatpush1.msra.mxu0 0.0
    %5647 = vmatprep.subr.mxu0 0.0
    %5648 = vmatpush1.msra.mxu0 0.0
    %5649 = vmatprep.subr.mxu0 0.0
    %5650 = vmatpush1.msra.mxu0 0.0
    %5651 = vmatprep.mubr.f32.mxu0 0.0
    %v5652 = vand.u32 %v5581, 4294901760
    %v5653 = vsub.f32 %v5581, %v5652
    %v5654 = vand.u32 %v5653, 4294901760
    %v5655 = vsub.f32 %v5653, %v5654
    %v5656 = vand.u32 %v5655, 4294901760
    %5657 = vmatmul.mubr.f32.gmra.mrb[0].mxu0 %v5656
    %v5658 = vpop.f32.mrb[0].mxu0
    %v5659 = vadd.f32 0.0, %v5658
    %v5660 = vpop.f32.mrb[0].mxu0
    %5661 = vdwg.mxu0
    %5662 = vmatprep.subr.mxu0 0.0
    %v5663 = vand.u32 %v5576, 4294901760
    %v5664 = vsub.f32 %v5576, %v5663
    %v5665 = vand.u32 %v5664, 4294901760
    %v5666 = vsub.f32 %v5664, %v5665
    %v5667 = vand.u32 %v5666, 4294901760
    %5668 = vmatpush1.msra.mxu0 %v5667
    %5669 = vmatprep.subr.mxu0 0.0
    %v5670 = vand.u32 %v5577, 4294901760
    %v5671 = vsub.f32 %v5577, %v5670
    %v5672 = vand.u32 %v5671, 4294901760
    %v5673 = vsub.f32 %v5671, %v5672
    %v5674 = vand.u32 %v5673, 4294901760
    %5675 = vmatpush1.msra.mxu0 %v5674
    %5676 = vmatprep.subr.mxu0 0.0
    %v5677 = vand.u32 %v5578, 4294901760
    %v5678 = vsub.f32 %v5578, %v5677
    %v5679 = vand.u32 %v5678, 4294901760
    %v5680 = vsub.f32 %v5678, %v5679
    %v5681 = vand.u32 %v5680, 4294901760
    %5682 = vmatpush1.msra.mxu0 %v5681
    %5683 = vmatprep.subr.mxu0 0.0
    %v5684 = vand.u32 %v5579, 4294901760
    %v5685 = vsub.f32 %v5579, %v5684
    %v5686 = vand.u32 %v5685, 4294901760
    %v5687 = vsub.f32 %v5685, %v5686
    %v5688 = vand.u32 %v5687, 4294901760
    %5689 = vmatpush1.msra.mxu0 %v5688
    %5690 = vmatprep.subr.mxu0 0.0
    %5691 = vmatpush1.msra.mxu0 0.0
    %5692 = vmatprep.subr.mxu0 0.0
    %5693 = vmatpush1.msra.mxu0 0.0
    %5694 = vmatprep.subr.mxu0 0.0
    %5695 = vmatpush1.msra.mxu0 0.0
    %5696 = vmatprep.subr.mxu0 0.0
    %5697 = vmatpush1.msra.mxu0 0.0
    %5698 = vmatprep.subr.mxu0 0.0
    %5699 = vmatpush1.msra.mxu0 0.0
    %5700 = vmatprep.subr.mxu0 0.0
    %5701 = vmatpush1.msra.mxu0 0.0
    %5702 = vmatprep.subr.mxu0 0.0
    %5703 = vmatpush1.msra.mxu0 0.0
    %5704 = vmatprep.subr.mxu0 0.0
    %5705 = vmatpush1.msra.mxu0 0.0
    %5706 = vmatprep.subr.mxu0 0.0
    %5707 = vmatpush1.msra.mxu0 0.0
    %5708 = vmatprep.subr.mxu0 0.0
    %5709 = vmatpush1.msra.mxu0 0.0
    %5710 = vmatprep.subr.mxu0 0.0
    %5711 = vmatpush1.msra.mxu0 0.0
    %5712 = vmatprep.subr.mxu0 0.0
    %5713 = vmatpush1.msra.mxu0 0.0
    %5714 = vmatprep.subr.mxu0 0.0
    %5715 = vmatpush1.msra.mxu0 0.0
    %5716 = vmatprep.subr.mxu0 0.0
    %5717 = vmatpush1.msra.mxu0 0.0
    %5718 = vmatprep.subr.mxu0 0.0
    %5719 = vmatpush1.msra.mxu0 0.0
    %5720 = vmatprep.subr.mxu0 0.0
    %5721 = vmatpush1.msra.mxu0 0.0
    %5722 = vmatprep.subr.mxu0 0.0
    %5723 = vmatpush1.msra.mxu0 0.0
    %5724 = vmatprep.subr.mxu0 0.0
    %5725 = vmatpush1.msra.mxu0 0.0
    %5726 = vmatprep.subr.mxu0 0.0
    %5727 = vmatpush1.msra.mxu0 0.0
    %5728 = vmatprep.subr.mxu0 0.0
    %5729 = vmatpush1.msra.mxu0 0.0
    %5730 = vmatprep.subr.mxu0 0.0
    %5731 = vmatpush1.msra.mxu0 0.0
    %5732 = vmatprep.subr.mxu0 0.0
    %5733 = vmatpush1.msra.mxu0 0.0
    %5734 = vmatprep.subr.mxu0 0.0
    %5735 = vmatpush1.msra.mxu0 0.0
    %5736 = vmatprep.subr.mxu0 0.0
    %5737 = vmatpush1.msra.mxu0 0.0
    %5738 = vmatprep.subr.mxu0 0.0
    %5739 = vmatpush1.msra.mxu0 0.0
    %5740 = vmatprep.subr.mxu0 0.0
    %5741 = vmatpush1.msra.mxu0 0.0
    %5742 = vmatprep.subr.mxu0 0.0
    %5743 = vmatpush1.msra.mxu0 0.0
    %5744 = vmatprep.subr.mxu0 0.0
    %5745 = vmatpush1.msra.mxu0 0.0
    %5746 = vmatprep.mubr.f32.mxu0 0.0
    %v5747 = vand.u32 %v5581, 4294901760
    %5748 = vmatmul.mubr.f32.gmra.mrb[0].mxu0 %v5747
    %v5749 = vpop.f32.mrb[0].mxu0
    %v5750 = vadd.f32 %v5659, %v5749
    %v5751 = vpop.f32.mrb[0].mxu0
    %5752 = vdwg.mxu0
    %5753 = vmatprep.subr.mxu0 0.0
    %v5754 = vand.u32 %v5576, 4294901760
    %v5755 = vsub.f32 %v5576, %v5754
    %5756 = vmatpush1.msra.mxu0 %v5755
    %5757 = vmatprep.subr.mxu0 0.0
    %v5758 = vand.u32 %v5577, 4294901760
    %v5759 = vsub.f32 %v5577, %v5758
    %5760 = vmatpush1.msra.mxu0 %v5759
    %5761 = vmatprep.subr.mxu0 0.0
    %v5762 = vand.u32 %v5578, 4294901760
    %v5763 = vsub.f32 %v5578, %v5762
    %5764 = vmatpush1.msra.mxu0 %v5763
    %5765 = vmatprep.subr.mxu0 0.0
    %v5766 = vand.u32 %v5579, 4294901760
    %v5767 = vsub.f32 %v5579, %v5766
    %5768 = vmatpush1.msra.mxu0 %v5767
    %5769 = vmatprep.subr.mxu0 0.0
    %5770 = vmatpush1.msra.mxu0 0.0
    %5771 = vmatprep.subr.mxu0 0.0
    %5772 = vmatpush1.msra.mxu0 0.0
    %5773 = vmatprep.subr.mxu0 0.0
    %5774 = vmatpush1.msra.mxu0 0.0
    %5775 = vmatprep.subr.mxu0 0.0
    %5776 = vmatpush1.msra.mxu0 0.0
    %5777 = vmatprep.subr.mxu0 0.0
    %5778 = vmatpush1.msra.mxu0 0.0
    %5779 = vmatprep.subr.mxu0 0.0
    %5780 = vmatpush1.msra.mxu0 0.0
    %5781 = vmatprep.subr.mxu0 0.0
    %5782 = vmatpush1.msra.mxu0 0.0
    %5783 = vmatprep.subr.mxu0 0.0
    %5784 = vmatpush1.msra.mxu0 0.0
    %5785 = vmatprep.subr.mxu0 0.0
    %5786 = vmatpush1.msra.mxu0 0.0
    %5787 = vmatprep.subr.mxu0 0.0
    %5788 = vmatpush1.msra.mxu0 0.0
    %5789 = vmatprep.subr.mxu0 0.0
    %5790 = vmatpush1.msra.mxu0 0.0
    %5791 = vmatprep.subr.mxu0 0.0
    %5792 = vmatpush1.msra.mxu0 0.0
    %5793 = vmatprep.subr.mxu0 0.0
    %5794 = vmatpush1.msra.mxu0 0.0
    %5795 = vmatprep.subr.mxu0 0.0
    %5796 = vmatpush1.msra.mxu0 0.0
    %5797 = vmatprep.subr.mxu0 0.0
    %5798 = vmatpush1.msra.mxu0 0.0
    %5799 = vmatprep.subr.mxu0 0.0
    %5800 = vmatpush1.msra.mxu0 0.0
    %5801 = vmatprep.subr.mxu0 0.0
    %5802 = vmatpush1.msra.mxu0 0.0
    %5803 = vmatprep.subr.mxu0 0.0
    %5804 = vmatpush1.msra.mxu0 0.0
    %5805 = vmatprep.subr.mxu0 0.0
    %5806 = vmatpush1.msra.mxu0 0.0
    %5807 = vmatprep.subr.mxu0 0.0
    %5808 = vmatpush1.msra.mxu0 0.0
    %5809 = vmatprep.subr.mxu0 0.0
    %5810 = vmatpush1.msra.mxu0 0.0
    %5811 = vmatprep.subr.mxu0 0.0
    %5812 = vmatpush1.msra.mxu0 0.0
    %5813 = vmatprep.subr.mxu0 0.0
    %5814 = vmatpush1.msra.mxu0 0.0
    %5815 = vmatprep.subr.mxu0 0.0
    %5816 = vmatpush1.msra.mxu0 0.0
    %5817 = vmatprep.subr.mxu0 0.0
    %5818 = vmatpush1.msra.mxu0 0.0
    %5819 = vmatprep.subr.mxu0 0.0
    %5820 = vmatpush1.msra.mxu0 0.0
    %5821 = vmatprep.subr.mxu0 0.0
    %5822 = vmatpush1.msra.mxu0 0.0
    %5823 = vmatprep.subr.mxu0 0.0
    %5824 = vmatpush1.msra.mxu0 0.0
    %5825 = vmatprep.mubr.f32.mxu0 0.0
    %v5826 = vand.u32 %v5581, 4294901760
    %v5827 = vsub.f32 %v5581, %v5826
    %5828 = vmatmul.mubr.f32.gmra.mrb[0].mxu0 %v5827
    %v5829 = vpop.f32.mrb[0].mxu0
    %v5830 = vadd.f32 %v5750, %v5829
    %v5831 = vpop.f32.mrb[0].mxu0
    %5832 = vdwg.mxu0
    %5833 = vmatprep.subr.mxu0 0.0
    %v5834 = vand.u32 %v5576, 4294901760
    %5835 = vmatpush1.msra.mxu0 %v5834
    %5836 = vmatprep.subr.mxu0 0.0
    %v5837 = vand.u32 %v5577, 4294901760
    %5838 = vmatpush1.msra.mxu0 %v5837
    %5839 = vmatprep.subr.mxu0 0.0
    %v5840 = vand.u32 %v5578, 4294901760
    %5841 = vmatpush1.msra.mxu0 %v5840
    %5842 = vmatprep.subr.mxu0 0.0
    %v5843 = vand.u32 %v5579, 4294901760
    %5844 = vmatpush1.msra.mxu0 %v5843
    %5845 = vmatprep.subr.mxu0 0.0
    %5846 = vmatpush1.msra.mxu0 0.0
    %5847 = vmatprep.subr.mxu0 0.0
    %5848 = vmatpush1.msra.mxu0 0.0
    %5849 = vmatprep.subr.mxu0 0.0
    %5850 = vmatpush1.msra.mxu0 0.0
    %5851 = vmatprep.subr.mxu0 0.0
    %5852 = vmatpush1.msra.mxu0 0.0
    %5853 = vmatprep.subr.mxu0 0.0
    %5854 = vmatpush1.msra.mxu0 0.0
    %5855 = vmatprep.subr.mxu0 0.0
    %5856 = vmatpush1.msra.mxu0 0.0
    %5857 = vmatprep.subr.mxu0 0.0
    %5858 = vmatpush1.msra.mxu0 0.0
    %5859 = vmatprep.subr.mxu0 0.0
    %5860 = vmatpush1.msra.mxu0 0.0
    %5861 = vmatprep.subr.mxu0 0.0
    %5862 = vmatpush1.msra.mxu0 0.0
    %5863 = vmatprep.subr.mxu0 0.0
    %5864 = vmatpush1.msra.mxu0 0.0
    %5865 = vmatprep.subr.mxu0 0.0
    %5866 = vmatpush1.msra.mxu0 0.0
    %5867 = vmatprep.subr.mxu0 0.0
    %5868 = vmatpush1.msra.mxu0 0.0
    %5869 = vmatprep.subr.mxu0 0.0
    %5870 = vmatpush1.msra.mxu0 0.0
    %5871 = vmatprep.subr.mxu0 0.0
    %5872 = vmatpush1.msra.mxu0 0.0
    %5873 = vmatprep.subr.mxu0 0.0
    %5874 = vmatpush1.msra.mxu0 0.0
    %5875 = vmatprep.subr.mxu0 0.0
    %5876 = vmatpush1.msra.mxu0 0.0
    %5877 = vmatprep.subr.mxu0 0.0
    %5878 = vmatpush1.msra.mxu0 0.0
    %5879 = vmatprep.subr.mxu0 0.0
    %5880 = vmatpush1.msra.mxu0 0.0
    %5881 = vmatprep.subr.mxu0 0.0
    %5882 = vmatpush1.msra.mxu0 0.0
    %5883 = vmatprep.subr.mxu0 0.0
    %5884 = vmatpush1.msra.mxu0 0.0
    %5885 = vmatprep.subr.mxu0 0.0
    %5886 = vmatpush1.msra.mxu0 0.0
    %5887 = vmatprep.subr.mxu0 0.0
    %5888 = vmatpush1.msra.mxu0 0.0
    %5889 = vmatprep.subr.mxu0 0.0
    %5890 = vmatpush1.msra.mxu0 0.0
    %5891 = vmatprep.subr.mxu0 0.0
    %5892 = vmatpush1.msra.mxu0 0.0
    %5893 = vmatprep.subr.mxu0 0.0
    %5894 = vmatpush1.msra.mxu0 0.0
    %5895 = vmatprep.subr.mxu0 0.0
    %5896 = vmatpush1.msra.mxu0 0.0
    %5897 = vmatprep.subr.mxu0 0.0
    %5898 = vmatpush1.msra.mxu0 0.0
    %5899 = vmatprep.subr.mxu0 0.0
    %5900 = vmatpush1.msra.mxu0 0.0
    %5901 = vmatprep.mubr.f32.mxu0 0.0
    %v5902 = vand.u32 %v5581, 4294901760
    %v5903 = vsub.f32 %v5581, %v5902
    %v5904 = vand.u32 %v5903, 4294901760
    %5905 = vmatmul.mubr.f32.gmra.mrb[0].mxu0 %v5904
    %v5906 = vpop.f32.mrb[0].mxu0
    %v5907 = vadd.f32 %v5830, %v5906
    %v5908 = vpop.f32.mrb[0].mxu0
    %5909 = vdwg.mxu0
    %5910 = vmatprep.subr.mxu0 0.0
    %v5911 = vand.u32 %v5576, 4294901760
    %v5912 = vsub.f32 %v5576, %v5911
    %v5913 = vand.u32 %v5912, 4294901760
    %5914 = vmatpush1.msra.mxu0 %v5913
    %5915 = vmatprep.subr.mxu0 0.0
    %v5916 = vand.u32 %v5577, 4294901760
    %v5917 = vsub.f32 %v5577, %v5916
    %v5918 = vand.u32 %v5917, 4294901760
    %5919 = vmatpush1.msra.mxu0 %v5918
    %5920 = vmatprep.subr.mxu0 0.0
    %v5921 = vand.u32 %v5578, 4294901760
    %v5922 = vsub.f32 %v5578, %v5921
    %v5923 = vand.u32 %v5922, 4294901760
    %5924 = vmatpush1.msra.mxu0 %v5923
    %5925 = vmatprep.subr.mxu0 0.0
    %v5926 = vand.u32 %v5579, 4294901760
    %v5927 = vsub.f32 %v5579, %v5926
    %v5928 = vand.u32 %v5927, 4294901760
    %5929 = vmatpush1.msra.mxu0 %v5928
    %5930 = vmatprep.subr.mxu0 0.0
    %5931 = vmatpush1.msra.mxu0 0.0
    %5932 = vmatprep.subr.mxu0 0.0
    %5933 = vmatpush1.msra.mxu0 0.0
    %5934 = vmatprep.subr.mxu0 0.0
    %5935 = vmatpush1.msra.mxu0 0.0
    %5936 = vmatprep.subr.mxu0 0.0
    %5937 = vmatpush1.msra.mxu0 0.0
    %5938 = vmatprep.subr.mxu0 0.0
    %5939 = vmatpush1.msra.mxu0 0.0
    %5940 = vmatprep.subr.mxu0 0.0
    %5941 = vmatpush1.msra.mxu0 0.0
    %5942 = vmatprep.subr.mxu0 0.0
    %5943 = vmatpush1.msra.mxu0 0.0
    %5944 = vmatprep.subr.mxu0 0.0
    %5945 = vmatpush1.msra.mxu0 0.0
    %5946 = vmatprep.subr.mxu0 0.0
    %5947 = vmatpush1.msra.mxu0 0.0
    %5948 = vmatprep.subr.mxu0 0.0
    %5949 = vmatpush1.msra.mxu0 0.0
    %5950 = vmatprep.subr.mxu0 0.0
    %5951 = vmatpush1.msra.mxu0 0.0
    %5952 = vmatprep.subr.mxu0 0.0
    %5953 = vmatpush1.msra.mxu0 0.0
    %5954 = vmatprep.subr.mxu0 0.0
    %5955 = vmatpush1.msra.mxu0 0.0
    %5956 = vmatprep.subr.mxu0 0.0
    %5957 = vmatpush1.msra.mxu0 0.0
    %5958 = vmatprep.subr.mxu0 0.0
    %5959 = vmatpush1.msra.mxu0 0.0
    %5960 = vmatprep.subr.mxu0 0.0
    %5961 = vmatpush1.msra.mxu0 0.0
    %5962 = vmatprep.subr.mxu0 0.0
    %5963 = vmatpush1.msra.mxu0 0.0
    %5964 = vmatprep.subr.mxu0 0.0
    %5965 = vmatpush1.msra.mxu0 0.0
    %5966 = vmatprep.subr.mxu0 0.0
    %5967 = vmatpush1.msra.mxu0 0.0
    %5968 = vmatprep.subr.mxu0 0.0
    %5969 = vmatpush1.msra.mxu0 0.0
    %5970 = vmatprep.subr.mxu0 0.0
    %5971 = vmatpush1.msra.mxu0 0.0
    %5972 = vmatprep.subr.mxu0 0.0
    %5973 = vmatpush1.msra.mxu0 0.0
    %5974 = vmatprep.subr.mxu0 0.0
    %5975 = vmatpush1.msra.mxu0 0.0
    %5976 = vmatprep.subr.mxu0 0.0
    %5977 = vmatpush1.msra.mxu0 0.0
    %5978 = vmatprep.subr.mxu0 0.0
    %5979 = vmatpush1.msra.mxu0 0.0
    %5980 = vmatprep.subr.mxu0 0.0
    %5981 = vmatpush1.msra.mxu0 0.0
    %5982 = vmatprep.subr.mxu0 0.0
    %5983 = vmatpush1.msra.mxu0 0.0
    %5984 = vmatprep.subr.mxu0 0.0
    %5985 = vmatpush1.msra.mxu0 0.0
    %5986 = vmatprep.mubr.f32.mxu0 0.0
    %v5987 = vand.u32 %v5581, 4294901760
    %5988 = vmatmul.mubr.f32.gmra.mrb[0].mxu0 %v5987
    %v5989 = vpop.f32.mrb[0].mxu0
    %v5990 = vadd.f32 %v5907, %v5989
    %v5991 = vpop.f32.mrb[0].mxu0
    %5992 = vdwg.mxu0
    %5993 = vmatprep.subr.mxu0 0.0
    %v5994 = vand.u32 %v5576, 4294901760
    %5995 = vmatpush1.msra.mxu0 %v5994
    %5996 = vmatprep.subr.mxu0 0.0
    %v5997 = vand.u32 %v5577, 4294901760
    %5998 = vmatpush1.msra.mxu0 %v5997
    %5999 = vmatprep.subr.mxu0 0.0
    %v6000 = vand.u32 %v5578, 4294901760
    %6001 = vmatpush1.msra.mxu0 %v6000
    %6002 = vmatprep.subr.mxu0 0.0
    %v6003 = vand.u32 %v5579, 4294901760
    %6004 = vmatpush1.msra.mxu0 %v6003
    %6005 = vmatprep.subr.mxu0 0.0
    %6006 = vmatpush1.msra.mxu0 0.0
    %6007 = vmatprep.subr.mxu0 0.0
    %6008 = vmatpush1.msra.mxu0 0.0
    %6009 = vmatprep.subr.mxu0 0.0
    %6010 = vmatpush1.msra.mxu0 0.0
    %6011 = vmatprep.subr.mxu0 0.0
    %6012 = vmatpush1.msra.mxu0 0.0
    %6013 = vmatprep.subr.mxu0 0.0
    %6014 = vmatpush1.msra.mxu0 0.0
    %6015 = vmatprep.subr.mxu0 0.0
    %6016 = vmatpush1.msra.mxu0 0.0
    %6017 = vmatprep.subr.mxu0 0.0
    %6018 = vmatpush1.msra.mxu0 0.0
    %6019 = vmatprep.subr.mxu0 0.0
    %6020 = vmatpush1.msra.mxu0 0.0
    %6021 = vmatprep.subr.mxu0 0.0
    %6022 = vmatpush1.msra.mxu0 0.0
    %6023 = vmatprep.subr.mxu0 0.0
    %6024 = vmatpush1.msra.mxu0 0.0
    %6025 = vmatprep.subr.mxu0 0.0
    %6026 = vmatpush1.msra.mxu0 0.0
    %6027 = vmatprep.subr.mxu0 0.0
    %6028 = vmatpush1.msra.mxu0 0.0
    %6029 = vmatprep.subr.mxu0 0.0
    %6030 = vmatpush1.msra.mxu0 0.0
    %6031 = vmatprep.subr.mxu0 0.0
    %6032 = vmatpush1.msra.mxu0 0.0
    %6033 = vmatprep.subr.mxu0 0.0
    %6034 = vmatpush1.msra.mxu0 0.0
    %6035 = vmatprep.subr.mxu0 0.0
    %6036 = vmatpush1.msra.mxu0 0.0
    %6037 = vmatprep.subr.mxu0 0.0
    %6038 = vmatpush1.msra.mxu0 0.0
    %6039 = vmatprep.subr.mxu0 0.0
    %6040 = vmatpush1.msra.mxu0 0.0
    %6041 = vmatprep.subr.mxu0 0.0
    %6042 = vmatpush1.msra.mxu0 0.0
    %6043 = vmatprep.subr.mxu0 0.0
    %6044 = vmatpush1.msra.mxu0 0.0
    %6045 = vmatprep.subr.mxu0 0.0
    %6046 = vmatpush1.msra.mxu0 0.0
    %6047 = vmatprep.subr.mxu0 0.0
    %6048 = vmatpush1.msra.mxu0 0.0
    %6049 = vmatprep.subr.mxu0 0.0
    %6050 = vmatpush1.msra.mxu0 0.0
    %6051 = vmatprep.subr.mxu0 0.0
    %6052 = vmatpush1.msra.mxu0 0.0
    %6053 = vmatprep.subr.mxu0 0.0
    %6054 = vmatpush1.msra.mxu0 0.0
    %6055 = vmatprep.subr.mxu0 0.0
    %6056 = vmatpush1.msra.mxu0 0.0
    %6057 = vmatprep.subr.mxu0 0.0
    %6058 = vmatpush1.msra.mxu0 0.0
    %6059 = vmatprep.subr.mxu0 0.0
    %6060 = vmatpush1.msra.mxu0 0.0
    %6061 = vmatprep.mubr.f32.mxu0 0.0
    %v6062 = vand.u32 %v5581, 4294901760
    %6063 = vmatmul.mubr.f32.gmra.mrb[0].mxu0 %v6062
    %v6064 = vpop.f32.mrb[0].mxu0
    %v6065 = vadd.f32 %v5990, %v6064
    %v6066 = vpop.f32.mrb[0].mxu0
    %6067 = vdwg.mxu0
    %v6068 = vadd.f32 %v5574, %v6065
    %v6069 = vxor.u32 %v6068, 2147483648
    %v6070 = vmul.f32 %v6069, 1.442695
    %v6071 = vpow.pop %v6070
    %v6072 = vadd.f32 %v6071, 1.0
    %v6073 = vrcp.pop %v6072
    %v6074 = vmul.f32 1.0, %v6073
    %v6075 = vtanh.pop %v6068
    %v6076 = vld [vmem:[#allocation6] sm:$0x3]
    %6078 = vrot.lane.b32.xlu0 %v6076, 32
    %v6079 = vpop.permute.xlu0 %6078
    %v6081 = vmul.f32 %v6074, %v6079
    %6083 = vrot.lane.b32.xlu0 %v6075, 64
    %v6084 = vpop.permute.xlu0 %6083
    %v6086 = vmul.f32 %v6074, %v6084
    %6088 = vrot.lane.b32.xlu0 %v6086, 32
    %v6089 = vpop.permute.xlu0 %6088
    %v6091 = vadd.f32 %v6081, %v6089
    %v6092 = vtanh.pop %v6091
    %6094 = vrot.lane.b32.xlu0 %v6092, 64
    %v6095 = vpop.permute.xlu0 %6094
    %v6097 = vmul.f32 %v6074, %v6095
    %6099 = vrot.lane.b32.xlu0 %v6091, 96
    %v6100 = vpop.permute.xlu0 %6099
    %6102 = vst.msk [vmem:[#allocation6] sm:$0x3] %vm189, %v6100
    %6104 = vrot.lane.b32.xlu0 %v6097, 32
    %v6105 = vpop.permute.xlu0 %6104
    %6107 = vst.msk [vmem:[#allocation5] sm:$0x3] %vm189, %v6105
    %s6108 = sld [smem:[#allocation12]]
    %p6109 = scmp.eq.s32.totalorder %s6108, 1
    // Predicated region
    $region66: #{tpu_custom_call.1} parent=1 // pred_check
      %p6110 = pneg %p6109
    $region67: #{tpu_custom_call.1} parent=1 // pred_check_branch
      %6112 = sbr.rel (%p6110) target = $region69
    $region68: #{tpu_custom_call.1} parent=1 // pred_region
      %6113 = vst.msk [vmem:[#allocation20] sm:$0x1] %vm127, %v6105
    $region69: #{tpu_custom_call.1} parent=1 // pred_fallthru
      _
    %s6114 = sld [smem:[#allocation12 + $0x1]]
    %p6115 = scmp.eq.s32.totalorder %s6114, 1
    // Predicated region
    $region70: #{tpu_custom_call.1} parent=1 // pred_check
      %p6116 = pneg %p6115
    $region71: #{tpu_custom_call.1} parent=1 // pred_check_branch
      %6118 = sbr.rel (%p6116) target = $region73
    $region72: #{tpu_custom_call.1} parent=1 // pred_region
      %vm6119 = vcmask 254977
      %6120 = vst.msk [vmem:[#allocation20] sm:$0x2] %vm6119, %v6105
    $region73: #{tpu_custom_call.1} parent=1 // pred_fallthru
      _
    %v6121 = vld [vmem:[#allocation3 + $0x2] sm:$0x3]
    %v6122 = vld [vmem:[#allocation5] sm:$0x3]
    %v6123 = vld [vmem:[#allocation19] sm:$0xff]
    %v6124 = vld [vmem:[#allocation19 + $0x8] sm:$0xff]
    %v6125 = vld [vmem:[#allocation19 + $0x10] sm:$0xff]
    %v6126 = vld [vmem:[#allocation19 + $0x18] sm:$0xff]
    %v6128 = vsel %vm204, %v6122, 0
    %6130 = vmatprep.subr.mxu0 0.0
    %v6131 = vand.u32 %v6123, 4294901760
    %6132 = vmatpush1.msra.mxu0 %v6131
    %6133 = vmatprep.subr.mxu0 0.0
    %v6134 = vand.u32 %v6124, 4294901760
    %6135 = vmatpush1.msra.mxu0 %v6134
    %6136 = vmatprep.subr.mxu0 0.0
    %v6137 = vand.u32 %v6125, 4294901760
    %6138 = vmatpush1.msra.mxu0 %v6137
    %6139 = vmatprep.subr.mxu0 0.0
    %v6140 = vand.u32 %v6126, 4294901760
    %6141 = vmatpush1.msra.mxu0 %v6140
    %6142 = vmatprep.subr.mxu0 0.0
    %6143 = vmatpush1.msra.mxu0 0.0
    %6144 = vmatprep.subr.mxu0 0.0
    %6145 = vmatpush1.msra.mxu0 0.0
    %6146 = vmatprep.subr.mxu0 0.0
    %6147 = vmatpush1.msra.mxu0 0.0
    %6148 = vmatprep.subr.mxu0 0.0
    %6149 = vmatpush1.msra.mxu0 0.0
    %6150 = vmatprep.subr.mxu0 0.0
    %6151 = vmatpush1.msra.mxu0 0.0
    %6152 = vmatprep.subr.mxu0 0.0
    %6153 = vmatpush1.msra.mxu0 0.0
    %6154 = vmatprep.subr.mxu0 0.0
    %6155 = vmatpush1.msra.mxu0 0.0
    %6156 = vmatprep.subr.mxu0 0.0
    %6157 = vmatpush1.msra.mxu0 0.0
    %6158 = vmatprep.subr.mxu0 0.0
    %6159 = vmatpush1.msra.mxu0 0.0
    %6160 = vmatprep.subr.mxu0 0.0
    %6161 = vmatpush1.msra.mxu0 0.0
    %6162 = vmatprep.subr.mxu0 0.0
    %6163 = vmatpush1.msra.mxu0 0.0
    %6164 = vmatprep.subr.mxu0 0.0
    %6165 = vmatpush1.msra.mxu0 0.0
    %6166 = vmatprep.subr.mxu0 0.0
    %6167 = vmatpush1.msra.mxu0 0.0
    %6168 = vmatprep.subr.mxu0 0.0
    %6169 = vmatpush1.msra.mxu0 0.0
    %6170 = vmatprep.subr.mxu0 0.0
    %6171 = vmatpush1.msra.mxu0 0.0
    %6172 = vmatprep.subr.mxu0 0.0
    %6173 = vmatpush1.msra.mxu0 0.0
    %6174 = vmatprep.subr.mxu0 0.0
    %6175 = vmatpush1.msra.mxu0 0.0
    %6176 = vmatprep.subr.mxu0 0.0
    %6177 = vmatpush1.msra.mxu0 0.0
    %6178 = vmatprep.subr.mxu0 0.0
    %6179 = vmatpush1.msra.mxu0 0.0
    %6180 = vmatprep.subr.mxu0 0.0
    %6181 = vmatpush1.msra.mxu0 0.0
    %6182 = vmatprep.subr.mxu0 0.0
    %6183 = vmatpush1.msra.mxu0 0.0
    %6184 = vmatprep.subr.mxu0 0.0
    %6185 = vmatpush1.msra.mxu0 0.0
    %6186 = vmatprep.subr.mxu0 0.0
    %6187 = vmatpush1.msra.mxu0 0.0
    %6188 = vmatprep.subr.mxu0 0.0
    %6189 = vmatpush1.msra.mxu0 0.0
    %6190 = vmatprep.subr.mxu0 0.0
    %6191 = vmatpush1.msra.mxu0 0.0
    %6192 = vmatprep.subr.mxu0 0.0
    %6193 = vmatpush1.msra.mxu0 0.0
    %6194 = vmatprep.subr.mxu0 0.0
    %6195 = vmatpush1.msra.mxu0 0.0
    %6196 = vmatprep.subr.mxu0 0.0
    %6197 = vmatpush1.msra.mxu0 0.0
    %6198 = vmatprep.mubr.f32.mxu0 0.0
    %v6199 = vand.u32 %v6128, 4294901760
    %v6200 = vsub.f32 %v6128, %v6199
    %v6201 = vand.u32 %v6200, 4294901760
    %v6202 = vsub.f32 %v6200, %v6201
    %v6203 = vand.u32 %v6202, 4294901760
    %6204 = vmatmul.mubr.f32.gmra.mrb[0].mxu0 %v6203
    %v6205 = vpop.f32.mrb[0].mxu0
    %v6206 = vadd.f32 0.0, %v6205
    %v6207 = vpop.f32.mrb[0].mxu0
    %6208 = vdwg.mxu0
    %6209 = vmatprep.subr.mxu0 0.0
    %v6210 = vand.u32 %v6123, 4294901760
    %v6211 = vsub.f32 %v6123, %v6210
    %v6212 = vand.u32 %v6211, 4294901760
    %v6213 = vsub.f32 %v6211, %v6212
    %v6214 = vand.u32 %v6213, 4294901760
    %6215 = vmatpush1.msra.mxu0 %v6214
    %6216 = vmatprep.subr.mxu0 0.0
    %v6217 = vand.u32 %v6124, 4294901760
    %v6218 = vsub.f32 %v6124, %v6217
    %v6219 = vand.u32 %v6218, 4294901760
    %v6220 = vsub.f32 %v6218, %v6219
    %v6221 = vand.u32 %v6220, 4294901760
    %6222 = vmatpush1.msra.mxu0 %v6221
    %6223 = vmatprep.subr.mxu0 0.0
    %v6224 = vand.u32 %v6125, 4294901760
    %v6225 = vsub.f32 %v6125, %v6224
    %v6226 = vand.u32 %v6225, 4294901760
    %v6227 = vsub.f32 %v6225, %v6226
    %v6228 = vand.u32 %v6227, 4294901760
    %6229 = vmatpush1.msra.mxu0 %v6228
    %6230 = vmatprep.subr.mxu0 0.0
    %v6231 = vand.u32 %v6126, 4294901760
    %v6232 = vsub.f32 %v6126, %v6231
    %v6233 = vand.u32 %v6232, 4294901760
    %v6234 = vsub.f32 %v6232, %v6233
    %v6235 = vand.u32 %v6234, 4294901760
    %6236 = vmatpush1.msra.mxu0 %v6235
    %6237 = vmatprep.subr.mxu0 0.0
    %6238 = vmatpush1.msra.mxu0 0.0
    %6239 = vmatprep.subr.mxu0 0.0
    %6240 = vmatpush1.msra.mxu0 0.0
    %6241 = vmatprep.subr.mxu0 0.0
    %6242 = vmatpush1.msra.mxu0 0.0
    %6243 = vmatprep.subr.mxu0 0.0
    %6244 = vmatpush1.msra.mxu0 0.0
    %6245 = vmatprep.subr.mxu0 0.0
    %6246 = vmatpush1.msra.mxu0 0.0
    %6247 = vmatprep.subr.mxu0 0.0
    %6248 = vmatpush1.msra.mxu0 0.0
    %6249 = vmatprep.subr.mxu0 0.0
    %6250 = vmatpush1.msra.mxu0 0.0
    %6251 = vmatprep.subr.mxu0 0.0
    %6252 = vmatpush1.msra.mxu0 0.0
    %6253 = vmatprep.subr.mxu0 0.0
    %6254 = vmatpush1.msra.mxu0 0.0
    %6255 = vmatprep.subr.mxu0 0.0
    %6256 = vmatpush1.msra.mxu0 0.0
    %6257 = vmatprep.subr.mxu0 0.0
    %6258 = vmatpush1.msra.mxu0 0.0
    %6259 = vmatprep.subr.mxu0 0.0
    %6260 = vmatpush1.msra.mxu0 0.0
    %6261 = vmatprep.subr.mxu0 0.0
    %6262 = vmatpush1.msra.mxu0 0.0
    %6263 = vmatprep.subr.mxu0 0.0
    %6264 = vmatpush1.msra.mxu0 0.0
    %6265 = vmatprep.subr.mxu0 0.0
    %6266 = vmatpush1.msra.mxu0 0.0
    %6267 = vmatprep.subr.mxu0 0.0
    %6268 = vmatpush1.msra.mxu0 0.0
    %6269 = vmatprep.subr.mxu0 0.0
    %6270 = vmatpush1.msra.mxu0 0.0
    %6271 = vmatprep.subr.mxu0 0.0
    %6272 = vmatpush1.msra.mxu0 0.0
    %6273 = vmatprep.subr.mxu0 0.0
    %6274 = vmatpush1.msra.mxu0 0.0
    %6275 = vmatprep.subr.mxu0 0.0
    %6276 = vmatpush1.msra.mxu0 0.0
    %6277 = vmatprep.subr.mxu0 0.0
    %6278 = vmatpush1.msra.mxu0 0.0
    %6279 = vmatprep.subr.mxu0 0.0
    %6280 = vmatpush1.msra.mxu0 0.0
    %6281 = vmatprep.subr.mxu0 0.0
    %6282 = vmatpush1.msra.mxu0 0.0
    %6283 = vmatprep.subr.mxu0 0.0
    %6284 = vmatpush1.msra.mxu0 0.0
    %6285 = vmatprep.subr.mxu0 0.0
    %6286 = vmatpush1.msra.mxu0 0.0
    %6287 = vmatprep.subr.mxu0 0.0
    %6288 = vmatpush1.msra.mxu0 0.0
    %6289 = vmatprep.subr.mxu0 0.0
    %6290 = vmatpush1.msra.mxu0 0.0
    %6291 = vmatprep.subr.mxu0 0.0
    %6292 = vmatpush1.msra.mxu0 0.0
    %6293 = vmatprep.mubr.f32.mxu0 0.0
    %v6294 = vand.u32 %v6128, 4294901760
    %6295 = vmatmul.mubr.f32.gmra.mrb[0].mxu0 %v6294
    %v6296 = vpop.f32.mrb[0].mxu0
    %v6297 = vadd.f32 %v6206, %v6296
    %v6298 = vpop.f32.mrb[0].mxu0
    %6299 = vdwg.mxu0
    %6300 = vmatprep.subr.mxu0 0.0
    %v6301 = vand.u32 %v6123, 4294901760
    %v6302 = vsub.f32 %v6123, %v6301
    %6303 = vmatpush1.msra.mxu0 %v6302
    %6304 = vmatprep.subr.mxu0 0.0
    %v6305 = vand.u32 %v6124, 4294901760
    %v6306 = vsub.f32 %v6124, %v6305
    %6307 = vmatpush1.msra.mxu0 %v6306
    %6308 = vmatprep.subr.mxu0 0.0
    %v6309 = vand.u32 %v6125, 4294901760
    %v6310 = vsub.f32 %v6125, %v6309
    %6311 = vmatpush1.msra.mxu0 %v6310
    %6312 = vmatprep.subr.mxu0 0.0
    %v6313 = vand.u32 %v6126, 4294901760
    %v6314 = vsub.f32 %v6126, %v6313
    %6315 = vmatpush1.msra.mxu0 %v6314
    %6316 = vmatprep.subr.mxu0 0.0
    %6317 = vmatpush1.msra.mxu0 0.0
    %6318 = vmatprep.subr.mxu0 0.0
    %6319 = vmatpush1.msra.mxu0 0.0
    %6320 = vmatprep.subr.mxu0 0.0
    %6321 = vmatpush1.msra.mxu0 0.0
    %6322 = vmatprep.subr.mxu0 0.0
    %6323 = vmatpush1.msra.mxu0 0.0
    %6324 = vmatprep.subr.mxu0 0.0
    %6325 = vmatpush1.msra.mxu0 0.0
    %6326 = vmatprep.subr.mxu0 0.0
    %6327 = vmatpush1.msra.mxu0 0.0
    %6328 = vmatprep.subr.mxu0 0.0
    %6329 = vmatpush1.msra.mxu0 0.0
    %6330 = vmatprep.subr.mxu0 0.0
    %6331 = vmatpush1.msra.mxu0 0.0
    %6332 = vmatprep.subr.mxu0 0.0
    %6333 = vmatpush1.msra.mxu0 0.0
    %6334 = vmatprep.subr.mxu0 0.0
    %6335 = vmatpush1.msra.mxu0 0.0
    %6336 = vmatprep.subr.mxu0 0.0
    %6337 = vmatpush1.msra.mxu0 0.0
    %6338 = vmatprep.subr.mxu0 0.0
    %6339 = vmatpush1.msra.mxu0 0.0
    %6340 = vmatprep.subr.mxu0 0.0
    %6341 = vmatpush1.msra.mxu0 0.0
    %6342 = vmatprep.subr.mxu0 0.0
    %6343 = vmatpush1.msra.mxu0 0.0
    %6344 = vmatprep.subr.mxu0 0.0
    %6345 = vmatpush1.msra.mxu0 0.0
    %6346 = vmatprep.subr.mxu0 0.0
    %6347 = vmatpush1.msra.mxu0 0.0
    %6348 = vmatprep.subr.mxu0 0.0
    %6349 = vmatpush1.msra.mxu0 0.0
    %6350 = vmatprep.subr.mxu0 0.0
    %6351 = vmatpush1.msra.mxu0 0.0
    %6352 = vmatprep.subr.mxu0 0.0
    %6353 = vmatpush1.msra.mxu0 0.0
    %6354 = vmatprep.subr.mxu0 0.0
    %6355 = vmatpush1.msra.mxu0 0.0
    %6356 = vmatprep.subr.mxu0 0.0
    %6357 = vmatpush1.msra.mxu0 0.0
    %6358 = vmatprep.subr.mxu0 0.0
    %6359 = vmatpush1.msra.mxu0 0.0
    %6360 = vmatprep.subr.mxu0 0.0
    %6361 = vmatpush1.msra.mxu0 0.0
    %6362 = vmatprep.subr.mxu0 0.0
    %6363 = vmatpush1.msra.mxu0 0.0
    %6364 = vmatprep.subr.mxu0 0.0
    %6365 = vmatpush1.msra.mxu0 0.0
    %6366 = vmatprep.subr.mxu0 0.0
    %6367 = vmatpush1.msra.mxu0 0.0
    %6368 = vmatprep.subr.mxu0 0.0
    %6369 = vmatpush1.msra.mxu0 0.0
    %6370 = vmatprep.subr.mxu0 0.0
    %6371 = vmatpush1.msra.mxu0 0.0
    %6372 = vmatprep.mubr.f32.mxu0 0.0
    %v6373 = vand.u32 %v6128, 4294901760
    %v6374 = vsub.f32 %v6128, %v6373
    %6375 = vmatmul.mubr.f32.gmra.mrb[0].mxu0 %v6374
    %v6376 = vpop.f32.mrb[0].mxu0
    %v6377 = vadd.f32 %v6297, %v6376
    %v6378 = vpop.f32.mrb[0].mxu0
    %6379 = vdwg.mxu0
    %6380 = vmatprep.subr.mxu0 0.0
    %v6381 = vand.u32 %v6123, 4294901760
    %6382 = vmatpush1.msra.mxu0 %v6381
    %6383 = vmatprep.subr.mxu0 0.0
    %v6384 = vand.u32 %v6124, 4294901760
    %6385 = vmatpush1.msra.mxu0 %v6384
    %6386 = vmatprep.subr.mxu0 0.0
    %v6387 = vand.u32 %v6125, 4294901760
    %6388 = vmatpush1.msra.mxu0 %v6387
    %6389 = vmatprep.subr.mxu0 0.0
    %v6390 = vand.u32 %v6126, 4294901760
    %6391 = vmatpush1.msra.mxu0 %v6390
    %6392 = vmatprep.subr.mxu0 0.0
    %6393 = vmatpush1.msra.mxu0 0.0
    %6394 = vmatprep.subr.mxu0 0.0
    %6395 = vmatpush1.msra.mxu0 0.0
    %6396 = vmatprep.subr.mxu0 0.0
    %6397 = vmatpush1.msra.mxu0 0.0
    %6398 = vmatprep.subr.mxu0 0.0
    %6399 = vmatpush1.msra.mxu0 0.0
    %6400 = vmatprep.subr.mxu0 0.0
    %6401 = vmatpush1.msra.mxu0 0.0
    %6402 = vmatprep.subr.mxu0 0.0
    %6403 = vmatpush1.msra.mxu0 0.0
    %6404 = vmatprep.subr.mxu0 0.0
    %6405 = vmatpush1.msra.mxu0 0.0
    %6406 = vmatprep.subr.mxu0 0.0
    %6407 = vmatpush1.msra.mxu0 0.0
    %6408 = vmatprep.subr.mxu0 0.0
    %6409 = vmatpush1.msra.mxu0 0.0
    %6410 = vmatprep.subr.mxu0 0.0
    %6411 = vmatpush1.msra.mxu0 0.0
    %6412 = vmatprep.subr.mxu0 0.0
    %6413 = vmatpush1.msra.mxu0 0.0
    %6414 = vmatprep.subr.mxu0 0.0
    %6415 = vmatpush1.msra.mxu0 0.0
    %6416 = vmatprep.subr.mxu0 0.0
    %6417 = vmatpush1.msra.mxu0 0.0
    %6418 = vmatprep.subr.mxu0 0.0
    %6419 = vmatpush1.msra.mxu0 0.0
    %6420 = vmatprep.subr.mxu0 0.0
    %6421 = vmatpush1.msra.mxu0 0.0
    %6422 = vmatprep.subr.mxu0 0.0
    %6423 = vmatpush1.msra.mxu0 0.0
    %6424 = vmatprep.subr.mxu0 0.0
    %6425 = vmatpush1.msra.mxu0 0.0
    %6426 = vmatprep.subr.mxu0 0.0
    %6427 = vmatpush1.msra.mxu0 0.0
    %6428 = vmatprep.subr.mxu0 0.0
    %6429 = vmatpush1.msra.mxu0 0.0
    %6430 = vmatprep.subr.mxu0 0.0
    %6431 = vmatpush1.msra.mxu0 0.0
    %6432 = vmatprep.subr.mxu0 0.0
    %6433 = vmatpush1.msra.mxu0 0.0
    %6434 = vmatprep.subr.mxu0 0.0
    %6435 = vmatpush1.msra.mxu0 0.0
    %6436 = vmatprep.subr.mxu0 0.0
    %6437 = vmatpush1.msra.mxu0 0.0
    %6438 = vmatprep.subr.mxu0 0.0
    %6439 = vmatpush1.msra.mxu0 0.0
    %6440 = vmatprep.subr.mxu0 0.0
    %6441 = vmatpush1.msra.mxu0 0.0
    %6442 = vmatprep.subr.mxu0 0.0
    %6443 = vmatpush1.msra.mxu0 0.0
    %6444 = vmatprep.subr.mxu0 0.0
    %6445 = vmatpush1.msra.mxu0 0.0
    %6446 = vmatprep.subr.mxu0 0.0
    %6447 = vmatpush1.msra.mxu0 0.0
    %6448 = vmatprep.mubr.f32.mxu0 0.0
    %v6449 = vand.u32 %v6128, 4294901760
    %v6450 = vsub.f32 %v6128, %v6449
    %v6451 = vand.u32 %v6450, 4294901760
    %6452 = vmatmul.mubr.f32.gmra.mrb[0].mxu0 %v6451
    %v6453 = vpop.f32.mrb[0].mxu0
    %v6454 = vadd.f32 %v6377, %v6453
    %v6455 = vpop.f32.mrb[0].mxu0
    %6456 = vdwg.mxu0
    %6457 = vmatprep.subr.mxu0 0.0
    %v6458 = vand.u32 %v6123, 4294901760
    %v6459 = vsub.f32 %v6123, %v6458
    %v6460 = vand.u32 %v6459, 4294901760
    %6461 = vmatpush1.msra.mxu0 %v6460
    %6462 = vmatprep.subr.mxu0 0.0
    %v6463 = vand.u32 %v6124, 4294901760
    %v6464 = vsub.f32 %v6124, %v6463
    %v6465 = vand.u32 %v6464, 4294901760
    %6466 = vmatpush1.msra.mxu0 %v6465
    %6467 = vmatprep.subr.mxu0 0.0
    %v6468 = vand.u32 %v6125, 4294901760
    %v6469 = vsub.f32 %v6125, %v6468
    %v6470 = vand.u32 %v6469, 4294901760
    %6471 = vmatpush1.msra.mxu0 %v6470
    %6472 = vmatprep.subr.mxu0 0.0
    %v6473 = vand.u32 %v6126, 4294901760
    %v6474 = vsub.f32 %v6126, %v6473
    %v6475 = vand.u32 %v6474, 4294901760
    %6476 = vmatpush1.msra.mxu0 %v6475
    %6477 = vmatprep.subr.mxu0 0.0
    %6478 = vmatpush1.msra.mxu0 0.0
    %6479 = vmatprep.subr.mxu0 0.0
    %6480 = vmatpush1.msra.mxu0 0.0
    %6481 = vmatprep.subr.mxu0 0.0
    %6482 = vmatpush1.msra.mxu0 0.0
    %6483 = vmatprep.subr.mxu0 0.0
    %6484 = vmatpush1.msra.mxu0 0.0
    %6485 = vmatprep.subr.mxu0 0.0
    %6486 = vmatpush1.msra.mxu0 0.0
    %6487 = vmatprep.subr.mxu0 0.0
    %6488 = vmatpush1.msra.mxu0 0.0
    %6489 = vmatprep.subr.mxu0 0.0
    %6490 = vmatpush1.msra.mxu0 0.0
    %6491 = vmatprep.subr.mxu0 0.0
    %6492 = vmatpush1.msra.mxu0 0.0
    %6493 = vmatprep.subr.mxu0 0.0
    %6494 = vmatpush1.msra.mxu0 0.0
    %6495 = vmatprep.subr.mxu0 0.0
    %6496 = vmatpush1.msra.mxu0 0.0
    %6497 = vmatprep.subr.mxu0 0.0
    %6498 = vmatpush1.msra.mxu0 0.0
    %6499 = vmatprep.subr.mxu0 0.0
    %6500 = vmatpush1.msra.mxu0 0.0
    %6501 = vmatprep.subr.mxu0 0.0
    %6502 = vmatpush1.msra.mxu0 0.0
    %6503 = vmatprep.subr.mxu0 0.0
    %6504 = vmatpush1.msra.mxu0 0.0
    %6505 = vmatprep.subr.mxu0 0.0
    %6506 = vmatpush1.msra.mxu0 0.0
    %6507 = vmatprep.subr.mxu0 0.0
    %6508 = vmatpush1.msra.mxu0 0.0
    %6509 = vmatprep.subr.mxu0 0.0
    %6510 = vmatpush1.msra.mxu0 0.0
    %6511 = vmatprep.subr.mxu0 0.0
    %6512 = vmatpush1.msra.mxu0 0.0
    %6513 = vmatprep.subr.mxu0 0.0
    %6514 = vmatpush1.msra.mxu0 0.0
    %6515 = vmatprep.subr.mxu0 0.0
    %6516 = vmatpush1.msra.mxu0 0.0
    %6517 = vmatprep.subr.mxu0 0.0
    %6518 = vmatpush1.msra.mxu0 0.0
    %6519 = vmatprep.subr.mxu0 0.0
    %6520 = vmatpush1.msra.mxu0 0.0
    %6521 = vmatprep.subr.mxu0 0.0
    %6522 = vmatpush1.msra.mxu0 0.0
    %6523 = vmatprep.subr.mxu0 0.0
    %6524 = vmatpush1.msra.mxu0 0.0
    %6525 = vmatprep.subr.mxu0 0.0
    %6526 = vmatpush1.msra.mxu0 0.0
    %6527 = vmatprep.subr.mxu0 0.0
    %6528 = vmatpush1.msra.mxu0 0.0
    %6529 = vmatprep.subr.mxu0 0.0
    %6530 = vmatpush1.msra.mxu0 0.0
    %6531 = vmatprep.subr.mxu0 0.0
    %6532 = vmatpush1.msra.mxu0 0.0
    %6533 = vmatprep.mubr.f32.mxu0 0.0
    %v6534 = vand.u32 %v6128, 4294901760
    %6535 = vmatmul.mubr.f32.gmra.mrb[0].mxu0 %v6534
    %v6536 = vpop.f32.mrb[0].mxu0
    %v6537 = vadd.f32 %v6454, %v6536
    %v6538 = vpop.f32.mrb[0].mxu0
    %6539 = vdwg.mxu0
    %6540 = vmatprep.subr.mxu0 0.0
    %v6541 = vand.u32 %v6123, 4294901760
    %6542 = vmatpush1.msra.mxu0 %v6541
    %6543 = vmatprep.subr.mxu0 0.0
    %v6544 = vand.u32 %v6124, 4294901760
    %6545 = vmatpush1.msra.mxu0 %v6544
    %6546 = vmatprep.subr.mxu0 0.0
    %v6547 = vand.u32 %v6125, 4294901760
    %6548 = vmatpush1.msra.mxu0 %v6547
    %6549 = vmatprep.subr.mxu0 0.0
    %v6550 = vand.u32 %v6126, 4294901760
    %6551 = vmatpush1.msra.mxu0 %v6550
    %6552 = vmatprep.subr.mxu0 0.0
    %6553 = vmatpush1.msra.mxu0 0.0
    %6554 = vmatprep.subr.mxu0 0.0
    %6555 = vmatpush1.msra.mxu0 0.0
    %6556 = vmatprep.subr.mxu0 0.0
    %6557 = vmatpush1.msra.mxu0 0.0
    %6558 = vmatprep.subr.mxu0 0.0
    %6559 = vmatpush1.msra.mxu0 0.0
    %6560 = vmatprep.subr.mxu0 0.0
    %6561 = vmatpush1.msra.mxu0 0.0
    %6562 = vmatprep.subr.mxu0 0.0
    %6563 = vmatpush1.msra.mxu0 0.0
    %6564 = vmatprep.subr.mxu0 0.0
    %6565 = vmatpush1.msra.mxu0 0.0
    %6566 = vmatprep.subr.mxu0 0.0
    %6567 = vmatpush1.msra.mxu0 0.0
    %6568 = vmatprep.subr.mxu0 0.0
    %6569 = vmatpush1.msra.mxu0 0.0
    %6570 = vmatprep.subr.mxu0 0.0
    %6571 = vmatpush1.msra.mxu0 0.0
    %6572 = vmatprep.subr.mxu0 0.0
    %6573 = vmatpush1.msra.mxu0 0.0
    %6574 = vmatprep.subr.mxu0 0.0
    %6575 = vmatpush1.msra.mxu0 0.0
    %6576 = vmatprep.subr.mxu0 0.0
    %6577 = vmatpush1.msra.mxu0 0.0
    %6578 = vmatprep.subr.mxu0 0.0
    %6579 = vmatpush1.msra.mxu0 0.0
    %6580 = vmatprep.subr.mxu0 0.0
    %6581 = vmatpush1.msra.mxu0 0.0
    %6582 = vmatprep.subr.mxu0 0.0
    %6583 = vmatpush1.msra.mxu0 0.0
    %6584 = vmatprep.subr.mxu0 0.0
    %6585 = vmatpush1.msra.mxu0 0.0
    %6586 = vmatprep.subr.mxu0 0.0
    %6587 = vmatpush1.msra.mxu0 0.0
    %6588 = vmatprep.subr.mxu0 0.0
    %6589 = vmatpush1.msra.mxu0 0.0
    %6590 = vmatprep.subr.mxu0 0.0
    %6591 = vmatpush1.msra.mxu0 0.0
    %6592 = vmatprep.subr.mxu0 0.0
    %6593 = vmatpush1.msra.mxu0 0.0
    %6594 = vmatprep.subr.mxu0 0.0
    %6595 = vmatpush1.msra.mxu0 0.0
    %6596 = vmatprep.subr.mxu0 0.0
    %6597 = vmatpush1.msra.mxu0 0.0
    %6598 = vmatprep.subr.mxu0 0.0
    %6599 = vmatpush1.msra.mxu0 0.0
    %6600 = vmatprep.subr.mxu0 0.0
    %6601 = vmatpush1.msra.mxu0 0.0
    %6602 = vmatprep.subr.mxu0 0.0
    %6603 = vmatpush1.msra.mxu0 0.0
    %6604 = vmatprep.subr.mxu0 0.0
    %6605 = vmatpush1.msra.mxu0 0.0
    %6606 = vmatprep.subr.mxu0 0.0
    %6607 = vmatpush1.msra.mxu0 0.0
    %6608 = vmatprep.mubr.f32.mxu0 0.0
    %v6609 = vand.u32 %v6128, 4294901760
    %6610 = vmatmul.mubr.f32.gmra.mrb[0].mxu0 %v6609
    %v6611 = vpop.f32.mrb[0].mxu0
    %v6612 = vadd.f32 %v6537, %v6611
    %v6613 = vpop.f32.mrb[0].mxu0
    %6614 = vdwg.mxu0
    %v6615 = vadd.f32 %v6121, %v6612
    %v6616 = vxor.u32 %v6615, 2147483648
    %v6617 = vmul.f32 %v6616, 1.442695
    %v6618 = vpow.pop %v6617
    %v6619 = vadd.f32 %v6618, 1.0
    %v6620 = vrcp.pop %v6619
    %v6621 = vmul.f32 1.0, %v6620
    %v6622 = vtanh.pop %v6615
    %v6623 = vld [vmem:[#allocation6] sm:$0x3]
    %6625 = vrot.lane.b32.xlu0 %v6623, 32
    %v6626 = vpop.permute.xlu0 %6625
    %v6628 = vmul.f32 %v6621, %v6626
    %6630 = vrot.lane.b32.xlu0 %v6622, 64
    %v6631 = vpop.permute.xlu0 %6630
    %v6633 = vmul.f32 %v6621, %v6631
    %6635 = vrot.lane.b32.xlu0 %v6633, 32
    %v6636 = vpop.permute.xlu0 %6635
    %v6638 = vadd.f32 %v6628, %v6636
    %v6639 = vtanh.pop %v6638
    %6641 = vrot.lane.b32.xlu0 %v6639, 64
    %v6642 = vpop.permute.xlu0 %6641
    %v6644 = vmul.f32 %v6621, %v6642
    %6646 = vrot.lane.b32.xlu0 %v6638, 96
    %v6647 = vpop.permute.xlu0 %6646
    %6649 = vst.msk [vmem:[#allocation6] sm:$0x3] %vm189, %v6647
    %6651 = vrot.lane.b32.xlu0 %v6644, 32
    %v6652 = vpop.permute.xlu0 %6651
    %6654 = vst.msk [vmem:[#allocation5] sm:$0x3] %vm189, %v6652
    %s6655 = sld [smem:[#allocation12]]
    %p6656 = scmp.eq.s32.totalorder %s6655, 2
    // Predicated region
    $region74: #{tpu_custom_call.1} parent=1 // pred_check
      %p6657 = pneg %p6656
    $region75: #{tpu_custom_call.1} parent=1 // pred_check_branch
      %6659 = sbr.rel (%p6657) target = $region77
    $region76: #{tpu_custom_call.1} parent=1 // pred_region
      %6660 = vst.msk [vmem:[#allocation20] sm:$0x1] %vm127, %v6652
    $region77: #{tpu_custom_call.1} parent=1 // pred_fallthru
      _
    %s6661 = sld [smem:[#allocation12 + $0x1]]
    %p6662 = scmp.eq.s32.totalorder %s6661, 2
    // Predicated region
    $region78: #{tpu_custom_call.1} parent=1 // pred_check
      %p6663 = pneg %p6662
    $region79: #{tpu_custom_call.1} parent=1 // pred_check_branch
      %6665 = sbr.rel (%p6663) target = $region81
    $region80: #{tpu_custom_call.1} parent=1 // pred_region
      %vm6666 = vcmask 254977
      %6667 = vst.msk [vmem:[#allocation20] sm:$0x2] %vm6666, %v6652
    $region81: #{tpu_custom_call.1} parent=1 // pred_fallthru
      _
    %v6668 = vld [vmem:[#allocation3 + $0x4] sm:$0x3]
    %v6669 = vld [vmem:[#allocation5] sm:$0x3]
    %v6670 = vld [vmem:[#allocation19] sm:$0xff]
    %v6671 = vld [vmem:[#allocation19 + $0x8] sm:$0xff]
    %v6672 = vld [vmem:[#allocation19 + $0x10] sm:$0xff]
    %v6673 = vld [vmem:[#allocation19 + $0x18] sm:$0xff]
    %v6675 = vsel %vm204, %v6669, 0
    %6677 = vmatprep.subr.mxu0 0.0
    %v6678 = vand.u32 %v6670, 4294901760
    %6679 = vmatpush1.msra.mxu0 %v6678
    %6680 = vmatprep.subr.mxu0 0.0
    %v6681 = vand.u32 %v6671, 4294901760
    %6682 = vmatpush1.msra.mxu0 %v6681
    %6683 = vmatprep.subr.mxu0 0.0
    %v6684 = vand.u32 %v6672, 4294901760
    %6685 = vmatpush1.msra.mxu0 %v6684
    %6686 = vmatprep.subr.mxu0 0.0
    %v6687 = vand.u32 %v6673, 4294901760
    %6688 = vmatpush1.msra.mxu0 %v6687
    %6689 = vmatprep.subr.mxu0 0.0
    %6690 = vmatpush1.msra.mxu0 0.0
    %6691 = vmatprep.subr.mxu0 0.0
    %6692 = vmatpush1.msra.mxu0 0.0
    %6693 = vmatprep.subr.mxu0 0.0
    %6694 = vmatpush1.msra.mxu0 0.0
    %6695 = vmatprep.subr.mxu0 0.0
    %6696 = vmatpush1.msra.mxu0 0.0
    %6697 = vmatprep.subr.mxu0 0.0
    %6698 = vmatpush1.msra.mxu0 0.0
    %6699 = vmatprep.subr.mxu0 0.0
    %6700 = vmatpush1.msra.mxu0 0.0
    %6701 = vmatprep.subr.mxu0 0.0
    %6702 = vmatpush1.msra.mxu0 0.0
    %6703 = vmatprep.subr.mxu0 0.0
    %6704 = vmatpush1.msra.mxu0 0.0
    %6705 = vmatprep.subr.mxu0 0.0
    %6706 = vmatpush1.msra.mxu0 0.0
    %6707 = vmatprep.subr.mxu0 0.0
    %6708 = vmatpush1.msra.mxu0 0.0
    %6709 = vmatprep.subr.mxu0 0.0
    %6710 = vmatpush1.msra.mxu0 0.0
    %6711 = vmatprep.subr.mxu0 0.0
    %6712 = vmatpush1.msra.mxu0 0.0
    %6713 = vmatprep.subr.mxu0 0.0
    %6714 = vmatpush1.msra.mxu0 0.0
    %6715 = vmatprep.subr.mxu0 0.0
    %6716 = vmatpush1.msra.mxu0 0.0
    %6717 = vmatprep.subr.mxu0 0.0
    %6718 = vmatpush1.msra.mxu0 0.0
    %6719 = vmatprep.subr.mxu0 0.0
    %6720 = vmatpush1.msra.mxu0 0.0
    %6721 = vmatprep.subr.mxu0 0.0
    %6722 = vmatpush1.msra.mxu0 0.0
    %6723 = vmatprep.subr.mxu0 0.0
    %6724 = vmatpush1.msra.mxu0 0.0
    %6725 = vmatprep.subr.mxu0 0.0
    %6726 = vmatpush1.msra.mxu0 0.0
    %6727 = vmatprep.subr.mxu0 0.0
    %6728 = vmatpush1.msra.mxu0 0.0
    %6729 = vmatprep.subr.mxu0 0.0
    %6730 = vmatpush1.msra.mxu0 0.0
    %6731 = vmatprep.subr.mxu0 0.0
    %6732 = vmatpush1.msra.mxu0 0.0
    %6733 = vmatprep.subr.mxu0 0.0
    %6734 = vmatpush1.msra.mxu0 0.0
    %6735 = vmatprep.subr.mxu0 0.0
    %6736 = vmatpush1.msra.mxu0 0.0
    %6737 = vmatprep.subr.mxu0 0.0
    %6738 = vmatpush1.msra.mxu0 0.0
    %6739 = vmatprep.subr.mxu0 0.0
    %6740 = vmatpush1.msra.mxu0 0.0
    %6741 = vmatprep.subr.mxu0 0.0
    %6742 = vmatpush1.msra.mxu0 0.0
    %6743 = vmatprep.subr.mxu0 0.0
    %6744 = vmatpush1.msra.mxu0 0.0
    %6745 = vmatprep.mubr.f32.mxu0 0.0
    %v6746 = vand.u32 %v6675, 4294901760
    %v6747 = vsub.f32 %v6675, %v6746
    %v6748 = vand.u32 %v6747, 4294901760
    %v6749 = vsub.f32 %v6747, %v6748
    %v6750 = vand.u32 %v6749, 4294901760
    %6751 = vmatmul.mubr.f32.gmra.mrb[0].mxu0 %v6750
    %v6752 = vpop.f32.mrb[0].mxu0
    %v6753 = vadd.f32 0.0, %v6752
    %v6754 = vpop.f32.mrb[0].mxu0
    %6755 = vdwg.mxu0
    %6756 = vmatprep.subr.mxu0 0.0
    %v6757 = vand.u32 %v6670, 4294901760
    %v6758 = vsub.f32 %v6670, %v6757
    %v6759 = vand.u32 %v6758, 4294901760
    %v6760 = vsub.f32 %v6758, %v6759
    %v6761 = vand.u32 %v6760, 4294901760
    %6762 = vmatpush1.msra.mxu0 %v6761
    %6763 = vmatprep.subr.mxu0 0.0
    %v6764 = vand.u32 %v6671, 4294901760
    %v6765 = vsub.f32 %v6671, %v6764
    %v6766 = vand.u32 %v6765, 4294901760
    %v6767 = vsub.f32 %v6765, %v6766
    %v6768 = vand.u32 %v6767, 4294901760
    %6769 = vmatpush1.msra.mxu0 %v6768
    %6770 = vmatprep.subr.mxu0 0.0
    %v6771 = vand.u32 %v6672, 4294901760
    %v6772 = vsub.f32 %v6672, %v6771
    %v6773 = vand.u32 %v6772, 4294901760
    %v6774 = vsub.f32 %v6772, %v6773
    %v6775 = vand.u32 %v6774, 4294901760
    %6776 = vmatpush1.msra.mxu0 %v6775
    %6777 = vmatprep.subr.mxu0 0.0
    %v6778 = vand.u32 %v6673, 4294901760
    %v6779 = vsub.f32 %v6673, %v6778
    %v6780 = vand.u32 %v6779, 4294901760
    %v6781 = vsub.f32 %v6779, %v6780
    %v6782 = vand.u32 %v6781, 4294901760
    %6783 = vmatpush1.msra.mxu0 %v6782
    %6784 = vmatprep.subr.mxu0 0.0
    %6785 = vmatpush1.msra.mxu0 0.0
    %6786 = vmatprep.subr.mxu0 0.0
    %6787 = vmatpush1.msra.mxu0 0.0
    %6788 = vmatprep.subr.mxu0 0.0
    %6789 = vmatpush1.msra.mxu0 0.0
    %6790 = vmatprep.subr.mxu0 0.0
    %6791 = vmatpush1.msra.mxu0 0.0
    %6792 = vmatprep.subr.mxu0 0.0
    %6793 = vmatpush1.msra.mxu0 0.0
    %6794 = vmatprep.subr.mxu0 0.0
    %6795 = vmatpush1.msra.mxu0 0.0
    %6796 = vmatprep.subr.mxu0 0.0
    %6797 = vmatpush1.msra.mxu0 0.0
    %6798 = vmatprep.subr.mxu0 0.0
    %6799 = vmatpush1.msra.mxu0 0.0
    %6800 = vmatprep.subr.mxu0 0.0
    %6801 = vmatpush1.msra.mxu0 0.0
    %6802 = vmatprep.subr.mxu0 0.0
    %6803 = vmatpush1.msra.mxu0 0.0
    %6804 = vmatprep.subr.mxu0 0.0
    %6805 = vmatpush1.msra.mxu0 0.0
    %6806 = vmatprep.subr.mxu0 0.0
    %6807 = vmatpush1.msra.mxu0 0.0
    %6808 = vmatprep.subr.mxu0 0.0
    %6809 = vmatpush1.msra.mxu0 0.0
    %6810 = vmatprep.subr.mxu0 0.0
    %6811 = vmatpush1.msra.mxu0 0.0
    %6812 = vmatprep.subr.mxu0 0.0
    %6813 = vmatpush1.msra.mxu0 0.0
    %6814 = vmatprep.subr.mxu0 0.0
    %6815 = vmatpush1.msra.mxu0 0.0
    %6816 = vmatprep.subr.mxu0 0.0
    %6817 = vmatpush1.msra.mxu0 0.0
    %6818 = vmatprep.subr.mxu0 0.0
    %6819 = vmatpush1.msra.mxu0 0.0
    %6820 = vmatprep.subr.mxu0 0.0
    %6821 = vmatpush1.msra.mxu0 0.0
    %6822 = vmatprep.subr.mxu0 0.0
    %6823 = vmatpush1.msra.mxu0 0.0
    %6824 = vmatprep.subr.mxu0 0.0
    %6825 = vmatpush1.msra.mxu0 0.0
    %6826 = vmatprep.subr.mxu0 0.0
    %6827 = vmatpush1.msra.mxu0 0.0
    %6828 = vmatprep.subr.mxu0 0.0
    %6829 = vmatpush1.msra.mxu0 0.0
    %6830 = vmatprep.subr.mxu0 0.0
    %6831 = vmatpush1.msra.mxu0 0.0
    %6832 = vmatprep.subr.mxu0 0.0
    %6833 = vmatpush1.msra.mxu0 0.0
    %6834 = vmatprep.subr.mxu0 0.0
    %6835 = vmatpush1.msra.mxu0 0.0
    %6836 = vmatprep.subr.mxu0 0.0
    %6837 = vmatpush1.msra.mxu0 0.0
    %6838 = vmatprep.subr.mxu0 0.0
    %6839 = vmatpush1.msra.mxu0 0.0
    %6840 = vmatprep.mubr.f32.mxu0 0.0
    %v6841 = vand.u32 %v6675, 4294901760
    %6842 = vmatmul.mubr.f32.gmra.mrb[0].mxu0 %v6841
    %v6843 = vpop.f32.mrb[0].mxu0
    %v6844 = vadd.f32 %v6753, %v6843
    %v6845 = vpop.f32.mrb[0].mxu0
    %6846 = vdwg.mxu0
    %6847 = vmatprep.subr.mxu0 0.0
    %v6848 = vand.u32 %v6670, 4294901760
    %v6849 = vsub.f32 %v6670, %v6848
    %6850 = vmatpush1.msra.mxu0 %v6849
    %6851 = vmatprep.subr.mxu0 0.0
    %v6852 = vand.u32 %v6671, 4294901760
    %v6853 = vsub.f32 %v6671, %v6852
    %6854 = vmatpush1.msra.mxu0 %v6853
    %6855 = vmatprep.subr.mxu0 0.0
    %v6856 = vand.u32 %v6672, 4294901760
    %v6857 = vsub.f32 %v6672, %v6856
    %6858 = vmatpush1.msra.mxu0 %v6857
    %6859 = vmatprep.subr.mxu0 0.0
    %v6860 = vand.u32 %v6673, 4294901760
    %v6861 = vsub.f32 %v6673, %v6860
    %6862 = vmatpush1.msra.mxu0 %v6861
    %6863 = vmatprep.subr.mxu0 0.0
    %6864 = vmatpush1.msra.mxu0 0.0
    %6865 = vmatprep.subr.mxu0 0.0
    %6866 = vmatpush1.msra.mxu0 0.0
    %6867 = vmatprep.subr.mxu0 0.0
    %6868 = vmatpush1.msra.mxu0 0.0
    %6869 = vmatprep.subr.mxu0 0.0
    %6870 = vmatpush1.msra.mxu0 0.0
    %6871 = vmatprep.subr.mxu0 0.0
    %6872 = vmatpush1.msra.mxu0 0.0
    %6873 = vmatprep.subr.mxu0 0.0
    %6874 = vmatpush1.msra.mxu0 0.0
    %6875 = vmatprep.subr.mxu0 0.0
    %6876 = vmatpush1.msra.mxu0 0.0
    %6877 = vmatprep.subr.mxu0 0.0
    %6878 = vmatpush1.msra.mxu0 0.0
    %6879 = vmatprep.subr.mxu0 0.0
    %6880 = vmatpush1.msra.mxu0 0.0
    %6881 = vmatprep.subr.mxu0 0.0
    %6882 = vmatpush1.msra.mxu0 0.0
    %6883 = vmatprep.subr.mxu0 0.0
    %6884 = vmatpush1.msra.mxu0 0.0
    %6885 = vmatprep.subr.mxu0 0.0
    %6886 = vmatpush1.msra.mxu0 0.0
    %6887 = vmatprep.subr.mxu0 0.0
    %6888 = vmatpush1.msra.mxu0 0.0
    %6889 = vmatprep.subr.mxu0 0.0
    %6890 = vmatpush1.msra.mxu0 0.0
    %6891 = vmatprep.subr.mxu0 0.0
    %6892 = vmatpush1.msra.mxu0 0.0
    %6893 = vmatprep.subr.mxu0 0.0
    %6894 = vmatpush1.msra.mxu0 0.0
    %6895 = vmatprep.subr.mxu0 0.0
    %6896 = vmatpush1.msra.mxu0 0.0
    %6897 = vmatprep.subr.mxu0 0.0
    %6898 = vmatpush1.msra.mxu0 0.0
    %6899 = vmatprep.subr.mxu0 0.0
    %6900 = vmatpush1.msra.mxu0 0.0
    %6901 = vmatprep.subr.mxu0 0.0
    %6902 = vmatpush1.msra.mxu0 0.0
    %6903 = vmatprep.subr.mxu0 0.0
    %6904 = vmatpush1.msra.mxu0 0.0
    %6905 = vmatprep.subr.mxu0 0.0
    %6906 = vmatpush1.msra.mxu0 0.0
    %6907 = vmatprep.subr.mxu0 0.0
    %6908 = vmatpush1.msra.mxu0 0.0
    %6909 = vmatprep.subr.mxu0 0.0
    %6910 = vmatpush1.msra.mxu0 0.0
    %6911 = vmatprep.subr.mxu0 0.0
    %6912 = vmatpush1.msra.mxu0 0.0
    %6913 = vmatprep.subr.mxu0 0.0
    %6914 = vmatpush1.msra.mxu0 0.0
    %6915 = vmatprep.subr.mxu0 0.0
    %6916 = vmatpush1.msra.mxu0 0.0
    %6917 = vmatprep.subr.mxu0 0.0
    %6918 = vmatpush1.msra.mxu0 0.0
    %6919 = vmatprep.mubr.f32.mxu0 0.0
    %v6920 = vand.u32 %v6675, 4294901760
    %v6921 = vsub.f32 %v6675, %v6920
    %6922 = vmatmul.mubr.f32.gmra.mrb[0].mxu0 %v6921
    %v6923 = vpop.f32.mrb[0].mxu0
    %v6924 = vadd.f32 %v6844, %v6923
    %v6925 = vpop.f32.mrb[0].mxu0
    %6926 = vdwg.mxu0
    %6927 = vmatprep.subr.mxu0 0.0
    %v6928 = vand.u32 %v6670, 4294901760
    %6929 = vmatpush1.msra.mxu0 %v6928
    %6930 = vmatprep.subr.mxu0 0.0
    %v6931 = vand.u32 %v6671, 4294901760
    %6932 = vmatpush1.msra.mxu0 %v6931
    %6933 = vmatprep.subr.mxu0 0.0
    %v6934 = vand.u32 %v6672, 4294901760
    %6935 = vmatpush1.msra.mxu0 %v6934
    %6936 = vmatprep.subr.mxu0 0.0
    %v6937 = vand.u32 %v6673, 4294901760
    %6938 = vmatpush1.msra.mxu0 %v6937
    %6939 = vmatprep.subr.mxu0 0.0
    %6940 = vmatpush1.msra.mxu0 0.0
    %6941 = vmatprep.subr.mxu0 0.0
    %6942 = vmatpush1.msra.mxu0 0.0
    %6943 = vmatprep.subr.mxu0 0.0
    %6944 = vmatpush1.msra.mxu0 0.0
    %6945 = vmatprep.subr.mxu0 0.0
    %6946 = vmatpush1.msra.mxu0 0.0
    %6947 = vmatprep.subr.mxu0 0.0
    %6948 = vmatpush1.msra.mxu0 0.0
    %6949 = vmatprep.subr.mxu0 0.0
    %6950 = vmatpush1.msra.mxu0 0.0
    %6951 = vmatprep.subr.mxu0 0.0
    %6952 = vmatpush1.msra.mxu0 0.0
    %6953 = vmatprep.subr.mxu0 0.0
    %6954 = vmatpush1.msra.mxu0 0.0
    %6955 = vmatprep.subr.mxu0 0.0
    %6956 = vmatpush1.msra.mxu0 0.0
    %6957 = vmatprep.subr.mxu0 0.0
    %6958 = vmatpush1.msra.mxu0 0.0
    %6959 = vmatprep.subr.mxu0 0.0
    %6960 = vmatpush1.msra.mxu0 0.0
    %6961 = vmatprep.subr.mxu0 0.0
    %6962 = vmatpush1.msra.mxu0 0.0
    %6963 = vmatprep.subr.mxu0 0.0
    %6964 = vmatpush1.msra.mxu0 0.0
    %6965 = vmatprep.subr.mxu0 0.0
    %6966 = vmatpush1.msra.mxu0 0.0
    %6967 = vmatprep.subr.mxu0 0.0
    %6968 = vmatpush1.msra.mxu0 0.0
    %6969 = vmatprep.subr.mxu0 0.0
    %6970 = vmatpush1.msra.mxu0 0.0
    %6971 = vmatprep.subr.mxu0 0.0
    %6972 = vmatpush1.msra.mxu0 0.0
    %6973 = vmatprep.subr.mxu0 0.0
    %6974 = vmatpush1.msra.mxu0 0.0
    %6975 = vmatprep.subr.mxu0 0.0
    %6976 = vmatpush1.msra.mxu0 0.0
    %6977 = vmatprep.subr.mxu0 0.0
    %6978 = vmatpush1.msra.mxu0 0.0
    %6979 = vmatprep.subr.mxu0 0.0
    %6980 = vmatpush1.msra.mxu0 0.0
    %6981 = vmatprep.subr.mxu0 0.0
    %6982 = vmatpush1.msra.mxu0 0.0
    %6983 = vmatprep.subr.mxu0 0.0
    %6984 = vmatpush1.msra.mxu0 0.0
    %6985 = vmatprep.subr.mxu0 0.0
    %6986 = vmatpush1.msra.mxu0 0.0
    %6987 = vmatprep.subr.mxu0 0.0
    %6988 = vmatpush1.msra.mxu0 0.0
    %6989 = vmatprep.subr.mxu0 0.0
    %6990 = vmatpush1.msra.mxu0 0.0
    %6991 = vmatprep.subr.mxu0 0.0
    %6992 = vmatpush1.msra.mxu0 0.0
    %6993 = vmatprep.subr.mxu0 0.0
    %6994 = vmatpush1.msra.mxu0 0.0
    %6995 = vmatprep.mubr.f32.mxu0 0.0
    %v6996 = vand.u32 %v6675, 4294901760
    %v6997 = vsub.f32 %v6675, %v6996
    %v6998 = vand.u32 %v6997, 4294901760
    %6999 = vmatmul.mubr.f32.gmra.mrb[0].mxu0 %v6998
    %v7000 = vpop.f32.mrb[0].mxu0
    %v7001 = vadd.f32 %v6924, %v7000
    %v7002 = vpop.f32.mrb[0].mxu0
    %7003 = vdwg.mxu0
    %7004 = vmatprep.subr.mxu0 0.0
    %v7005 = vand.u32 %v6670, 4294901760
    %v7006 = vsub.f32 %v6670, %v7005
    %v7007 = vand.u32 %v7006, 4294901760
    %7008 = vmatpush1.msra.mxu0 %v7007
    %7009 = vmatprep.subr.mxu0 0.0
    %v7010 = vand.u32 %v6671, 4294901760
    %v7011 = vsub.f32 %v6671, %v7010
    %v7012 = vand.u32 %v7011, 4294901760
    %7013 = vmatpush1.msra.mxu0 %v7012
    %7014 = vmatprep.subr.mxu0 0.0
    %v7015 = vand.u32 %v6672, 4294901760
    %v7016 = vsub.f32 %v6672, %v7015
    %v7017 = vand.u32 %v7016, 4294901760
    %7018 = vmatpush1.msra.mxu0 %v7017
    %7019 = vmatprep.subr.mxu0 0.0
    %v7020 = vand.u32 %v6673, 4294901760
    %v7021 = vsub.f32 %v6673, %v7020
    %v7022 = vand.u32 %v7021, 4294901760
    %7023 = vmatpush1.msra.mxu0 %v7022
    %7024 = vmatprep.subr.mxu0 0.0
    %7025 = vmatpush1.msra.mxu0 0.0
    %7026 = vmatprep.subr.mxu0 0.0
    %7027 = vmatpush1.msra.mxu0 0.0
    %7028 = vmatprep.subr.mxu0 0.0
    %7029 = vmatpush1.msra.mxu0 0.0
    %7030 = vmatprep.subr.mxu0 0.0
    %7031 = vmatpush1.msra.mxu0 0.0
    %7032 = vmatprep.subr.mxu0 0.0
    %7033 = vmatpush1.msra.mxu0 0.0
    %7034 = vmatprep.subr.mxu0 0.0
    %7035 = vmatpush1.msra.mxu0 0.0
    %7036 = vmatprep.subr.mxu0 0.0
    %7037 = vmatpush1.msra.mxu0 0.0
    %7038 = vmatprep.subr.mxu0 0.0
    %7039 = vmatpush1.msra.mxu0 0.0
    %7040 = vmatprep.subr.mxu0 0.0
    %7041 = vmatpush1.msra.mxu0 0.0
    %7042 = vmatprep.subr.mxu0 0.0
    %7043 = vmatpush1.msra.mxu0 0.0
    %7044 = vmatprep.subr.mxu0 0.0
    %7045 = vmatpush1.msra.mxu0 0.0
    %7046 = vmatprep.subr.mxu0 0.0
    %7047 = vmatpush1.msra.mxu0 0.0
    %7048 = vmatprep.subr.mxu0 0.0
    %7049 = vmatpush1.msra.mxu0 0.0
    %7050 = vmatprep.subr.mxu0 0.0
    %7051 = vmatpush1.msra.mxu0 0.0
    %7052 = vmatprep.subr.mxu0 0.0
    %7053 = vmatpush1.msra.mxu0 0.0
    %7054 = vmatprep.subr.mxu0 0.0
    %7055 = vmatpush1.msra.mxu0 0.0
    %7056 = vmatprep.subr.mxu0 0.0
    %7057 = vmatpush1.msra.mxu0 0.0
    %7058 = vmatprep.subr.mxu0 0.0
    %7059 = vmatpush1.msra.mxu0 0.0
    %7060 = vmatprep.subr.mxu0 0.0
    %7061 = vmatpush1.msra.mxu0 0.0
    %7062 = vmatprep.subr.mxu0 0.0
    %7063 = vmatpush1.msra.mxu0 0.0
    %7064 = vmatprep.subr.mxu0 0.0
    %7065 = vmatpush1.msra.mxu0 0.0
    %7066 = vmatprep.subr.mxu0 0.0
    %7067 = vmatpush1.msra.mxu0 0.0
    %7068 = vmatprep.subr.mxu0 0.0
    %7069 = vmatpush1.msra.mxu0 0.0
    %7070 = vmatprep.subr.mxu0 0.0
    %7071 = vmatpush1.msra.mxu0 0.0
    %7072 = vmatprep.subr.mxu0 0.0
    %7073 = vmatpush1.msra.mxu0 0.0
    %7074 = vmatprep.subr.mxu0 0.0
    %7075 = vmatpush1.msra.mxu0 0.0
    %7076 = vmatprep.subr.mxu0 0.0
    %7077 = vmatpush1.msra.mxu0 0.0
    %7078 = vmatprep.subr.mxu0 0.0
    %7079 = vmatpush1.msra.mxu0 0.0
    %7080 = vmatprep.mubr.f32.mxu0 0.0
    %v7081 = vand.u32 %v6675, 4294901760
    %7082 = vmatmul.mubr.f32.gmra.mrb[0].mxu0 %v7081
    %v7083 = vpop.f32.mrb[0].mxu0
    %v7084 = vadd.f32 %v7001, %v7083
    %v7085 = vpop.f32.mrb[0].mxu0
    %7086 = vdwg.mxu0
    %7087 = vmatprep.subr.mxu0 0.0
    %v7088 = vand.u32 %v6670, 4294901760
    %7089 = vmatpush1.msra.mxu0 %v7088
    %7090 = vmatprep.subr.mxu0 0.0
    %v7091 = vand.u32 %v6671, 4294901760
    %7092 = vmatpush1.msra.mxu0 %v7091
    %7093 = vmatprep.subr.mxu0 0.0
    %v7094 = vand.u32 %v6672, 4294901760
    %7095 = vmatpush1.msra.mxu0 %v7094
    %7096 = vmatprep.subr.mxu0 0.0
    %v7097 = vand.u32 %v6673, 4294901760
    %7098 = vmatpush1.msra.mxu0 %v7097
    %7099 = vmatprep.subr.mxu0 0.0
    %7100 = vmatpush1.msra.mxu0 0.0
    %7101 = vmatprep.subr.mxu0 0.0
    %7102 = vmatpush1.msra.mxu0 0.0
    %7103 = vmatprep.subr.mxu0 0.0
    %7104 = vmatpush1.msra.mxu0 0.0
    %7105 = vmatprep.subr.mxu0 0.0
    %7106 = vmatpush1.msra.mxu0 0.0
    %7107 = vmatprep.subr.mxu0 0.0
    %7108 = vmatpush1.msra.mxu0 0.0
    %7109 = vmatprep.subr.mxu0 0.0
    %7110 = vmatpush1.msra.mxu0 0.0
    %7111 = vmatprep.subr.mxu0 0.0
    %7112 = vmatpush1.msra.mxu0 0.0
    %7113 = vmatprep.subr.mxu0 0.0
    %7114 = vmatpush1.msra.mxu0 0.0
    %7115 = vmatprep.subr.mxu0 0.0
    %7116 = vmatpush1.msra.mxu0 0.0
    %7117 = vmatprep.subr.mxu0 0.0
    %7118 = vmatpush1.msra.mxu0 0.0
    %7119 = vmatprep.subr.mxu0 0.0
    %7120 = vmatpush1.msra.mxu0 0.0
    %7121 = vmatprep.subr.mxu0 0.0
    %7122 = vmatpush1.msra.mxu0 0.0
    %7123 = vmatprep.subr.mxu0 0.0
    %7124 = vmatpush1.msra.mxu0 0.0
    %7125 = vmatprep.subr.mxu0 0.0
    %7126 = vmatpush1.msra.mxu0 0.0
    %7127 = vmatprep.subr.mxu0 0.0
    %7128 = vmatpush1.msra.mxu0 0.0
    %7129 = vmatprep.subr.mxu0 0.0
    %7130 = vmatpush1.msra.mxu0 0.0
    %7131 = vmatprep.subr.mxu0 0.0
    %7132 = vmatpush1.msra.mxu0 0.0
    %7133 = vmatprep.subr.mxu0 0.0
    %7134 = vmatpush1.msra.mxu0 0.0
    %7135 = vmatprep.subr.mxu0 0.0
    %7136 = vmatpush1.msra.mxu0 0.0
    %7137 = vmatprep.subr.mxu0 0.0
    %7138 = vmatpush1.msra.mxu0 0.0
    %7139 = vmatprep.subr.mxu0 0.0
    %7140 = vmatpush1.msra.mxu0 0.0
    %7141 = vmatprep.subr.mxu0 0.0
    %7142 = vmatpush1.msra.mxu0 0.0
    %7143 = vmatprep.subr.mxu0 0.0
    %7144 = vmatpush1.msra.mxu0 0.0
    %7145 = vmatprep.subr.mxu0 0.0
    %7146 = vmatpush1.msra.mxu0 0.0
    %7147 = vmatprep.subr.mxu0 0.0
    %7148 = vmatpush1.msra.mxu0 0.0
    %7149 = vmatprep.subr.mxu0 0.0
    %7150 = vmatpush1.msra.mxu0 0.0
    %7151 = vmatprep.subr.mxu0 0.0
    %7152 = vmatpush1.msra.mxu0 0.0
    %7153 = vmatprep.subr.mxu0 0.0
    %7154 = vmatpush1.msra.mxu0 0.0
    %7155 = vmatprep.mubr.f32.mxu0 0.0
    %v7156 = vand.u32 %v6675, 4294901760
    %7157 = vmatmul.mubr.f32.gmra.mrb[0].mxu0 %v7156
    %v7158 = vpop.f32.mrb[0].mxu0
    %v7159 = vadd.f32 %v7084, %v7158
    %v7160 = vpop.f32.mrb[0].mxu0
    %7161 = vdwg.mxu0
    %v7162 = vadd.f32 %v6668, %v7159
    %v7163 = vxor.u32 %v7162, 2147483648
    %v7164 = vmul.f32 %v7163, 1.442695
    %v7165 = vpow.pop %v7164
    %v7166 = vadd.f32 %v7165, 1.0
    %v7167 = vrcp.pop %v7166
    %v7168 = vmul.f32 1.0, %v7167
    %v7169 = vtanh.pop %v7162
    %v7170 = vld [vmem:[#allocation6] sm:$0x3]
    %7172 = vrot.lane.b32.xlu0 %v7170, 32
    %v7173 = vpop.permute.xlu0 %7172
    %v7175 = vmul.f32 %v7168, %v7173
    %7177 = vrot.lane.b32.xlu0 %v7169, 64
    %v7178 = vpop.permute.xlu0 %7177
    %v7180 = vmul.f32 %v7168, %v7178
    %7182 = vrot.lane.b32.xlu0 %v7180, 32
    %v7183 = vpop.permute.xlu0 %7182
    %v7185 = vadd.f32 %v7175, %v7183
    %v7186 = vtanh.pop %v7185
    %7188 = vrot.lane.b32.xlu0 %v7186, 64
    %v7189 = vpop.permute.xlu0 %7188
    %v7191 = vmul.f32 %v7168, %v7189
    %7193 = vrot.lane.b32.xlu0 %v7185, 96
    %v7194 = vpop.permute.xlu0 %7193
    %7196 = vst.msk [vmem:[#allocation6] sm:$0x3] %vm189, %v7194
    %7198 = vrot.lane.b32.xlu0 %v7191, 32
    %v7199 = vpop.permute.xlu0 %7198
    %7201 = vst.msk [vmem:[#allocation5] sm:$0x3] %vm189, %v7199
    %s7202 = sld [smem:[#allocation12]]
    %p7203 = scmp.eq.s32.totalorder %s7202, 3
    // Predicated region
    $region82: #{tpu_custom_call.1} parent=1 // pred_check
      %p7204 = pneg %p7203
    $region83: #{tpu_custom_call.1} parent=1 // pred_check_branch
      %7206 = sbr.rel (%p7204) target = $region85
    $region84: #{tpu_custom_call.1} parent=1 // pred_region
      %7207 = vst.msk [vmem:[#allocation20] sm:$0x1] %vm127, %v7199
    $region85: #{tpu_custom_call.1} parent=1 // pred_fallthru
      _
    %s7208 = sld [smem:[#allocation12 + $0x1]]
    %p7209 = scmp.eq.s32.totalorder %s7208, 3
    // Predicated region
    $region86: #{tpu_custom_call.1} parent=1 // pred_check
      %p7210 = pneg %p7209
    $region87: #{tpu_custom_call.1} parent=1 // pred_check_branch
      %7212 = sbr.rel (%p7210) target = $region89
    $region88: #{tpu_custom_call.1} parent=1 // pred_region
      %vm7213 = vcmask 254977
      %7214 = vst.msk [vmem:[#allocation20] sm:$0x2] %vm7213, %v7199
    $region89: #{tpu_custom_call.1} parent=1 // pred_fallthru
      _
    %v7215 = vld [vmem:[#allocation3 + $0x6] sm:$0x3]
    %v7216 = vld [vmem:[#allocation5] sm:$0x3]
    %v7217 = vld [vmem:[#allocation19] sm:$0xff]
    %v7218 = vld [vmem:[#allocation19 + $0x8] sm:$0xff]
    %v7219 = vld [vmem:[#allocation19 + $0x10] sm:$0xff]
    %v7220 = vld [vmem:[#allocation19 + $0x18] sm:$0xff]
    %v7222 = vsel %vm204, %v7216, 0
    %7224 = vmatprep.subr.mxu0 0.0
    %v7225 = vand.u32 %v7217, 4294901760
    %7226 = vmatpush1.msra.mxu0 %v7225
    %7227 = vmatprep.subr.mxu0 0.0
    %v7228 = vand.u32 %v7218, 4294901760
    %7229 = vmatpush1.msra.mxu0 %v7228
    %7230 = vmatprep.subr.mxu0 0.0
    %v7231 = vand.u32 %v7219, 4294901760
    %7232 = vmatpush1.msra.mxu0 %v7231
    %7233 = vmatprep.subr.mxu0 0.0
    %v7234 = vand.u32 %v7220, 4294901760
    %7235 = vmatpush1.msra.mxu0 %v7234
    %7236 = vmatprep.subr.mxu0 0.0
    %7237 = vmatpush1.msra.mxu0 0.0
    %7238 = vmatprep.subr.mxu0 0.0
    %7239 = vmatpush1.msra.mxu0 0.0
    %7240 = vmatprep.subr.mxu0 0.0
    %7241 = vmatpush1.msra.mxu0 0.0
    %7242 = vmatprep.subr.mxu0 0.0
    %7243 = vmatpush1.msra.mxu0 0.0
    %7244 = vmatprep.subr.mxu0 0.0
    %7245 = vmatpush1.msra.mxu0 0.0
    %7246 = vmatprep.subr.mxu0 0.0
    %7247 = vmatpush1.msra.mxu0 0.0
    %7248 = vmatprep.subr.mxu0 0.0
    %7249 = vmatpush1.msra.mxu0 0.0
    %7250 = vmatprep.subr.mxu0 0.0
    %7251 = vmatpush1.msra.mxu0 0.0
    %7252 = vmatprep.subr.mxu0 0.0
    %7253 = vmatpush1.msra.mxu0 0.0
    %7254 = vmatprep.subr.mxu0 0.0
    %7255 = vmatpush1.msra.mxu0 0.0
    %7256 = vmatprep.subr.mxu0 0.0
    %7257 = vmatpush1.msra.mxu0 0.0
    %7258 = vmatprep.subr.mxu0 0.0
    %7259 = vmatpush1.msra.mxu0 0.0
    %7260 = vmatprep.subr.mxu0 0.0
    %7261 = vmatpush1.msra.mxu0 0.0
    %7262 = vmatprep.subr.mxu0 0.0
    %7263 = vmatpush1.msra.mxu0 0.0
    %7264 = vmatprep.subr.mxu0 0.0
    %7265 = vmatpush1.msra.mxu0 0.0
    %7266 = vmatprep.subr.mxu0 0.0
    %7267 = vmatpush1.msra.mxu0 0.0
    %7268 = vmatprep.subr.mxu0 0.0
    %7269 = vmatpush1.msra.mxu0 0.0
    %7270 = vmatprep.subr.mxu0 0.0
    %7271 = vmatpush1.msra.mxu0 0.0
    %7272 = vmatprep.subr.mxu0 0.0
    %7273 = vmatpush1.msra.mxu0 0.0
    %7274 = vmatprep.subr.mxu0 0.0
    %7275 = vmatpush1.msra.mxu0 0.0
    %7276 = vmatprep.subr.mxu0 0.0
    %7277 = vmatpush1.msra.mxu0 0.0
    %7278 = vmatprep.subr.mxu0 0.0
    %7279 = vmatpush1.msra.mxu0 0.0
    %7280 = vmatprep.subr.mxu0 0.0
    %7281 = vmatpush1.msra.mxu0 0.0
    %7282 = vmatprep.subr.mxu0 0.0
    %7283 = vmatpush1.msra.mxu0 0.0
    %7284 = vmatprep.subr.mxu0 0.0
    %7285 = vmatpush1.msra.mxu0 0.0
    %7286 = vmatprep.subr.mxu0 0.0
    %7287 = vmatpush1.msra.mxu0 0.0
    %7288 = vmatprep.subr.mxu0 0.0
    %7289 = vmatpush1.msra.mxu0 0.0
    %7290 = vmatprep.subr.mxu0 0.0
    %7291 = vmatpush1.msra.mxu0 0.0
    %7292 = vmatprep.mubr.f32.mxu0 0.0
    %v7293 = vand.u32 %v7222, 4294901760
    %v7294 = vsub.f32 %v7222, %v7293
    %v7295 = vand.u32 %v7294, 4294901760
    %v7296 = vsub.f32 %v7294, %v7295
    %v7297 = vand.u32 %v7296, 4294901760
    %7298 = vmatmul.mubr.f32.gmra.mrb[0].mxu0 %v7297
    %v7299 = vpop.f32.mrb[0].mxu0
    %v7300 = vadd.f32 0.0, %v7299
    %v7301 = vpop.f32.mrb[0].mxu0
    %7302 = vdwg.mxu0
    %7303 = vmatprep.subr.mxu0 0.0
    %v7304 = vand.u32 %v7217, 4294901760
    %v7305 = vsub.f32 %v7217, %v7304
    %v7306 = vand.u32 %v7305, 4294901760
    %v7307 = vsub.f32 %v7305, %v7306
    %v7308 = vand.u32 %v7307, 4294901760
    %7309 = vmatpush1.msra.mxu0 %v7308
    %7310 = vmatprep.subr.mxu0 0.0
    %v7311 = vand.u32 %v7218, 4294901760
    %v7312 = vsub.f32 %v7218, %v7311
    %v7313 = vand.u32 %v7312, 4294901760
    %v7314 = vsub.f32 %v7312, %v7313
    %v7315 = vand.u32 %v7314, 4294901760
    %7316 = vmatpush1.msra.mxu0 %v7315
    %7317 = vmatprep.subr.mxu0 0.0
    %v7318 = vand.u32 %v7219, 4294901760
    %v7319 = vsub.f32 %v7219, %v7318
    %v7320 = vand.u32 %v7319, 4294901760
    %v7321 = vsub.f32 %v7319, %v7320
    %v7322 = vand.u32 %v7321, 4294901760
    %7323 = vmatpush1.msra.mxu0 %v7322
    %7324 = vmatprep.subr.mxu0 0.0
    %v7325 = vand.u32 %v7220, 4294901760
    %v7326 = vsub.f32 %v7220, %v7325
    %v7327 = vand.u32 %v7326, 4294901760
    %v7328 = vsub.f32 %v7326, %v7327
    %v7329 = vand.u32 %v7328, 4294901760
    %7330 = vmatpush1.msra.mxu0 %v7329
    %7331 = vmatprep.subr.mxu0 0.0
    %7332 = vmatpush1.msra.mxu0 0.0
    %7333 = vmatprep.subr.mxu0 0.0
    %7334 = vmatpush1.msra.mxu0 0.0
    %7335 = vmatprep.subr.mxu0 0.0
    %7336 = vmatpush1.msra.mxu0 0.0
    %7337 = vmatprep.subr.mxu0 0.0
    %7338 = vmatpush1.msra.mxu0 0.0
    %7339 = vmatprep.subr.mxu0 0.0
    %7340 = vmatpush1.msra.mxu0 0.0
    %7341 = vmatprep.subr.mxu0 0.0
    %7342 = vmatpush1.msra.mxu0 0.0
    %7343 = vmatprep.subr.mxu0 0.0
    %7344 = vmatpush1.msra.mxu0 0.0
    %7345 = vmatprep.subr.mxu0 0.0
    %7346 = vmatpush1.msra.mxu0 0.0
    %7347 = vmatprep.subr.mxu0 0.0
    %7348 = vmatpush1.msra.mxu0 0.0
    %7349 = vmatprep.subr.mxu0 0.0
    %7350 = vmatpush1.msra.mxu0 0.0
    %7351 = vmatprep.subr.mxu0 0.0
    %7352 = vmatpush1.msra.mxu0 0.0
    %7353 = vmatprep.subr.mxu0 0.0
    %7354 = vmatpush1.msra.mxu0 0.0
    %7355 = vmatprep.subr.mxu0 0.0
    %7356 = vmatpush1.msra.mxu0 0.0
    %7357 = vmatprep.subr.mxu0 0.0
    %7358 = vmatpush1.msra.mxu0 0.0
    %7359 = vmatprep.subr.mxu0 0.0
    %7360 = vmatpush1.msra.mxu0 0.0
    %7361 = vmatprep.subr.mxu0 0.0
    %7362 = vmatpush1.msra.mxu0 0.0
    %7363 = vmatprep.subr.mxu0 0.0
    %7364 = vmatpush1.msra.mxu0 0.0
    %7365 = vmatprep.subr.mxu0 0.0
    %7366 = vmatpush1.msra.mxu0 0.0
    %7367 = vmatprep.subr.mxu0 0.0
    %7368 = vmatpush1.msra.mxu0 0.0
    %7369 = vmatprep.subr.mxu0 0.0
    %7370 = vmatpush1.msra.mxu0 0.0
    %7371 = vmatprep.subr.mxu0 0.0
    %7372 = vmatpush1.msra.mxu0 0.0
    %7373 = vmatprep.subr.mxu0 0.0
    %7374 = vmatpush1.msra.mxu0 0.0
    %7375 = vmatprep.subr.mxu0 0.0
    %7376 = vmatpush1.msra.mxu0 0.0
    %7377 = vmatprep.subr.mxu0 0.0
    %7378 = vmatpush1.msra.mxu0 0.0
    %7379 = vmatprep.subr.mxu0 0.0
    %7380 = vmatpush1.msra.mxu0 0.0
    %7381 = vmatprep.subr.mxu0 0.0
    %7382 = vmatpush1.msra.mxu0 0.0
    %7383 = vmatprep.subr.mxu0 0.0
    %7384 = vmatpush1.msra.mxu0 0.0
    %7385 = vmatprep.subr.mxu0 0.0
    %7386 = vmatpush1.msra.mxu0 0.0
    %7387 = vmatprep.mubr.f32.mxu0 0.0
    %v7388 = vand.u32 %v7222, 4294901760
    %7389 = vmatmul.mubr.f32.gmra.mrb[0].mxu0 %v7388
    %v7390 = vpop.f32.mrb[0].mxu0
    %v7391 = vadd.f32 %v7300, %v7390
    %v7392 = vpop.f32.mrb[0].mxu0
    %7393 = vdwg.mxu0
    %7394 = vmatprep.subr.mxu0 0.0
    %v7395 = vand.u32 %v7217, 4294901760
    %v7396 = vsub.f32 %v7217, %v7395
    %7397 = vmatpush1.msra.mxu0 %v7396
    %7398 = vmatprep.subr.mxu0 0.0
    %v7399 = vand.u32 %v7218, 4294901760
    %v7400 = vsub.f32 %v7218, %v7399
    %7401 = vmatpush1.msra.mxu0 %v7400
    %7402 = vmatprep.subr.mxu0 0.0
    %v7403 = vand.u32 %v7219, 4294901760
    %v7404 = vsub.f32 %v7219, %v7403
    %7405 = vmatpush1.msra.mxu0 %v7404
    %7406 = vmatprep.subr.mxu0 0.0
    %v7407 = vand.u32 %v7220, 4294901760
    %v7408 = vsub.f32 %v7220, %v7407
    %7409 = vmatpush1.msra.mxu0 %v7408
    %7410 = vmatprep.subr.mxu0 0.0
    %7411 = vmatpush1.msra.mxu0 0.0
    %7412 = vmatprep.subr.mxu0 0.0
    %7413 = vmatpush1.msra.mxu0 0.0
    %7414 = vmatprep.subr.mxu0 0.0
    %7415 = vmatpush1.msra.mxu0 0.0
    %7416 = vmatprep.subr.mxu0 0.0
    %7417 = vmatpush1.msra.mxu0 0.0
    %7418 = vmatprep.subr.mxu0 0.0
    %7419 = vmatpush1.msra.mxu0 0.0
    %7420 = vmatprep.subr.mxu0 0.0
    %7421 = vmatpush1.msra.mxu0 0.0
    %7422 = vmatprep.subr.mxu0 0.0
    %7423 = vmatpush1.msra.mxu0 0.0
    %7424 = vmatprep.subr.mxu0 0.0
    %7425 = vmatpush1.msra.mxu0 0.0
    %7426 = vmatprep.subr.mxu0 0.0
    %7427 = vmatpush1.msra.mxu0 0.0
    %7428 = vmatprep.subr.mxu0 0.0
    %7429 = vmatpush1.msra.mxu0 0.0
    %7430 = vmatprep.subr.mxu0 0.0
    %7431 = vmatpush1.msra.mxu0 0.0
    %7432 = vmatprep.subr.mxu0 0.0
    %7433 = vmatpush1.msra.mxu0 0.0
    %7434 = vmatprep.subr.mxu0 0.0
    %7435 = vmatpush1.msra.mxu0 0.0
    %7436 = vmatprep.subr.mxu0 0.0
    %7437 = vmatpush1.msra.mxu0 0.0
    %7438 = vmatprep.subr.mxu0 0.0
    %7439 = vmatpush1.msra.mxu0 0.0
    %7440 = vmatprep.subr.mxu0 0.0
    %7441 = vmatpush1.msra.mxu0 0.0
    %7442 = vmatprep.subr.mxu0 0.0
    %7443 = vmatpush1.msra.mxu0 0.0
    %7444 = vmatprep.subr.mxu0 0.0
    %7445 = vmatpush1.msra.mxu0 0.0
    %7446 = vmatprep.subr.mxu0 0.0
    %7447 = vmatpush1.msra.mxu0 0.0
    %7448 = vmatprep.subr.mxu0 0.0
    %7449 = vmatpush1.msra.mxu0 0.0
    %7450 = vmatprep.subr.mxu0 0.0
    %7451 = vmatpush1.msra.mxu0 0.0
    %7452 = vmatprep.subr.mxu0 0.0
    %7453 = vmatpush1.msra.mxu0 0.0
    %7454 = vmatprep.subr.mxu0 0.0
    %7455 = vmatpush1.msra.mxu0 0.0
    %7456 = vmatprep.subr.mxu0 0.0
    %7457 = vmatpush1.msra.mxu0 0.0
    %7458 = vmatprep.subr.mxu0 0.0
    %7459 = vmatpush1.msra.mxu0 0.0
    %7460 = vmatprep.subr.mxu0 0.0
    %7461 = vmatpush1.msra.mxu0 0.0
    %7462 = vmatprep.subr.mxu0 0.0
    %7463 = vmatpush1.msra.mxu0 0.0
    %7464 = vmatprep.subr.mxu0 0.0
    %7465 = vmatpush1.msra.mxu0 0.0
    %7466 = vmatprep.mubr.f32.mxu0 0.0
    %v7467 = vand.u32 %v7222, 4294901760
    %v7468 = vsub.f32 %v7222, %v7467
    %7469 = vmatmul.mubr.f32.gmra.mrb[0].mxu0 %v7468
    %v7470 = vpop.f32.mrb[0].mxu0
    %v7471 = vadd.f32 %v7391, %v7470
    %v7472 = vpop.f32.mrb[0].mxu0
    %7473 = vdwg.mxu0
    %7474 = vmatprep.subr.mxu0 0.0
    %v7475 = vand.u32 %v7217, 4294901760
    %7476 = vmatpush1.msra.mxu0 %v7475
    %7477 = vmatprep.subr.mxu0 0.0
    %v7478 = vand.u32 %v7218, 4294901760
    %7479 = vmatpush1.msra.mxu0 %v7478
    %7480 = vmatprep.subr.mxu0 0.0
    %v7481 = vand.u32 %v7219, 4294901760
    %7482 = vmatpush1.msra.mxu0 %v7481
    %7483 = vmatprep.subr.mxu0 0.0
    %v7484 = vand.u32 %v7220, 4294901760
    %7485 = vmatpush1.msra.mxu0 %v7484
    %7486 = vmatprep.subr.mxu0 0.0
    %7487 = vmatpush1.msra.mxu0 0.0
    %7488 = vmatprep.subr.mxu0 0.0
    %7489 = vmatpush1.msra.mxu0 0.0
    %7490 = vmatprep.subr.mxu0 0.0
    %7491 = vmatpush1.msra.mxu0 0.0
    %7492 = vmatprep.subr.mxu0 0.0
    %7493 = vmatpush1.msra.mxu0 0.0
    %7494 = vmatprep.subr.mxu0 0.0
    %7495 = vmatpush1.msra.mxu0 0.0
    %7496 = vmatprep.subr.mxu0 0.0
    %7497 = vmatpush1.msra.mxu0 0.0
    %7498 = vmatprep.subr.mxu0 0.0
    %7499 = vmatpush1.msra.mxu0 0.0
    %7500 = vmatprep.subr.mxu0 0.0
    %7501 = vmatpush1.msra.mxu0 0.0
    %7502 = vmatprep.subr.mxu0 0.0
    %7503 = vmatpush1.msra.mxu0 0.0
    %7504 = vmatprep.subr.mxu0 0.0
    %7505 = vmatpush1.msra.mxu0 0.0
    %7506 = vmatprep.subr.mxu0 0.0
    %7507 = vmatpush1.msra.mxu0 0.0
    %7508 = vmatprep.subr.mxu0 0.0
    %7509 = vmatpush1.msra.mxu0 0.0
    %7510 = vmatprep.subr.mxu0 0.0
    %7511 = vmatpush1.msra.mxu0 0.0
    %7512 = vmatprep.subr.mxu0 0.0
    %7513 = vmatpush1.msra.mxu0 0.0
    %7514 = vmatprep.subr.mxu0 0.0
    %7515 = vmatpush1.msra.mxu0 0.0
    %7516 = vmatprep.subr.mxu0 0.0
    %7517 = vmatpush1.msra.mxu0 0.0
    %7518 = vmatprep.subr.mxu0 0.0
    %7519 = vmatpush1.msra.mxu0 0.0
    %7520 = vmatprep.subr.mxu0 0.0
    %7521 = vmatpush1.msra.mxu0 0.0
    %7522 = vmatprep.subr.mxu0 0.0
    %7523 = vmatpush1.msra.mxu0 0.0
    %7524 = vmatprep.subr.mxu0 0.0
    %7525 = vmatpush1.msra.mxu0 0.0
    %7526 = vmatprep.subr.mxu0 0.0
    %7527 = vmatpush1.msra.mxu0 0.0
    %7528 = vmatprep.subr.mxu0 0.0
    %7529 = vmatpush1.msra.mxu0 0.0
    %7530 = vmatprep.subr.mxu0 0.0
    %7531 = vmatpush1.msra.mxu0 0.0
    %7532 = vmatprep.subr.mxu0 0.0
    %7533 = vmatpush1.msra.mxu0 0.0
    %7534 = vmatprep.subr.mxu0 0.0
    %7535 = vmatpush1.msra.mxu0 0.0
    %7536 = vmatprep.subr.mxu0 0.0
    %7537 = vmatpush1.msra.mxu0 0.0
    %7538 = vmatprep.subr.mxu0 0.0
    %7539 = vmatpush1.msra.mxu0 0.0
    %7540 = vmatprep.subr.mxu0 0.0
    %7541 = vmatpush1.msra.mxu0 0.0
    %7542 = vmatprep.mubr.f32.mxu0 0.0
    %v7543 = vand.u32 %v7222, 4294901760
    %v7544 = vsub.f32 %v7222, %v7543
    %v7545 = vand.u32 %v7544, 4294901760
    %7546 = vmatmul.mubr.f32.gmra.mrb[0].mxu0 %v7545
    %v7547 = vpop.f32.mrb[0].mxu0
    %v7548 = vadd.f32 %v7471, %v7547
    %v7549 = vpop.f32.mrb[0].mxu0
    %7550 = vdwg.mxu0
    %7551 = vmatprep.subr.mxu0 0.0
    %v7552 = vand.u32 %v7217, 4294901760
    %v7553 = vsub.f32 %v7217, %v7552
    %v7554 = vand.u32 %v7553, 4294901760
    %7555 = vmatpush1.msra.mxu0 %v7554
    %7556 = vmatprep.subr.mxu0 0.0
    %v7557 = vand.u32 %v7218, 4294901760
    %v7558 = vsub.f32 %v7218, %v7557
    %v7559 = vand.u32 %v7558, 4294901760
    %7560 = vmatpush1.msra.mxu0 %v7559
    %7561 = vmatprep.subr.mxu0 0.0
    %v7562 = vand.u32 %v7219, 4294901760
    %v7563 = vsub.f32 %v7219, %v7562
    %v7564 = vand.u32 %v7563, 4294901760
    %7565 = vmatpush1.msra.mxu0 %v7564
    %7566 = vmatprep.subr.mxu0 0.0
    %v7567 = vand.u32 %v7220, 4294901760
    %v7568 = vsub.f32 %v7220, %v7567
    %v7569 = vand.u32 %v7568, 4294901760
    %7570 = vmatpush1.msra.mxu0 %v7569
    %7571 = vmatprep.subr.mxu0 0.0
    %7572 = vmatpush1.msra.mxu0 0.0
    %7573 = vmatprep.subr.mxu0 0.0
    %7574 = vmatpush1.msra.mxu0 0.0
    %7575 = vmatprep.subr.mxu0 0.0
    %7576 = vmatpush1.msra.mxu0 0.0
    %7577 = vmatprep.subr.mxu0 0.0
    %7578 = vmatpush1.msra.mxu0 0.0
    %7579 = vmatprep.subr.mxu0 0.0
    %7580 = vmatpush1.msra.mxu0 0.0
    %7581 = vmatprep.subr.mxu0 0.0
    %7582 = vmatpush1.msra.mxu0 0.0
    %7583 = vmatprep.subr.mxu0 0.0
    %7584 = vmatpush1.msra.mxu0 0.0
    %7585 = vmatprep.subr.mxu0 0.0
    %7586 = vmatpush1.msra.mxu0 0.0
    %7587 = vmatprep.subr.mxu0 0.0
    %7588 = vmatpush1.msra.mxu0 0.0
    %7589 = vmatprep.subr.mxu0 0.0
    %7590 = vmatpush1.msra.mxu0 0.0
    %7591 = vmatprep.subr.mxu0 0.0
    %7592 = vmatpush1.msra.mxu0 0.0
    %7593 = vmatprep.subr.mxu0 0.0
    %7594 = vmatpush1.msra.mxu0 0.0
    %7595 = vmatprep.subr.mxu0 0.0
    %7596 = vmatpush1.msra.mxu0 0.0
    %7597 = vmatprep.subr.mxu0 0.0
    %7598 = vmatpush1.msra.mxu0 0.0
    %7599 = vmatprep.subr.mxu0 0.0
    %7600 = vmatpush1.msra.mxu0 0.0
    %7601 = vmatprep.subr.mxu0 0.0
    %7602 = vmatpush1.msra.mxu0 0.0
    %7603 = vmatprep.subr.mxu0 0.0
    %7604 = vmatpush1.msra.mxu0 0.0
    %7605 = vmatprep.subr.mxu0 0.0
    %7606 = vmatpush1.msra.mxu0 0.0
    %7607 = vmatprep.subr.mxu0 0.0
    %7608 = vmatpush1.msra.mxu0 0.0
    %7609 = vmatprep.subr.mxu0 0.0
    %7610 = vmatpush1.msra.mxu0 0.0
    %7611 = vmatprep.subr.mxu0 0.0
    %7612 = vmatpush1.msra.mxu0 0.0
    %7613 = vmatprep.subr.mxu0 0.0
    %7614 = vmatpush1.msra.mxu0 0.0
    %7615 = vmatprep.subr.mxu0 0.0
    %7616 = vmatpush1.msra.mxu0 0.0
    %7617 = vmatprep.subr.mxu0 0.0
    %7618 = vmatpush1.msra.mxu0 0.0
    %7619 = vmatprep.subr.mxu0 0.0
    %7620 = vmatpush1.msra.mxu0 0.0
    %7621 = vmatprep.subr.mxu0 0.0
    %7622 = vmatpush1.msra.mxu0 0.0
    %7623 = vmatprep.subr.mxu0 0.0
    %7624 = vmatpush1.msra.mxu0 0.0
    %7625 = vmatprep.subr.mxu0 0.0
    %7626 = vmatpush1.msra.mxu0 0.0
    %7627 = vmatprep.mubr.f32.mxu0 0.0
    %v7628 = vand.u32 %v7222, 4294901760
    %7629 = vmatmul.mubr.f32.gmra.mrb[0].mxu0 %v7628
    %v7630 = vpop.f32.mrb[0].mxu0
    %v7631 = vadd.f32 %v7548, %v7630
    %v7632 = vpop.f32.mrb[0].mxu0
    %7633 = vdwg.mxu0
    %7634 = vmatprep.subr.mxu0 0.0
    %v7635 = vand.u32 %v7217, 4294901760
    %7636 = vmatpush1.msra.mxu0 %v7635
    %7637 = vmatprep.subr.mxu0 0.0
    %v7638 = vand.u32 %v7218, 4294901760
    %7639 = vmatpush1.msra.mxu0 %v7638
    %7640 = vmatprep.subr.mxu0 0.0
    %v7641 = vand.u32 %v7219, 4294901760
    %7642 = vmatpush1.msra.mxu0 %v7641
    %7643 = vmatprep.subr.mxu0 0.0
    %v7644 = vand.u32 %v7220, 4294901760
    %7645 = vmatpush1.msra.mxu0 %v7644
    %7646 = vmatprep.subr.mxu0 0.0
    %7647 = vmatpush1.msra.mxu0 0.0
    %7648 = vmatprep.subr.mxu0 0.0
    %7649 = vmatpush1.msra.mxu0 0.0
    %7650 = vmatprep.subr.mxu0 0.0
    %7651 = vmatpush1.msra.mxu0 0.0
    %7652 = vmatprep.subr.mxu0 0.0
    %7653 = vmatpush1.msra.mxu0 0.0
    %7654 = vmatprep.subr.mxu0 0.0
    %7655 = vmatpush1.msra.mxu0 0.0
    %7656 = vmatprep.subr.mxu0 0.0
    %7657 = vmatpush1.msra.mxu0 0.0
    %7658 = vmatprep.subr.mxu0 0.0
    %7659 = vmatpush1.msra.mxu0 0.0
    %7660 = vmatprep.subr.mxu0 0.0
    %7661 = vmatpush1.msra.mxu0 0.0
    %7662 = vmatprep.subr.mxu0 0.0
    %7663 = vmatpush1.msra.mxu0 0.0
    %7664 = vmatprep.subr.mxu0 0.0
    %7665 = vmatpush1.msra.mxu0 0.0
    %7666 = vmatprep.subr.mxu0 0.0
    %7667 = vmatpush1.msra.mxu0 0.0
    %7668 = vmatprep.subr.mxu0 0.0
    %7669 = vmatpush1.msra.mxu0 0.0
    %7670 = vmatprep.subr.mxu0 0.0
    %7671 = vmatpush1.msra.mxu0 0.0
    %7672 = vmatprep.subr.mxu0 0.0
    %7673 = vmatpush1.msra.mxu0 0.0
    %7674 = vmatprep.subr.mxu0 0.0
    %7675 = vmatpush1.msra.mxu0 0.0
    %7676 = vmatprep.subr.mxu0 0.0
    %7677 = vmatpush1.msra.mxu0 0.0
    %7678 = vmatprep.subr.mxu0 0.0
    %7679 = vmatpush1.msra.mxu0 0.0
    %7680 = vmatprep.subr.mxu0 0.0
    %7681 = vmatpush1.msra.mxu0 0.0
    %7682 = vmatprep.subr.mxu0 0.0
    %7683 = vmatpush1.msra.mxu0 0.0
    %7684 = vmatprep.subr.mxu0 0.0
    %7685 = vmatpush1.msra.mxu0 0.0
    %7686 = vmatprep.subr.mxu0 0.0
    %7687 = vmatpush1.msra.mxu0 0.0
    %7688 = vmatprep.subr.mxu0 0.0
    %7689 = vmatpush1.msra.mxu0 0.0
    %7690 = vmatprep.subr.mxu0 0.0
    %7691 = vmatpush1.msra.mxu0 0.0
    %7692 = vmatprep.subr.mxu0 0.0
    %7693 = vmatpush1.msra.mxu0 0.0
    %7694 = vmatprep.subr.mxu0 0.0
    %7695 = vmatpush1.msra.mxu0 0.0
    %7696 = vmatprep.subr.mxu0 0.0
    %7697 = vmatpush1.msra.mxu0 0.0
    %7698 = vmatprep.subr.mxu0 0.0
    %7699 = vmatpush1.msra.mxu0 0.0
    %7700 = vmatprep.subr.mxu0 0.0
    %7701 = vmatpush1.msra.mxu0 0.0
    %7702 = vmatprep.mubr.f32.mxu0 0.0
    %v7703 = vand.u32 %v7222, 4294901760
    %7704 = vmatmul.mubr.f32.gmra.mrb[0].mxu0 %v7703
    %v7705 = vpop.f32.mrb[0].mxu0
    %v7706 = vadd.f32 %v7631, %v7705
    %v7707 = vpop.f32.mrb[0].mxu0
    %7708 = vdwg.mxu0
    %v7709 = vadd.f32 %v7215, %v7706
    %v7710 = vxor.u32 %v7709, 2147483648
    %v7711 = vmul.f32 %v7710, 1.442695
    %v7712 = vpow.pop %v7711
    %v7713 = vadd.f32 %v7712, 1.0
    %v7714 = vrcp.pop %v7713
    %v7715 = vmul.f32 1.0, %v7714
    %v7716 = vtanh.pop %v7709
    %v7717 = vld [vmem:[#allocation6] sm:$0x3]
    %7719 = vrot.lane.b32.xlu0 %v7717, 32
    %v7720 = vpop.permute.xlu0 %7719
    %v7722 = vmul.f32 %v7715, %v7720
    %7724 = vrot.lane.b32.xlu0 %v7716, 64
    %v7725 = vpop.permute.xlu0 %7724
    %v7727 = vmul.f32 %v7715, %v7725
    %7729 = vrot.lane.b32.xlu0 %v7727, 32
    %v7730 = vpop.permute.xlu0 %7729
    %v7732 = vadd.f32 %v7722, %v7730
    %v7733 = vtanh.pop %v7732
    %7735 = vrot.lane.b32.xlu0 %v7733, 64
    %v7736 = vpop.permute.xlu0 %7735
    %v7738 = vmul.f32 %v7715, %v7736
    %7740 = vrot.lane.b32.xlu0 %v7732, 96
    %v7741 = vpop.permute.xlu0 %7740
    %7743 = vst.msk [vmem:[#allocation6] sm:$0x3] %vm189, %v7741
    %7745 = vrot.lane.b32.xlu0 %v7738, 32
    %v7746 = vpop.permute.xlu0 %7745
    %7748 = vst.msk [vmem:[#allocation5] sm:$0x3] %vm189, %v7746
    %s7749 = sld [smem:[#allocation12]]
    %p7750 = scmp.eq.s32.totalorder %s7749, 4
    // Predicated region
    $region90: #{tpu_custom_call.1} parent=1 // pred_check
      %p7751 = pneg %p7750
    $region91: #{tpu_custom_call.1} parent=1 // pred_check_branch
      %7753 = sbr.rel (%p7751) target = $region93
    $region92: #{tpu_custom_call.1} parent=1 // pred_region
      %7754 = vst.msk [vmem:[#allocation20] sm:$0x1] %vm127, %v7746
    $region93: #{tpu_custom_call.1} parent=1 // pred_fallthru
      _
    %s7755 = sld [smem:[#allocation12 + $0x1]]
    %p7756 = scmp.eq.s32.totalorder %s7755, 4
    // Predicated region
    $region94: #{tpu_custom_call.1} parent=1 // pred_check
      %p7757 = pneg %p7756
    $region95: #{tpu_custom_call.1} parent=1 // pred_check_branch
      %7759 = sbr.rel (%p7757) target = $region97
    $region96: #{tpu_custom_call.1} parent=1 // pred_region
      %vm7760 = vcmask 254977
      %7761 = vst.msk [vmem:[#allocation20] sm:$0x2] %vm7760, %v7746
    $region97: #{tpu_custom_call.1} parent=1 // pred_fallthru
      _
    %v7762 = vld [vmem:[#allocation3 + $0x8] sm:$0x3]
    %v7763 = vld [vmem:[#allocation5] sm:$0x3]
    %v7764 = vld [vmem:[#allocation19] sm:$0xff]
    %v7765 = vld [vmem:[#allocation19 + $0x8] sm:$0xff]
    %v7766 = vld [vmem:[#allocation19 + $0x10] sm:$0xff]
    %v7767 = vld [vmem:[#allocation19 + $0x18] sm:$0xff]
    %v7769 = vsel %vm204, %v7763, 0
    %7771 = vmatprep.subr.mxu0 0.0
    %v7772 = vand.u32 %v7764, 4294901760
    %7773 = vmatpush1.msra.mxu0 %v7772
    %7774 = vmatprep.subr.mxu0 0.0
    %v7775 = vand.u32 %v7765, 4294901760
    %7776 = vmatpush1.msra.mxu0 %v7775
    %7777 = vmatprep.subr.mxu0 0.0
    %v7778 = vand.u32 %v7766, 4294901760
    %7779 = vmatpush1.msra.mxu0 %v7778
    %7780 = vmatprep.subr.mxu0 0.0
    %v7781 = vand.u32 %v7767, 4294901760
    %7782 = vmatpush1.msra.mxu0 %v7781
    %7783 = vmatprep.subr.mxu0 0.0
    %7784 = vmatpush1.msra.mxu0 0.0
    %7785 = vmatprep.subr.mxu0 0.0
    %7786 = vmatpush1.msra.mxu0 0.0
    %7787 = vmatprep.subr.mxu0 0.0
    %7788 = vmatpush1.msra.mxu0 0.0
    %7789 = vmatprep.subr.mxu0 0.0
    %7790 = vmatpush1.msra.mxu0 0.0
    %7791 = vmatprep.subr.mxu0 0.0
    %7792 = vmatpush1.msra.mxu0 0.0
    %7793 = vmatprep.subr.mxu0 0.0
    %7794 = vmatpush1.msra.mxu0 0.0
    %7795 = vmatprep.subr.mxu0 0.0
    %7796 = vmatpush1.msra.mxu0 0.0
    %7797 = vmatprep.subr.mxu0 0.0
    %7798 = vmatpush1.msra.mxu0 0.0
    %7799 = vmatprep.subr.mxu0 0.0
    %7800 = vmatpush1.msra.mxu0 0.0
    %7801 = vmatprep.subr.mxu0 0.0
    %7802 = vmatpush1.msra.mxu0 0.0
    %7803 = vmatprep.subr.mxu0 0.0
    %7804 = vmatpush1.msra.mxu0 0.0
    %7805 = vmatprep.subr.mxu0 0.0
    %7806 = vmatpush1.msra.mxu0 0.0
    %7807 = vmatprep.subr.mxu0 0.0
    %7808 = vmatpush1.msra.mxu0 0.0
    %7809 = vmatprep.subr.mxu0 0.0
    %7810 = vmatpush1.msra.mxu0 0.0
    %7811 = vmatprep.subr.mxu0 0.0
    %7812 = vmatpush1.msra.mxu0 0.0
    %7813 = vmatprep.subr.mxu0 0.0
    %7814 = vmatpush1.msra.mxu0 0.0
    %7815 = vmatprep.subr.mxu0 0.0
    %7816 = vmatpush1.msra.mxu0 0.0
    %7817 = vmatprep.subr.mxu0 0.0
    %7818 = vmatpush1.msra.mxu0 0.0
    %7819 = vmatprep.subr.mxu0 0.0
    %7820 = vmatpush1.msra.mxu0 0.0
    %7821 = vmatprep.subr.mxu0 0.0
    %7822 = vmatpush1.msra.mxu0 0.0
    %7823 = vmatprep.subr.mxu0 0.0
    %7824 = vmatpush1.msra.mxu0 0.0
    %7825 = vmatprep.subr.mxu0 0.0
    %7826 = vmatpush1.msra.mxu0 0.0
    %7827 = vmatprep.subr.mxu0 0.0
    %7828 = vmatpush1.msra.mxu0 0.0
    %7829 = vmatprep.subr.mxu0 0.0
    %7830 = vmatpush1.msra.mxu0 0.0
    %7831 = vmatprep.subr.mxu0 0.0
    %7832 = vmatpush1.msra.mxu0 0.0
    %7833 = vmatprep.subr.mxu0 0.0
    %7834 = vmatpush1.msra.mxu0 0.0
    %7835 = vmatprep.subr.mxu0 0.0
    %7836 = vmatpush1.msra.mxu0 0.0
    %7837 = vmatprep.subr.mxu0 0.0
    %7838 = vmatpush1.msra.mxu0 0.0
    %7839 = vmatprep.mubr.f32.mxu0 0.0
    %v7840 = vand.u32 %v7769, 4294901760
    %v7841 = vsub.f32 %v7769, %v7840
    %v7842 = vand.u32 %v7841, 4294901760
    %v7843 = vsub.f32 %v7841, %v7842
    %v7844 = vand.u32 %v7843, 4294901760
    %7845 = vmatmul.mubr.f32.gmra.mrb[0].mxu0 %v7844
    %v7846 = vpop.f32.mrb[0].mxu0
    %v7847 = vadd.f32 0.0, %v7846
    %v7848 = vpop.f32.mrb[0].mxu0
    %7849 = vdwg.mxu0
    %7850 = vmatprep.subr.mxu0 0.0
    %v7851 = vand.u32 %v7764, 4294901760
    %v7852 = vsub.f32 %v7764, %v7851
    %v7853 = vand.u32 %v7852, 4294901760
    %v7854 = vsub.f32 %v7852, %v7853
    %v7855 = vand.u32 %v7854, 4294901760
    %7856 = vmatpush1.msra.mxu0 %v7855
    %7857 = vmatprep.subr.mxu0 0.0
    %v7858 = vand.u32 %v7765, 4294901760
    %v7859 = vsub.f32 %v7765, %v7858
    %v7860 = vand.u32 %v7859, 4294901760
    %v7861 = vsub.f32 %v7859, %v7860
    %v7862 = vand.u32 %v7861, 4294901760
    %7863 = vmatpush1.msra.mxu0 %v7862
    %7864 = vmatprep.subr.mxu0 0.0
    %v7865 = vand.u32 %v7766, 4294901760
    %v7866 = vsub.f32 %v7766, %v7865
    %v7867 = vand.u32 %v7866, 4294901760
    %v7868 = vsub.f32 %v7866, %v7867
    %v7869 = vand.u32 %v7868, 4294901760
    %7870 = vmatpush1.msra.mxu0 %v7869
    %7871 = vmatprep.subr.mxu0 0.0
    %v7872 = vand.u32 %v7767, 4294901760
    %v7873 = vsub.f32 %v7767, %v7872
    %v7874 = vand.u32 %v7873, 4294901760
    %v7875 = vsub.f32 %v7873, %v7874
    %v7876 = vand.u32 %v7875, 4294901760
    %7877 = vmatpush1.msra.mxu0 %v7876
    %7878 = vmatprep.subr.mxu0 0.0
    %7879 = vmatpush1.msra.mxu0 0.0
    %7880 = vmatprep.subr.mxu0 0.0
    %7881 = vmatpush1.msra.mxu0 0.0
    %7882 = vmatprep.subr.mxu0 0.0
    %7883 = vmatpush1.msra.mxu0 0.0
    %7884 = vmatprep.subr.mxu0 0.0
    %7885 = vmatpush1.msra.mxu0 0.0
    %7886 = vmatprep.subr.mxu0 0.0
    %7887 = vmatpush1.msra.mxu0 0.0
    %7888 = vmatprep.subr.mxu0 0.0
    %7889 = vmatpush1.msra.mxu0 0.0
    %7890 = vmatprep.subr.mxu0 0.0
    %7891 = vmatpush1.msra.mxu0 0.0
    %7892 = vmatprep.subr.mxu0 0.0
    %7893 = vmatpush1.msra.mxu0 0.0
    %7894 = vmatprep.subr.mxu0 0.0
    %7895 = vmatpush1.msra.mxu0 0.0
    %7896 = vmatprep.subr.mxu0 0.0
    %7897 = vmatpush1.msra.mxu0 0.0
    %7898 = vmatprep.subr.mxu0 0.0
    %7899 = vmatpush1.msra.mxu0 0.0
    %7900 = vmatprep.subr.mxu0 0.0
    %7901 = vmatpush1.msra.mxu0 0.0
    %7902 = vmatprep.subr.mxu0 0.0
    %7903 = vmatpush1.msra.mxu0 0.0
    %7904 = vmatprep.subr.mxu0 0.0
    %7905 = vmatpush1.msra.mxu0 0.0
    %7906 = vmatprep.subr.mxu0 0.0
    %7907 = vmatpush1.msra.mxu0 0.0
    %7908 = vmatprep.subr.mxu0 0.0
    %7909 = vmatpush1.msra.mxu0 0.0
    %7910 = vmatprep.subr.mxu0 0.0
    %7911 = vmatpush1.msra.mxu0 0.0
    %7912 = vmatprep.subr.mxu0 0.0
    %7913 = vmatpush1.msra.mxu0 0.0
    %7914 = vmatprep.subr.mxu0 0.0
    %7915 = vmatpush1.msra.mxu0 0.0
    %7916 = vmatprep.subr.mxu0 0.0
    %7917 = vmatpush1.msra.mxu0 0.0
    %7918 = vmatprep.subr.mxu0 0.0
    %7919 = vmatpush1.msra.mxu0 0.0
    %7920 = vmatprep.subr.mxu0 0.0
    %7921 = vmatpush1.msra.mxu0 0.0
    %7922 = vmatprep.subr.mxu0 0.0
    %7923 = vmatpush1.msra.mxu0 0.0
    %7924 = vmatprep.subr.mxu0 0.0
    %7925 = vmatpush1.msra.mxu0 0.0
    %7926 = vmatprep.subr.mxu0 0.0
    %7927 = vmatpush1.msra.mxu0 0.0
    %7928 = vmatprep.subr.mxu0 0.0
    %7929 = vmatpush1.msra.mxu0 0.0
    %7930 = vmatprep.subr.mxu0 0.0
    %7931 = vmatpush1.msra.mxu0 0.0
    %7932 = vmatprep.subr.mxu0 0.0
    %7933 = vmatpush1.msra.mxu0 0.0
    %7934 = vmatprep.mubr.f32.mxu0 0.0
    %v7935 = vand.u32 %v7769, 4294901760
    %7936 = vmatmul.mubr.f32.gmra.mrb[0].mxu0 %v7935
    %v7937 = vpop.f32.mrb[0].mxu0
    %v7938 = vadd.f32 %v7847, %v7937
    %v7939 = vpop.f32.mrb[0].mxu0
    %7940 = vdwg.mxu0
    %7941 = vmatprep.subr.mxu0 0.0
    %v7942 = vand.u32 %v7764, 4294901760
    %v7943 = vsub.f32 %v7764, %v7942
    %7944 = vmatpush1.msra.mxu0 %v7943
    %7945 = vmatprep.subr.mxu0 0.0
    %v7946 = vand.u32 %v7765, 4294901760
    %v7947 = vsub.f32 %v7765, %v7946
    %7948 = vmatpush1.msra.mxu0 %v7947
    %7949 = vmatprep.subr.mxu0 0.0
    %v7950 = vand.u32 %v7766, 4294901760
    %v7951 = vsub.f32 %v7766, %v7950
    %7952 = vmatpush1.msra.mxu0 %v7951
    %7953 = vmatprep.subr.mxu0 0.0
    %v7954 = vand.u32 %v7767, 4294901760
    %v7955 = vsub.f32 %v7767, %v7954
    %7956 = vmatpush1.msra.mxu0 %v7955
    %7957 = vmatprep.subr.mxu0 0.0
    %7958 = vmatpush1.msra.mxu0 0.0
    %7959 = vmatprep.subr.mxu0 0.0
    %7960 = vmatpush1.msra.mxu0 0.0
    %7961 = vmatprep.subr.mxu0 0.0
    %7962 = vmatpush1.msra.mxu0 0.0
    %7963 = vmatprep.subr.mxu0 0.0
    %7964 = vmatpush1.msra.mxu0 0.0
    %7965 = vmatprep.subr.mxu0 0.0
    %7966 = vmatpush1.msra.mxu0 0.0
    %7967 = vmatprep.subr.mxu0 0.0
    %7968 = vmatpush1.msra.mxu0 0.0
    %7969 = vmatprep.subr.mxu0 0.0
    %7970 = vmatpush1.msra.mxu0 0.0
    %7971 = vmatprep.subr.mxu0 0.0
    %7972 = vmatpush1.msra.mxu0 0.0
    %7973 = vmatprep.subr.mxu0 0.0
    %7974 = vmatpush1.msra.mxu0 0.0
    %7975 = vmatprep.subr.mxu0 0.0
    %7976 = vmatpush1.msra.mxu0 0.0
    %7977 = vmatprep.subr.mxu0 0.0
    %7978 = vmatpush1.msra.mxu0 0.0
    %7979 = vmatprep.subr.mxu0 0.0
    %7980 = vmatpush1.msra.mxu0 0.0
    %7981 = vmatprep.subr.mxu0 0.0
    %7982 = vmatpush1.msra.mxu0 0.0
    %7983 = vmatprep.subr.mxu0 0.0
    %7984 = vmatpush1.msra.mxu0 0.0
    %7985 = vmatprep.subr.mxu0 0.0
    %7986 = vmatpush1.msra.mxu0 0.0
    %7987 = vmatprep.subr.mxu0 0.0
    %7988 = vmatpush1.msra.mxu0 0.0
    %7989 = vmatprep.subr.mxu0 0.0
    %7990 = vmatpush1.msra.mxu0 0.0
    %7991 = vmatprep.subr.mxu0 0.0
    %7992 = vmatpush1.msra.mxu0 0.0
    %7993 = vmatprep.subr.mxu0 0.0
    %7994 = vmatpush1.msra.mxu0 0.0
    %7995 = vmatprep.subr.mxu0 0.0
    %7996 = vmatpush1.msra.mxu0 0.0
    %7997 = vmatprep.subr.mxu0 0.0
    %7998 = vmatpush1.msra.mxu0 0.0
    %7999 = vmatprep.subr.mxu0 0.0
    %8000 = vmatpush1.msra.mxu0 0.0
    %8001 = vmatprep.subr.mxu0 0.0
    %8002 = vmatpush1.msra.mxu0 0.0
    %8003 = vmatprep.subr.mxu0 0.0
    %8004 = vmatpush1.msra.mxu0 0.0
    %8005 = vmatprep.subr.mxu0 0.0
    %8006 = vmatpush1.msra.mxu0 0.0
    %8007 = vmatprep.subr.mxu0 0.0
    %8008 = vmatpush1.msra.mxu0 0.0
    %8009 = vmatprep.subr.mxu0 0.0
    %8010 = vmatpush1.msra.mxu0 0.0
    %8011 = vmatprep.subr.mxu0 0.0
    %8012 = vmatpush1.msra.mxu0 0.0
    %8013 = vmatprep.mubr.f32.mxu0 0.0
    %v8014 = vand.u32 %v7769, 4294901760
    %v8015 = vsub.f32 %v7769, %v8014
    %8016 = vmatmul.mubr.f32.gmra.mrb[0].mxu0 %v8015
    %v8017 = vpop.f32.mrb[0].mxu0
    %v8018 = vadd.f32 %v7938, %v8017
    %v8019 = vpop.f32.mrb[0].mxu0
    %8020 = vdwg.mxu0
    %8021 = vmatprep.subr.mxu0 0.0
    %v8022 = vand.u32 %v7764, 4294901760
    %8023 = vmatpush1.msra.mxu0 %v8022
    %8024 = vmatprep.subr.mxu0 0.0
    %v8025 = vand.u32 %v7765, 4294901760
    %8026 = vmatpush1.msra.mxu0 %v8025
    %8027 = vmatprep.subr.mxu0 0.0
    %v8028 = vand.u32 %v7766, 4294901760
    %8029 = vmatpush1.msra.mxu0 %v8028
    %8030 = vmatprep.subr.mxu0 0.0
    %v8031 = vand.u32 %v7767, 4294901760
    %8032 = vmatpush1.msra.mxu0 %v8031
    %8033 = vmatprep.subr.mxu0 0.0
    %8034 = vmatpush1.msra.mxu0 0.0
    %8035 = vmatprep.subr.mxu0 0.0
    %8036 = vmatpush1.msra.mxu0 0.0
    %8037 = vmatprep.subr.mxu0 0.0
    %8038 = vmatpush1.msra.mxu0 0.0
    %8039 = vmatprep.subr.mxu0 0.0
    %8040 = vmatpush1.msra.mxu0 0.0
    %8041 = vmatprep.subr.mxu0 0.0
    %8042 = vmatpush1.msra.mxu0 0.0
    %8043 = vmatprep.subr.mxu0 0.0
    %8044 = vmatpush1.msra.mxu0 0.0
    %8045 = vmatprep.subr.mxu0 0.0
    %8046 = vmatpush1.msra.mxu0 0.0
    %8047 = vmatprep.subr.mxu0 0.0
    %8048 = vmatpush1.msra.mxu0 0.0
    %8049 = vmatprep.subr.mxu0 0.0
    %8050 = vmatpush1.msra.mxu0 0.0
    %8051 = vmatprep.subr.mxu0 0.0
    %8052 = vmatpush1.msra.mxu0 0.0
    %8053 = vmatprep.subr.mxu0 0.0
    %8054 = vmatpush1.msra.mxu0 0.0
    %8055 = vmatprep.subr.mxu0 0.0
    %8056 = vmatpush1.msra.mxu0 0.0
    %8057 = vmatprep.subr.mxu0 0.0
    %8058 = vmatpush1.msra.mxu0 0.0
    %8059 = vmatprep.subr.mxu0 0.0
    %8060 = vmatpush1.msra.mxu0 0.0
    %8061 = vmatprep.subr.mxu0 0.0
    %8062 = vmatpush1.msra.mxu0 0.0
    %8063 = vmatprep.subr.mxu0 0.0
    %8064 = vmatpush1.msra.mxu0 0.0
    %8065 = vmatprep.subr.mxu0 0.0
    %8066 = vmatpush1.msra.mxu0 0.0
    %8067 = vmatprep.subr.mxu0 0.0
    %8068 = vmatpush1.msra.mxu0 0.0
    %8069 = vmatprep.subr.mxu0 0.0
    %8070 = vmatpush1.msra.mxu0 0.0
    %8071 = vmatprep.subr.mxu0 0.0
    %8072 = vmatpush1.msra.mxu0 0.0
    %8073 = vmatprep.subr.mxu0 0.0
    %8074 = vmatpush1.msra.mxu0 0.0
    %8075 = vmatprep.subr.mxu0 0.0
    %8076 = vmatpush1.msra.mxu0 0.0
    %8077 = vmatprep.subr.mxu0 0.0
    %8078 = vmatpush1.msra.mxu0 0.0
    %8079 = vmatprep.subr.mxu0 0.0
    %8080 = vmatpush1.msra.mxu0 0.0
    %8081 = vmatprep.subr.mxu0 0.0
    %8082 = vmatpush1.msra.mxu0 0.0
    %8083 = vmatprep.subr.mxu0 0.0
    %8084 = vmatpush1.msra.mxu0 0.0
    %8085 = vmatprep.subr.mxu0 0.0
    %8086 = vmatpush1.msra.mxu0 0.0
    %8087 = vmatprep.subr.mxu0 0.0
    %8088 = vmatpush1.msra.mxu0 0.0
    %8089 = vmatprep.mubr.f32.mxu0 0.0
    %v8090 = vand.u32 %v7769, 4294901760
    %v8091 = vsub.f32 %v7769, %v8090
    %v8092 = vand.u32 %v8091, 4294901760
    %8093 = vmatmul.mubr.f32.gmra.mrb[0].mxu0 %v8092
    %v8094 = vpop.f32.mrb[0].mxu0
    %v8095 = vadd.f32 %v8018, %v8094
    %v8096 = vpop.f32.mrb[0].mxu0
    %8097 = vdwg.mxu0
    %8098 = vmatprep.subr.mxu0 0.0
    %v8099 = vand.u32 %v7764, 4294901760
    %v8100 = vsub.f32 %v7764, %v8099
    %v8101 = vand.u32 %v8100, 4294901760
    %8102 = vmatpush1.msra.mxu0 %v8101
    %8103 = vmatprep.subr.mxu0 0.0
    %v8104 = vand.u32 %v7765, 4294901760
    %v8105 = vsub.f32 %v7765, %v8104
    %v8106 = vand.u32 %v8105, 4294901760
    %8107 = vmatpush1.msra.mxu0 %v8106
    %8108 = vmatprep.subr.mxu0 0.0
    %v8109 = vand.u32 %v7766, 4294901760
    %v8110 = vsub.f32 %v7766, %v8109
    %v8111 = vand.u32 %v8110, 4294901760
    %8112 = vmatpush1.msra.mxu0 %v8111
    %8113 = vmatprep.subr.mxu0 0.0
    %v8114 = vand.u32 %v7767, 4294901760
    %v8115 = vsub.f32 %v7767, %v8114
    %v8116 = vand.u32 %v8115, 4294901760
    %8117 = vmatpush1.msra.mxu0 %v8116
    %8118 = vmatprep.subr.mxu0 0.0
    %8119 = vmatpush1.msra.mxu0 0.0
    %8120 = vmatprep.subr.mxu0 0.0
    %8121 = vmatpush1.msra.mxu0 0.0
    %8122 = vmatprep.subr.mxu0 0.0
    %8123 = vmatpush1.msra.mxu0 0.0
    %8124 = vmatprep.subr.mxu0 0.0
    %8125 = vmatpush1.msra.mxu0 0.0
    %8126 = vmatprep.subr.mxu0 0.0
    %8127 = vmatpush1.msra.mxu0 0.0
    %8128 = vmatprep.subr.mxu0 0.0
    %8129 = vmatpush1.msra.mxu0 0.0
    %8130 = vmatprep.subr.mxu0 0.0
    %8131 = vmatpush1.msra.mxu0 0.0
    %8132 = vmatprep.subr.mxu0 0.0
    %8133 = vmatpush1.msra.mxu0 0.0
    %8134 = vmatprep.subr.mxu0 0.0
    %8135 = vmatpush1.msra.mxu0 0.0
    %8136 = vmatprep.subr.mxu0 0.0
    %8137 = vmatpush1.msra.mxu0 0.0
    %8138 = vmatprep.subr.mxu0 0.0
    %8139 = vmatpush1.msra.mxu0 0.0
    %8140 = vmatprep.subr.mxu0 0.0
    %8141 = vmatpush1.msra.mxu0 0.0
    %8142 = vmatprep.subr.mxu0 0.0
    %8143 = vmatpush1.msra.mxu0 0.0
    %8144 = vmatprep.subr.mxu0 0.0
    %8145 = vmatpush1.msra.mxu0 0.0
    %8146 = vmatprep.subr.mxu0 0.0
    %8147 = vmatpush1.msra.mxu0 0.0
    %8148 = vmatprep.subr.mxu0 0.0
    %8149 = vmatpush1.msra.mxu0 0.0
    %8150 = vmatprep.subr.mxu0 0.0
    %8151 = vmatpush1.msra.mxu0 0.0
    %8152 = vmatprep.subr.mxu0 0.0
    %8153 = vmatpush1.msra.mxu0 0.0
    %8154 = vmatprep.subr.mxu0 0.0
    %8155 = vmatpush1.msra.mxu0 0.0
    %8156 = vmatprep.subr.mxu0 0.0
    %8157 = vmatpush1.msra.mxu0 0.0
    %8158 = vmatprep.subr.mxu0 0.0
    %8159 = vmatpush1.msra.mxu0 0.0
    %8160 = vmatprep.subr.mxu0 0.0
    %8161 = vmatpush1.msra.mxu0 0.0
    %8162 = vmatprep.subr.mxu0 0.0
    %8163 = vmatpush1.msra.mxu0 0.0
    %8164 = vmatprep.subr.mxu0 0.0
    %8165 = vmatpush1.msra.mxu0 0.0
    %8166 = vmatprep.subr.mxu0 0.0
    %8167 = vmatpush1.msra.mxu0 0.0
    %8168 = vmatprep.subr.mxu0 0.0
    %8169 = vmatpush1.msra.mxu0 0.0
    %8170 = vmatprep.subr.mxu0 0.0
    %8171 = vmatpush1.msra.mxu0 0.0
    %8172 = vmatprep.subr.mxu0 0.0
    %8173 = vmatpush1.msra.mxu0 0.0
    %8174 = vmatprep.mubr.f32.mxu0 0.0
    %v8175 = vand.u32 %v7769, 4294901760
    %8176 = vmatmul.mubr.f32.gmra.mrb[0].mxu0 %v8175
    %v8177 = vpop.f32.mrb[0].mxu0
    %v8178 = vadd.f32 %v8095, %v8177
    %v8179 = vpop.f32.mrb[0].mxu0
    %8180 = vdwg.mxu0
    %8181 = vmatprep.subr.mxu0 0.0
    %v8182 = vand.u32 %v7764, 4294901760
    %8183 = vmatpush1.msra.mxu0 %v8182
    %8184 = vmatprep.subr.mxu0 0.0
    %v8185 = vand.u32 %v7765, 4294901760
    %8186 = vmatpush1.msra.mxu0 %v8185
    %8187 = vmatprep.subr.mxu0 0.0
    %v8188 = vand.u32 %v7766, 4294901760
    %8189 = vmatpush1.msra.mxu0 %v8188
    %8190 = vmatprep.subr.mxu0 0.0
    %v8191 = vand.u32 %v7767, 4294901760
    %8192 = vmatpush1.msra.mxu0 %v8191
    %8193 = vmatprep.subr.mxu0 0.0
    %8194 = vmatpush1.msra.mxu0 0.0
    %8195 = vmatprep.subr.mxu0 0.0
    %8196 = vmatpush1.msra.mxu0 0.0
    %8197 = vmatprep.subr.mxu0 0.0
    %8198 = vmatpush1.msra.mxu0 0.0
    %8199 = vmatprep.subr.mxu0 0.0
    %8200 = vmatpush1.msra.mxu0 0.0
    %8201 = vmatprep.subr.mxu0 0.0
    %8202 = vmatpush1.msra.mxu0 0.0
    %8203 = vmatprep.subr.mxu0 0.0
    %8204 = vmatpush1.msra.mxu0 0.0
    %8205 = vmatprep.subr.mxu0 0.0
    %8206 = vmatpush1.msra.mxu0 0.0
    %8207 = vmatprep.subr.mxu0 0.0
    %8208 = vmatpush1.msra.mxu0 0.0
    %8209 = vmatprep.subr.mxu0 0.0
    %8210 = vmatpush1.msra.mxu0 0.0
    %8211 = vmatprep.subr.mxu0 0.0
    %8212 = vmatpush1.msra.mxu0 0.0
    %8213 = vmatprep.subr.mxu0 0.0
    %8214 = vmatpush1.msra.mxu0 0.0
    %8215 = vmatprep.subr.mxu0 0.0
    %8216 = vmatpush1.msra.mxu0 0.0
    %8217 = vmatprep.subr.mxu0 0.0
    %8218 = vmatpush1.msra.mxu0 0.0
    %8219 = vmatprep.subr.mxu0 0.0
    %8220 = vmatpush1.msra.mxu0 0.0
    %8221 = vmatprep.subr.mxu0 0.0
    %8222 = vmatpush1.msra.mxu0 0.0
    %8223 = vmatprep.subr.mxu0 0.0
    %8224 = vmatpush1.msra.mxu0 0.0
    %8225 = vmatprep.subr.mxu0 0.0
    %8226 = vmatpush1.msra.mxu0 0.0
    %8227 = vmatprep.subr.mxu0 0.0
    %8228 = vmatpush1.msra.mxu0 0.0
    %8229 = vmatprep.subr.mxu0 0.0
    %8230 = vmatpush1.msra.mxu0 0.0
    %8231 = vmatprep.subr.mxu0 0.0
    %8232 = vmatpush1.msra.mxu0 0.0
    %8233 = vmatprep.subr.mxu0 0.0
    %8234 = vmatpush1.msra.mxu0 0.0
    %8235 = vmatprep.subr.mxu0 0.0
    %8236 = vmatpush1.msra.mxu0 0.0
    %8237 = vmatprep.subr.mxu0 0.0
    %8238 = vmatpush1.msra.mxu0 0.0
    %8239 = vmatprep.subr.mxu0 0.0
    %8240 = vmatpush1.msra.mxu0 0.0
    %8241 = vmatprep.subr.mxu0 0.0
    %8242 = vmatpush1.msra.mxu0 0.0
    %8243 = vmatprep.subr.mxu0 0.0
    %8244 = vmatpush1.msra.mxu0 0.0
    %8245 = vmatprep.subr.mxu0 0.0
    %8246 = vmatpush1.msra.mxu0 0.0
    %8247 = vmatprep.subr.mxu0 0.0
    %8248 = vmatpush1.msra.mxu0 0.0
    %8249 = vmatprep.mubr.f32.mxu0 0.0
    %v8250 = vand.u32 %v7769, 4294901760
    %8251 = vmatmul.mubr.f32.gmra.mrb[0].mxu0 %v8250
    %v8252 = vpop.f32.mrb[0].mxu0
    %v8253 = vadd.f32 %v8178, %v8252
    %v8254 = vpop.f32.mrb[0].mxu0
    %8255 = vdwg.mxu0
    %v8256 = vadd.f32 %v7762, %v8253
    %v8257 = vxor.u32 %v8256, 2147483648
    %v8258 = vmul.f32 %v8257, 1.442695
    %v8259 = vpow.pop %v8258
    %v8260 = vadd.f32 %v8259, 1.0
    %v8261 = vrcp.pop %v8260
    %v8262 = vmul.f32 1.0, %v8261
    %v8263 = vtanh.pop %v8256
    %v8264 = vld [vmem:[#allocation6] sm:$0x3]
    %8266 = vrot.lane.b32.xlu0 %v8264, 32
    %v8267 = vpop.permute.xlu0 %8266
    %v8269 = vmul.f32 %v8262, %v8267
    %8271 = vrot.lane.b32.xlu0 %v8263, 64
    %v8272 = vpop.permute.xlu0 %8271
    %v8274 = vmul.f32 %v8262, %v8272
    %8276 = vrot.lane.b32.xlu0 %v8274, 32
    %v8277 = vpop.permute.xlu0 %8276
    %v8279 = vadd.f32 %v8269, %v8277
    %v8280 = vtanh.pop %v8279
    %8282 = vrot.lane.b32.xlu0 %v8280, 64
    %v8283 = vpop.permute.xlu0 %8282
    %v8285 = vmul.f32 %v8262, %v8283
    %8287 = vrot.lane.b32.xlu0 %v8279, 96
    %v8288 = vpop.permute.xlu0 %8287
    %8290 = vst.msk [vmem:[#allocation6] sm:$0x3] %vm189, %v8288
    %8292 = vrot.lane.b32.xlu0 %v8285, 32
    %v8293 = vpop.permute.xlu0 %8292
    %8295 = vst.msk [vmem:[#allocation5] sm:$0x3] %vm189, %v8293
    %s8296 = sld [smem:[#allocation12]]
    %p8297 = scmp.eq.s32.totalorder %s8296, 5
    // Predicated region
    $region98: #{tpu_custom_call.1} parent=1 // pred_check
      %p8298 = pneg %p8297
    $region99: #{tpu_custom_call.1} parent=1 // pred_check_branch
      %8300 = sbr.rel (%p8298) target = $region101
    $region100: #{tpu_custom_call.1} parent=1 // pred_region
      %8301 = vst.msk [vmem:[#allocation20] sm:$0x1] %vm127, %v8293
    $region101: #{tpu_custom_call.1} parent=1 // pred_fallthru
      _
    %s8302 = sld [smem:[#allocation12 + $0x1]]
    %p8303 = scmp.eq.s32.totalorder %s8302, 5
    // Predicated region
    $region102: #{tpu_custom_call.1} parent=1 // pred_check
      %p8304 = pneg %p8303
    $region103: #{tpu_custom_call.1} parent=1 // pred_check_branch
      %8306 = sbr.rel (%p8304) target = $region105
    $region104: #{tpu_custom_call.1} parent=1 // pred_region
      %vm8307 = vcmask 254977
      %8308 = vst.msk [vmem:[#allocation20] sm:$0x2] %vm8307, %v8293
    $region105: #{tpu_custom_call.1} parent=1 // pred_fallthru
      _
    %v8309 = vld [vmem:[#allocation3 + $0xa] sm:$0x3]
    %v8310 = vld [vmem:[#allocation5] sm:$0x3]
    %v8311 = vld [vmem:[#allocation19] sm:$0xff]
    %v8312 = vld [vmem:[#allocation19 + $0x8] sm:$0xff]
    %v8313 = vld [vmem:[#allocation19 + $0x10] sm:$0xff]
    %v8314 = vld [vmem:[#allocation19 + $0x18] sm:$0xff]
    %v8316 = vsel %vm204, %v8310, 0
    %8318 = vmatprep.subr.mxu0 0.0
    %v8319 = vand.u32 %v8311, 4294901760
    %8320 = vmatpush1.msra.mxu0 %v8319
    %8321 = vmatprep.subr.mxu0 0.0
    %v8322 = vand.u32 %v8312, 4294901760
    %8323 = vmatpush1.msra.mxu0 %v8322
    %8324 = vmatprep.subr.mxu0 0.0
    %v8325 = vand.u32 %v8313, 4294901760
    %8326 = vmatpush1.msra.mxu0 %v8325
    %8327 = vmatprep.subr.mxu0 0.0
    %v8328 = vand.u32 %v8314, 4294901760
    %8329 = vmatpush1.msra.mxu0 %v8328
    %8330 = vmatprep.subr.mxu0 0.0
    %8331 = vmatpush1.msra.mxu0 0.0
    %8332 = vmatprep.subr.mxu0 0.0
    %8333 = vmatpush1.msra.mxu0 0.0
    %8334 = vmatprep.subr.mxu0 0.0
    %8335 = vmatpush1.msra.mxu0 0.0
    %8336 = vmatprep.subr.mxu0 0.0
    %8337 = vmatpush1.msra.mxu0 0.0
    %8338 = vmatprep.subr.mxu0 0.0
    %8339 = vmatpush1.msra.mxu0 0.0
    %8340 = vmatprep.subr.mxu0 0.0
    %8341 = vmatpush1.msra.mxu0 0.0
    %8342 = vmatprep.subr.mxu0 0.0
    %8343 = vmatpush1.msra.mxu0 0.0
    %8344 = vmatprep.subr.mxu0 0.0
    %8345 = vmatpush1.msra.mxu0 0.0
    %8346 = vmatprep.subr.mxu0 0.0
    %8347 = vmatpush1.msra.mxu0 0.0
    %8348 = vmatprep.subr.mxu0 0.0
    %8349 = vmatpush1.msra.mxu0 0.0
    %8350 = vmatprep.subr.mxu0 0.0
    %8351 = vmatpush1.msra.mxu0 0.0
    %8352 = vmatprep.subr.mxu0 0.0
    %8353 = vmatpush1.msra.mxu0 0.0
    %8354 = vmatprep.subr.mxu0 0.0
    %8355 = vmatpush1.msra.mxu0 0.0
    %8356 = vmatprep.subr.mxu0 0.0
    %8357 = vmatpush1.msra.mxu0 0.0
    %8358 = vmatprep.subr.mxu0 0.0
    %8359 = vmatpush1.msra.mxu0 0.0
    %8360 = vmatprep.subr.mxu0 0.0
    %8361 = vmatpush1.msra.mxu0 0.0
    %8362 = vmatprep.subr.mxu0 0.0
    %8363 = vmatpush1.msra.mxu0 0.0
    %8364 = vmatprep.subr.mxu0 0.0
    %8365 = vmatpush1.msra.mxu0 0.0
    %8366 = vmatprep.subr.mxu0 0.0
    %8367 = vmatpush1.msra.mxu0 0.0
    %8368 = vmatprep.subr.mxu0 0.0
    %8369 = vmatpush1.msra.mxu0 0.0
    %8370 = vmatprep.subr.mxu0 0.0
    %8371 = vmatpush1.msra.mxu0 0.0
    %8372 = vmatprep.subr.mxu0 0.0
    %8373 = vmatpush1.msra.mxu0 0.0
    %8374 = vmatprep.subr.mxu0 0.0
    %8375 = vmatpush1.msra.mxu0 0.0
    %8376 = vmatprep.subr.mxu0 0.0
    %8377 = vmatpush1.msra.mxu0 0.0
    %8378 = vmatprep.subr.mxu0 0.0
    %8379 = vmatpush1.msra.mxu0 0.0
    %8380 = vmatprep.subr.mxu0 0.0
    %8381 = vmatpush1.msra.mxu0 0.0
    %8382 = vmatprep.subr.mxu0 0.0
    %8383 = vmatpush1.msra.mxu0 0.0
    %8384 = vmatprep.subr.mxu0 0.0
    %8385 = vmatpush1.msra.mxu0 0.0
    %8386 = vmatprep.mubr.f32.mxu0 0.0
    %v8387 = vand.u32 %v8316, 4294901760
    %v8388 = vsub.f32 %v8316, %v8387
    %v8389 = vand.u32 %v8388, 4294901760
    %v8390 = vsub.f32 %v8388, %v8389
    %v8391 = vand.u32 %v8390, 4294901760
    %8392 = vmatmul.mubr.f32.gmra.mrb[0].mxu0 %v8391
    %v8393 = vpop.f32.mrb[0].mxu0
    %v8394 = vadd.f32 0.0, %v8393
    %v8395 = vpop.f32.mrb[0].mxu0
    %8396 = vdwg.mxu0
    %8397 = vmatprep.subr.mxu0 0.0
    %v8398 = vand.u32 %v8311, 4294901760
    %v8399 = vsub.f32 %v8311, %v8398
    %v8400 = vand.u32 %v8399, 4294901760
    %v8401 = vsub.f32 %v8399, %v8400
    %v8402 = vand.u32 %v8401, 4294901760
    %8403 = vmatpush1.msra.mxu0 %v8402
    %8404 = vmatprep.subr.mxu0 0.0
    %v8405 = vand.u32 %v8312, 4294901760
    %v8406 = vsub.f32 %v8312, %v8405
    %v8407 = vand.u32 %v8406, 4294901760
    %v8408 = vsub.f32 %v8406, %v8407
    %v8409 = vand.u32 %v8408, 4294901760
    %8410 = vmatpush1.msra.mxu0 %v8409
    %8411 = vmatprep.subr.mxu0 0.0
    %v8412 = vand.u32 %v8313, 4294901760
    %v8413 = vsub.f32 %v8313, %v8412
    %v8414 = vand.u32 %v8413, 4294901760
    %v8415 = vsub.f32 %v8413, %v8414
    %v8416 = vand.u32 %v8415, 4294901760
    %8417 = vmatpush1.msra.mxu0 %v8416
    %8418 = vmatprep.subr.mxu0 0.0
    %v8419 = vand.u32 %v8314, 4294901760
    %v8420 = vsub.f32 %v8314, %v8419
    %v8421 = vand.u32 %v8420, 4294901760
    %v8422 = vsub.f32 %v8420, %v8421
    %v8423 = vand.u32 %v8422, 4294901760
    %8424 = vmatpush1.msra.mxu0 %v8423
    %8425 = vmatprep.subr.mxu0 0.0
    %8426 = vmatpush1.msra.mxu0 0.0
    %8427 = vmatprep.subr.mxu0 0.0
    %8428 = vmatpush1.msra.mxu0 0.0
    %8429 = vmatprep.subr.mxu0 0.0
    %8430 = vmatpush1.msra.mxu0 0.0
    %8431 = vmatprep.subr.mxu0 0.0
    %8432 = vmatpush1.msra.mxu0 0.0
    %8433 = vmatprep.subr.mxu0 0.0
    %8434 = vmatpush1.msra.mxu0 0.0
    %8435 = vmatprep.subr.mxu0 0.0
    %8436 = vmatpush1.msra.mxu0 0.0
    %8437 = vmatprep.subr.mxu0 0.0
    %8438 = vmatpush1.msra.mxu0 0.0
    %8439 = vmatprep.subr.mxu0 0.0
    %8440 = vmatpush1.msra.mxu0 0.0
    %8441 = vmatprep.subr.mxu0 0.0
    %8442 = vmatpush1.msra.mxu0 0.0
    %8443 = vmatprep.subr.mxu0 0.0
    %8444 = vmatpush1.msra.mxu0 0.0
    %8445 = vmatprep.subr.mxu0 0.0
    %8446 = vmatpush1.msra.mxu0 0.0
    %8447 = vmatprep.subr.mxu0 0.0
    %8448 = vmatpush1.msra.mxu0 0.0
    %8449 = vmatprep.subr.mxu0 0.0
    %8450 = vmatpush1.msra.mxu0 0.0
    %8451 = vmatprep.subr.mxu0 0.0
    %8452 = vmatpush1.msra.mxu0 0.0
    %8453 = vmatprep.subr.mxu0 0.0
    %8454 = vmatpush1.msra.mxu0 0.0
    %8455 = vmatprep.subr.mxu0 0.0
    %8456 = vmatpush1.msra.mxu0 0.0
    %8457 = vmatprep.subr.mxu0 0.0
    %8458 = vmatpush1.msra.mxu0 0.0
    %8459 = vmatprep.subr.mxu0 0.0
    %8460 = vmatpush1.msra.mxu0 0.0
    %8461 = vmatprep.subr.mxu0 0.0
    %8462 = vmatpush1.msra.mxu0 0.0
    %8463 = vmatprep.subr.mxu0 0.0
    %8464 = vmatpush1.msra.mxu0 0.0
    %8465 = vmatprep.subr.mxu0 0.0
    %8466 = vmatpush1.msra.mxu0 0.0
    %8467 = vmatprep.subr.mxu0 0.0
    %8468 = vmatpush1.msra.mxu0 0.0
    %8469 = vmatprep.subr.mxu0 0.0
    %8470 = vmatpush1.msra.mxu0 0.0
    %8471 = vmatprep.subr.mxu0 0.0
    %8472 = vmatpush1.msra.mxu0 0.0
    %8473 = vmatprep.subr.mxu0 0.0
    %8474 = vmatpush1.msra.mxu0 0.0
    %8475 = vmatprep.subr.mxu0 0.0
    %8476 = vmatpush1.msra.mxu0 0.0
    %8477 = vmatprep.subr.mxu0 0.0
    %8478 = vmatpush1.msra.mxu0 0.0
    %8479 = vmatprep.subr.mxu0 0.0
    %8480 = vmatpush1.msra.mxu0 0.0
    %8481 = vmatprep.mubr.f32.mxu0 0.0
    %v8482 = vand.u32 %v8316, 4294901760
    %8483 = vmatmul.mubr.f32.gmra.mrb[0].mxu0 %v8482
    %v8484 = vpop.f32.mrb[0].mxu0
    %v8485 = vadd.f32 %v8394, %v8484
    %v8486 = vpop.f32.mrb[0].mxu0
    %8487 = vdwg.mxu0
    %8488 = vmatprep.subr.mxu0 0.0
    %v8489 = vand.u32 %v8311, 4294901760
    %v8490 = vsub.f32 %v8311, %v8489
    %8491 = vmatpush1.msra.mxu0 %v8490
    %8492 = vmatprep.subr.mxu0 0.0
    %v8493 = vand.u32 %v8312, 4294901760
    %v8494 = vsub.f32 %v8312, %v8493
    %8495 = vmatpush1.msra.mxu0 %v8494
    %8496 = vmatprep.subr.mxu0 0.0
    %v8497 = vand.u32 %v8313, 4294901760
    %v8498 = vsub.f32 %v8313, %v8497
    %8499 = vmatpush1.msra.mxu0 %v8498
    %8500 = vmatprep.subr.mxu0 0.0
    %v8501 = vand.u32 %v8314, 4294901760
    %v8502 = vsub.f32 %v8314, %v8501
    %8503 = vmatpush1.msra.mxu0 %v8502
    %8504 = vmatprep.subr.mxu0 0.0
    %8505 = vmatpush1.msra.mxu0 0.0
    %8506 = vmatprep.subr.mxu0 0.0
    %8507 = vmatpush1.msra.mxu0 0.0
    %8508 = vmatprep.subr.mxu0 0.0
    %8509 = vmatpush1.msra.mxu0 0.0
    %8510 = vmatprep.subr.mxu0 0.0
    %8511 = vmatpush1.msra.mxu0 0.0
    %8512 = vmatprep.subr.mxu0 0.0
    %8513 = vmatpush1.msra.mxu0 0.0
    %8514 = vmatprep.subr.mxu0 0.0
    %8515 = vmatpush1.msra.mxu0 0.0
    %8516 = vmatprep.subr.mxu0 0.0
    %8517 = vmatpush1.msra.mxu0 0.0
    %8518 = vmatprep.subr.mxu0 0.0
    %8519 = vmatpush1.msra.mxu0 0.0
    %8520 = vmatprep.subr.mxu0 0.0
    %8521 = vmatpush1.msra.mxu0 0.0
    %8522 = vmatprep.subr.mxu0 0.0
    %8523 = vmatpush1.msra.mxu0 0.0
    %8524 = vmatprep.subr.mxu0 0.0
    %8525 = vmatpush1.msra.mxu0 0.0
    %8526 = vmatprep.subr.mxu0 0.0
    %8527 = vmatpush1.msra.mxu0 0.0
    %8528 = vmatprep.subr.mxu0 0.0
    %8529 = vmatpush1.msra.mxu0 0.0
    %8530 = vmatprep.subr.mxu0 0.0
    %8531 = vmatpush1.msra.mxu0 0.0
    %8532 = vmatprep.subr.mxu0 0.0
    %8533 = vmatpush1.msra.mxu0 0.0
    %8534 = vmatprep.subr.mxu0 0.0
    %8535 = vmatpush1.msra.mxu0 0.0
    %8536 = vmatprep.subr.mxu0 0.0
    %8537 = vmatpush1.msra.mxu0 0.0
    %8538 = vmatprep.subr.mxu0 0.0
    %8539 = vmatpush1.msra.mxu0 0.0
    %8540 = vmatprep.subr.mxu0 0.0
    %8541 = vmatpush1.msra.mxu0 0.0
    %8542 = vmatprep.subr.mxu0 0.0
    %8543 = vmatpush1.msra.mxu0 0.0
    %8544 = vmatprep.subr.mxu0 0.0
    %8545 = vmatpush1.msra.mxu0 0.0
    %8546 = vmatprep.subr.mxu0 0.0
    %8547 = vmatpush1.msra.mxu0 0.0
    %8548 = vmatprep.subr.mxu0 0.0
    %8549 = vmatpush1.msra.mxu0 0.0
    %8550 = vmatprep.subr.mxu0 0.0
    %8551 = vmatpush1.msra.mxu0 0.0
    %8552 = vmatprep.subr.mxu0 0.0
    %8553 = vmatpush1.msra.mxu0 0.0
    %8554 = vmatprep.subr.mxu0 0.0
    %8555 = vmatpush1.msra.mxu0 0.0
    %8556 = vmatprep.subr.mxu0 0.0
    %8557 = vmatpush1.msra.mxu0 0.0
    %8558 = vmatprep.subr.mxu0 0.0
    %8559 = vmatpush1.msra.mxu0 0.0
    %8560 = vmatprep.mubr.f32.mxu0 0.0
    %v8561 = vand.u32 %v8316, 4294901760
    %v8562 = vsub.f32 %v8316, %v8561
    %8563 = vmatmul.mubr.f32.gmra.mrb[0].mxu0 %v8562
    %v8564 = vpop.f32.mrb[0].mxu0
    %v8565 = vadd.f32 %v8485, %v8564
    %v8566 = vpop.f32.mrb[0].mxu0
    %8567 = vdwg.mxu0
    %8568 = vmatprep.subr.mxu0 0.0
    %v8569 = vand.u32 %v8311, 4294901760
    %8570 = vmatpush1.msra.mxu0 %v8569
    %8571 = vmatprep.subr.mxu0 0.0
    %v8572 = vand.u32 %v8312, 4294901760
    %8573 = vmatpush1.msra.mxu0 %v8572
    %8574 = vmatprep.subr.mxu0 0.0
    %v8575 = vand.u32 %v8313, 4294901760
    %8576 = vmatpush1.msra.mxu0 %v8575
    %8577 = vmatprep.subr.mxu0 0.0
    %v8578 = vand.u32 %v8314, 4294901760
    %8579 = vmatpush1.msra.mxu0 %v8578
    %8580 = vmatprep.subr.mxu0 0.0
    %8581 = vmatpush1.msra.mxu0 0.0
    %8582 = vmatprep.subr.mxu0 0.0
    %8583 = vmatpush1.msra.mxu0 0.0
    %8584 = vmatprep.subr.mxu0 0.0
    %8585 = vmatpush1.msra.mxu0 0.0
    %8586 = vmatprep.subr.mxu0 0.0
    %8587 = vmatpush1.msra.mxu0 0.0
    %8588 = vmatprep.subr.mxu0 0.0
    %8589 = vmatpush1.msra.mxu0 0.0
    %8590 = vmatprep.subr.mxu0 0.0
    %8591 = vmatpush1.msra.mxu0 0.0
    %8592 = vmatprep.subr.mxu0 0.0
    %8593 = vmatpush1.msra.mxu0 0.0
    %8594 = vmatprep.subr.mxu0 0.0
    %8595 = vmatpush1.msra.mxu0 0.0
    %8596 = vmatprep.subr.mxu0 0.0
    %8597 = vmatpush1.msra.mxu0 0.0
    %8598 = vmatprep.subr.mxu0 0.0
    %8599 = vmatpush1.msra.mxu0 0.0
    %8600 = vmatprep.subr.mxu0 0.0
    %8601 = vmatpush1.msra.mxu0 0.0
    %8602 = vmatprep.subr.mxu0 0.0
    %8603 = vmatpush1.msra.mxu0 0.0
    %8604 = vmatprep.subr.mxu0 0.0
    %8605 = vmatpush1.msra.mxu0 0.0
    %8606 = vmatprep.subr.mxu0 0.0
    %8607 = vmatpush1.msra.mxu0 0.0
    %8608 = vmatprep.subr.mxu0 0.0
    %8609 = vmatpush1.msra.mxu0 0.0
    %8610 = vmatprep.subr.mxu0 0.0
    %8611 = vmatpush1.msra.mxu0 0.0
    %8612 = vmatprep.subr.mxu0 0.0
    %8613 = vmatpush1.msra.mxu0 0.0
    %8614 = vmatprep.subr.mxu0 0.0
    %8615 = vmatpush1.msra.mxu0 0.0
    %8616 = vmatprep.subr.mxu0 0.0
    %8617 = vmatpush1.msra.mxu0 0.0
    %8618 = vmatprep.subr.mxu0 0.0
    %8619 = vmatpush1.msra.mxu0 0.0
    %8620 = vmatprep.subr.mxu0 0.0
    %8621 = vmatpush1.msra.mxu0 0.0
    %8622 = vmatprep.subr.mxu0 0.0
    %8623 = vmatpush1.msra.mxu0 0.0
    %8624 = vmatprep.subr.mxu0 0.0
    %8625 = vmatpush1.msra.mxu0 0.0
    %8626 = vmatprep.subr.mxu0 0.0
    %8627 = vmatpush1.msra.mxu0 0.0
    %8628 = vmatprep.subr.mxu0 0.0
    %8629 = vmatpush1.msra.mxu0 0.0
    %8630 = vmatprep.subr.mxu0 0.0
    %8631 = vmatpush1.msra.mxu0 0.0
    %8632 = vmatprep.subr.mxu0 0.0
    %8633 = vmatpush1.msra.mxu0 0.0
    %8634 = vmatprep.subr.mxu0 0.0
    %8635 = vmatpush1.msra.mxu0 0.0
    %8636 = vmatprep.mubr.f32.mxu0 0.0
    %v8637 = vand.u32 %v8316, 4294901760
    %v8638 = vsub.f32 %v8316, %v8637
    %v8639 = vand.u32 %v8638, 4294901760
    %8640 = vmatmul.mubr.f32.gmra.mrb[0].mxu0 %v8639
    %v8641 = vpop.f32.mrb[0].mxu0
    %v8642 = vadd.f32 %v8565, %v8641
    %v8643 = vpop.f32.mrb[0].mxu0
    %8644 = vdwg.mxu0
    %8645 = vmatprep.subr.mxu0 0.0
    %v8646 = vand.u32 %v8311, 4294901760
    %v8647 = vsub.f32 %v8311, %v8646
    %v8648 = vand.u32 %v8647, 4294901760
    %8649 = vmatpush1.msra.mxu0 %v8648
    %8650 = vmatprep.subr.mxu0 0.0
    %v8651 = vand.u32 %v8312, 4294901760
    %v8652 = vsub.f32 %v8312, %v8651
    %v8653 = vand.u32 %v8652, 4294901760
    %8654 = vmatpush1.msra.mxu0 %v8653
    %8655 = vmatprep.subr.mxu0 0.0
    %v8656 = vand.u32 %v8313, 4294901760
    %v8657 = vsub.f32 %v8313, %v8656
    %v8658 = vand.u32 %v8657, 4294901760
    %8659 = vmatpush1.msra.mxu0 %v8658
    %8660 = vmatprep.subr.mxu0 0.0
    %v8661 = vand.u32 %v8314, 4294901760
    %v8662 = vsub.f32 %v8314, %v8661
    %v8663 = vand.u32 %v8662, 4294901760
    %8664 = vmatpush1.msra.mxu0 %v8663
    %8665 = vmatprep.subr.mxu0 0.0
    %8666 = vmatpush1.msra.mxu0 0.0
    %8667 = vmatprep.subr.mxu0 0.0
    %8668 = vmatpush1.msra.mxu0 0.0
    %8669 = vmatprep.subr.mxu0 0.0
    %8670 = vmatpush1.msra.mxu0 0.0
    %8671 = vmatprep.subr.mxu0 0.0
    %8672 = vmatpush1.msra.mxu0 0.0
    %8673 = vmatprep.subr.mxu0 0.0
    %8674 = vmatpush1.msra.mxu0 0.0
    %8675 = vmatprep.subr.mxu0 0.0
    %8676 = vmatpush1.msra.mxu0 0.0
    %8677 = vmatprep.subr.mxu0 0.0
    %8678 = vmatpush1.msra.mxu0 0.0
    %8679 = vmatprep.subr.mxu0 0.0
    %8680 = vmatpush1.msra.mxu0 0.0
    %8681 = vmatprep.subr.mxu0 0.0
    %8682 = vmatpush1.msra.mxu0 0.0
    %8683 = vmatprep.subr.mxu0 0.0
    %8684 = vmatpush1.msra.mxu0 0.0
    %8685 = vmatprep.subr.mxu0 0.0
    %8686 = vmatpush1.msra.mxu0 0.0
    %8687 = vmatprep.subr.mxu0 0.0
    %8688 = vmatpush1.msra.mxu0 0.0
    %8689 = vmatprep.subr.mxu0 0.0
    %8690 = vmatpush1.msra.mxu0 0.0
    %8691 = vmatprep.subr.mxu0 0.0
    %8692 = vmatpush1.msra.mxu0 0.0
    %8693 = vmatprep.subr.mxu0 0.0
    %8694 = vmatpush1.msra.mxu0 0.0
    %8695 = vmatprep.subr.mxu0 0.0
    %8696 = vmatpush1.msra.mxu0 0.0
    %8697 = vmatprep.subr.mxu0 0.0
    %8698 = vmatpush1.msra.mxu0 0.0
    %8699 = vmatprep.subr.mxu0 0.0
    %8700 = vmatpush1.msra.mxu0 0.0
    %8701 = vmatprep.subr.mxu0 0.0
    %8702 = vmatpush1.msra.mxu0 0.0
    %8703 = vmatprep.subr.mxu0 0.0
    %8704 = vmatpush1.msra.mxu0 0.0
    %8705 = vmatprep.subr.mxu0 0.0
    %8706 = vmatpush1.msra.mxu0 0.0
    %8707 = vmatprep.subr.mxu0 0.0
    %8708 = vmatpush1.msra.mxu0 0.0
    %8709 = vmatprep.subr.mxu0 0.0
    %8710 = vmatpush1.msra.mxu0 0.0
    %8711 = vmatprep.subr.mxu0 0.0
    %8712 = vmatpush1.msra.mxu0 0.0
    %8713 = vmatprep.subr.mxu0 0.0
    %8714 = vmatpush1.msra.mxu0 0.0
    %8715 = vmatprep.subr.mxu0 0.0
    %8716 = vmatpush1.msra.mxu0 0.0
    %8717 = vmatprep.subr.mxu0 0.0
    %8718 = vmatpush1.msra.mxu0 0.0
    %8719 = vmatprep.subr.mxu0 0.0
    %8720 = vmatpush1.msra.mxu0 0.0
    %8721 = vmatprep.mubr.f32.mxu0 0.0
    %v8722 = vand.u32 %v8316, 4294901760
    %8723 = vmatmul.mubr.f32.gmra.mrb[0].mxu0 %v8722
    %v8724 = vpop.f32.mrb[0].mxu0
    %v8725 = vadd.f32 %v8642, %v8724
    %v8726 = vpop.f32.mrb[0].mxu0
    %8727 = vdwg.mxu0
    %8728 = vmatprep.subr.mxu0 0.0
    %v8729 = vand.u32 %v8311, 4294901760
    %8730 = vmatpush1.msra.mxu0 %v8729
    %8731 = vmatprep.subr.mxu0 0.0
    %v8732 = vand.u32 %v8312, 4294901760
    %8733 = vmatpush1.msra.mxu0 %v8732
    %8734 = vmatprep.subr.mxu0 0.0
    %v8735 = vand.u32 %v8313, 4294901760
    %8736 = vmatpush1.msra.mxu0 %v8735
    %8737 = vmatprep.subr.mxu0 0.0
    %v8738 = vand.u32 %v8314, 4294901760
    %8739 = vmatpush1.msra.mxu0 %v8738
    %8740 = vmatprep.subr.mxu0 0.0
    %8741 = vmatpush1.msra.mxu0 0.0
    %8742 = vmatprep.subr.mxu0 0.0
    %8743 = vmatpush1.msra.mxu0 0.0
    %8744 = vmatprep.subr.mxu0 0.0
    %8745 = vmatpush1.msra.mxu0 0.0
    %8746 = vmatprep.subr.mxu0 0.0
    %8747 = vmatpush1.msra.mxu0 0.0
    %8748 = vmatprep.subr.mxu0 0.0
    %8749 = vmatpush1.msra.mxu0 0.0
    %8750 = vmatprep.subr.mxu0 0.0
    %8751 = vmatpush1.msra.mxu0 0.0
    %8752 = vmatprep.subr.mxu0 0.0
    %8753 = vmatpush1.msra.mxu0 0.0
    %8754 = vmatprep.subr.mxu0 0.0
    %8755 = vmatpush1.msra.mxu0 0.0
    %8756 = vmatprep.subr.mxu0 0.0
    %8757 = vmatpush1.msra.mxu0 0.0
    %8758 = vmatprep.subr.mxu0 0.0
    %8759 = vmatpush1.msra.mxu0 0.0
    %8760 = vmatprep.subr.mxu0 0.0
    %8761 = vmatpush1.msra.mxu0 0.0
    %8762 = vmatprep.subr.mxu0 0.0
    %8763 = vmatpush1.msra.mxu0 0.0
    %8764 = vmatprep.subr.mxu0 0.0
    %8765 = vmatpush1.msra.mxu0 0.0
    %8766 = vmatprep.subr.mxu0 0.0
    %8767 = vmatpush1.msra.mxu0 0.0
    %8768 = vmatprep.subr.mxu0 0.0
    %8769 = vmatpush1.msra.mxu0 0.0
    %8770 = vmatprep.subr.mxu0 0.0
    %8771 = vmatpush1.msra.mxu0 0.0
    %8772 = vmatprep.subr.mxu0 0.0
    %8773 = vmatpush1.msra.mxu0 0.0
    %8774 = vmatprep.subr.mxu0 0.0
    %8775 = vmatpush1.msra.mxu0 0.0
    %8776 = vmatprep.subr.mxu0 0.0
    %8777 = vmatpush1.msra.mxu0 0.0
    %8778 = vmatprep.subr.mxu0 0.0
    %8779 = vmatpush1.msra.mxu0 0.0
    %8780 = vmatprep.subr.mxu0 0.0
    %8781 = vmatpush1.msra.mxu0 0.0
    %8782 = vmatprep.subr.mxu0 0.0
    %8783 = vmatpush1.msra.mxu0 0.0
    %8784 = vmatprep.subr.mxu0 0.0
    %8785 = vmatpush1.msra.mxu0 0.0
    %8786 = vmatprep.subr.mxu0 0.0
    %8787 = vmatpush1.msra.mxu0 0.0
    %8788 = vmatprep.subr.mxu0 0.0
    %8789 = vmatpush1.msra.mxu0 0.0
    %8790 = vmatprep.subr.mxu0 0.0
    %8791 = vmatpush1.msra.mxu0 0.0
    %8792 = vmatprep.subr.mxu0 0.0
    %8793 = vmatpush1.msra.mxu0 0.0
    %8794 = vmatprep.subr.mxu0 0.0
    %8795 = vmatpush1.msra.mxu0 0.0
    %8796 = vmatprep.mubr.f32.mxu0 0.0
    %v8797 = vand.u32 %v8316, 4294901760
    %8798 = vmatmul.mubr.f32.gmra.mrb[0].mxu0 %v8797
    %v8799 = vpop.f32.mrb[0].mxu0
    %v8800 = vadd.f32 %v8725, %v8799
    %v8801 = vpop.f32.mrb[0].mxu0
    %8802 = vdwg.mxu0
    %v8803 = vadd.f32 %v8309, %v8800
    %v8804 = vxor.u32 %v8803, 2147483648
    %v8805 = vmul.f32 %v8804, 1.442695
    %v8806 = vpow.pop %v8805
    %v8807 = vadd.f32 %v8806, 1.0
    %v8808 = vrcp.pop %v8807
    %v8809 = vmul.f32 1.0, %v8808
    %v8810 = vtanh.pop %v8803
    %v8811 = vld [vmem:[#allocation6] sm:$0x3]
    %8813 = vrot.lane.b32.xlu0 %v8811, 32
    %v8814 = vpop.permute.xlu0 %8813
    %v8816 = vmul.f32 %v8809, %v8814
    %8818 = vrot.lane.b32.xlu0 %v8810, 64
    %v8819 = vpop.permute.xlu0 %8818
    %v8821 = vmul.f32 %v8809, %v8819
    %8823 = vrot.lane.b32.xlu0 %v8821, 32
    %v8824 = vpop.permute.xlu0 %8823
    %v8826 = vadd.f32 %v8816, %v8824
    %v8827 = vtanh.pop %v8826
    %8829 = vrot.lane.b32.xlu0 %v8827, 64
    %v8830 = vpop.permute.xlu0 %8829
    %v8832 = vmul.f32 %v8809, %v8830
    %8834 = vrot.lane.b32.xlu0 %v8826, 96
    %v8835 = vpop.permute.xlu0 %8834
    %8837 = vst.msk [vmem:[#allocation6] sm:$0x3] %vm189, %v8835
    %8839 = vrot.lane.b32.xlu0 %v8832, 32
    %v8840 = vpop.permute.xlu0 %8839
    %8842 = vst.msk [vmem:[#allocation5] sm:$0x3] %vm189, %v8840
    %s8843 = sld [smem:[#allocation12]]
    %p8844 = scmp.eq.s32.totalorder %s8843, 6
    // Predicated region
    $region106: #{tpu_custom_call.1} parent=1 // pred_check
      %p8845 = pneg %p8844
    $region107: #{tpu_custom_call.1} parent=1 // pred_check_branch
      %8847 = sbr.rel (%p8845) target = $region109
    $region108: #{tpu_custom_call.1} parent=1 // pred_region
      %8848 = vst.msk [vmem:[#allocation20] sm:$0x1] %vm127, %v8840
    $region109: #{tpu_custom_call.1} parent=1 // pred_fallthru
      _
    %s8849 = sld [smem:[#allocation12 + $0x1]]
    %p8850 = scmp.eq.s32.totalorder %s8849, 6
    // Predicated region
    $region110: #{tpu_custom_call.1} parent=1 // pred_check
      %p8851 = pneg %p8850
    $region111: #{tpu_custom_call.1} parent=1 // pred_check_branch
      %8853 = sbr.rel (%p8851) target = $region113
    $region112: #{tpu_custom_call.1} parent=1 // pred_region
      %vm8854 = vcmask 254977
      %8855 = vst.msk [vmem:[#allocation20] sm:$0x2] %vm8854, %v8840
    $region113: #{tpu_custom_call.1} parent=1 // pred_fallthru
      _
    %v8856 = vld [vmem:[#allocation3 + $0xc] sm:$0x3]
    %v8857 = vld [vmem:[#allocation5] sm:$0x3]
    %v8858 = vld [vmem:[#allocation19] sm:$0xff]
    %v8859 = vld [vmem:[#allocation19 + $0x8] sm:$0xff]
    %v8860 = vld [vmem:[#allocation19 + $0x10] sm:$0xff]
    %v8861 = vld [vmem:[#allocation19 + $0x18] sm:$0xff]
    %v8863 = vsel %vm204, %v8857, 0
    %8865 = vmatprep.subr.mxu0 0.0
    %v8866 = vand.u32 %v8858, 4294901760
    %8867 = vmatpush1.msra.mxu0 %v8866
    %8868 = vmatprep.subr.mxu0 0.0
    %v8869 = vand.u32 %v8859, 4294901760
    %8870 = vmatpush1.msra.mxu0 %v8869
    %8871 = vmatprep.subr.mxu0 0.0
    %v8872 = vand.u32 %v8860, 4294901760
    %8873 = vmatpush1.msra.mxu0 %v8872
    %8874 = vmatprep.subr.mxu0 0.0
    %v8875 = vand.u32 %v8861, 4294901760
    %8876 = vmatpush1.msra.mxu0 %v8875
    %8877 = vmatprep.subr.mxu0 0.0
    %8878 = vmatpush1.msra.mxu0 0.0
    %8879 = vmatprep.subr.mxu0 0.0
    %8880 = vmatpush1.msra.mxu0 0.0
    %8881 = vmatprep.subr.mxu0 0.0
    %8882 = vmatpush1.msra.mxu0 0.0
    %8883 = vmatprep.subr.mxu0 0.0
    %8884 = vmatpush1.msra.mxu0 0.0
    %8885 = vmatprep.subr.mxu0 0.0
    %8886 = vmatpush1.msra.mxu0 0.0
    %8887 = vmatprep.subr.mxu0 0.0
    %8888 = vmatpush1.msra.mxu0 0.0
    %8889 = vmatprep.subr.mxu0 0.0
    %8890 = vmatpush1.msra.mxu0 0.0
    %8891 = vmatprep.subr.mxu0 0.0
    %8892 = vmatpush1.msra.mxu0 0.0
    %8893 = vmatprep.subr.mxu0 0.0
    %8894 = vmatpush1.msra.mxu0 0.0
    %8895 = vmatprep.subr.mxu0 0.0
    %8896 = vmatpush1.msra.mxu0 0.0
    %8897 = vmatprep.subr.mxu0 0.0
    %8898 = vmatpush1.msra.mxu0 0.0
    %8899 = vmatprep.subr.mxu0 0.0
    %8900 = vmatpush1.msra.mxu0 0.0
    %8901 = vmatprep.subr.mxu0 0.0
    %8902 = vmatpush1.msra.mxu0 0.0
    %8903 = vmatprep.subr.mxu0 0.0
    %8904 = vmatpush1.msra.mxu0 0.0
    %8905 = vmatprep.subr.mxu0 0.0
    %8906 = vmatpush1.msra.mxu0 0.0
    %8907 = vmatprep.subr.mxu0 0.0
    %8908 = vmatpush1.msra.mxu0 0.0
    %8909 = vmatprep.subr.mxu0 0.0
    %8910 = vmatpush1.msra.mxu0 0.0
    %8911 = vmatprep.subr.mxu0 0.0
    %8912 = vmatpush1.msra.mxu0 0.0
    %8913 = vmatprep.subr.mxu0 0.0
    %8914 = vmatpush1.msra.mxu0 0.0
    %8915 = vmatprep.subr.mxu0 0.0
    %8916 = vmatpush1.msra.mxu0 0.0
    %8917 = vmatprep.subr.mxu0 0.0
    %8918 = vmatpush1.msra.mxu0 0.0
    %8919 = vmatprep.subr.mxu0 0.0
    %8920 = vmatpush1.msra.mxu0 0.0
    %8921 = vmatprep.subr.mxu0 0.0
    %8922 = vmatpush1.msra.mxu0 0.0
    %8923 = vmatprep.subr.mxu0 0.0
    %8924 = vmatpush1.msra.mxu0 0.0
    %8925 = vmatprep.subr.mxu0 0.0
    %8926 = vmatpush1.msra.mxu0 0.0
    %8927 = vmatprep.subr.mxu0 0.0
    %8928 = vmatpush1.msra.mxu0 0.0
    %8929 = vmatprep.subr.mxu0 0.0
    %8930 = vmatpush1.msra.mxu0 0.0
    %8931 = vmatprep.subr.mxu0 0.0
    %8932 = vmatpush1.msra.mxu0 0.0
    %8933 = vmatprep.mubr.f32.mxu0 0.0
    %v8934 = vand.u32 %v8863, 4294901760
    %v8935 = vsub.f32 %v8863, %v8934
    %v8936 = vand.u32 %v8935, 4294901760
    %v8937 = vsub.f32 %v8935, %v8936
    %v8938 = vand.u32 %v8937, 4294901760
    %8939 = vmatmul.mubr.f32.gmra.mrb[0].mxu0 %v8938
    %v8940 = vpop.f32.mrb[0].mxu0
    %v8941 = vadd.f32 0.0, %v8940
    %v8942 = vpop.f32.mrb[0].mxu0
    %8943 = vdwg.mxu0
    %8944 = vmatprep.subr.mxu0 0.0
    %v8945 = vand.u32 %v8858, 4294901760
    %v8946 = vsub.f32 %v8858, %v8945
    %v8947 = vand.u32 %v8946, 4294901760
    %v8948 = vsub.f32 %v8946, %v8947
    %v8949 = vand.u32 %v8948, 4294901760
    %8950 = vmatpush1.msra.mxu0 %v8949
    %8951 = vmatprep.subr.mxu0 0.0
    %v8952 = vand.u32 %v8859, 4294901760
    %v8953 = vsub.f32 %v8859, %v8952
    %v8954 = vand.u32 %v8953, 4294901760
    %v8955 = vsub.f32 %v8953, %v8954
    %v8956 = vand.u32 %v8955, 4294901760
    %8957 = vmatpush1.msra.mxu0 %v8956
    %8958 = vmatprep.subr.mxu0 0.0
    %v8959 = vand.u32 %v8860, 4294901760
    %v8960 = vsub.f32 %v8860, %v8959
    %v8961 = vand.u32 %v8960, 4294901760
    %v8962 = vsub.f32 %v8960, %v8961
    %v8963 = vand.u32 %v8962, 4294901760
    %8964 = vmatpush1.msra.mxu0 %v8963
    %8965 = vmatprep.subr.mxu0 0.0
    %v8966 = vand.u32 %v8861, 4294901760
    %v8967 = vsub.f32 %v8861, %v8966
    %v8968 = vand.u32 %v8967, 4294901760
    %v8969 = vsub.f32 %v8967, %v8968
    %v8970 = vand.u32 %v8969, 4294901760
    %8971 = vmatpush1.msra.mxu0 %v8970
    %8972 = vmatprep.subr.mxu0 0.0
    %8973 = vmatpush1.msra.mxu0 0.0
    %8974 = vmatprep.subr.mxu0 0.0
    %8975 = vmatpush1.msra.mxu0 0.0
    %8976 = vmatprep.subr.mxu0 0.0
    %8977 = vmatpush1.msra.mxu0 0.0
    %8978 = vmatprep.subr.mxu0 0.0
    %8979 = vmatpush1.msra.mxu0 0.0
    %8980 = vmatprep.subr.mxu0 0.0
    %8981 = vmatpush1.msra.mxu0 0.0
    %8982 = vmatprep.subr.mxu0 0.0
    %8983 = vmatpush1.msra.mxu0 0.0
    %8984 = vmatprep.subr.mxu0 0.0
    %8985 = vmatpush1.msra.mxu0 0.0
    %8986 = vmatprep.subr.mxu0 0.0
    %8987 = vmatpush1.msra.mxu0 0.0
    %8988 = vmatprep.subr.mxu0 0.0
    %8989 = vmatpush1.msra.mxu0 0.0
    %8990 = vmatprep.subr.mxu0 0.0
    %8991 = vmatpush1.msra.mxu0 0.0
    %8992 = vmatprep.subr.mxu0 0.0
    %8993 = vmatpush1.msra.mxu0 0.0
    %8994 = vmatprep.subr.mxu0 0.0
    %8995 = vmatpush1.msra.mxu0 0.0
    %8996 = vmatprep.subr.mxu0 0.0
    %8997 = vmatpush1.msra.mxu0 0.0
    %8998 = vmatprep.subr.mxu0 0.0
    %8999 = vmatpush1.msra.mxu0 0.0
    %9000 = vmatprep.subr.mxu0 0.0
    %9001 = vmatpush1.msra.mxu0 0.0
    %9002 = vmatprep.subr.mxu0 0.0
    %9003 = vmatpush1.msra.mxu0 0.0
    %9004 = vmatprep.subr.mxu0 0.0
    %9005 = vmatpush1.msra.mxu0 0.0
    %9006 = vmatprep.subr.mxu0 0.0
    %9007 = vmatpush1.msra.mxu0 0.0
    %9008 = vmatprep.subr.mxu0 0.0
    %9009 = vmatpush1.msra.mxu0 0.0
    %9010 = vmatprep.subr.mxu0 0.0
    %9011 = vmatpush1.msra.mxu0 0.0
    %9012 = vmatprep.subr.mxu0 0.0
    %9013 = vmatpush1.msra.mxu0 0.0
    %9014 = vmatprep.subr.mxu0 0.0
    %9015 = vmatpush1.msra.mxu0 0.0
    %9016 = vmatprep.subr.mxu0 0.0
    %9017 = vmatpush1.msra.mxu0 0.0
    %9018 = vmatprep.subr.mxu0 0.0
    %9019 = vmatpush1.msra.mxu0 0.0
    %9020 = vmatprep.subr.mxu0 0.0
    %9021 = vmatpush1.msra.mxu0 0.0
    %9022 = vmatprep.subr.mxu0 0.0
    %9023 = vmatpush1.msra.mxu0 0.0
    %9024 = vmatprep.subr.mxu0 0.0
    %9025 = vmatpush1.msra.mxu0 0.0
    %9026 = vmatprep.subr.mxu0 0.0
    %9027 = vmatpush1.msra.mxu0 0.0
    %9028 = vmatprep.mubr.f32.mxu0 0.0
    %v9029 = vand.u32 %v8863, 4294901760
    %9030 = vmatmul.mubr.f32.gmra.mrb[0].mxu0 %v9029
    %v9031 = vpop.f32.mrb[0].mxu0
    %v9032 = vadd.f32 %v8941, %v9031
    %v9033 = vpop.f32.mrb[0].mxu0
    %9034 = vdwg.mxu0
    %9035 = vmatprep.subr.mxu0 0.0
    %v9036 = vand.u32 %v8858, 4294901760
    %v9037 = vsub.f32 %v8858, %v9036
    %9038 = vmatpush1.msra.mxu0 %v9037
    %9039 = vmatprep.subr.mxu0 0.0
    %v9040 = vand.u32 %v8859, 4294901760
    %v9041 = vsub.f32 %v8859, %v9040
    %9042 = vmatpush1.msra.mxu0 %v9041
    %9043 = vmatprep.subr.mxu0 0.0
    %v9044 = vand.u32 %v8860, 4294901760
    %v9045 = vsub.f32 %v8860, %v9044
    %9046 = vmatpush1.msra.mxu0 %v9045
    %9047 = vmatprep.subr.mxu0 0.0
    %v9048 = vand.u32 %v8861, 4294901760
    %v9049 = vsub.f32 %v8861, %v9048
    %9050 = vmatpush1.msra.mxu0 %v9049
    %9051 = vmatprep.subr.mxu0 0.0
    %9052 = vmatpush1.msra.mxu0 0.0
    %9053 = vmatprep.subr.mxu0 0.0
    %9054 = vmatpush1.msra.mxu0 0.0
    %9055 = vmatprep.subr.mxu0 0.0
    %9056 = vmatpush1.msra.mxu0 0.0
    %9057 = vmatprep.subr.mxu0 0.0
    %9058 = vmatpush1.msra.mxu0 0.0
    %9059 = vmatprep.subr.mxu0 0.0
    %9060 = vmatpush1.msra.mxu0 0.0
    %9061 = vmatprep.subr.mxu0 0.0
    %9062 = vmatpush1.msra.mxu0 0.0
    %9063 = vmatprep.subr.mxu0 0.0
    %9064 = vmatpush1.msra.mxu0 0.0
    %9065 = vmatprep.subr.mxu0 0.0
    %9066 = vmatpush1.msra.mxu0 0.0
    %9067 = vmatprep.subr.mxu0 0.0
    %9068 = vmatpush1.msra.mxu0 0.0
    %9069 = vmatprep.subr.mxu0 0.0
    %9070 = vmatpush1.msra.mxu0 0.0
    %9071 = vmatprep.subr.mxu0 0.0
    %9072 = vmatpush1.msra.mxu0 0.0
    %9073 = vmatprep.subr.mxu0 0.0
    %9074 = vmatpush1.msra.mxu0 0.0
    %9075 = vmatprep.subr.mxu0 0.0
    %9076 = vmatpush1.msra.mxu0 0.0
    %9077 = vmatprep.subr.mxu0 0.0
    %9078 = vmatpush1.msra.mxu0 0.0
    %9079 = vmatprep.subr.mxu0 0.0
    %9080 = vmatpush1.msra.mxu0 0.0
    %9081 = vmatprep.subr.mxu0 0.0
    %9082 = vmatpush1.msra.mxu0 0.0
    %9083 = vmatprep.subr.mxu0 0.0
    %9084 = vmatpush1.msra.mxu0 0.0
    %9085 = vmatprep.subr.mxu0 0.0
    %9086 = vmatpush1.msra.mxu0 0.0
    %9087 = vmatprep.subr.mxu0 0.0
    %9088 = vmatpush1.msra.mxu0 0.0
    %9089 = vmatprep.subr.mxu0 0.0
    %9090 = vmatpush1.msra.mxu0 0.0
    %9091 = vmatprep.subr.mxu0 0.0
    %9092 = vmatpush1.msra.mxu0 0.0
    %9093 = vmatprep.subr.mxu0 0.0
    %9094 = vmatpush1.msra.mxu0 0.0
    %9095 = vmatprep.subr.mxu0 0.0
    %9096 = vmatpush1.msra.mxu0 0.0
    %9097 = vmatprep.subr.mxu0 0.0
    %9098 = vmatpush1.msra.mxu0 0.0
    %9099 = vmatprep.subr.mxu0 0.0
    %9100 = vmatpush1.msra.mxu0 0.0
    %9101 = vmatprep.subr.mxu0 0.0
    %9102 = vmatpush1.msra.mxu0 0.0
    %9103 = vmatprep.subr.mxu0 0.0
    %9104 = vmatpush1.msra.mxu0 0.0
    %9105 = vmatprep.subr.mxu0 0.0
    %9106 = vmatpush1.msra.mxu0 0.0
    %9107 = vmatprep.mubr.f32.mxu0 0.0
    %v9108 = vand.u32 %v8863, 4294901760
    %v9109 = vsub.f32 %v8863, %v9108
    %9110 = vmatmul.mubr.f32.gmra.mrb[0].mxu0 %v9109
    %v9111 = vpop.f32.mrb[0].mxu0
    %v9112 = vadd.f32 %v9032, %v9111
    %v9113 = vpop.f32.mrb[0].mxu0
    %9114 = vdwg.mxu0
    %9115 = vmatprep.subr.mxu0 0.0
    %v9116 = vand.u32 %v8858, 4294901760
    %9117 = vmatpush1.msra.mxu0 %v9116
    %9118 = vmatprep.subr.mxu0 0.0
    %v9119 = vand.u32 %v8859, 4294901760
    %9120 = vmatpush1.msra.mxu0 %v9119
    %9121 = vmatprep.subr.mxu0 0.0
    %v9122 = vand.u32 %v8860, 4294901760
    %9123 = vmatpush1.msra.mxu0 %v9122
    %9124 = vmatprep.subr.mxu0 0.0
    %v9125 = vand.u32 %v8861, 4294901760
    %9126 = vmatpush1.msra.mxu0 %v9125
    %9127 = vmatprep.subr.mxu0 0.0
    %9128 = vmatpush1.msra.mxu0 0.0
    %9129 = vmatprep.subr.mxu0 0.0
    %9130 = vmatpush1.msra.mxu0 0.0
    %9131 = vmatprep.subr.mxu0 0.0
    %9132 = vmatpush1.msra.mxu0 0.0
    %9133 = vmatprep.subr.mxu0 0.0
    %9134 = vmatpush1.msra.mxu0 0.0
    %9135 = vmatprep.subr.mxu0 0.0
    %9136 = vmatpush1.msra.mxu0 0.0
    %9137 = vmatprep.subr.mxu0 0.0
    %9138 = vmatpush1.msra.mxu0 0.0
    %9139 = vmatprep.subr.mxu0 0.0
    %9140 = vmatpush1.msra.mxu0 0.0
    %9141 = vmatprep.subr.mxu0 0.0
    %9142 = vmatpush1.msra.mxu0 0.0
    %9143 = vmatprep.subr.mxu0 0.0
    %9144 = vmatpush1.msra.mxu0 0.0
    %9145 = vmatprep.subr.mxu0 0.0
    %9146 = vmatpush1.msra.mxu0 0.0
    %9147 = vmatprep.subr.mxu0 0.0
    %9148 = vmatpush1.msra.mxu0 0.0
    %9149 = vmatprep.subr.mxu0 0.0
    %9150 = vmatpush1.msra.mxu0 0.0
    %9151 = vmatprep.subr.mxu0 0.0
    %9152 = vmatpush1.msra.mxu0 0.0
    %9153 = vmatprep.subr.mxu0 0.0
    %9154 = vmatpush1.msra.mxu0 0.0
    %9155 = vmatprep.subr.mxu0 0.0
    %9156 = vmatpush1.msra.mxu0 0.0
    %9157 = vmatprep.subr.mxu0 0.0
    %9158 = vmatpush1.msra.mxu0 0.0
    %9159 = vmatprep.subr.mxu0 0.0
    %9160 = vmatpush1.msra.mxu0 0.0
    %9161 = vmatprep.subr.mxu0 0.0
    %9162 = vmatpush1.msra.mxu0 0.0
    %9163 = vmatprep.subr.mxu0 0.0
    %9164 = vmatpush1.msra.mxu0 0.0
    %9165 = vmatprep.subr.mxu0 0.0
    %9166 = vmatpush1.msra.mxu0 0.0
    %9167 = vmatprep.subr.mxu0 0.0
    %9168 = vmatpush1.msra.mxu0 0.0
    %9169 = vmatprep.subr.mxu0 0.0
    %9170 = vmatpush1.msra.mxu0 0.0
    %9171 = vmatprep.subr.mxu0 0.0
    %9172 = vmatpush1.msra.mxu0 0.0
    %9173 = vmatprep.subr.mxu0 0.0
    %9174 = vmatpush1.msra.mxu0 0.0
    %9175 = vmatprep.subr.mxu0 0.0
    %9176 = vmatpush1.msra.mxu0 0.0
    %9177 = vmatprep.subr.mxu0 0.0
    %9178 = vmatpush1.msra.mxu0 0.0
    %9179 = vmatprep.subr.mxu0 0.0
    %9180 = vmatpush1.msra.mxu0 0.0
    %9181 = vmatprep.subr.mxu0 0.0
    %9182 = vmatpush1.msra.mxu0 0.0
    %9183 = vmatprep.mubr.f32.mxu0 0.0
    %v9184 = vand.u32 %v8863, 4294901760
    %v9185 = vsub.f32 %v8863, %v9184
    %v9186 = vand.u32 %v9185, 4294901760
    %9187 = vmatmul.mubr.f32.gmra.mrb[0].mxu0 %v9186
    %v9188 = vpop.f32.mrb[0].mxu0
    %v9189 = vadd.f32 %v9112, %v9188
    %v9190 = vpop.f32.mrb[0].mxu0
    %9191 = vdwg.mxu0
    %9192 = vmatprep.subr.mxu0 0.0
    %v9193 = vand.u32 %v8858, 4294901760
    %v9194 = vsub.f32 %v8858, %v9193
    %v9195 = vand.u32 %v9194, 4294901760
    %9196 = vmatpush1.msra.mxu0 %v9195
    %9197 = vmatprep.subr.mxu0 0.0
    %v9198 = vand.u32 %v8859, 4294901760
    %v9199 = vsub.f32 %v8859, %v9198
    %v9200 = vand.u32 %v9199, 4294901760
    %9201 = vmatpush1.msra.mxu0 %v9200
    %9202 = vmatprep.subr.mxu0 0.0
    %v9203 = vand.u32 %v8860, 4294901760
    %v9204 = vsub.f32 %v8860, %v9203
    %v9205 = vand.u32 %v9204, 4294901760
    %9206 = vmatpush1.msra.mxu0 %v9205
    %9207 = vmatprep.subr.mxu0 0.0
    %v9208 = vand.u32 %v8861, 4294901760
    %v9209 = vsub.f32 %v8861, %v9208
    %v9210 = vand.u32 %v9209, 4294901760
    %9211 = vmatpush1.msra.mxu0 %v9210
    %9212 = vmatprep.subr.mxu0 0.0
    %9213 = vmatpush1.msra.mxu0 0.0
    %9214 = vmatprep.subr.mxu0 0.0
    %9215 = vmatpush1.msra.mxu0 0.0
    %9216 = vmatprep.subr.mxu0 0.0
    %9217 = vmatpush1.msra.mxu0 0.0
    %9218 = vmatprep.subr.mxu0 0.0
    %9219 = vmatpush1.msra.mxu0 0.0
    %9220 = vmatprep.subr.mxu0 0.0
    %9221 = vmatpush1.msra.mxu0 0.0
    %9222 = vmatprep.subr.mxu0 0.0
    %9223 = vmatpush1.msra.mxu0 0.0
    %9224 = vmatprep.subr.mxu0 0.0
    %9225 = vmatpush1.msra.mxu0 0.0
    %9226 = vmatprep.subr.mxu0 0.0
    %9227 = vmatpush1.msra.mxu0 0.0
    %9228 = vmatprep.subr.mxu0 0.0
    %9229 = vmatpush1.msra.mxu0 0.0
    %9230 = vmatprep.subr.mxu0 0.0
    %9231 = vmatpush1.msra.mxu0 0.0
    %9232 = vmatprep.subr.mxu0 0.0
    %9233 = vmatpush1.msra.mxu0 0.0
    %9234 = vmatprep.subr.mxu0 0.0
    %9235 = vmatpush1.msra.mxu0 0.0
    %9236 = vmatprep.subr.mxu0 0.0
    %9237 = vmatpush1.msra.mxu0 0.0
    %9238 = vmatprep.subr.mxu0 0.0
    %9239 = vmatpush1.msra.mxu0 0.0
    %9240 = vmatprep.subr.mxu0 0.0
    %9241 = vmatpush1.msra.mxu0 0.0
    %9242 = vmatprep.subr.mxu0 0.0
    %9243 = vmatpush1.msra.mxu0 0.0
    %9244 = vmatprep.subr.mxu0 0.0
    %9245 = vmatpush1.msra.mxu0 0.0
    %9246 = vmatprep.subr.mxu0 0.0
    %9247 = vmatpush1.msra.mxu0 0.0
    %9248 = vmatprep.subr.mxu0 0.0
    %9249 = vmatpush1.msra.mxu0 0.0
    %9250 = vmatprep.subr.mxu0 0.0
    %9251 = vmatpush1.msra.mxu0 0.0
    %9252 = vmatprep.subr.mxu0 0.0
    %9253 = vmatpush1.msra.mxu0 0.0
    %9254 = vmatprep.subr.mxu0 0.0
    %9255 = vmatpush1.msra.mxu0 0.0
    %9256 = vmatprep.subr.mxu0 0.0
    %9257 = vmatpush1.msra.mxu0 0.0
    %9258 = vmatprep.subr.mxu0 0.0
    %9259 = vmatpush1.msra.mxu0 0.0
    %9260 = vmatprep.subr.mxu0 0.0
    %9261 = vmatpush1.msra.mxu0 0.0
    %9262 = vmatprep.subr.mxu0 0.0
    %9263 = vmatpush1.msra.mxu0 0.0
    %9264 = vmatprep.subr.mxu0 0.0
    %9265 = vmatpush1.msra.mxu0 0.0
    %9266 = vmatprep.subr.mxu0 0.0
    %9267 = vmatpush1.msra.mxu0 0.0
    %9268 = vmatprep.mubr.f32.mxu0 0.0
    %v9269 = vand.u32 %v8863, 4294901760
    %9270 = vmatmul.mubr.f32.gmra.mrb[0].mxu0 %v9269
    %v9271 = vpop.f32.mrb[0].mxu0
    %v9272 = vadd.f32 %v9189, %v9271
    %v9273 = vpop.f32.mrb[0].mxu0
    %9274 = vdwg.mxu0
    %9275 = vmatprep.subr.mxu0 0.0
    %v9276 = vand.u32 %v8858, 4294901760
    %9277 = vmatpush1.msra.mxu0 %v9276
    %9278 = vmatprep.subr.mxu0 0.0
    %v9279 = vand.u32 %v8859, 4294901760
    %9280 = vmatpush1.msra.mxu0 %v9279
    %9281 = vmatprep.subr.mxu0 0.0
    %v9282 = vand.u32 %v8860, 4294901760
    %9283 = vmatpush1.msra.mxu0 %v9282
    %9284 = vmatprep.subr.mxu0 0.0
    %v9285 = vand.u32 %v8861, 4294901760
    %9286 = vmatpush1.msra.mxu0 %v9285
    %9287 = vmatprep.subr.mxu0 0.0
    %9288 = vmatpush1.msra.mxu0 0.0
    %9289 = vmatprep.subr.mxu0 0.0
    %9290 = vmatpush1.msra.mxu0 0.0
    %9291 = vmatprep.subr.mxu0 0.0
    %9292 = vmatpush1.msra.mxu0 0.0
    %9293 = vmatprep.subr.mxu0 0.0
    %9294 = vmatpush1.msra.mxu0 0.0
    %9295 = vmatprep.subr.mxu0 0.0
    %9296 = vmatpush1.msra.mxu0 0.0
    %9297 = vmatprep.subr.mxu0 0.0
    %9298 = vmatpush1.msra.mxu0 0.0
    %9299 = vmatprep.subr.mxu0 0.0
    %9300 = vmatpush1.msra.mxu0 0.0
    %9301 = vmatprep.subr.mxu0 0.0
    %9302 = vmatpush1.msra.mxu0 0.0
    %9303 = vmatprep.subr.mxu0 0.0
    %9304 = vmatpush1.msra.mxu0 0.0
    %9305 = vmatprep.subr.mxu0 0.0
    %9306 = vmatpush1.msra.mxu0 0.0
    %9307 = vmatprep.subr.mxu0 0.0
    %9308 = vmatpush1.msra.mxu0 0.0
    %9309 = vmatprep.subr.mxu0 0.0
    %9310 = vmatpush1.msra.mxu0 0.0
    %9311 = vmatprep.subr.mxu0 0.0
    %9312 = vmatpush1.msra.mxu0 0.0
    %9313 = vmatprep.subr.mxu0 0.0
    %9314 = vmatpush1.msra.mxu0 0.0
    %9315 = vmatprep.subr.mxu0 0.0
    %9316 = vmatpush1.msra.mxu0 0.0
    %9317 = vmatprep.subr.mxu0 0.0
    %9318 = vmatpush1.msra.mxu0 0.0
    %9319 = vmatprep.subr.mxu0 0.0
    %9320 = vmatpush1.msra.mxu0 0.0
    %9321 = vmatprep.subr.mxu0 0.0
    %9322 = vmatpush1.msra.mxu0 0.0
    %9323 = vmatprep.subr.mxu0 0.0
    %9324 = vmatpush1.msra.mxu0 0.0
    %9325 = vmatprep.subr.mxu0 0.0
    %9326 = vmatpush1.msra.mxu0 0.0
    %9327 = vmatprep.subr.mxu0 0.0
    %9328 = vmatpush1.msra.mxu0 0.0
    %9329 = vmatprep.subr.mxu0 0.0
    %9330 = vmatpush1.msra.mxu0 0.0
    %9331 = vmatprep.subr.mxu0 0.0
    %9332 = vmatpush1.msra.mxu0 0.0
    %9333 = vmatprep.subr.mxu0 0.0
    %9334 = vmatpush1.msra.mxu0 0.0
    %9335 = vmatprep.subr.mxu0 0.0
    %9336 = vmatpush1.msra.mxu0 0.0
    %9337 = vmatprep.subr.mxu0 0.0
    %9338 = vmatpush1.msra.mxu0 0.0
    %9339 = vmatprep.subr.mxu0 0.0
    %9340 = vmatpush1.msra.mxu0 0.0
    %9341 = vmatprep.subr.mxu0 0.0
    %9342 = vmatpush1.msra.mxu0 0.0
    %9343 = vmatprep.mubr.f32.mxu0 0.0
    %v9344 = vand.u32 %v8863, 4294901760
    %9345 = vmatmul.mubr.f32.gmra.mrb[0].mxu0 %v9344
    %v9346 = vpop.f32.mrb[0].mxu0
    %v9347 = vadd.f32 %v9272, %v9346
    %v9348 = vpop.f32.mrb[0].mxu0
    %9349 = vdwg.mxu0
    %v9350 = vadd.f32 %v8856, %v9347
    %v9351 = vxor.u32 %v9350, 2147483648
    %v9352 = vmul.f32 %v9351, 1.442695
    %v9353 = vpow.pop %v9352
    %v9354 = vadd.f32 %v9353, 1.0
    %v9355 = vrcp.pop %v9354
    %v9356 = vmul.f32 1.0, %v9355
    %v9357 = vtanh.pop %v9350
    %v9358 = vld [vmem:[#allocation6] sm:$0x3]
    %9360 = vrot.lane.b32.xlu0 %v9358, 32
    %v9361 = vpop.permute.xlu0 %9360
    %v9363 = vmul.f32 %v9356, %v9361
    %9365 = vrot.lane.b32.xlu0 %v9357, 64
    %v9366 = vpop.permute.xlu0 %9365
    %v9368 = vmul.f32 %v9356, %v9366
    %9370 = vrot.lane.b32.xlu0 %v9368, 32
    %v9371 = vpop.permute.xlu0 %9370
    %v9373 = vadd.f32 %v9363, %v9371
    %v9374 = vtanh.pop %v9373
    %9376 = vrot.lane.b32.xlu0 %v9374, 64
    %v9377 = vpop.permute.xlu0 %9376
    %v9379 = vmul.f32 %v9356, %v9377
    %9381 = vrot.lane.b32.xlu0 %v9373, 96
    %v9382 = vpop.permute.xlu0 %9381
    %9384 = vst.msk [vmem:[#allocation6] sm:$0x3] %vm189, %v9382
    %9386 = vrot.lane.b32.xlu0 %v9379, 32
    %v9387 = vpop.permute.xlu0 %9386
    %9389 = vst.msk [vmem:[#allocation5] sm:$0x3] %vm189, %v9387
    %s9390 = sld [smem:[#allocation12]]
    %p9391 = scmp.eq.s32.totalorder %s9390, 7
    // Predicated region
    $region114: #{tpu_custom_call.1} parent=1 // pred_check
      %p9392 = pneg %p9391
    $region115: #{tpu_custom_call.1} parent=1 // pred_check_branch
      %9394 = sbr.rel (%p9392) target = $region117
    $region116: #{tpu_custom_call.1} parent=1 // pred_region
      %9395 = vst.msk [vmem:[#allocation20] sm:$0x1] %vm127, %v9387
    $region117: #{tpu_custom_call.1} parent=1 // pred_fallthru
      _
    %s9396 = sld [smem:[#allocation12 + $0x1]]
    %p9397 = scmp.eq.s32.totalorder %s9396, 7
    // Predicated region
    $region118: #{tpu_custom_call.1} parent=1 // pred_check
      %p9398 = pneg %p9397
    $region119: #{tpu_custom_call.1} parent=1 // pred_check_branch
      %9400 = sbr.rel (%p9398) target = $region121
    $region120: #{tpu_custom_call.1} parent=1 // pred_region
      %vm9401 = vcmask 254977
      %9402 = vst.msk [vmem:[#allocation20] sm:$0x2] %vm9401, %v9387
    $region121: #{tpu_custom_call.1} parent=1 // pred_fallthru
      _
    %v9403 = vld [vmem:[#allocation3 + $0xe] sm:$0x3]
    %v9404 = vld [vmem:[#allocation5] sm:$0x3]
    %v9405 = vld [vmem:[#allocation19] sm:$0xff]
    %v9406 = vld [vmem:[#allocation19 + $0x8] sm:$0xff]
    %v9407 = vld [vmem:[#allocation19 + $0x10] sm:$0xff]
    %v9408 = vld [vmem:[#allocation19 + $0x18] sm:$0xff]
    %v9410 = vsel %vm204, %v9404, 0
    %9412 = vmatprep.subr.mxu0 0.0
    %v9413 = vand.u32 %v9405, 4294901760
    %9414 = vmatpush1.msra.mxu0 %v9413
    %9415 = vmatprep.subr.mxu0 0.0
    %v9416 = vand.u32 %v9406, 4294901760
    %9417 = vmatpush1.msra.mxu0 %v9416
    %9418 = vmatprep.subr.mxu0 0.0
    %v9419 = vand.u32 %v9407, 4294901760
    %9420 = vmatpush1.msra.mxu0 %v9419
    %9421 = vmatprep.subr.mxu0 0.0
    %v9422 = vand.u32 %v9408, 4294901760
    %9423 = vmatpush1.msra.mxu0 %v9422
    %9424 = vmatprep.subr.mxu0 0.0
    %9425 = vmatpush1.msra.mxu0 0.0
    %9426 = vmatprep.subr.mxu0 0.0
    %9427 = vmatpush1.msra.mxu0 0.0
    %9428 = vmatprep.subr.mxu0 0.0
    %9429 = vmatpush1.msra.mxu0 0.0
    %9430 = vmatprep.subr.mxu0 0.0
    %9431 = vmatpush1.msra.mxu0 0.0
    %9432 = vmatprep.subr.mxu0 0.0
    %9433 = vmatpush1.msra.mxu0 0.0
    %9434 = vmatprep.subr.mxu0 0.0
    %9435 = vmatpush1.msra.mxu0 0.0
    %9436 = vmatprep.subr.mxu0 0.0
    %9437 = vmatpush1.msra.mxu0 0.0
    %9438 = vmatprep.subr.mxu0 0.0
    %9439 = vmatpush1.msra.mxu0 0.0
    %9440 = vmatprep.subr.mxu0 0.0
    %9441 = vmatpush1.msra.mxu0 0.0
    %9442 = vmatprep.subr.mxu0 0.0
    %9443 = vmatpush1.msra.mxu0 0.0
    %9444 = vmatprep.subr.mxu0 0.0
    %9445 = vmatpush1.msra.mxu0 0.0
    %9446 = vmatprep.subr.mxu0 0.0
    %9447 = vmatpush1.msra.mxu0 0.0
    %9448 = vmatprep.subr.mxu0 0.0
    %9449 = vmatpush1.msra.mxu0 0.0
    %9450 = vmatprep.subr.mxu0 0.0
    %9451 = vmatpush1.msra.mxu0 0.0
    %9452 = vmatprep.subr.mxu0 0.0
    %9453 = vmatpush1.msra.mxu0 0.0
    %9454 = vmatprep.subr.mxu0 0.0
    %9455 = vmatpush1.msra.mxu0 0.0
    %9456 = vmatprep.subr.mxu0 0.0
    %9457 = vmatpush1.msra.mxu0 0.0
    %9458 = vmatprep.subr.mxu0 0.0
    %9459 = vmatpush1.msra.mxu0 0.0
    %9460 = vmatprep.subr.mxu0 0.0
    %9461 = vmatpush1.msra.mxu0 0.0
    %9462 = vmatprep.subr.mxu0 0.0
    %9463 = vmatpush1.msra.mxu0 0.0
    %9464 = vmatprep.subr.mxu0 0.0
    %9465 = vmatpush1.msra.mxu0 0.0
    %9466 = vmatprep.subr.mxu0 0.0
    %9467 = vmatpush1.msra.mxu0 0.0
    %9468 = vmatprep.subr.mxu0 0.0
    %9469 = vmatpush1.msra.mxu0 0.0
    %9470 = vmatprep.subr.mxu0 0.0
    %9471 = vmatpush1.msra.mxu0 0.0
    %9472 = vmatprep.subr.mxu0 0.0
    %9473 = vmatpush1.msra.mxu0 0.0
    %9474 = vmatprep.subr.mxu0 0.0
    %9475 = vmatpush1.msra.mxu0 0.0
    %9476 = vmatprep.subr.mxu0 0.0
    %9477 = vmatpush1.msra.mxu0 0.0
    %9478 = vmatprep.subr.mxu0 0.0
    %9479 = vmatpush1.msra.mxu0 0.0
    %9480 = vmatprep.mubr.f32.mxu0 0.0
    %v9481 = vand.u32 %v9410, 4294901760
    %v9482 = vsub.f32 %v9410, %v9481
    %v9483 = vand.u32 %v9482, 4294901760
    %v9484 = vsub.f32 %v9482, %v9483
    %v9485 = vand.u32 %v9484, 4294901760
    %9486 = vmatmul.mubr.f32.gmra.mrb[0].mxu0 %v9485
    %v9487 = vpop.f32.mrb[0].mxu0
    %v9488 = vadd.f32 0.0, %v9487
    %v9489 = vpop.f32.mrb[0].mxu0
    %9490 = vdwg.mxu0
    %9491 = vmatprep.subr.mxu0 0.0
    %v9492 = vand.u32 %v9405, 4294901760
    %v9493 = vsub.f32 %v9405, %v9492
    %v9494 = vand.u32 %v9493, 4294901760
    %v9495 = vsub.f32 %v9493, %v9494
    %v9496 = vand.u32 %v9495, 4294901760
    %9497 = vmatpush1.msra.mxu0 %v9496
    %9498 = vmatprep.subr.mxu0 0.0
    %v9499 = vand.u32 %v9406, 4294901760
    %v9500 = vsub.f32 %v9406, %v9499
    %v9501 = vand.u32 %v9500, 4294901760
    %v9502 = vsub.f32 %v9500, %v9501
    %v9503 = vand.u32 %v9502, 4294901760
    %9504 = vmatpush1.msra.mxu0 %v9503
    %9505 = vmatprep.subr.mxu0 0.0
    %v9506 = vand.u32 %v9407, 4294901760
    %v9507 = vsub.f32 %v9407, %v9506
    %v9508 = vand.u32 %v9507, 4294901760
    %v9509 = vsub.f32 %v9507, %v9508
    %v9510 = vand.u32 %v9509, 4294901760
    %9511 = vmatpush1.msra.mxu0 %v9510
    %9512 = vmatprep.subr.mxu0 0.0
    %v9513 = vand.u32 %v9408, 4294901760
    %v9514 = vsub.f32 %v9408, %v9513
    %v9515 = vand.u32 %v9514, 4294901760
    %v9516 = vsub.f32 %v9514, %v9515
    %v9517 = vand.u32 %v9516, 4294901760
    %9518 = vmatpush1.msra.mxu0 %v9517
    %9519 = vmatprep.subr.mxu0 0.0
    %9520 = vmatpush1.msra.mxu0 0.0
    %9521 = vmatprep.subr.mxu0 0.0
    %9522 = vmatpush1.msra.mxu0 0.0
    %9523 = vmatprep.subr.mxu0 0.0
    %9524 = vmatpush1.msra.mxu0 0.0
    %9525 = vmatprep.subr.mxu0 0.0
    %9526 = vmatpush1.msra.mxu0 0.0
    %9527 = vmatprep.subr.mxu0 0.0
    %9528 = vmatpush1.msra.mxu0 0.0
    %9529 = vmatprep.subr.mxu0 0.0
    %9530 = vmatpush1.msra.mxu0 0.0
    %9531 = vmatprep.subr.mxu0 0.0
    %9532 = vmatpush1.msra.mxu0 0.0
    %9533 = vmatprep.subr.mxu0 0.0
    %9534 = vmatpush1.msra.mxu0 0.0
    %9535 = vmatprep.subr.mxu0 0.0
    %9536 = vmatpush1.msra.mxu0 0.0
    %9537 = vmatprep.subr.mxu0 0.0
    %9538 = vmatpush1.msra.mxu0 0.0
    %9539 = vmatprep.subr.mxu0 0.0
    %9540 = vmatpush1.msra.mxu0 0.0
    %9541 = vmatprep.subr.mxu0 0.0
    %9542 = vmatpush1.msra.mxu0 0.0
    %9543 = vmatprep.subr.mxu0 0.0
    %9544 = vmatpush1.msra.mxu0 0.0
    %9545 = vmatprep.subr.mxu0 0.0
    %9546 = vmatpush1.msra.mxu0 0.0
    %9547 = vmatprep.subr.mxu0 0.0
    %9548 = vmatpush1.msra.mxu0 0.0
    %9549 = vmatprep.subr.mxu0 0.0
    %9550 = vmatpush1.msra.mxu0 0.0
    %9551 = vmatprep.subr.mxu0 0.0
    %9552 = vmatpush1.msra.mxu0 0.0
    %9553 = vmatprep.subr.mxu0 0.0
    %9554 = vmatpush1.msra.mxu0 0.0
    %9555 = vmatprep.subr.mxu0 0.0
    %9556 = vmatpush1.msra.mxu0 0.0
    %9557 = vmatprep.subr.mxu0 0.0
    %9558 = vmatpush1.msra.mxu0 0.0
    %9559 = vmatprep.subr.mxu0 0.0
    %9560 = vmatpush1.msra.mxu0 0.0
    %9561 = vmatprep.subr.mxu0 0.0
    %9562 = vmatpush1.msra.mxu0 0.0
    %9563 = vmatprep.subr.mxu0 0.0
    %9564 = vmatpush1.msra.mxu0 0.0
    %9565 = vmatprep.subr.mxu0 0.0
    %9566 = vmatpush1.msra.mxu0 0.0
    %9567 = vmatprep.subr.mxu0 0.0
    %9568 = vmatpush1.msra.mxu0 0.0
    %9569 = vmatprep.subr.mxu0 0.0
    %9570 = vmatpush1.msra.mxu0 0.0
    %9571 = vmatprep.subr.mxu0 0.0
    %9572 = vmatpush1.msra.mxu0 0.0
    %9573 = vmatprep.subr.mxu0 0.0
    %9574 = vmatpush1.msra.mxu0 0.0
    %9575 = vmatprep.mubr.f32.mxu0 0.0
    %v9576 = vand.u32 %v9410, 4294901760
    %9577 = vmatmul.mubr.f32.gmra.mrb[0].mxu0 %v9576
    %v9578 = vpop.f32.mrb[0].mxu0
    %v9579 = vadd.f32 %v9488, %v9578
    %v9580 = vpop.f32.mrb[0].mxu0
    %9581 = vdwg.mxu0
    %9582 = vmatprep.subr.mxu0 0.0
    %v9583 = vand.u32 %v9405, 4294901760
    %v9584 = vsub.f32 %v9405, %v9583
    %9585 = vmatpush1.msra.mxu0 %v9584
    %9586 = vmatprep.subr.mxu0 0.0
    %v9587 = vand.u32 %v9406, 4294901760
    %v9588 = vsub.f32 %v9406, %v9587
    %9589 = vmatpush1.msra.mxu0 %v9588
    %9590 = vmatprep.subr.mxu0 0.0
    %v9591 = vand.u32 %v9407, 4294901760
    %v9592 = vsub.f32 %v9407, %v9591
    %9593 = vmatpush1.msra.mxu0 %v9592
    %9594 = vmatprep.subr.mxu0 0.0
    %v9595 = vand.u32 %v9408, 4294901760
    %v9596 = vsub.f32 %v9408, %v9595
    %9597 = vmatpush1.msra.mxu0 %v9596
    %9598 = vmatprep.subr.mxu0 0.0
    %9599 = vmatpush1.msra.mxu0 0.0
    %9600 = vmatprep.subr.mxu0 0.0
    %9601 = vmatpush1.msra.mxu0 0.0
    %9602 = vmatprep.subr.mxu0 0.0
    %9603 = vmatpush1.msra.mxu0 0.0
    %9604 = vmatprep.subr.mxu0 0.0
    %9605 = vmatpush1.msra.mxu0 0.0
    %9606 = vmatprep.subr.mxu0 0.0
    %9607 = vmatpush1.msra.mxu0 0.0
    %9608 = vmatprep.subr.mxu0 0.0
    %9609 = vmatpush1.msra.mxu0 0.0
    %9610 = vmatprep.subr.mxu0 0.0
    %9611 = vmatpush1.msra.mxu0 0.0
    %9612 = vmatprep.subr.mxu0 0.0
    %9613 = vmatpush1.msra.mxu0 0.0
    %9614 = vmatprep.subr.mxu0 0.0
    %9615 = vmatpush1.msra.mxu0 0.0
    %9616 = vmatprep.subr.mxu0 0.0
    %9617 = vmatpush1.msra.mxu0 0.0
    %9618 = vmatprep.subr.mxu0 0.0
    %9619 = vmatpush1.msra.mxu0 0.0
    %9620 = vmatprep.subr.mxu0 0.0
    %9621 = vmatpush1.msra.mxu0 0.0
    %9622 = vmatprep.subr.mxu0 0.0
    %9623 = vmatpush1.msra.mxu0 0.0
    %9624 = vmatprep.subr.mxu0 0.0
    %9625 = vmatpush1.msra.mxu0 0.0
    %9626 = vmatprep.subr.mxu0 0.0
    %9627 = vmatpush1.msra.mxu0 0.0
    %9628 = vmatprep.subr.mxu0 0.0
    %9629 = vmatpush1.msra.mxu0 0.0
    %9630 = vmatprep.subr.mxu0 0.0
    %9631 = vmatpush1.msra.mxu0 0.0
    %9632 = vmatprep.subr.mxu0 0.0
    %9633 = vmatpush1.msra.mxu0 0.0
    %9634 = vmatprep.subr.mxu0 0.0
    %9635 = vmatpush1.msra.mxu0 0.0
    %9636 = vmatprep.subr.mxu0 0.0
    %9637 = vmatpush1.msra.mxu0 0.0
    %9638 = vmatprep.subr.mxu0 0.0
    %9639 = vmatpush1.msra.mxu0 0.0
    %9640 = vmatprep.subr.mxu0 0.0
    %9641 = vmatpush1.msra.mxu0 0.0
    %9642 = vmatprep.subr.mxu0 0.0
    %9643 = vmatpush1.msra.mxu0 0.0
    %9644 = vmatprep.subr.mxu0 0.0
    %9645 = vmatpush1.msra.mxu0 0.0
    %9646 = vmatprep.subr.mxu0 0.0
    %9647 = vmatpush1.msra.mxu0 0.0
    %9648 = vmatprep.subr.mxu0 0.0
    %9649 = vmatpush1.msra.mxu0 0.0
    %9650 = vmatprep.subr.mxu0 0.0
    %9651 = vmatpush1.msra.mxu0 0.0
    %9652 = vmatprep.subr.mxu0 0.0
    %9653 = vmatpush1.msra.mxu0 0.0
    %9654 = vmatprep.mubr.f32.mxu0 0.0
    %v9655 = vand.u32 %v9410, 4294901760
    %v9656 = vsub.f32 %v9410, %v9655
    %9657 = vmatmul.mubr.f32.gmra.mrb[0].mxu0 %v9656
    %v9658 = vpop.f32.mrb[0].mxu0
    %v9659 = vadd.f32 %v9579, %v9658
    %v9660 = vpop.f32.mrb[0].mxu0
    %9661 = vdwg.mxu0
    %9662 = vmatprep.subr.mxu0 0.0
    %v9663 = vand.u32 %v9405, 4294901760
    %9664 = vmatpush1.msra.mxu0 %v9663
    %9665 = vmatprep.subr.mxu0 0.0
    %v9666 = vand.u32 %v9406, 4294901760
    %9667 = vmatpush1.msra.mxu0 %v9666
    %9668 = vmatprep.subr.mxu0 0.0
    %v9669 = vand.u32 %v9407, 4294901760
    %9670 = vmatpush1.msra.mxu0 %v9669
    %9671 = vmatprep.subr.mxu0 0.0
    %v9672 = vand.u32 %v9408, 4294901760
    %9673 = vmatpush1.msra.mxu0 %v9672
    %9674 = vmatprep.subr.mxu0 0.0
    %9675 = vmatpush1.msra.mxu0 0.0
    %9676 = vmatprep.subr.mxu0 0.0
    %9677 = vmatpush1.msra.mxu0 0.0
    %9678 = vmatprep.subr.mxu0 0.0
    %9679 = vmatpush1.msra.mxu0 0.0
    %9680 = vmatprep.subr.mxu0 0.0
    %9681 = vmatpush1.msra.mxu0 0.0
    %9682 = vmatprep.subr.mxu0 0.0
    %9683 = vmatpush1.msra.mxu0 0.0
    %9684 = vmatprep.subr.mxu0 0.0
    %9685 = vmatpush1.msra.mxu0 0.0
    %9686 = vmatprep.subr.mxu0 0.0
    %9687 = vmatpush1.msra.mxu0 0.0
    %9688 = vmatprep.subr.mxu0 0.0
    %9689 = vmatpush1.msra.mxu0 0.0
    %9690 = vmatprep.subr.mxu0 0.0
    %9691 = vmatpush1.msra.mxu0 0.0
    %9692 = vmatprep.subr.mxu0 0.0
    %9693 = vmatpush1.msra.mxu0 0.0
    %9694 = vmatprep.subr.mxu0 0.0
    %9695 = vmatpush1.msra.mxu0 0.0
    %9696 = vmatprep.subr.mxu0 0.0
    %9697 = vmatpush1.msra.mxu0 0.0
    %9698 = vmatprep.subr.mxu0 0.0
    %9699 = vmatpush1.msra.mxu0 0.0
    %9700 = vmatprep.subr.mxu0 0.0
    %9701 = vmatpush1.msra.mxu0 0.0
    %9702 = vmatprep.subr.mxu0 0.0
    %9703 = vmatpush1.msra.mxu0 0.0
    %9704 = vmatprep.subr.mxu0 0.0
    %9705 = vmatpush1.msra.mxu0 0.0
    %9706 = vmatprep.subr.mxu0 0.0
    %9707 = vmatpush1.msra.mxu0 0.0
    %9708 = vmatprep.subr.mxu0 0.0
    %9709 = vmatpush1.msra.mxu0 0.0
    %9710 = vmatprep.subr.mxu0 0.0
    %9711 = vmatpush1.msra.mxu0 0.0
    %9712 = vmatprep.subr.mxu0 0.0
    %9713 = vmatpush1.msra.mxu0 0.0
    %9714 = vmatprep.subr.mxu0 0.0
    %9715 = vmatpush1.msra.mxu0 0.0
    %9716 = vmatprep.subr.mxu0 0.0
    %9717 = vmatpush1.msra.mxu0 0.0
    %9718 = vmatprep.subr.mxu0 0.0
    %9719 = vmatpush1.msra.mxu0 0.0
    %9720 = vmatprep.subr.mxu0 0.0
    %9721 = vmatpush1.msra.mxu0 0.0
    %9722 = vmatprep.subr.mxu0 0.0
    %9723 = vmatpush1.msra.mxu0 0.0
    %9724 = vmatprep.subr.mxu0 0.0
    %9725 = vmatpush1.msra.mxu0 0.0
    %9726 = vmatprep.subr.mxu0 0.0
    %9727 = vmatpush1.msra.mxu0 0.0
    %9728 = vmatprep.subr.mxu0 0.0
    %9729 = vmatpush1.msra.mxu0 0.0
    %9730 = vmatprep.mubr.f32.mxu0 0.0
    %v9731 = vand.u32 %v9410, 4294901760
    %v9732 = vsub.f32 %v9410, %v9731
    %v9733 = vand.u32 %v9732, 4294901760
    %9734 = vmatmul.mubr.f32.gmra.mrb[0].mxu0 %v9733
    %v9735 = vpop.f32.mrb[0].mxu0
    %v9736 = vadd.f32 %v9659, %v9735
    %v9737 = vpop.f32.mrb[0].mxu0
    %9738 = vdwg.mxu0
    %9739 = vmatprep.subr.mxu0 0.0
    %v9740 = vand.u32 %v9405, 4294901760
    %v9741 = vsub.f32 %v9405, %v9740
    %v9742 = vand.u32 %v9741, 4294901760
    %9743 = vmatpush1.msra.mxu0 %v9742
    %9744 = vmatprep.subr.mxu0 0.0
    %v9745 = vand.u32 %v9406, 4294901760
    %v9746 = vsub.f32 %v9406, %v9745
    %v9747 = vand.u32 %v9746, 4294901760
    %9748 = vmatpush1.msra.mxu0 %v9747
    %9749 = vmatprep.subr.mxu0 0.0
    %v9750 = vand.u32 %v9407, 4294901760
    %v9751 = vsub.f32 %v9407, %v9750
    %v9752 = vand.u32 %v9751, 4294901760
    %9753 = vmatpush1.msra.mxu0 %v9752
    %9754 = vmatprep.subr.mxu0 0.0
    %v9755 = vand.u32 %v9408, 4294901760
    %v9756 = vsub.f32 %v9408, %v9755
    %v9757 = vand.u32 %v9756, 4294901760
    %9758 = vmatpush1.msra.mxu0 %v9757
    %9759 = vmatprep.subr.mxu0 0.0
    %9760 = vmatpush1.msra.mxu0 0.0
    %9761 = vmatprep.subr.mxu0 0.0
    %9762 = vmatpush1.msra.mxu0 0.0
    %9763 = vmatprep.subr.mxu0 0.0
    %9764 = vmatpush1.msra.mxu0 0.0
    %9765 = vmatprep.subr.mxu0 0.0
    %9766 = vmatpush1.msra.mxu0 0.0
    %9767 = vmatprep.subr.mxu0 0.0
    %9768 = vmatpush1.msra.mxu0 0.0
    %9769 = vmatprep.subr.mxu0 0.0
    %9770 = vmatpush1.msra.mxu0 0.0
    %9771 = vmatprep.subr.mxu0 0.0
    %9772 = vmatpush1.msra.mxu0 0.0
    %9773 = vmatprep.subr.mxu0 0.0
    %9774 = vmatpush1.msra.mxu0 0.0
    %9775 = vmatprep.subr.mxu0 0.0
    %9776 = vmatpush1.msra.mxu0 0.0
    %9777 = vmatprep.subr.mxu0 0.0
    %9778 = vmatpush1.msra.mxu0 0.0
    %9779 = vmatprep.subr.mxu0 0.0
    %9780 = vmatpush1.msra.mxu0 0.0
    %9781 = vmatprep.subr.mxu0 0.0
    %9782 = vmatpush1.msra.mxu0 0.0
    %9783 = vmatprep.subr.mxu0 0.0
    %9784 = vmatpush1.msra.mxu0 0.0
    %9785 = vmatprep.subr.mxu0 0.0
    %9786 = vmatpush1.msra.mxu0 0.0
    %9787 = vmatprep.subr.mxu0 0.0
    %9788 = vmatpush1.msra.mxu0 0.0
    %9789 = vmatprep.subr.mxu0 0.0
    %9790 = vmatpush1.msra.mxu0 0.0
    %9791 = vmatprep.subr.mxu0 0.0
    %9792 = vmatpush1.msra.mxu0 0.0
    %9793 = vmatprep.subr.mxu0 0.0
    %9794 = vmatpush1.msra.mxu0 0.0
    %9795 = vmatprep.subr.mxu0 0.0
    %9796 = vmatpush1.msra.mxu0 0.0
    %9797 = vmatprep.subr.mxu0 0.0
    %9798 = vmatpush1.msra.mxu0 0.0
    %9799 = vmatprep.subr.mxu0 0.0
    %9800 = vmatpush1.msra.mxu0 0.0
    %9801 = vmatprep.subr.mxu0 0.0
    %9802 = vmatpush1.msra.mxu0 0.0
    %9803 = vmatprep.subr.mxu0 0.0
    %9804 = vmatpush1.msra.mxu0 0.0
    %9805 = vmatprep.subr.mxu0 0.0
    %9806 = vmatpush1.msra.mxu0 0.0
    %9807 = vmatprep.subr.mxu0 0.0
    %9808 = vmatpush1.msra.mxu0 0.0
    %9809 = vmatprep.subr.mxu0 0.0
    %9810 = vmatpush1.msra.mxu0 0.0
    %9811 = vmatprep.subr.mxu0 0.0
    %9812 = vmatpush1.msra.mxu0 0.0
    %9813 = vmatprep.subr.mxu0 0.0
    %9814 = vmatpush1.msra.mxu0 0.0
    %9815 = vmatprep.mubr.f32.mxu0 0.0
    %v9816 = vand.u32 %v9410, 4294901760
    %9817 = vmatmul.mubr.f32.gmra.mrb[0].mxu0 %v9816
    %v9818 = vpop.f32.mrb[0].mxu0
    %v9819 = vadd.f32 %v9736, %v9818
    %v9820 = vpop.f32.mrb[0].mxu0
    %9821 = vdwg.mxu0
    %9822 = vmatprep.subr.mxu0 0.0
    %v9823 = vand.u32 %v9405, 4294901760
    %9824 = vmatpush1.msra.mxu0 %v9823
    %9825 = vmatprep.subr.mxu0 0.0
    %v9826 = vand.u32 %v9406, 4294901760
    %9827 = vmatpush1.msra.mxu0 %v9826
    %9828 = vmatprep.subr.mxu0 0.0
    %v9829 = vand.u32 %v9407, 4294901760
    %9830 = vmatpush1.msra.mxu0 %v9829
    %9831 = vmatprep.subr.mxu0 0.0
    %v9832 = vand.u32 %v9408, 4294901760
    %9833 = vmatpush1.msra.mxu0 %v9832
    %9834 = vmatprep.subr.mxu0 0.0
    %9835 = vmatpush1.msra.mxu0 0.0
    %9836 = vmatprep.subr.mxu0 0.0
    %9837 = vmatpush1.msra.mxu0 0.0
    %9838 = vmatprep.subr.mxu0 0.0
    %9839 = vmatpush1.msra.mxu0 0.0
    %9840 = vmatprep.subr.mxu0 0.0
    %9841 = vmatpush1.msra.mxu0 0.0
    %9842 = vmatprep.subr.mxu0 0.0
    %9843 = vmatpush1.msra.mxu0 0.0
    %9844 = vmatprep.subr.mxu0 0.0
    %9845 = vmatpush1.msra.mxu0 0.0
    %9846 = vmatprep.subr.mxu0 0.0
    %9847 = vmatpush1.msra.mxu0 0.0
    %9848 = vmatprep.subr.mxu0 0.0
    %9849 = vmatpush1.msra.mxu0 0.0
    %9850 = vmatprep.subr.mxu0 0.0
    %9851 = vmatpush1.msra.mxu0 0.0
    %9852 = vmatprep.subr.mxu0 0.0
    %9853 = vmatpush1.msra.mxu0 0.0
    %9854 = vmatprep.subr.mxu0 0.0
    %9855 = vmatpush1.msra.mxu0 0.0
    %9856 = vmatprep.subr.mxu0 0.0
    %9857 = vmatpush1.msra.mxu0 0.0
    %9858 = vmatprep.subr.mxu0 0.0
    %9859 = vmatpush1.msra.mxu0 0.0
    %9860 = vmatprep.subr.mxu0 0.0
    %9861 = vmatpush1.msra.mxu0 0.0
    %9862 = vmatprep.subr.mxu0 0.0
    %9863 = vmatpush1.msra.mxu0 0.0
    %9864 = vmatprep.subr.mxu0 0.0
    %9865 = vmatpush1.msra.mxu0 0.0
    %9866 = vmatprep.subr.mxu0 0.0
    %9867 = vmatpush1.msra.mxu0 0.0
    %9868 = vmatprep.subr.mxu0 0.0
    %9869 = vmatpush1.msra.mxu0 0.0
    %9870 = vmatprep.subr.mxu0 0.0
    %9871 = vmatpush1.msra.mxu0 0.0
    %9872 = vmatprep.subr.mxu0 0.0
    %9873 = vmatpush1.msra.mxu0 0.0
    %9874 = vmatprep.subr.mxu0 0.0
    %9875 = vmatpush1.msra.mxu0 0.0
    %9876 = vmatprep.subr.mxu0 0.0
    %9877 = vmatpush1.msra.mxu0 0.0
    %9878 = vmatprep.subr.mxu0 0.0
    %9879 = vmatpush1.msra.mxu0 0.0
    %9880 = vmatprep.subr.mxu0 0.0
    %9881 = vmatpush1.msra.mxu0 0.0
    %9882 = vmatprep.subr.mxu0 0.0
    %9883 = vmatpush1.msra.mxu0 0.0
    %9884 = vmatprep.subr.mxu0 0.0
    %9885 = vmatpush1.msra.mxu0 0.0
    %9886 = vmatprep.subr.mxu0 0.0
    %9887 = vmatpush1.msra.mxu0 0.0
    %9888 = vmatprep.subr.mxu0 0.0
    %9889 = vmatpush1.msra.mxu0 0.0
    %9890 = vmatprep.mubr.f32.mxu0 0.0
    %v9891 = vand.u32 %v9410, 4294901760
    %9892 = vmatmul.mubr.f32.gmra.mrb[0].mxu0 %v9891
    %v9893 = vpop.f32.mrb[0].mxu0
    %v9894 = vadd.f32 %v9819, %v9893
    %v9895 = vpop.f32.mrb[0].mxu0
    %9896 = vdwg.mxu0
    %v9897 = vadd.f32 %v9403, %v9894
    %v9898 = vxor.u32 %v9897, 2147483648
    %v9899 = vmul.f32 %v9898, 1.442695
    %v9900 = vpow.pop %v9899
    %v9901 = vadd.f32 %v9900, 1.0
    %v9902 = vrcp.pop %v9901
    %v9903 = vmul.f32 1.0, %v9902
    %v9904 = vtanh.pop %v9897
    %v9905 = vld [vmem:[#allocation6] sm:$0x3]
    %9907 = vrot.lane.b32.xlu0 %v9905, 32
    %v9908 = vpop.permute.xlu0 %9907
    %v9910 = vmul.f32 %v9903, %v9908
    %9912 = vrot.lane.b32.xlu0 %v9904, 64
    %v9913 = vpop.permute.xlu0 %9912
    %v9915 = vmul.f32 %v9903, %v9913
    %9917 = vrot.lane.b32.xlu0 %v9915, 32
    %v9918 = vpop.permute.xlu0 %9917
    %v9920 = vadd.f32 %v9910, %v9918
    %v9921 = vtanh.pop %v9920
    %9923 = vrot.lane.b32.xlu0 %v9921, 64
    %v9924 = vpop.permute.xlu0 %9923
    %v9926 = vmul.f32 %v9903, %v9924
    %9928 = vrot.lane.b32.xlu0 %v9920, 96
    %v9929 = vpop.permute.xlu0 %9928
    %9931 = vst.msk [vmem:[#allocation6] sm:$0x3] %vm189, %v9929
    %9933 = vrot.lane.b32.xlu0 %v9926, 32
    %v9934 = vpop.permute.xlu0 %9933
    %9936 = vst.msk [vmem:[#allocation5] sm:$0x3] %vm189, %v9934
    %s9937 = sld [smem:[#allocation12]]
    %p9938 = scmp.eq.s32.totalorder %s9937, 8
    // Predicated region
    $region122: #{tpu_custom_call.1} parent=1 // pred_check
      %p9939 = pneg %p9938
    $region123: #{tpu_custom_call.1} parent=1 // pred_check_branch
      %9941 = sbr.rel (%p9939) target = $region125
    $region124: #{tpu_custom_call.1} parent=1 // pred_region
      %9942 = vst.msk [vmem:[#allocation20] sm:$0x1] %vm127, %v9934
    $region125: #{tpu_custom_call.1} parent=1 // pred_fallthru
      _
    %s9943 = sld [smem:[#allocation12 + $0x1]]
    %p9944 = scmp.eq.s32.totalorder %s9943, 8
    // Predicated region
    $region126: #{tpu_custom_call.1} parent=1 // pred_check
      %p9945 = pneg %p9944
    $region127: #{tpu_custom_call.1} parent=1 // pred_check_branch
      %9947 = sbr.rel (%p9945) target = $region129
    $region128: #{tpu_custom_call.1} parent=1 // pred_region
      %vm9948 = vcmask 254977
      %9949 = vst.msk [vmem:[#allocation20] sm:$0x2] %vm9948, %v9934
    $region129: #{tpu_custom_call.1} parent=1 // pred_fallthru
      _
    // Predicated region
    $region130: #{tpu_custom_call.1} parent=1 // pred_check
      _
    $region131: #{tpu_custom_call.1} parent=1 // pred_check_branch
      %9951 = sbr.rel (0) target = $region133
    $region132: #{tpu_custom_call.1} parent=1 // pred_region
      %s9953 = ssub.s32 32, 32
      %9954 = vsyncadd [#allocation9], %s9953
      %s9956 = sshll.u32 [#allocation20], 4
      %s9957 = int_to_ptr.vmem [resolvable:$true] %s9956
      %9959 = dma.vmem_to_hbm [thread:$0]  %s9957, 32, %s9, [#allocation9]
    $region133: #{tpu_custom_call.1} parent=1 // pred_fallthru
      _
    // Predicated region
    $region134: #{tpu_custom_call.1} parent=1 // pred_check
      _
    $region135: #{tpu_custom_call.1} parent=1 // pred_check_branch
      %9961 = sbr.rel (0) target = $region137
    $region136: #{tpu_custom_call.1} parent=1 // pred_region
      %9962 = dma.done [#allocation9], 32
    $region137: #{tpu_custom_call.1} parent=1 // pred_fallthru
      _
    %9963 = vsyncpa [#allocation8], 1
    %9964 = vsyncpa [#allocation15], 1
    %9965 = vsyncpa [#allocation18], 1
    %9966 = vsyncpa [#allocation9], 1
    %9967 = vsyncpa [#allocation10], 1
    %9968 = vsyncpa [#allocation11], 1

</llo_original>
